<compile_context>
chip_gen: v5e
topology: v5e:2x2
jax: 0.10.0
libtpu: 0.0.40
codegen_flags: <defaults>
</compile_context>

<pallas_src>
import numpy as np

import jax
import jax.numpy as jnp
from jax import lax
from jax.experimental import pallas as pl
from jax.experimental.pallas import tpu as pltpu


# ------------------------------ Pallas kernel ------------------------------- #

def _fused_kernel(x_ref,
                  w1_ref, b1_ref, g1_ref, d1_ref,
                  w2_ref, b2_ref, g2_ref, d2_ref,
                  w3_ref, b3_ref, g3_ref, d3_ref,
                  fcw_ref, fcb_ref,
                  rw1_ref, rb1_ref, rw2_ref, rb2_ref, rw3_ref, rb3_ref,
                  o_ref):
    """Whole ReleaseRelationNet forward for one block of TB samples.

    The input block stacks 2*TB images (the TB hand images first, then the TB
    matching ball images) along the matmul M dimension; every image occupies a
    fixed number of rows per stage (its data rows plus its zero H-padding
    rows), so each conv layer is `kh` row-shifted MXU matmuls of the whole
    stack against banded weights that already fold in the width zero-padding.
    All intermediates stay in values (registers / compiler-managed VMEM).
    """
    m1 = x_ref.shape[1]
    n_img = m1 // 20                      # 2 * TB images in this block
    tb = n_img // 2
    f_dim = fcw_ref.shape[1]

    def conv_relu_wpool(x, w_ref, b_ref, kh, shift0):
        # x: (M, K) f32 stacked images; rows past each image's valid rows are
        # zero and double as the conv's H zero-padding.  w_ref[dy] is a
        # (K, W*Cout) banded weight with the W zero-padding folded in and
        # output columns ordered (ow % 2, ow // 2, cout), so the 2x max-pool
        # over W is a max of the two contiguous (128-aligned) column halves.
        m = x.shape[0]
        acc = None
        for dy in range(kh):                                    # static unroll
            s = (shift0 - dy) % m
            # Rolled (wrapped) rows only ever land on zero pad rows or on
            # unused garbage output rows, so a rotate is safe here.
            xs = x if s == 0 else jnp.roll(x, s, axis=0)
            t = jnp.dot(xs.astype(jnp.bfloat16), w_ref[dy],
                        preferred_element_type=jnp.float32)
            acc = t if acc is None else acc + t
        act = jnp.maximum(acc + b_ref[...], 0.0)                # bias + ReLU
        half = act.shape[1] // 2
        return jnp.maximum(act[:, :half], act[:, half:])        # 2x max-pool (W)

    def hpool_bn(y, g_ref, d_ref, rows_per_img, valid_rows):
        # 2x max-pool over H (adjacent-row pairs, done on values), eval-mode
        # BatchNorm, then zero each image's trailing pad rows so they act as
        # the next conv's zero H-padding.
        m, c = y.shape
        p = jnp.max(y.reshape(m // 2, 2, c), axis=1)
        p = p * g_ref[...] + d_ref[...]
        r = lax.broadcasted_iota(jnp.int32, (m // 2, 1), 0)
        return jnp.where((r % rows_per_img) < valid_rows, p, 0.0)

    # stage 1: (n_img*20, 96) -> (n_img*10, 256); 8 valid rows per image
    x1 = x_ref[0]
    y1 = conv_relu_wpool(x1, w1_ref, b1_ref, kh=5, shift0=0)
    x2 = hpool_bn(y1, g1_ref, d1_ref, rows_per_img=10, valid_rows=8)
    # stage 2: (n_img*10, 256) -> (n_img*5, 256); 4 valid rows per image
    y2 = conv_relu_wpool(x2, w2_ref, b2_ref, kh=3, shift0=1)
    x3 = hpool_bn(y2, g2_ref, d2_ref, rows_per_img=5, valid_rows=4)
    # stage 3: conv -> 2x2 max-pool -> BN -> adaptive avg-pool -> fc
    y3 = conv_relu_wpool(x3, w3_ref, b3_ref, kh=3, shift0=1)    # (n_img*5, 256)
    p3 = jnp.maximum(y3, jnp.roll(y3, -1, axis=0))              # H pair-max
    p3 = p3 * g3_ref[...] + d3_ref[...]                         # BatchNorm3
    s = p3[:, :128] + p3[:, 128:]                               # sum over W
    s = s + jnp.roll(s, -2, axis=0)                             # + next H pair
    pooled = 0.25 * jnp.concatenate(                            # row i*5 holds
        [s[i * 5:i * 5 + 1, :] for i in range(n_img)], axis=0)  # image i's mean
    feats = jnp.dot(pooled.astype(jnp.bfloat16), fcw_ref[...],
                    preferred_element_type=jnp.float32) + fcb_ref[...]

    # relation head: Linear(2F,128)+ReLU -> [Dropout=id] -> Linear(128,64)+ReLU
    # -> Linear(64,1) -> Sigmoid.  Hand features are feats[:tb], ball features
    # feats[tb:], so torch.cat + Linear becomes a split matmul.
    rw1 = rw1_ref[...]
    h = (jnp.dot(feats[:tb].astype(jnp.bfloat16), rw1[:f_dim],
                 preferred_element_type=jnp.float32)
         + jnp.dot(feats[tb:].astype(jnp.bfloat16), rw1[f_dim:],
                   preferred_element_type=jnp.float32) + rb1_ref[...])
    h = jnp.maximum(h, 0.0)
    # TODO(synk): Dropout(0.5) has no effect at inference; implemented as identity.
    h = jnp.dot(h.astype(jnp.bfloat16), rw2_ref[...],
                preferred_element_type=jnp.float32) + rb2_ref[...]
    h = jnp.maximum(h, 0.0)
    logit = jnp.dot(h.astype(jnp.bfloat16), rw3_ref[...],
                    preferred_element_type=jnp.float32) + rb3_ref[...]
    o_ref[0] = jax.nn.sigmoid(logit)


# -------------------------------- JAX glue ---------------------------------- #

def _choose_sample_tile(n):
    """Samples per grid step: big enough to fatten the matmul M dimension,
    small enough to keep >= 2 grid steps so both v7x TensorCores get work."""
    if n <= 1:
        return 1
    for tb in range(min(8, n // 2), 0, -1):
        if n % tb == 0:
            return tb
    return 1


def _pack_inputs(hand_t, hand_tm1, ball_t, ball_tm1, tb):
    """NCHW inputs -> (G, 2*TB*20, 96) blocks: per block, TB hand images then
    the TB matching ball images; each image is 16 rows of (w, c)-flattened
    pixels (c = cat(t, t-1) channels, fastest) with 2 zero H-pad rows above
    and below (the W padding is folded into the banded conv weights)."""
    n = hand_t.shape[0]

    def stream(a, b):
        x = jnp.stack([a.astype(jnp.float32), b.astype(jnp.float32)], axis=1)
        x = jnp.transpose(x, (0, 3, 4, 1, 2))            # (N, H, W, time, C)
        return x.reshape(n, 16, 96)

    x = jnp.stack([stream(hand_t, hand_tm1), stream(ball_t, ball_tm1)], axis=0)
    x = jnp.pad(x, ((0, 0), (0, 0), (2, 2), (0, 0)))     # H zero pad -> 20 rows
    g = n // tb
    x = x.reshape(2, g, tb, 20, 96).transpose(1, 0, 2, 3, 4)
    return x.reshape(g, 2 * tb * 20, 96)


@jax.jit
def release_relation_net(pk, hand_t, hand_tm1, ball_t, ball_tm1):
    """Matches ReleaseRelationNet.forward; inputs are NCHW (N, 3, 16, 16)."""
    n = hand_t.shape[0]
    tb = _choose_sample_tile(n)
    g = n // tb
    x = _pack_inputs(hand_t, hand_tm1, ball_t, ball_tm1, tb)

    weights = (pk["w1"], pk["b1"], pk["g1"], pk["d1"],
               pk["w2"], pk["b2"], pk["g2"], pk["d2"],
               pk["w3"], pk["b3"], pk["g3"], pk["d3"],
               pk["fcw"], pk["fcb"],
               pk["rw1"], pk["rb1"], pk["rw2"], pk["rb2"],
               pk["rw3"], pk["rb3"])
    full = lambda a: pl.BlockSpec(a.shape, lambda i, nd=a.ndim: (0,) * nd)

    out = pl.pallas_call(
        _fused_kernel,
        out_shape=jax.ShapeDtypeStruct((g, tb, 1), jnp.float32),
        grid=(g,),
        in_specs=[pl.BlockSpec((1, 2 * tb * 20, 96), lambda i: (i, 0, 0))]
                 + [full(a) for a in weights],
        out_specs=pl.BlockSpec((1, tb, 1), lambda i: (i, 0, 0)),
        compiler_params=pltpu.CompilerParams(
            dimension_semantics=("parallel",)),
    )(x, *weights)
    return out.reshape(n, 1)


# --------------------------- parameter handling ----------------------------- #

def init_params(key, feature_dim=128):
    """Random parameters in framework-agnostic shapes.
    Conv weights are (KH, KW, Cin, Cout); linear weights are (in, out).
    TODO(synk): when importing trained PyTorch weights, transpose Conv2d
    (Cout,Cin,KH,KW)->(KH,KW,Cin,Cout), Linear (out,in)->(in,out), and fold
    real BatchNorm running stats / affine into the scale & shift below."""
    ks = jax.random.split(key, 8)
    dense = lambda k, shape, fan_in: (jax.random.normal(k, shape, jnp.float32)
                                      / jnp.sqrt(jnp.float32(fan_in)))
    eps = 1e-5
    # BatchNorm2d (eval) with default stats: mean=0, var=1, gamma=1, beta=0.
    bn = lambda c: (jnp.full((1, c), 1.0 / np.sqrt(1.0 + eps), jnp.float32),
                    jnp.zeros((1, c), jnp.float32))
    p = {
        "conv1_w": dense(ks[0], (5, 5, 6, 32), 5 * 5 * 6),
        "conv1_b": jnp.zeros((1, 32), jnp.float32),
        "conv2_w": dense(ks[1], (3, 3, 32, 64), 3 * 3 * 32),
        "conv2_b": jnp.zeros((1, 64), jnp.float32),
        "conv3_w": dense(ks[2], (3, 3, 64, 128), 3 * 3 * 64),
        "conv3_b": jnp.zeros((1, 128), jnp.float32),
        "fc_w": dense(ks[3], (128, feature_dim), 128),
        "fc_b": jnp.zeros((1, feature_dim), jnp.float32),
        "rh_w1": dense(ks[4], (2 * feature_dim, 128), 2 * feature_dim),
        "rh_b1": jnp.zeros((1, 128), jnp.float32),
        "rh_w2": dense(ks[5], (128, 64), 128),
        "rh_b2": jnp.zeros((1, 64), jnp.float32),
        "rh_w3": dense(ks[6], (64, 1), 64),
        "rh_b3": jnp.zeros((1, 1), jnp.float32),
    }
    p["bn1_scale"], p["bn1_shift"] = bn(32)
    p["bn2_scale"], p["bn2_shift"] = bn(64)
    p["bn3_scale"], p["bn3_shift"] = bn(128)
    return p


def _banded_conv_weight(k, width, dtype=jnp.bfloat16):
    """(KH, KW, Cin, Cout) 'same' conv kernel -> (KH, width*Cin, width*Cout)
    banded matrices.  The width zero-padding is folded in (out-of-range taps
    dropped) and output columns are ordered (ow % 2, ow // 2, cout) so the 2x
    max-pool over W is a max of the two contiguous column halves."""
    k = np.asarray(k, np.float32)
    kh, kw, cin, cout = k.shape
    padw = (kw - 1) // 2
    half = (width // 2) * cout
    out = np.zeros((kh, width * cin, width * cout), np.float32)
    for dy in range(kh):
        for dx in range(kw):
            for ow in range(width):
                iw = ow + dx - padw
                if 0 <= iw < width:
                    col = (ow % 2) * half + (ow // 2) * cout
                    out[dy, iw * cin:(iw + 1) * cin, col:col + cout] = k[dy, dx]
    return jnp.asarray(out, dtype)


def prepare_params(p):
    """One-time conversion to the kernel layout: banded bf16 conv weights,
    biases / BatchNorm affine tiled to the (w, c)-flattened column layout,
    bf16 matmul weights for the fc / relation head (f32 accumulation)."""
    bf16 = lambda a: jnp.asarray(a, jnp.bfloat16)
    tile = lambda v, n: jnp.tile(v, (1, n))
    return {
        "w1": _banded_conv_weight(p["conv1_w"], 16), "b1": tile(p["conv1_b"], 16),
        "g1": tile(p["bn1_scale"], 8), "d1": tile(p["bn1_shift"], 8),
        "w2": _banded_conv_weight(p["conv2_w"], 8), "b2": tile(p["conv2_b"], 8),
        "g2": tile(p["bn2_scale"], 4), "d2": tile(p["bn2_shift"], 4),
        "w3": _banded_conv_weight(p["conv3_w"], 4), "b3": tile(p["conv3_b"], 4),
        "g3": tile(p["bn3_scale"], 2), "d3": tile(p["bn3_shift"], 2),
        "fcw": bf16(p["fc_w"]), "fcb": p["fc_b"],
        "rw1": bf16(p["rh_w1"]), "rb1": p["rh_b1"],
        "rw2": bf16(p["rh_w2"]), "rb2": p["rh_b2"],
        "rw3": bf16(p["rh_w3"]), "rb3": p["rh_b3"],
    }


# ----------------------------------- main ------------------------------------ #

if __name__ == "__main__":
    key = jax.random.PRNGKey(0)
    kp, k1, k2, k3, k4 = jax.random.split(key, 5)
    # PyTorch-style NCHW inputs: batch=2, 3 channels per image, 16x16 spatial.
    hand_t = jax.random.normal(k1, (2, 3, 16, 16), jnp.float32)
    hand_tm1 = jax.random.normal(k2, (2, 3, 16, 16), jnp.float32)
    ball_t = jax.random.normal(k3, (2, 3, 16, 16), jnp.float32)
    ball_tm1 = jax.random.normal(k4, (2, 3, 16, 16), jnp.float32)

    params = prepare_params(init_params(kp, feature_dim=128))

    out = release_relation_net(params, hand_t, hand_tm1, ball_t, ball_tm1)
    out = jax.block_until_ready(out)

    assert out.shape == (2, 1), out.shape
    assert bool(jnp.all((out >= 0.0) & (out <= 1.0)))
    print("KERNEL_OK")
</pallas_src>

<mosaic_0001>
module attributes {stable_mosaic.version = 11 : i64} {
  func.func @_fused_kernel(%arg0: i32, %arg1: memref<1x40x96xf32, #tpu.memory_space<vmem>>, %arg2: memref<5x96x512xbf16, #tpu.memory_space<vmem>>, %arg3: memref<1x512xf32, #tpu.memory_space<vmem>>, %arg4: memref<1x256xf32, #tpu.memory_space<vmem>>, %arg5: memref<1x256xf32, #tpu.memory_space<vmem>>, %arg6: memref<3x256x512xbf16, #tpu.memory_space<vmem>>, %arg7: memref<1x512xf32, #tpu.memory_space<vmem>>, %arg8: memref<1x256xf32, #tpu.memory_space<vmem>>, %arg9: memref<1x256xf32, #tpu.memory_space<vmem>>, %arg10: memref<3x256x512xbf16, #tpu.memory_space<vmem>>, %arg11: memref<1x512xf32, #tpu.memory_space<vmem>>, %arg12: memref<1x256xf32, #tpu.memory_space<vmem>>, %arg13: memref<1x256xf32, #tpu.memory_space<vmem>>, %arg14: memref<128x128xbf16, #tpu.memory_space<vmem>>, %arg15: memref<1x128xf32, #tpu.memory_space<vmem>>, %arg16: memref<256x128xbf16, #tpu.memory_space<vmem>>, %arg17: memref<1x128xf32, #tpu.memory_space<vmem>>, %arg18: memref<128x64xbf16, #tpu.memory_space<vmem>>, %arg19: memref<1x64xf32, #tpu.memory_space<vmem>>, %arg20: memref<64x1xbf16, #tpu.memory_space<vmem>>, %arg21: memref<1x1xf32, #tpu.memory_space<vmem>>, %arg22: memref<1x1x1xf32, #tpu.memory_space<vmem>>) attributes {dimension_semantics = [#tpu.dimension_semantics<parallel>], iteration_bounds = array<i64: 2>, scalar_prefetch = 0 : i64, scratch_operands = 0 : i64, tpu.core_type = #tpu.core_type<tc>, window_params = [{transform_indices = @transform_0, window_bounds = array<i64: 1, 40, 96>}, {pipeline_mode = #tpu.pipeline_mode<synchronous>, transform_indices = @transform_1, window_bounds = array<i64: 5, 96, 512>}, {pipeline_mode = #tpu.pipeline_mode<synchronous>, transform_indices = @transform_2, window_bounds = array<i64: 1, 512>}, {pipeline_mode = #tpu.pipeline_mode<synchronous>, transform_indices = @transform_3, window_bounds = array<i64: 1, 256>}, {pipeline_mode = #tpu.pipeline_mode<synchronous>, transform_indices = @transform_4, window_bounds = array<i64: 1, 256>}, {pipeline_mode = #tpu.pipeline_mode<synchronous>, transform_indices = @transform_5, window_bounds = array<i64: 3, 256, 512>}, {pipeline_mode = #tpu.pipeline_mode<synchronous>, transform_indices = @transform_6, window_bounds = array<i64: 1, 512>}, {pipeline_mode = #tpu.pipeline_mode<synchronous>, transform_indices = @transform_7, window_bounds = array<i64: 1, 256>}, {pipeline_mode = #tpu.pipeline_mode<synchronous>, transform_indices = @transform_8, window_bounds = array<i64: 1, 256>}, {pipeline_mode = #tpu.pipeline_mode<synchronous>, transform_indices = @transform_9, window_bounds = array<i64: 3, 256, 512>}, {pipeline_mode = #tpu.pipeline_mode<synchronous>, transform_indices = @transform_10, window_bounds = array<i64: 1, 512>}, {pipeline_mode = #tpu.pipeline_mode<synchronous>, transform_indices = @transform_11, window_bounds = array<i64: 1, 256>}, {pipeline_mode = #tpu.pipeline_mode<synchronous>, transform_indices = @transform_12, window_bounds = array<i64: 1, 256>}, {pipeline_mode = #tpu.pipeline_mode<synchronous>, transform_indices = @transform_13, window_bounds = array<i64: 128, 128>}, {pipeline_mode = #tpu.pipeline_mode<synchronous>, transform_indices = @transform_14, window_bounds = array<i64: 1, 128>}, {pipeline_mode = #tpu.pipeline_mode<synchronous>, transform_indices = @transform_15, window_bounds = array<i64: 256, 128>}, {pipeline_mode = #tpu.pipeline_mode<synchronous>, transform_indices = @transform_16, window_bounds = array<i64: 1, 128>}, {pipeline_mode = #tpu.pipeline_mode<synchronous>, transform_indices = @transform_17, window_bounds = array<i64: 128, 64>}, {pipeline_mode = #tpu.pipeline_mode<synchronous>, transform_indices = @transform_18, window_bounds = array<i64: 1, 64>}, {pipeline_mode = #tpu.pipeline_mode<synchronous>, transform_indices = @transform_19, window_bounds = array<i64: 64, 1>}, {pipeline_mode = #tpu.pipeline_mode<synchronous>, transform_indices = @transform_20, window_bounds = array<i64: 1, 1>}, {transform_indices = @transform_21, window_bounds = array<i64: 1, 1, 1>}]} {
    %c0 = arith.constant 0 : index
    %c0_0 = arith.constant 0 : index
    %c0_1 = arith.constant 0 : index
    %0 = vector.load %arg1[%c0, %c0_0, %c0_1] : memref<1x40x96xf32, #tpu.memory_space<vmem>>, vector<1x40x96xf32>
    %1 = vector.shape_cast %0 : vector<1x40x96xf32> to vector<40x96xf32>
    %2 = arith.truncf %1 : vector<40x96xf32> to vector<40x96xbf16>
    %c0_2 = arith.constant 0 : index
    %c0_3 = arith.constant 0 : index
    %c0_4 = arith.constant 0 : index
    %3 = vector.load %arg2[%c0_2, %c0_3, %c0_4] : memref<5x96x512xbf16, #tpu.memory_space<vmem>>, vector<1x96x512xbf16>
    %4 = vector.shape_cast %3 : vector<1x96x512xbf16> to vector<96x512xbf16>
    %cst = arith.constant dense<0.000000e+00> : vector<40x512xf32>
    %5 = tpu.matmul %2, %4, %cst {dimension_numbers = #tpu.dot_dimension_numbers<[1], [0], [0], [1], [0, 0, 1, 1], [], []>} : vector<40x96xbf16>, vector<96x512xbf16>, vector<40x512xf32> -> vector<40x512xf32>
    %6 = vector.extract_strided_slice %1 {offsets = [1, 0], sizes = [39, 96], strides = [1, 1]} : vector<40x96xf32> to vector<39x96xf32>
    %7 = vector.extract_strided_slice %1 {offsets = [0, 0], sizes = [1, 96], strides = [1, 1]} : vector<40x96xf32> to vector<1x96xf32>
    %8 = tpu.concatenate %6, %7 in 0 : vector<39x96xf32>, vector<1x96xf32> -> vector<40x96xf32>
    %9 = arith.truncf %8 : vector<40x96xf32> to vector<40x96xbf16>
    %c1 = arith.constant 1 : index
    %c0_5 = arith.constant 0 : index
    %c0_6 = arith.constant 0 : index
    %10 = vector.load %arg2[%c1, %c0_5, %c0_6] : memref<5x96x512xbf16, #tpu.memory_space<vmem>>, vector<1x96x512xbf16>
    %11 = vector.shape_cast %10 : vector<1x96x512xbf16> to vector<96x512xbf16>
    %cst_7 = arith.constant dense<0.000000e+00> : vector<40x512xf32>
    %12 = tpu.matmul %9, %11, %cst_7 {dimension_numbers = #tpu.dot_dimension_numbers<[1], [0], [0], [1], [0, 0, 1, 1], [], []>} : vector<40x96xbf16>, vector<96x512xbf16>, vector<40x512xf32> -> vector<40x512xf32>
    %13 = arith.addf %5, %12 : vector<40x512xf32>
    %14 = vector.extract_strided_slice %1 {offsets = [2, 0], sizes = [38, 96], strides = [1, 1]} : vector<40x96xf32> to vector<38x96xf32>
    %15 = vector.extract_strided_slice %1 {offsets = [0, 0], sizes = [2, 96], strides = [1, 1]} : vector<40x96xf32> to vector<2x96xf32>
    %16 = tpu.concatenate %14, %15 in 0 : vector<38x96xf32>, vector<2x96xf32> -> vector<40x96xf32>
    %17 = arith.truncf %16 : vector<40x96xf32> to vector<40x96xbf16>
    %c2 = arith.constant 2 : index
    %c0_8 = arith.constant 0 : index
    %c0_9 = arith.constant 0 : index
    %18 = vector.load %arg2[%c2, %c0_8, %c0_9] : memref<5x96x512xbf16, #tpu.memory_space<vmem>>, vector<1x96x512xbf16>
    %19 = vector.shape_cast %18 : vector<1x96x512xbf16> to vector<96x512xbf16>
    %cst_10 = arith.constant dense<0.000000e+00> : vector<40x512xf32>
    %20 = tpu.matmul %17, %19, %cst_10 {dimension_numbers = #tpu.dot_dimension_numbers<[1], [0], [0], [1], [0, 0, 1, 1], [], []>} : vector<40x96xbf16>, vector<96x512xbf16>, vector<40x512xf32> -> vector<40x512xf32>
    %21 = arith.addf %13, %20 : vector<40x512xf32>
    %22 = vector.extract_strided_slice %1 {offsets = [3, 0], sizes = [37, 96], strides = [1, 1]} : vector<40x96xf32> to vector<37x96xf32>
    %23 = vector.extract_strided_slice %1 {offsets = [0, 0], sizes = [3, 96], strides = [1, 1]} : vector<40x96xf32> to vector<3x96xf32>
    %24 = tpu.concatenate %22, %23 in 0 : vector<37x96xf32>, vector<3x96xf32> -> vector<40x96xf32>
    %25 = arith.truncf %24 : vector<40x96xf32> to vector<40x96xbf16>
    %c3 = arith.constant 3 : index
    %c0_11 = arith.constant 0 : index
    %c0_12 = arith.constant 0 : index
    %26 = vector.load %arg2[%c3, %c0_11, %c0_12] : memref<5x96x512xbf16, #tpu.memory_space<vmem>>, vector<1x96x512xbf16>
    %27 = vector.shape_cast %26 : vector<1x96x512xbf16> to vector<96x512xbf16>
    %cst_13 = arith.constant dense<0.000000e+00> : vector<40x512xf32>
    %28 = tpu.matmul %25, %27, %cst_13 {dimension_numbers = #tpu.dot_dimension_numbers<[1], [0], [0], [1], [0, 0, 1, 1], [], []>} : vector<40x96xbf16>, vector<96x512xbf16>, vector<40x512xf32> -> vector<40x512xf32>
    %29 = arith.addf %21, %28 : vector<40x512xf32>
    %30 = vector.extract_strided_slice %1 {offsets = [4, 0], sizes = [36, 96], strides = [1, 1]} : vector<40x96xf32> to vector<36x96xf32>
    %31 = vector.extract_strided_slice %1 {offsets = [0, 0], sizes = [4, 96], strides = [1, 1]} : vector<40x96xf32> to vector<4x96xf32>
    %32 = tpu.concatenate %30, %31 in 0 : vector<36x96xf32>, vector<4x96xf32> -> vector<40x96xf32>
    %33 = arith.truncf %32 : vector<40x96xf32> to vector<40x96xbf16>
    %c4 = arith.constant 4 : index
    %c0_14 = arith.constant 0 : index
    %c0_15 = arith.constant 0 : index
    %34 = vector.load %arg2[%c4, %c0_14, %c0_15] : memref<5x96x512xbf16, #tpu.memory_space<vmem>>, vector<1x96x512xbf16>
    %35 = vector.shape_cast %34 : vector<1x96x512xbf16> to vector<96x512xbf16>
    %cst_16 = arith.constant dense<0.000000e+00> : vector<40x512xf32>
    %36 = tpu.matmul %33, %35, %cst_16 {dimension_numbers = #tpu.dot_dimension_numbers<[1], [0], [0], [1], [0, 0, 1, 1], [], []>} : vector<40x96xbf16>, vector<96x512xbf16>, vector<40x512xf32> -> vector<40x512xf32>
    %37 = arith.addf %29, %36 : vector<40x512xf32>
    %c0_17 = arith.constant 0 : index
    %c0_18 = arith.constant 0 : index
    %38 = vector.load %arg3[%c0_17, %c0_18] : memref<1x512xf32, #tpu.memory_space<vmem>>, vector<1x512xf32>
    %39 = vector.broadcast %38 : vector<1x512xf32> to vector<40x512xf32>
    %40 = arith.addf %37, %39 : vector<40x512xf32>
    %cst_19 = arith.constant 0.000000e+00 : f32
    %41 = vector.broadcast %cst_19 : f32 to vector<40x512xf32>
    %42 = arith.maximumf %40, %41 : vector<40x512xf32>
    %43 = vector.extract_strided_slice %42 {offsets = [0, 0], sizes = [40, 256], strides = [1, 1]} : vector<40x512xf32> to vector<40x256xf32>
    %44 = vector.extract_strided_slice %42 {offsets = [0, 256], sizes = [40, 256], strides = [1, 1]} : vector<40x512xf32> to vector<40x256xf32>
    %45 = arith.maximumf %43, %44 : vector<40x256xf32>
    %46 = vector.shape_cast %45 : vector<40x256xf32> to vector<20x2x256xf32>
    %cst_20 = arith.constant dense<0xFF800000> : vector<20x256xf32>
    %47 = vector.multi_reduction <maximumf>, %46, %cst_20 [1] : vector<20x2x256xf32> to vector<20x256xf32>
    %c0_21 = arith.constant 0 : index
    %c0_22 = arith.constant 0 : index
    %48 = vector.load %arg4[%c0_21, %c0_22] : memref<1x256xf32, #tpu.memory_space<vmem>>, vector<1x256xf32>
    %49 = vector.broadcast %48 : vector<1x256xf32> to vector<20x256xf32>
    %50 = arith.mulf %47, %49 : vector<20x256xf32>
    %c0_23 = arith.constant 0 : index
    %c0_24 = arith.constant 0 : index
    %51 = vector.load %arg5[%c0_23, %c0_24] : memref<1x256xf32, #tpu.memory_space<vmem>>, vector<1x256xf32>
    %52 = vector.broadcast %51 : vector<1x256xf32> to vector<20x256xf32>
    %53 = arith.addf %50, %52 : vector<20x256xf32>
    %54 = tpu.iota {dimensions = array<i32: 0>} : vector<20x1xi32>
    %c10_i32 = arith.constant 10 : i32
    %c0_i32 = arith.constant 0 : i32
    %55 = arith.cmpi eq, %c10_i32, %c0_i32 : i32
    %c1_i32 = arith.constant 1 : i32
    %56 = arith.select %55, %c1_i32, %c10_i32 : i32
    %57 = vector.broadcast %56 : i32 to vector<20x1xi32>
    %58 = arith.remsi %54, %57 : vector<20x1xi32>
    %c0_i32_25 = arith.constant 0 : i32
    %59 = vector.broadcast %c0_i32_25 : i32 to vector<20x1xi32>
    %60 = arith.cmpi ne, %58, %59 : vector<20x1xi32>
    %c0_i32_26 = arith.constant 0 : i32
    %61 = vector.broadcast %c0_i32_26 : i32 to vector<20x1xi32>
    %62 = arith.cmpi slt, %58, %61 : vector<20x1xi32>
    %c0_i32_27 = arith.constant 0 : i32
    %63 = arith.cmpi slt, %56, %c0_i32_27 : i32
    %64 = vector.broadcast %63 : i1 to vector<20x1xi1>
    %65 = vector.broadcast %64 : vector<20x1xi1> to vector<20x1xi1>
    %66 = arith.xori %62, %65 : vector<20x1xi1>
    %67 = arith.andi %66, %60 : vector<20x1xi1>
    %68 = vector.broadcast %56 : i32 to vector<20x1xi32>
    %69 = arith.addi %58, %68 : vector<20x1xi32>
    %70 = arith.select %67, %69, %58 : vector<20x1xi1>, vector<20x1xi32>
    %c8_i32 = arith.constant 8 : i32
    %71 = vector.broadcast %c8_i32 : i32 to vector<20x1xi32>
    %72 = arith.cmpi slt, %70, %71 : vector<20x1xi32>
    %cst_28 = arith.constant 0.000000e+00 : f32
    %73 = vector.shape_cast %72 : vector<20x1xi1> to vector<20x1xi1>
    %74 = vector.broadcast %73 : vector<20x1xi1> to vector<20x256xi1>
    %75 = vector.broadcast %cst_28 : f32 to vector<20x256xf32>
    %76 = arith.select %74, %53, %75 : vector<20x256xi1>, vector<20x256xf32>
    %77 = vector.extract_strided_slice %76 {offsets = [19, 0], sizes = [1, 256], strides = [1, 1]} : vector<20x256xf32> to vector<1x256xf32>
    %78 = vector.extract_strided_slice %76 {offsets = [0, 0], sizes = [19, 256], strides = [1, 1]} : vector<20x256xf32> to vector<19x256xf32>
    %79 = tpu.concatenate %77, %78 in 0 : vector<1x256xf32>, vector<19x256xf32> -> vector<20x256xf32>
    %80 = arith.truncf %79 : vector<20x256xf32> to vector<20x256xbf16>
    %c0_29 = arith.constant 0 : index
    %c0_30 = arith.constant 0 : index
    %c0_31 = arith.constant 0 : index
    %81 = vector.load %arg6[%c0_29, %c0_30, %c0_31] : memref<3x256x512xbf16, #tpu.memory_space<vmem>>, vector<1x256x512xbf16>
    %82 = vector.shape_cast %81 : vector<1x256x512xbf16> to vector<256x512xbf16>
    %cst_32 = arith.constant dense<0.000000e+00> : vector<20x512xf32>
    %83 = tpu.matmul %80, %82, %cst_32 {dimension_numbers = #tpu.dot_dimension_numbers<[1], [0], [0], [1], [0, 0, 1, 1], [], []>} : vector<20x256xbf16>, vector<256x512xbf16>, vector<20x512xf32> -> vector<20x512xf32>
    %84 = arith.truncf %76 : vector<20x256xf32> to vector<20x256xbf16>
    %c1_33 = arith.constant 1 : index
    %c0_34 = arith.constant 0 : index
    %c0_35 = arith.constant 0 : index
    %85 = vector.load %arg6[%c1_33, %c0_34, %c0_35] : memref<3x256x512xbf16, #tpu.memory_space<vmem>>, vector<1x256x512xbf16>
    %86 = vector.shape_cast %85 : vector<1x256x512xbf16> to vector<256x512xbf16>
    %cst_36 = arith.constant dense<0.000000e+00> : vector<20x512xf32>
    %87 = tpu.matmul %84, %86, %cst_36 {dimension_numbers = #tpu.dot_dimension_numbers<[1], [0], [0], [1], [0, 0, 1, 1], [], []>} : vector<20x256xbf16>, vector<256x512xbf16>, vector<20x512xf32> -> vector<20x512xf32>
    %88 = arith.addf %83, %87 : vector<20x512xf32>
    %89 = vector.extract_strided_slice %76 {offsets = [1, 0], sizes = [19, 256], strides = [1, 1]} : vector<20x256xf32> to vector<19x256xf32>
    %90 = vector.extract_strided_slice %76 {offsets = [0, 0], sizes = [1, 256], strides = [1, 1]} : vector<20x256xf32> to vector<1x256xf32>
    %91 = tpu.concatenate %89, %90 in 0 : vector<19x256xf32>, vector<1x256xf32> -> vector<20x256xf32>
    %92 = arith.truncf %91 : vector<20x256xf32> to vector<20x256xbf16>
    %c2_37 = arith.constant 2 : index
    %c0_38 = arith.constant 0 : index
    %c0_39 = arith.constant 0 : index
    %93 = vector.load %arg6[%c2_37, %c0_38, %c0_39] : memref<3x256x512xbf16, #tpu.memory_space<vmem>>, vector<1x256x512xbf16>
    %94 = vector.shape_cast %93 : vector<1x256x512xbf16> to vector<256x512xbf16>
    %cst_40 = arith.constant dense<0.000000e+00> : vector<20x512xf32>
    %95 = tpu.matmul %92, %94, %cst_40 {dimension_numbers = #tpu.dot_dimension_numbers<[1], [0], [0], [1], [0, 0, 1, 1], [], []>} : vector<20x256xbf16>, vector<256x512xbf16>, vector<20x512xf32> -> vector<20x512xf32>
    %96 = arith.addf %88, %95 : vector<20x512xf32>
    %c0_41 = arith.constant 0 : index
    %c0_42 = arith.constant 0 : index
    %97 = vector.load %arg7[%c0_41, %c0_42] : memref<1x512xf32, #tpu.memory_space<vmem>>, vector<1x512xf32>
    %98 = vector.broadcast %97 : vector<1x512xf32> to vector<20x512xf32>
    %99 = arith.addf %96, %98 : vector<20x512xf32>
    %cst_43 = arith.constant 0.000000e+00 : f32
    %100 = vector.broadcast %cst_43 : f32 to vector<20x512xf32>
    %101 = arith.maximumf %99, %100 : vector<20x512xf32>
    %102 = vector.extract_strided_slice %101 {offsets = [0, 0], sizes = [20, 256], strides = [1, 1]} : vector<20x512xf32> to vector<20x256xf32>
    %103 = vector.extract_strided_slice %101 {offsets = [0, 256], sizes = [20, 256], strides = [1, 1]} : vector<20x512xf32> to vector<20x256xf32>
    %104 = arith.maximumf %102, %103 : vector<20x256xf32>
    %105 = vector.shape_cast %104 : vector<20x256xf32> to vector<10x2x256xf32>
    %cst_44 = arith.constant dense<0xFF800000> : vector<10x256xf32>
    %106 = vector.multi_reduction <maximumf>, %105, %cst_44 [1] : vector<10x2x256xf32> to vector<10x256xf32>
    %c0_45 = arith.constant 0 : index
    %c0_46 = arith.constant 0 : index
    %107 = vector.load %arg8[%c0_45, %c0_46] : memref<1x256xf32, #tpu.memory_space<vmem>>, vector<1x256xf32>
    %108 = vector.broadcast %107 : vector<1x256xf32> to vector<10x256xf32>
    %109 = arith.mulf %106, %108 : vector<10x256xf32>
    %c0_47 = arith.constant 0 : index
    %c0_48 = arith.constant 0 : index
    %110 = vector.load %arg9[%c0_47, %c0_48] : memref<1x256xf32, #tpu.memory_space<vmem>>, vector<1x256xf32>
    %111 = vector.broadcast %110 : vector<1x256xf32> to vector<10x256xf32>
    %112 = arith.addf %109, %111 : vector<10x256xf32>
    %113 = tpu.iota {dimensions = array<i32: 0>} : vector<10x1xi32>
    %c5_i32 = arith.constant 5 : i32
    %c0_i32_49 = arith.constant 0 : i32
    %114 = arith.cmpi eq, %c5_i32, %c0_i32_49 : i32
    %c1_i32_50 = arith.constant 1 : i32
    %115 = arith.select %114, %c1_i32_50, %c5_i32 : i32
    %116 = vector.broadcast %115 : i32 to vector<10x1xi32>
    %117 = arith.remsi %113, %116 : vector<10x1xi32>
    %c0_i32_51 = arith.constant 0 : i32
    %118 = vector.broadcast %c0_i32_51 : i32 to vector<10x1xi32>
    %119 = arith.cmpi ne, %117, %118 : vector<10x1xi32>
    %c0_i32_52 = arith.constant 0 : i32
    %120 = vector.broadcast %c0_i32_52 : i32 to vector<10x1xi32>
    %121 = arith.cmpi slt, %117, %120 : vector<10x1xi32>
    %c0_i32_53 = arith.constant 0 : i32
    %122 = arith.cmpi slt, %115, %c0_i32_53 : i32
    %123 = vector.broadcast %122 : i1 to vector<10x1xi1>
    %124 = vector.broadcast %123 : vector<10x1xi1> to vector<10x1xi1>
    %125 = arith.xori %121, %124 : vector<10x1xi1>
    %126 = arith.andi %125, %119 : vector<10x1xi1>
    %127 = vector.broadcast %115 : i32 to vector<10x1xi32>
    %128 = arith.addi %117, %127 : vector<10x1xi32>
    %129 = arith.select %126, %128, %117 : vector<10x1xi1>, vector<10x1xi32>
    %c4_i32 = arith.constant 4 : i32
    %130 = vector.broadcast %c4_i32 : i32 to vector<10x1xi32>
    %131 = arith.cmpi slt, %129, %130 : vector<10x1xi32>
    %cst_54 = arith.constant 0.000000e+00 : f32
    %132 = vector.shape_cast %131 : vector<10x1xi1> to vector<10x1xi1>
    %133 = vector.broadcast %132 : vector<10x1xi1> to vector<10x256xi1>
    %134 = vector.broadcast %cst_54 : f32 to vector<10x256xf32>
    %135 = arith.select %133, %112, %134 : vector<10x256xi1>, vector<10x256xf32>
    %136 = vector.extract_strided_slice %135 {offsets = [9, 0], sizes = [1, 256], strides = [1, 1]} : vector<10x256xf32> to vector<1x256xf32>
    %137 = vector.extract_strided_slice %135 {offsets = [0, 0], sizes = [9, 256], strides = [1, 1]} : vector<10x256xf32> to vector<9x256xf32>
    %138 = tpu.concatenate %136, %137 in 0 : vector<1x256xf32>, vector<9x256xf32> -> vector<10x256xf32>
    %139 = arith.truncf %138 : vector<10x256xf32> to vector<10x256xbf16>
    %c0_55 = arith.constant 0 : index
    %c0_56 = arith.constant 0 : index
    %c0_57 = arith.constant 0 : index
    %140 = vector.load %arg10[%c0_55, %c0_56, %c0_57] : memref<3x256x512xbf16, #tpu.memory_space<vmem>>, vector<1x256x512xbf16>
    %141 = vector.shape_cast %140 : vector<1x256x512xbf16> to vector<256x512xbf16>
    %cst_58 = arith.constant dense<0.000000e+00> : vector<10x512xf32>
    %142 = tpu.matmul %139, %141, %cst_58 {dimension_numbers = #tpu.dot_dimension_numbers<[1], [0], [0], [1], [0, 0, 1, 1], [], []>} : vector<10x256xbf16>, vector<256x512xbf16>, vector<10x512xf32> -> vector<10x512xf32>
    %143 = arith.truncf %135 : vector<10x256xf32> to vector<10x256xbf16>
    %c1_59 = arith.constant 1 : index
    %c0_60 = arith.constant 0 : index
    %c0_61 = arith.constant 0 : index
    %144 = vector.load %arg10[%c1_59, %c0_60, %c0_61] : memref<3x256x512xbf16, #tpu.memory_space<vmem>>, vector<1x256x512xbf16>
    %145 = vector.shape_cast %144 : vector<1x256x512xbf16> to vector<256x512xbf16>
    %cst_62 = arith.constant dense<0.000000e+00> : vector<10x512xf32>
    %146 = tpu.matmul %143, %145, %cst_62 {dimension_numbers = #tpu.dot_dimension_numbers<[1], [0], [0], [1], [0, 0, 1, 1], [], []>} : vector<10x256xbf16>, vector<256x512xbf16>, vector<10x512xf32> -> vector<10x512xf32>
    %147 = arith.addf %142, %146 : vector<10x512xf32>
    %148 = vector.extract_strided_slice %135 {offsets = [1, 0], sizes = [9, 256], strides = [1, 1]} : vector<10x256xf32> to vector<9x256xf32>
    %149 = vector.extract_strided_slice %135 {offsets = [0, 0], sizes = [1, 256], strides = [1, 1]} : vector<10x256xf32> to vector<1x256xf32>
    %150 = tpu.concatenate %148, %149 in 0 : vector<9x256xf32>, vector<1x256xf32> -> vector<10x256xf32>
    %151 = arith.truncf %150 : vector<10x256xf32> to vector<10x256xbf16>
    %c2_63 = arith.constant 2 : index
    %c0_64 = arith.constant 0 : index
    %c0_65 = arith.constant 0 : index
    %152 = vector.load %arg10[%c2_63, %c0_64, %c0_65] : memref<3x256x512xbf16, #tpu.memory_space<vmem>>, vector<1x256x512xbf16>
    %153 = vector.shape_cast %152 : vector<1x256x512xbf16> to vector<256x512xbf16>
    %cst_66 = arith.constant dense<0.000000e+00> : vector<10x512xf32>
    %154 = tpu.matmul %151, %153, %cst_66 {dimension_numbers = #tpu.dot_dimension_numbers<[1], [0], [0], [1], [0, 0, 1, 1], [], []>} : vector<10x256xbf16>, vector<256x512xbf16>, vector<10x512xf32> -> vector<10x512xf32>
    %155 = arith.addf %147, %154 : vector<10x512xf32>
    %c0_67 = arith.constant 0 : index
    %c0_68 = arith.constant 0 : index
    %156 = vector.load %arg11[%c0_67, %c0_68] : memref<1x512xf32, #tpu.memory_space<vmem>>, vector<1x512xf32>
    %157 = vector.broadcast %156 : vector<1x512xf32> to vector<10x512xf32>
    %158 = arith.addf %155, %157 : vector<10x512xf32>
    %cst_69 = arith.constant 0.000000e+00 : f32
    %159 = vector.broadcast %cst_69 : f32 to vector<10x512xf32>
    %160 = arith.maximumf %158, %159 : vector<10x512xf32>
    %161 = vector.extract_strided_slice %160 {offsets = [0, 0], sizes = [10, 256], strides = [1, 1]} : vector<10x512xf32> to vector<10x256xf32>
    %162 = vector.extract_strided_slice %160 {offsets = [0, 256], sizes = [10, 256], strides = [1, 1]} : vector<10x512xf32> to vector<10x256xf32>
    %163 = arith.maximumf %161, %162 : vector<10x256xf32>
    %164 = vector.extract_strided_slice %163 {offsets = [1, 0], sizes = [9, 256], strides = [1, 1]} : vector<10x256xf32> to vector<9x256xf32>
    %165 = vector.extract_strided_slice %163 {offsets = [0, 0], sizes = [1, 256], strides = [1, 1]} : vector<10x256xf32> to vector<1x256xf32>
    %166 = tpu.concatenate %164, %165 in 0 : vector<9x256xf32>, vector<1x256xf32> -> vector<10x256xf32>
    %167 = arith.maximumf %163, %166 : vector<10x256xf32>
    %c0_70 = arith.constant 0 : index
    %c0_71 = arith.constant 0 : index
    %168 = vector.load %arg12[%c0_70, %c0_71] : memref<1x256xf32, #tpu.memory_space<vmem>>, vector<1x256xf32>
    %169 = vector.broadcast %168 : vector<1x256xf32> to vector<10x256xf32>
    %170 = arith.mulf %167, %169 : vector<10x256xf32>
    %c0_72 = arith.constant 0 : index
    %c0_73 = arith.constant 0 : index
    %171 = vector.load %arg13[%c0_72, %c0_73] : memref<1x256xf32, #tpu.memory_space<vmem>>, vector<1x256xf32>
    %172 = vector.broadcast %171 : vector<1x256xf32> to vector<10x256xf32>
    %173 = arith.addf %170, %172 : vector<10x256xf32>
    %174 = vector.extract_strided_slice %173 {offsets = [0, 0], sizes = [10, 128], strides = [1, 1]} : vector<10x256xf32> to vector<10x128xf32>
    %175 = vector.extract_strided_slice %173 {offsets = [0, 128], sizes = [10, 128], strides = [1, 1]} : vector<10x256xf32> to vector<10x128xf32>
    %176 = arith.addf %174, %175 : vector<10x128xf32>
    %177 = vector.extract_strided_slice %176 {offsets = [2, 0], sizes = [8, 128], strides = [1, 1]} : vector<10x128xf32> to vector<8x128xf32>
    %178 = vector.extract_strided_slice %176 {offsets = [0, 0], sizes = [2, 128], strides = [1, 1]} : vector<10x128xf32> to vector<2x128xf32>
    %179 = tpu.concatenate %177, %178 in 0 : vector<8x128xf32>, vector<2x128xf32> -> vector<10x128xf32>
    %180 = arith.addf %176, %179 : vector<10x128xf32>
    %181 = vector.extract_strided_slice %180 {offsets = [0, 0], sizes = [1, 128], strides = [1, 1]} : vector<10x128xf32> to vector<1x128xf32>
    %182 = vector.extract_strided_slice %180 {offsets = [5, 0], sizes = [1, 128], strides = [1, 1]} : vector<10x128xf32> to vector<1x128xf32>
    %183 = tpu.concatenate %181, %182 in 0 : vector<1x128xf32>, vector<1x128xf32> -> vector<2x128xf32>
    %cst_74 = arith.constant 2.500000e-01 : f32
    %184 = vector.broadcast %cst_74 : f32 to vector<2x128xf32>
    %185 = arith.mulf %184, %183 : vector<2x128xf32>
    %186 = arith.truncf %185 : vector<2x128xf32> to vector<2x128xbf16>
    %c0_75 = arith.constant 0 : index
    %c0_76 = arith.constant 0 : index
    %187 = vector.load %arg14[%c0_75, %c0_76] : memref<128x128xbf16, #tpu.memory_space<vmem>>, vector<128x128xbf16>
    %cst_77 = arith.constant dense<0.000000e+00> : vector<2x128xf32>
    %188 = tpu.matmul %186, %187, %cst_77 {dimension_numbers = #tpu.dot_dimension_numbers<[1], [0], [0], [1], [0, 0, 1, 1], [], []>} : vector<2x128xbf16>, vector<128x128xbf16>, vector<2x128xf32> -> vector<2x128xf32>
    %c0_78 = arith.constant 0 : index
    %c0_79 = arith.constant 0 : index
    %189 = vector.load %arg15[%c0_78, %c0_79] : memref<1x128xf32, #tpu.memory_space<vmem>>, vector<1x128xf32>
    %190 = vector.broadcast %189 : vector<1x128xf32> to vector<2x128xf32>
    %191 = arith.addf %188, %190 : vector<2x128xf32>
    %c0_80 = arith.constant 0 : index
    %c0_81 = arith.constant 0 : index
    %192 = vector.load %arg16[%c0_80, %c0_81] : memref<256x128xbf16, #tpu.memory_space<vmem>>, vector<256x128xbf16>
    %193 = vector.extract_strided_slice %191 {offsets = [0, 0], sizes = [1, 128], strides = [1, 1]} : vector<2x128xf32> to vector<1x128xf32>
    %194 = arith.truncf %193 : vector<1x128xf32> to vector<1x128xbf16>
    %195 = vector.extract_strided_slice %192 {offsets = [0, 0], sizes = [128, 128], strides = [1, 1]} : vector<256x128xbf16> to vector<128x128xbf16>
    %cst_82 = arith.constant dense<0.000000e+00> : vector<1x128xf32>
    %196 = tpu.matmul %194, %195, %cst_82 {dimension_numbers = #tpu.dot_dimension_numbers<[1], [0], [0], [1], [0, 0, 1, 1], [], []>} : vector<1x128xbf16>, vector<128x128xbf16>, vector<1x128xf32> -> vector<1x128xf32>
    %197 = vector.extract_strided_slice %191 {offsets = [1, 0], sizes = [1, 128], strides = [1, 1]} : vector<2x128xf32> to vector<1x128xf32>
    %198 = arith.truncf %197 : vector<1x128xf32> to vector<1x128xbf16>
    %199 = vector.extract_strided_slice %192 {offsets = [128, 0], sizes = [128, 128], strides = [1, 1]} : vector<256x128xbf16> to vector<128x128xbf16>
    %cst_83 = arith.constant dense<0.000000e+00> : vector<1x128xf32>
    %200 = tpu.matmul %198, %199, %cst_83 {dimension_numbers = #tpu.dot_dimension_numbers<[1], [0], [0], [1], [0, 0, 1, 1], [], []>} : vector<1x128xbf16>, vector<128x128xbf16>, vector<1x128xf32> -> vector<1x128xf32>
    %201 = arith.addf %196, %200 : vector<1x128xf32>
    %c0_84 = arith.constant 0 : index
    %c0_85 = arith.constant 0 : index
    %202 = vector.load %arg17[%c0_84, %c0_85] : memref<1x128xf32, #tpu.memory_space<vmem>>, vector<1x128xf32>
    %203 = arith.addf %201, %202 : vector<1x128xf32>
    %cst_86 = arith.constant 0.000000e+00 : f32
    %204 = vector.broadcast %cst_86 : f32 to vector<1x128xf32>
    %205 = arith.maximumf %203, %204 : vector<1x128xf32>
    %206 = arith.truncf %205 : vector<1x128xf32> to vector<1x128xbf16>
    %c0_87 = arith.constant 0 : index
    %c0_88 = arith.constant 0 : index
    %207 = vector.load %arg18[%c0_87, %c0_88] : memref<128x64xbf16, #tpu.memory_space<vmem>>, vector<128x64xbf16>
    %cst_89 = arith.constant dense<0.000000e+00> : vector<1x64xf32>
    %208 = tpu.matmul %206, %207, %cst_89 {dimension_numbers = #tpu.dot_dimension_numbers<[1], [0], [0], [1], [0, 0, 1, 1], [], []>} : vector<1x128xbf16>, vector<128x64xbf16>, vector<1x64xf32> -> vector<1x64xf32>
    %c0_90 = arith.constant 0 : index
    %c0_91 = arith.constant 0 : index
    %209 = vector.load %arg19[%c0_90, %c0_91] : memref<1x64xf32, #tpu.memory_space<vmem>>, vector<1x64xf32>
    %210 = arith.addf %208, %209 : vector<1x64xf32>
    %cst_92 = arith.constant 0.000000e+00 : f32
    %211 = vector.broadcast %cst_92 : f32 to vector<1x64xf32>
    %212 = arith.maximumf %210, %211 : vector<1x64xf32>
    %213 = arith.truncf %212 : vector<1x64xf32> to vector<1x64xbf16>
    %c0_93 = arith.constant 0 : index
    %c0_94 = arith.constant 0 : index
    %214 = vector.load %arg20[%c0_93, %c0_94] : memref<64x1xbf16, #tpu.memory_space<vmem>>, vector<64x1xbf16>
    %cst_95 = arith.constant dense<0.000000e+00> : vector<1x1xf32>
    %215 = tpu.matmul %213, %214, %cst_95 {dimension_numbers = #tpu.dot_dimension_numbers<[1], [0], [0], [1], [0, 0, 1, 1], [], []>} : vector<1x64xbf16>, vector<64x1xbf16>, vector<1x1xf32> -> vector<1x1xf32>
    %c0_96 = arith.constant 0 : index
    %c0_97 = arith.constant 0 : index
    %216 = vector.load %arg21[%c0_96, %c0_97] : memref<1x1xf32, #tpu.memory_space<vmem>>, vector<1x1xf32>
    %217 = arith.addf %215, %216 : vector<1x1xf32>
    %218 = arith.negf %217 : vector<1x1xf32>
    %219 = math.exp %218 : vector<1x1xf32>
    %cst_98 = arith.constant 1.000000e+00 : f32
    %220 = vector.broadcast %cst_98 : f32 to vector<1x1xf32>
    %221 = arith.addf %220, %219 : vector<1x1xf32>
    %222 = arith.divf %220, %221 : vector<1x1xf32>
    %c0_99 = arith.constant 0 : index
    %c0_100 = arith.constant 0 : index
    %c0_101 = arith.constant 0 : index
    %223 = vector.load %arg22[%c0_99, %c0_100, %c0_101] : memref<1x1x1xf32, #tpu.memory_space<vmem>>, vector<1x1x1xf32>
    %224 = vector.shape_cast %223 : vector<1x1x1xf32> to vector<1x1xf32>
    %225 = vector.shape_cast %222 : vector<1x1xf32> to vector<1x1x1xf32>
    tpu.vector_store %arg22[%c0_99, %c0_100, %c0_101], %225 {strides = array<i32>} : memref<1x1x1xf32, #tpu.memory_space<vmem>>, vector<1x1x1xf32>,
    return
  }
  func.func @transform_0(%arg0: i32) -> (i32, i32, i32) {
    %c0_i32 = arith.constant 0 : i32
    %c0_i32_0 = arith.constant 0 : i32
    %c0_i32_1 = arith.constant 0 : i32
    return %arg0, %c0_i32, %c0_i32_0 : i32, i32, i32
  }
  func.func @transform_1(%arg0: i32) -> (i32, i32, i32) {
    %c0_i32 = arith.constant 0 : i32
    %c0_i32_0 = arith.constant 0 : i32
    %c0_i32_1 = arith.constant 0 : i32
    %c0_i32_2 = arith.constant 0 : i32
    return %c0_i32, %c0_i32_0, %c0_i32_1 : i32, i32, i32
  }
  func.func @transform_2(%arg0: i32) -> (i32, i32) {
    %c0_i32 = arith.constant 0 : i32
    %c0_i32_0 = arith.constant 0 : i32
    %c0_i32_1 = arith.constant 0 : i32
    return %c0_i32, %c0_i32_0 : i32, i32
  }
  func.func @transform_3(%arg0: i32) -> (i32, i32) {
    %c0_i32 = arith.constant 0 : i32
    %c0_i32_0 = arith.constant 0 : i32
    %c0_i32_1 = arith.constant 0 : i32
    return %c0_i32, %c0_i32_0 : i32, i32
  }
  func.func @transform_4(%arg0: i32) -> (i32, i32) {
    %c0_i32 = arith.constant 0 : i32
    %c0_i32_0 = arith.constant 0 : i32
    %c0_i32_1 = arith.constant 0 : i32
    return %c0_i32, %c0_i32_0 : i32, i32
  }
  func.func @transform_5(%arg0: i32) -> (i32, i32, i32) {
    %c0_i32 = arith.constant 0 : i32
    %c0_i32_0 = arith.constant 0 : i32
    %c0_i32_1 = arith.constant 0 : i32
    %c0_i32_2 = arith.constant 0 : i32
    return %c0_i32, %c0_i32_0, %c0_i32_1 : i32, i32, i32
  }
  func.func @transform_6(%arg0: i32) -> (i32, i32) {
    %c0_i32 = arith.constant 0 : i32
    %c0_i32_0 = arith.constant 0 : i32
    %c0_i32_1 = arith.constant 0 : i32
    return %c0_i32, %c0_i32_0 : i32, i32
  }
  func.func @transform_7(%arg0: i32) -> (i32, i32) {
    %c0_i32 = arith.constant 0 : i32
    %c0_i32_0 = arith.constant 0 : i32
    %c0_i32_1 = arith.constant 0 : i32
    return %c0_i32, %c0_i32_0 : i32, i32
  }
  func.func @transform_8(%arg0: i32) -> (i32, i32) {
    %c0_i32 = arith.constant 0 : i32
    %c0_i32_0 = arith.constant 0 : i32
    %c0_i32_1 = arith.constant 0 : i32
    return %c0_i32, %c0_i32_0 : i32, i32
  }
  func.func @transform_9(%arg0: i32) -> (i32, i32, i32) {
    %c0_i32 = arith.constant 0 : i32
    %c0_i32_0 = arith.constant 0 : i32
    %c0_i32_1 = arith.constant 0 : i32
    %c0_i32_2 = arith.constant 0 : i32
    return %c0_i32, %c0_i32_0, %c0_i32_1 : i32, i32, i32
  }
  func.func @transform_10(%arg0: i32) -> (i32, i32) {
    %c0_i32 = arith.constant 0 : i32
    %c0_i32_0 = arith.constant 0 : i32
    %c0_i32_1 = arith.constant 0 : i32
    return %c0_i32, %c0_i32_0 : i32, i32
  }
  func.func @transform_11(%arg0: i32) -> (i32, i32) {
    %c0_i32 = arith.constant 0 : i32
    %c0_i32_0 = arith.constant 0 : i32
    %c0_i32_1 = arith.constant 0 : i32
    return %c0_i32, %c0_i32_0 : i32, i32
  }
  func.func @transform_12(%arg0: i32) -> (i32, i32) {
    %c0_i32 = arith.constant 0 : i32
    %c0_i32_0 = arith.constant 0 : i32
    %c0_i32_1 = arith.constant 0 : i32
    return %c0_i32, %c0_i32_0 : i32, i32
  }
  func.func @transform_13(%arg0: i32) -> (i32, i32) {
    %c0_i32 = arith.constant 0 : i32
    %c0_i32_0 = arith.constant 0 : i32
    %c0_i32_1 = arith.constant 0 : i32
    return %c0_i32, %c0_i32_0 : i32, i32
  }
  func.func @transform_14(%arg0: i32) -> (i32, i32) {
    %c0_i32 = arith.constant 0 : i32
    %c0_i32_0 = arith.constant 0 : i32
    %c0_i32_1 = arith.constant 0 : i32
    return %c0_i32, %c0_i32_0 : i32, i32
  }
  func.func @transform_15(%arg0: i32) -> (i32, i32) {
    %c0_i32 = arith.constant 0 : i32
    %c0_i32_0 = arith.constant 0 : i32
    %c0_i32_1 = arith.constant 0 : i32
    return %c0_i32, %c0_i32_0 : i32, i32
  }
  func.func @transform_16(%arg0: i32) -> (i32, i32) {
    %c0_i32 = arith.constant 0 : i32
    %c0_i32_0 = arith.constant 0 : i32
    %c0_i32_1 = arith.constant 0 : i32
    return %c0_i32, %c0_i32_0 : i32, i32
  }
  func.func @transform_17(%arg0: i32) -> (i32, i32) {
    %c0_i32 = arith.constant 0 : i32
    %c0_i32_0 = arith.constant 0 : i32
    %c0_i32_1 = arith.constant 0 : i32
    return %c0_i32, %c0_i32_0 : i32, i32
  }
  func.func @transform_18(%arg0: i32) -> (i32, i32) {
    %c0_i32 = arith.constant 0 : i32
    %c0_i32_0 = arith.constant 0 : i32
    %c0_i32_1 = arith.constant 0 : i32
    return %c0_i32, %c0_i32_0 : i32, i32
  }
  func.func @transform_19(%arg0: i32) -> (i32, i32) {
    %c0_i32 = arith.constant 0 : i32
    %c0_i32_0 = arith.constant 0 : i32
    %c0_i32_1 = arith.constant 0 : i32
    return %c0_i32, %c0_i32_0 : i32, i32
  }
  func.func @transform_20(%arg0: i32) -> (i32, i32) {
    %c0_i32 = arith.constant 0 : i32
    %c0_i32_0 = arith.constant 0 : i32
    %c0_i32_1 = arith.constant 0 : i32
    return %c0_i32, %c0_i32_0 : i32, i32
  }
  func.func @transform_21(%arg0: i32) -> (i32, i32, i32) {
    %c0_i32 = arith.constant 0 : i32
    %c0_i32_0 = arith.constant 0 : i32
    %c0_i32_1 = arith.constant 0 : i32
    return %arg0, %c0_i32, %c0_i32_0 : i32, i32, i32
  }
}

</mosaic_0001>

<llo_original>
// kernel: release_relation_net.1
$region0: #{release_relation_net.1}
  #allocation0 [shape = 'u32[]', space=smem, size = 0x4, offset = 0x4, fixed_abs, tag = 'smem constant byte address 0x4 - core index']
  #allocation1 [shape = 'u32[72,128]{1,0:T(1,128)}', space=vmem, size = 0x9000, scoped, tag = 'internal scratch']
  #allocation2 [shape = 'f32[1,1]{1,0:T(1,128)S(1)}', space=vmem, size = 0x200, scoped, tag = 'scoped memory for release_relation_net.1']
  %s0 = inlined_call_operand.vmem [shape: f32[2,40,96], index: 0, kind: input, shape index: {}]
  %s1 = inlined_call_operand.vmem [shape: bf16[5,96,512], index: 1, kind: input, shape index: {}]
  %s2 = inlined_call_operand.vmem [shape: f32[1,512], index: 2, kind: input, shape index: {}]
  %s3 = inlined_call_operand.vmem [shape: f32[1,256], index: 3, kind: input, shape index: {}]
  %s4 = inlined_call_operand.vmem [shape: f32[1,256], index: 4, kind: input, shape index: {}]
  %s5 = inlined_call_operand.hbm [shape: bf16[3,256,512], index: 5, kind: input, shape index: {}]
  %s6 = inlined_call_operand.vmem [shape: f32[1,512], index: 6, kind: input, shape index: {}]
  %s7 = inlined_call_operand.vmem [shape: f32[1,256], index: 7, kind: input, shape index: {}]
  %s8 = inlined_call_operand.vmem [shape: f32[1,256], index: 8, kind: input, shape index: {}]
  %s9 = inlined_call_operand.hbm [shape: bf16[3,256,512], index: 9, kind: input, shape index: {}]
  %s10 = inlined_call_operand.vmem [shape: f32[1,512], index: 10, kind: input, shape index: {}]
  %s11 = inlined_call_operand.vmem [shape: f32[1,256], index: 11, kind: input, shape index: {}]
  %s12 = inlined_call_operand.vmem [shape: f32[1,256], index: 12, kind: input, shape index: {}]
  %s13 = inlined_call_operand.vmem [shape: bf16[128,128], index: 13, kind: input, shape index: {}]
  %s14 = inlined_call_operand.vmem [shape: f32[1,128], index: 14, kind: input, shape index: {}]
  %s15 = inlined_call_operand.vmem [shape: bf16[256,128], index: 15, kind: input, shape index: {}]
  %s16 = inlined_call_operand.vmem [shape: f32[1,128], index: 16, kind: input, shape index: {}]
  %s17 = inlined_call_operand.vmem [shape: bf16[128,64], index: 17, kind: input, shape index: {}]
  %s18 = inlined_call_operand.vmem [shape: f32[1,64], index: 18, kind: input, shape index: {}]
  %s19 = inlined_call_operand.vmem [shape: bf16[64,1], index: 19, kind: input, shape index: {}]
  %s20 = inlined_call_operand.<no memory space> [shape: f32[1,1], index: 20, kind: input, shape index: {}]
  %s21 = inlined_call_operand.vmem [shape: f32[2,1,1], index: 21, kind: output, shape index: {}]
  %s22 = sld [smem:[#allocation0]]
  $region125: #{release_relation_net.1} parent=0
    _
  %s24 = ssub.s32 1, %s22
  %s25 = scalar_select 0, %s24, %s22
  %v26 = vstv %s20
  %27 = vst [vmem:[#allocation2] sm:$0x1] %v26
  $region1: #{release_relation_net.1} parent=0
    #allocation3 [shape = 'u8[786432]{0}', space=vmem, size = 0xc0000, scoped, tag = 'input window, operand 5, single buffered']
    #allocation4 [shape = 's32[2]{0}', space=sflag, size = 0x8, scoped, tag = 'scoped memory for release_relation_net.1']
    #allocation5 [shape = 'u8[786432]{0}', space=vmem, size = 0xc0000, scoped, tag = 'input window, operand 9, single buffered']
    #allocation6 [shape = 's32[1]{0}', space=sflag, size = 0x4, scoped, tag = 'scoped memory for release_relation_net.1']
    %28 = vsyncpa [#allocation4], 0
    %29 = vsyncpa [#allocation6], 0
    loop: start=0, step=1, limit=4
    $region2: #{release_relation_net.1} parent=1 // loop_pre_header
      _
    $region3: #{release_relation_net.1} parent=1 // loop_header
      %s31 = sphi 0, %s35
      %p32 = scmp.ge.s32.totalorder %s31, 4
      %s41 = sphi 0, %s43
      %s44 = sphi 0, %s41
      %s45 = sphi 0, %s44
      %s61 = sphi 0, %s45
      %s65 = sphi 0, %s65
      %s67 = sphi 0, %s65
      %s68 = sphi 0, %s67
      %s82 = sphi 0, %s68
      %s86 = sphi 0, %s86
      %s88 = sphi 0, %s86
      %s89 = sphi 0, %s88
      %s103 = sphi 0, %s89
      %s107 = sphi 0, %s107
      %s109 = sphi 0, %s107
      %s110 = sphi 0, %s109
      %s124 = sphi 0, %s110
      %s128 = sphi 0, %s128
      %s130 = sphi 0, %s128
      %s131 = sphi 0, %s130
      %s145 = sphi 0, %s131
      %s149 = sphi 0, %s149
      %s151 = sphi 0, %s149
      %s152 = sphi 0, %s151
      %s166 = sphi 0, %s152
      %s170 = sphi 0, %s170
      %s172 = sphi 0, %s170
      %s173 = sphi 0, %s172
      %s187 = sphi 0, %s173
      %s191 = sphi 0, %s191
      %s193 = sphi 0, %s191
      %s194 = sphi 0, %s193
      %s208 = sphi 0, %s194
      %s212 = sphi 0, %s212
      %s214 = sphi 0, %s212
      %s215 = sphi 0, %s214
      %s229 = sphi 0, %s215
      %s233 = sphi 0, %s233
      %s235 = sphi 0, %s233
      %s236 = sphi 0, %s235
      %s250 = sphi 0, %s236
      %s254 = sphi 0, %s254
      %s256 = sphi 0, %s254
      %s257 = sphi 0, %s256
      %s271 = sphi 0, %s257
      %s275 = sphi 0, %s275
      %s277 = sphi 0, %s275
      %s278 = sphi 0, %s277
      %s292 = sphi 0, %s278
      %s296 = sphi 0, %s296
      %s298 = sphi 0, %s296
      %s299 = sphi 0, %s298
      %s313 = sphi 0, %s299
      %s317 = sphi 0, %s317
      %s319 = sphi 0, %s317
      %s320 = sphi 0, %s319
      %s334 = sphi 0, %s320
      %s338 = sphi 0, %s338
      %s340 = sphi 0, %s338
      %s341 = sphi 0, %s340
      %s355 = sphi 0, %s341
      %s359 = sphi 0, %s359
      %s361 = sphi 0, %s359
      %s362 = sphi 0, %s361
      %s376 = sphi 0, %s362
      %s380 = sphi 0, %s380
      %s382 = sphi 0, %s380
      %s383 = sphi 0, %s382
      %s397 = sphi 0, %s383
      %s401 = sphi 0, %s401
      %s403 = sphi 0, %s401
      %s404 = sphi 0, %s403
      %s418 = sphi 0, %s404
      %s422 = sphi 0, %s422
      %s424 = sphi 0, %s422
      %s425 = sphi 0, %s424
      %s439 = sphi 0, %s425
      %s443 = sphi 0, %s443
      %s445 = sphi 0, %s443
      %s446 = sphi 0, %s445
      %s460 = sphi 0, %s446
      %s464 = sphi 0, %s464
      %s466 = sphi 0, %s464
      %s467 = sphi 0, %s466
      %s481 = sphi 0, %s467
      %s487 = sphi 0, %s489
      %s490 = sphi 0, %s487
      %s491 = sphi 0, %s490
      %s507 = sphi 0, %s491
    $region4: #{release_relation_net.1} parent=1 // loop_header_branch
      %34 = sbr.rel (%p32) target = $region8
    $region5: #{release_relation_net.1} parent=1 // loop_body
      %s36 = ssub.s32 %s31, 1
      %s37 = ssub.s32 %s31, 2
      %s38 = sadd.s32 %s31, 1
      %s39 = ssub.s32 %s31, %s38
      %p40 = scmp.eq.s32.totalorder %s39, 0
      %s42 = sadd.s32 %s41, 1
      %s43 = scalar_select %p40, %s41, %s42
      %p46 = pneg %p40
      %p47 = scmp.eq.s32.totalorder %s31, 1
      %p48 = por %p46, %p47
      %p49 = scmp.ne.s32.totalorder %s41, %s44
      %p50 = scmp.eq.s32.totalorder %s31, 0
      %p51 = por %p49, %p50
      %p52 = scmp.ne.s32.totalorder %s41, %s44
      %p53 = scmp.eq.s32.totalorder %s36, 1
      %p54 = por %p52, %p53
      %p55 = scmp.ne.s32.totalorder %s44, %s45
      %p56 = scmp.eq.s32.totalorder %s36, 0
      %p57 = por %p55, %p56
      %p58 = scmp.ne.s32.totalorder %s44, %s45
      %p59 = scmp.eq.s32.totalorder %s37, 1
      %p60 = por %p58, %p59
      %p62 = scmp.ne.s32.totalorder %s45, %s61
      %p63 = scmp.eq.s32.totalorder %s37, 0
      %p64 = por %p62, %p63
      %s66 = sadd.s32 %s65, 1
      %p69 = scmp.eq.s32.totalorder %s31, 1
      %p70 = scmp.ne.s32.totalorder %s65, %s67
      %p71 = scmp.eq.s32.totalorder %s31, 0
      %p72 = por %p70, %p71
      %p73 = scmp.ne.s32.totalorder %s65, %s67
      %p74 = scmp.eq.s32.totalorder %s36, 1
      %p75 = por %p73, %p74
      %p76 = scmp.ne.s32.totalorder %s67, %s68
      %p77 = scmp.eq.s32.totalorder %s36, 0
      %p78 = por %p76, %p77
      %p79 = scmp.ne.s32.totalorder %s67, %s68
      %p80 = scmp.eq.s32.totalorder %s37, 1
      %p81 = por %p79, %p80
      %p83 = scmp.ne.s32.totalorder %s68, %s82
      %p84 = scmp.eq.s32.totalorder %s37, 0
      %p85 = por %p83, %p84
      %s87 = sadd.s32 %s86, 1
      %p90 = scmp.eq.s32.totalorder %s31, 1
      %p91 = scmp.ne.s32.totalorder %s86, %s88
      %p92 = scmp.eq.s32.totalorder %s31, 0
      %p93 = por %p91, %p92
      %p94 = scmp.ne.s32.totalorder %s86, %s88
      %p95 = scmp.eq.s32.totalorder %s36, 1
      %p96 = por %p94, %p95
      %p97 = scmp.ne.s32.totalorder %s88, %s89
      %p98 = scmp.eq.s32.totalorder %s36, 0
      %p99 = por %p97, %p98
      %p100 = scmp.ne.s32.totalorder %s88, %s89
      %p101 = scmp.eq.s32.totalorder %s37, 1
      %p102 = por %p100, %p101
      %p104 = scmp.ne.s32.totalorder %s89, %s103
      %p105 = scmp.eq.s32.totalorder %s37, 0
      %p106 = por %p104, %p105
      %s108 = sadd.s32 %s107, 1
      %p111 = scmp.eq.s32.totalorder %s31, 1
      %p112 = scmp.ne.s32.totalorder %s107, %s109
      %p113 = scmp.eq.s32.totalorder %s31, 0
      %p114 = por %p112, %p113
      %p115 = scmp.ne.s32.totalorder %s107, %s109
      %p116 = scmp.eq.s32.totalorder %s36, 1
      %p117 = por %p115, %p116
      %p118 = scmp.ne.s32.totalorder %s109, %s110
      %p119 = scmp.eq.s32.totalorder %s36, 0
      %p120 = por %p118, %p119
      %p121 = scmp.ne.s32.totalorder %s109, %s110
      %p122 = scmp.eq.s32.totalorder %s37, 1
      %p123 = por %p121, %p122
      %p125 = scmp.ne.s32.totalorder %s110, %s124
      %p126 = scmp.eq.s32.totalorder %s37, 0
      %p127 = por %p125, %p126
      %s129 = sadd.s32 %s128, 1
      %p132 = scmp.eq.s32.totalorder %s31, 1
      %p133 = scmp.ne.s32.totalorder %s128, %s130
      %p134 = scmp.eq.s32.totalorder %s31, 0
      %p135 = por %p133, %p134
      %p136 = scmp.ne.s32.totalorder %s128, %s130
      %p137 = scmp.eq.s32.totalorder %s36, 1
      %p138 = por %p136, %p137
      %p139 = scmp.ne.s32.totalorder %s130, %s131
      %p140 = scmp.eq.s32.totalorder %s36, 0
      %p141 = por %p139, %p140
      %p142 = scmp.ne.s32.totalorder %s130, %s131
      %p143 = scmp.eq.s32.totalorder %s37, 1
      %p144 = por %p142, %p143
      %p146 = scmp.ne.s32.totalorder %s131, %s145
      %p147 = scmp.eq.s32.totalorder %s37, 0
      %p148 = por %p146, %p147
      %s150 = sadd.s32 %s149, 1
      %p153 = scmp.eq.s32.totalorder %s31, 1
      %p154 = scmp.ne.s32.totalorder %s149, %s151
      %p155 = scmp.eq.s32.totalorder %s31, 0
      %p156 = por %p154, %p155
      %p157 = scmp.ne.s32.totalorder %s149, %s151
      %p158 = scmp.eq.s32.totalorder %s36, 1
      %p159 = por %p157, %p158
      %p160 = scmp.ne.s32.totalorder %s151, %s152
      %p161 = scmp.eq.s32.totalorder %s36, 0
      %p162 = por %p160, %p161
      %p163 = scmp.ne.s32.totalorder %s151, %s152
      %p164 = scmp.eq.s32.totalorder %s37, 1
      %p165 = por %p163, %p164
      %p167 = scmp.ne.s32.totalorder %s152, %s166
      %p168 = scmp.eq.s32.totalorder %s37, 0
      %p169 = por %p167, %p168
      %s171 = sadd.s32 %s170, 1
      %p174 = scmp.eq.s32.totalorder %s31, 1
      %p175 = scmp.ne.s32.totalorder %s170, %s172
      %p176 = scmp.eq.s32.totalorder %s31, 0
      %p177 = por %p175, %p176
      %p178 = scmp.ne.s32.totalorder %s170, %s172
      %p179 = scmp.eq.s32.totalorder %s36, 1
      %p180 = por %p178, %p179
      %p181 = scmp.ne.s32.totalorder %s172, %s173
      %p182 = scmp.eq.s32.totalorder %s36, 0
      %p183 = por %p181, %p182
      %p184 = scmp.ne.s32.totalorder %s172, %s173
      %p185 = scmp.eq.s32.totalorder %s37, 1
      %p186 = por %p184, %p185
      %p188 = scmp.ne.s32.totalorder %s173, %s187
      %p189 = scmp.eq.s32.totalorder %s37, 0
      %p190 = por %p188, %p189
      %s192 = sadd.s32 %s191, 1
      %p195 = scmp.eq.s32.totalorder %s31, 1
      %p196 = scmp.ne.s32.totalorder %s191, %s193
      %p197 = scmp.eq.s32.totalorder %s31, 0
      %p198 = por %p196, %p197
      %p199 = scmp.ne.s32.totalorder %s191, %s193
      %p200 = scmp.eq.s32.totalorder %s36, 1
      %p201 = por %p199, %p200
      %p202 = scmp.ne.s32.totalorder %s193, %s194
      %p203 = scmp.eq.s32.totalorder %s36, 0
      %p204 = por %p202, %p203
      %p205 = scmp.ne.s32.totalorder %s193, %s194
      %p206 = scmp.eq.s32.totalorder %s37, 1
      %p207 = por %p205, %p206
      %p209 = scmp.ne.s32.totalorder %s194, %s208
      %p210 = scmp.eq.s32.totalorder %s37, 0
      %p211 = por %p209, %p210
      %s213 = sadd.s32 %s212, 1
      %p216 = scmp.eq.s32.totalorder %s31, 1
      %p217 = scmp.ne.s32.totalorder %s212, %s214
      %p218 = scmp.eq.s32.totalorder %s31, 0
      %p219 = por %p217, %p218
      %p220 = scmp.ne.s32.totalorder %s212, %s214
      %p221 = scmp.eq.s32.totalorder %s36, 1
      %p222 = por %p220, %p221
      %p223 = scmp.ne.s32.totalorder %s214, %s215
      %p224 = scmp.eq.s32.totalorder %s36, 0
      %p225 = por %p223, %p224
      %p226 = scmp.ne.s32.totalorder %s214, %s215
      %p227 = scmp.eq.s32.totalorder %s37, 1
      %p228 = por %p226, %p227
      %p230 = scmp.ne.s32.totalorder %s215, %s229
      %p231 = scmp.eq.s32.totalorder %s37, 0
      %p232 = por %p230, %p231
      %s234 = sadd.s32 %s233, 1
      %p237 = scmp.eq.s32.totalorder %s31, 1
      %p238 = scmp.ne.s32.totalorder %s233, %s235
      %p239 = scmp.eq.s32.totalorder %s31, 0
      %p240 = por %p238, %p239
      %p241 = scmp.ne.s32.totalorder %s233, %s235
      %p242 = scmp.eq.s32.totalorder %s36, 1
      %p243 = por %p241, %p242
      %p244 = scmp.ne.s32.totalorder %s235, %s236
      %p245 = scmp.eq.s32.totalorder %s36, 0
      %p246 = por %p244, %p245
      %p247 = scmp.ne.s32.totalorder %s235, %s236
      %p248 = scmp.eq.s32.totalorder %s37, 1
      %p249 = por %p247, %p248
      %p251 = scmp.ne.s32.totalorder %s236, %s250
      %p252 = scmp.eq.s32.totalorder %s37, 0
      %p253 = por %p251, %p252
      %s255 = sadd.s32 %s254, 1
      %p258 = scmp.eq.s32.totalorder %s31, 1
      %p259 = scmp.ne.s32.totalorder %s254, %s256
      %p260 = scmp.eq.s32.totalorder %s31, 0
      %p261 = por %p259, %p260
      %p262 = scmp.ne.s32.totalorder %s254, %s256
      %p263 = scmp.eq.s32.totalorder %s36, 1
      %p264 = por %p262, %p263
      %p265 = scmp.ne.s32.totalorder %s256, %s257
      %p266 = scmp.eq.s32.totalorder %s36, 0
      %p267 = por %p265, %p266
      %p268 = scmp.ne.s32.totalorder %s256, %s257
      %p269 = scmp.eq.s32.totalorder %s37, 1
      %p270 = por %p268, %p269
      %p272 = scmp.ne.s32.totalorder %s257, %s271
      %p273 = scmp.eq.s32.totalorder %s37, 0
      %p274 = por %p272, %p273
      %s276 = sadd.s32 %s275, 1
      %p279 = scmp.eq.s32.totalorder %s31, 1
      %p280 = scmp.ne.s32.totalorder %s275, %s277
      %p281 = scmp.eq.s32.totalorder %s31, 0
      %p282 = por %p280, %p281
      %p283 = scmp.ne.s32.totalorder %s275, %s277
      %p284 = scmp.eq.s32.totalorder %s36, 1
      %p285 = por %p283, %p284
      %p286 = scmp.ne.s32.totalorder %s277, %s278
      %p287 = scmp.eq.s32.totalorder %s36, 0
      %p288 = por %p286, %p287
      %p289 = scmp.ne.s32.totalorder %s277, %s278
      %p290 = scmp.eq.s32.totalorder %s37, 1
      %p291 = por %p289, %p290
      %p293 = scmp.ne.s32.totalorder %s278, %s292
      %p294 = scmp.eq.s32.totalorder %s37, 0
      %p295 = por %p293, %p294
      %s297 = sadd.s32 %s296, 1
      %p300 = scmp.eq.s32.totalorder %s31, 1
      %p301 = scmp.ne.s32.totalorder %s296, %s298
      %p302 = scmp.eq.s32.totalorder %s31, 0
      %p303 = por %p301, %p302
      %p304 = scmp.ne.s32.totalorder %s296, %s298
      %p305 = scmp.eq.s32.totalorder %s36, 1
      %p306 = por %p304, %p305
      %p307 = scmp.ne.s32.totalorder %s298, %s299
      %p308 = scmp.eq.s32.totalorder %s36, 0
      %p309 = por %p307, %p308
      %p310 = scmp.ne.s32.totalorder %s298, %s299
      %p311 = scmp.eq.s32.totalorder %s37, 1
      %p312 = por %p310, %p311
      %p314 = scmp.ne.s32.totalorder %s299, %s313
      %p315 = scmp.eq.s32.totalorder %s37, 0
      %p316 = por %p314, %p315
      %s318 = sadd.s32 %s317, 1
      %p321 = scmp.eq.s32.totalorder %s31, 1
      %p322 = scmp.ne.s32.totalorder %s317, %s319
      %p323 = scmp.eq.s32.totalorder %s31, 0
      %p324 = por %p322, %p323
      %p325 = scmp.ne.s32.totalorder %s317, %s319
      %p326 = scmp.eq.s32.totalorder %s36, 1
      %p327 = por %p325, %p326
      %p328 = scmp.ne.s32.totalorder %s319, %s320
      %p329 = scmp.eq.s32.totalorder %s36, 0
      %p330 = por %p328, %p329
      %p331 = scmp.ne.s32.totalorder %s319, %s320
      %p332 = scmp.eq.s32.totalorder %s37, 1
      %p333 = por %p331, %p332
      %p335 = scmp.ne.s32.totalorder %s320, %s334
      %p336 = scmp.eq.s32.totalorder %s37, 0
      %p337 = por %p335, %p336
      %s339 = sadd.s32 %s338, 1
      %p342 = scmp.eq.s32.totalorder %s31, 1
      %p343 = scmp.ne.s32.totalorder %s338, %s340
      %p344 = scmp.eq.s32.totalorder %s31, 0
      %p345 = por %p343, %p344
      %p346 = scmp.ne.s32.totalorder %s338, %s340
      %p347 = scmp.eq.s32.totalorder %s36, 1
      %p348 = por %p346, %p347
      %p349 = scmp.ne.s32.totalorder %s340, %s341
      %p350 = scmp.eq.s32.totalorder %s36, 0
      %p351 = por %p349, %p350
      %p352 = scmp.ne.s32.totalorder %s340, %s341
      %p353 = scmp.eq.s32.totalorder %s37, 1
      %p354 = por %p352, %p353
      %p356 = scmp.ne.s32.totalorder %s341, %s355
      %p357 = scmp.eq.s32.totalorder %s37, 0
      %p358 = por %p356, %p357
      %s360 = sadd.s32 %s359, 1
      %p363 = scmp.eq.s32.totalorder %s31, 1
      %p364 = scmp.ne.s32.totalorder %s359, %s361
      %p365 = scmp.eq.s32.totalorder %s31, 0
      %p366 = por %p364, %p365
      %p367 = scmp.ne.s32.totalorder %s359, %s361
      %p368 = scmp.eq.s32.totalorder %s36, 1
      %p369 = por %p367, %p368
      %p370 = scmp.ne.s32.totalorder %s361, %s362
      %p371 = scmp.eq.s32.totalorder %s36, 0
      %p372 = por %p370, %p371
      %p373 = scmp.ne.s32.totalorder %s361, %s362
      %p374 = scmp.eq.s32.totalorder %s37, 1
      %p375 = por %p373, %p374
      %p377 = scmp.ne.s32.totalorder %s362, %s376
      %p378 = scmp.eq.s32.totalorder %s37, 0
      %p379 = por %p377, %p378
      %s381 = sadd.s32 %s380, 1
      %p384 = scmp.eq.s32.totalorder %s31, 1
      %p385 = scmp.ne.s32.totalorder %s380, %s382
      %p386 = scmp.eq.s32.totalorder %s31, 0
      %p387 = por %p385, %p386
      %p388 = scmp.ne.s32.totalorder %s380, %s382
      %p389 = scmp.eq.s32.totalorder %s36, 1
      %p390 = por %p388, %p389
      %p391 = scmp.ne.s32.totalorder %s382, %s383
      %p392 = scmp.eq.s32.totalorder %s36, 0
      %p393 = por %p391, %p392
      %p394 = scmp.ne.s32.totalorder %s382, %s383
      %p395 = scmp.eq.s32.totalorder %s37, 1
      %p396 = por %p394, %p395
      %p398 = scmp.ne.s32.totalorder %s383, %s397
      %p399 = scmp.eq.s32.totalorder %s37, 0
      %p400 = por %p398, %p399
      %s402 = sadd.s32 %s401, 1
      %p405 = scmp.eq.s32.totalorder %s31, 1
      %p406 = scmp.ne.s32.totalorder %s401, %s403
      %p407 = scmp.eq.s32.totalorder %s31, 0
      %p408 = por %p406, %p407
      %p409 = scmp.ne.s32.totalorder %s401, %s403
      %p410 = scmp.eq.s32.totalorder %s36, 1
      %p411 = por %p409, %p410
      %p412 = scmp.ne.s32.totalorder %s403, %s404
      %p413 = scmp.eq.s32.totalorder %s36, 0
      %p414 = por %p412, %p413
      %p415 = scmp.ne.s32.totalorder %s403, %s404
      %p416 = scmp.eq.s32.totalorder %s37, 1
      %p417 = por %p415, %p416
      %p419 = scmp.ne.s32.totalorder %s404, %s418
      %p420 = scmp.eq.s32.totalorder %s37, 0
      %p421 = por %p419, %p420
      %s423 = sadd.s32 %s422, 1
      %p426 = scmp.eq.s32.totalorder %s31, 1
      %p427 = scmp.ne.s32.totalorder %s422, %s424
      %p428 = scmp.eq.s32.totalorder %s31, 0
      %p429 = por %p427, %p428
      %p430 = scmp.ne.s32.totalorder %s422, %s424
      %p431 = scmp.eq.s32.totalorder %s36, 1
      %p432 = por %p430, %p431
      %p433 = scmp.ne.s32.totalorder %s424, %s425
      %p434 = scmp.eq.s32.totalorder %s36, 0
      %p435 = por %p433, %p434
      %p436 = scmp.ne.s32.totalorder %s424, %s425
      %p437 = scmp.eq.s32.totalorder %s37, 1
      %p438 = por %p436, %p437
      %p440 = scmp.ne.s32.totalorder %s425, %s439
      %p441 = scmp.eq.s32.totalorder %s37, 0
      %p442 = por %p440, %p441
      %s444 = sadd.s32 %s443, 1
      %p447 = scmp.eq.s32.totalorder %s31, 1
      %p448 = scmp.ne.s32.totalorder %s443, %s445
      %p449 = scmp.eq.s32.totalorder %s31, 0
      %p450 = por %p448, %p449
      %p451 = scmp.ne.s32.totalorder %s443, %s445
      %p452 = scmp.eq.s32.totalorder %s36, 1
      %p453 = por %p451, %p452
      %p454 = scmp.ne.s32.totalorder %s445, %s446
      %p455 = scmp.eq.s32.totalorder %s36, 0
      %p456 = por %p454, %p455
      %p457 = scmp.ne.s32.totalorder %s445, %s446
      %p458 = scmp.eq.s32.totalorder %s37, 1
      %p459 = por %p457, %p458
      %p461 = scmp.ne.s32.totalorder %s446, %s460
      %p462 = scmp.eq.s32.totalorder %s37, 0
      %p463 = por %p461, %p462
      %s465 = sadd.s32 %s464, 1
      %p468 = scmp.eq.s32.totalorder %s31, 1
      %p469 = scmp.ne.s32.totalorder %s464, %s466
      %p470 = scmp.eq.s32.totalorder %s31, 0
      %p471 = por %p469, %p470
      %p472 = scmp.ne.s32.totalorder %s464, %s466
      %p473 = scmp.eq.s32.totalorder %s36, 1
      %p474 = por %p472, %p473
      %p475 = scmp.ne.s32.totalorder %s466, %s467
      %p476 = scmp.eq.s32.totalorder %s36, 0
      %p477 = por %p475, %p476
      %p478 = scmp.ne.s32.totalorder %s466, %s467
      %p479 = scmp.eq.s32.totalorder %s37, 1
      %p480 = por %p478, %p479
      %p482 = scmp.ne.s32.totalorder %s467, %s481
      %p483 = scmp.eq.s32.totalorder %s37, 0
      %p484 = por %p482, %p483
      %s485 = ssub.s32 %s31, %s38
      %p486 = scmp.eq.s32.totalorder %s485, 0
      %s488 = sadd.s32 %s487, 1
      %s489 = scalar_select %p486, %s487, %s488
      %p492 = pneg %p486
      %p493 = scmp.eq.s32.totalorder %s31, 1
      %p494 = por %p492, %p493
      %p495 = scmp.ne.s32.totalorder %s487, %s490
      %p496 = scmp.eq.s32.totalorder %s31, 0
      %p497 = por %p495, %p496
      %p498 = scmp.ne.s32.totalorder %s487, %s490
      %p499 = scmp.eq.s32.totalorder %s36, 1
      %p500 = por %p498, %p499
      %p501 = scmp.ne.s32.totalorder %s490, %s491
      %p502 = scmp.eq.s32.totalorder %s36, 0
      %p503 = por %p501, %p502
      %p504 = scmp.ne.s32.totalorder %s490, %s491
      %p505 = scmp.eq.s32.totalorder %s37, 1
      %p506 = por %p504, %p505
      %p508 = scmp.ne.s32.totalorder %s491, %s507
      %p509 = scmp.eq.s32.totalorder %s37, 0
      %p510 = por %p508, %p509
      %p511 = scmp.le.s32.totalorder 1, %s31
      %p512 = scmp.lt.s32.totalorder %s31, 3
      %p513 = pnand %p511, %p512
      %p514 = pneg %p513
      // Predicated region
      $region9: #{release_relation_net.1} parent=5 // pred_check
        _
      $region10: #{release_relation_net.1} parent=5 // pred_check_branch
        %516 = sbr.rel (%p513) target = $region12
      $region11: #{release_relation_net.1} parent=5 // pred_region
        %s517 = ssub.s32 %s31, 1
        // Predicated region
        $region13: #{release_relation_net.1} parent=11 // pred_check
          %p518 = pneg %p78
        $region14: #{release_relation_net.1} parent=11 // pred_check_branch
          %520 = sbr.rel (%p518) target = $region16
        $region15: #{release_relation_net.1} parent=11 // pred_region
          _
        $region16: #{release_relation_net.1} parent=11 // pred_fallthru
          _
        // Predicated region
        $region17: #{release_relation_net.1} parent=11 // pred_check
          %p521 = pneg %p99
        $region18: #{release_relation_net.1} parent=11 // pred_check_branch
          %523 = sbr.rel (%p521) target = $region20
        $region19: #{release_relation_net.1} parent=11 // pred_region
          _
        $region20: #{release_relation_net.1} parent=11 // pred_fallthru
          _
        // Predicated region
        $region21: #{release_relation_net.1} parent=11 // pred_check
          %p524 = pneg %p120
        $region22: #{release_relation_net.1} parent=11 // pred_check_branch
          %526 = sbr.rel (%p524) target = $region24
        $region23: #{release_relation_net.1} parent=11 // pred_region
          _
        $region24: #{release_relation_net.1} parent=11 // pred_fallthru
          _
        // Predicated region
        $region25: #{release_relation_net.1} parent=11 // pred_check
          %p527 = pneg %p141
        $region26: #{release_relation_net.1} parent=11 // pred_check_branch
          %529 = sbr.rel (%p527) target = $region28
        $region27: #{release_relation_net.1} parent=11 // pred_region
          _
        $region28: #{release_relation_net.1} parent=11 // pred_fallthru
          _
        // Predicated region
        $region29: #{release_relation_net.1} parent=11 // pred_check
          %p530 = pneg %p162
        $region30: #{release_relation_net.1} parent=11 // pred_check_branch
          %532 = sbr.rel (%p530) target = $region32
        $region31: #{release_relation_net.1} parent=11 // pred_region
          %534 = vsyncadd [#allocation4], 0
          %s535 = sshll.u32 %s5, 4
          %s536 = int_to_ptr.hbm [resolvable:$true] %s535
          %s537 = sshll.u32 [#allocation3], 4
          %s538 = int_to_ptr.vmem [resolvable:$true] %s537
          %543 = dma.hbm_to_vmem [thread:$0]  %s536, 24576, %s538, [#allocation4], 256, 256, 16
        $region32: #{release_relation_net.1} parent=11 // pred_fallthru
          _
        // Predicated region
        $region33: #{release_relation_net.1} parent=11 // pred_check
          %p544 = pneg %p183
        $region34: #{release_relation_net.1} parent=11 // pred_check_branch
          %546 = sbr.rel (%p544) target = $region36
        $region35: #{release_relation_net.1} parent=11 // pred_region
          _
        $region36: #{release_relation_net.1} parent=11 // pred_fallthru
          _
        // Predicated region
        $region37: #{release_relation_net.1} parent=11 // pred_check
          %p547 = pneg %p204
        $region38: #{release_relation_net.1} parent=11 // pred_check_branch
          %549 = sbr.rel (%p547) target = $region40
        $region39: #{release_relation_net.1} parent=11 // pred_region
          _
        $region40: #{release_relation_net.1} parent=11 // pred_fallthru
          _
        // Predicated region
        $region41: #{release_relation_net.1} parent=11 // pred_check
          %p550 = pneg %p225
        $region42: #{release_relation_net.1} parent=11 // pred_check_branch
          %552 = sbr.rel (%p550) target = $region44
        $region43: #{release_relation_net.1} parent=11 // pred_region
          _
        $region44: #{release_relation_net.1} parent=11 // pred_fallthru
          _
        // Predicated region
        $region45: #{release_relation_net.1} parent=11 // pred_check
          %p553 = pneg %p246
        $region46: #{release_relation_net.1} parent=11 // pred_check_branch
          %555 = sbr.rel (%p553) target = $region48
        $region47: #{release_relation_net.1} parent=11 // pred_region
          %557 = vsyncadd [#allocation6], 0
          %s558 = sshll.u32 %s9, 4
          %s559 = int_to_ptr.hbm [resolvable:$true] %s558
          %s560 = sshll.u32 [#allocation5], 4
          %s561 = int_to_ptr.vmem [resolvable:$true] %s560
          %566 = dma.hbm_to_vmem [thread:$0]  %s559, 24576, %s561, [#allocation6], 256, 256, 16
        $region48: #{release_relation_net.1} parent=11 // pred_fallthru
          _
        // Predicated region
        $region49: #{release_relation_net.1} parent=11 // pred_check
          %p567 = pneg %p267
        $region50: #{release_relation_net.1} parent=11 // pred_check_branch
          %569 = sbr.rel (%p567) target = $region52
        $region51: #{release_relation_net.1} parent=11 // pred_region
          _
        $region52: #{release_relation_net.1} parent=11 // pred_fallthru
          _
        // Predicated region
        $region53: #{release_relation_net.1} parent=11 // pred_check
          %p570 = pneg %p288
        $region54: #{release_relation_net.1} parent=11 // pred_check_branch
          %572 = sbr.rel (%p570) target = $region56
        $region55: #{release_relation_net.1} parent=11 // pred_region
          _
        $region56: #{release_relation_net.1} parent=11 // pred_fallthru
          _
        // Predicated region
        $region57: #{release_relation_net.1} parent=11 // pred_check
          %p573 = pneg %p309
        $region58: #{release_relation_net.1} parent=11 // pred_check_branch
          %575 = sbr.rel (%p573) target = $region60
        $region59: #{release_relation_net.1} parent=11 // pred_region
          _
        $region60: #{release_relation_net.1} parent=11 // pred_fallthru
          _
        // Predicated region
        $region61: #{release_relation_net.1} parent=11 // pred_check
          %p576 = pneg %p330
        $region62: #{release_relation_net.1} parent=11 // pred_check_branch
          %578 = sbr.rel (%p576) target = $region64
        $region63: #{release_relation_net.1} parent=11 // pred_region
          _
        $region64: #{release_relation_net.1} parent=11 // pred_fallthru
          _
        // Predicated region
        $region65: #{release_relation_net.1} parent=11 // pred_check
          %p579 = pneg %p351
        $region66: #{release_relation_net.1} parent=11 // pred_check_branch
          %581 = sbr.rel (%p579) target = $region68
        $region67: #{release_relation_net.1} parent=11 // pred_region
          _
        $region68: #{release_relation_net.1} parent=11 // pred_fallthru
          _
        // Predicated region
        $region69: #{release_relation_net.1} parent=11 // pred_check
          %p582 = pneg %p372
        $region70: #{release_relation_net.1} parent=11 // pred_check_branch
          %584 = sbr.rel (%p582) target = $region72
        $region71: #{release_relation_net.1} parent=11 // pred_region
          _
        $region72: #{release_relation_net.1} parent=11 // pred_fallthru
          _
        // Predicated region
        $region73: #{release_relation_net.1} parent=11 // pred_check
          %p585 = pneg %p393
        $region74: #{release_relation_net.1} parent=11 // pred_check_branch
          %587 = sbr.rel (%p585) target = $region76
        $region75: #{release_relation_net.1} parent=11 // pred_region
          _
        $region76: #{release_relation_net.1} parent=11 // pred_fallthru
          _
        // Predicated region
        $region77: #{release_relation_net.1} parent=11 // pred_check
          %p588 = pneg %p414
        $region78: #{release_relation_net.1} parent=11 // pred_check_branch
          %590 = sbr.rel (%p588) target = $region80
        $region79: #{release_relation_net.1} parent=11 // pred_region
          _
        $region80: #{release_relation_net.1} parent=11 // pred_fallthru
          _
        // Predicated region
        $region81: #{release_relation_net.1} parent=11 // pred_check
          %p591 = pneg %p435
        $region82: #{release_relation_net.1} parent=11 // pred_check_branch
          %593 = sbr.rel (%p591) target = $region84
        $region83: #{release_relation_net.1} parent=11 // pred_region
          _
        $region84: #{release_relation_net.1} parent=11 // pred_fallthru
          _
        // Predicated region
        $region85: #{release_relation_net.1} parent=11 // pred_check
          %p594 = pneg %p456
        $region86: #{release_relation_net.1} parent=11 // pred_check_branch
          %596 = sbr.rel (%p594) target = $region88
        $region87: #{release_relation_net.1} parent=11 // pred_region
          _
        $region88: #{release_relation_net.1} parent=11 // pred_fallthru
          _
        // Predicated region
        $region89: #{release_relation_net.1} parent=11 // pred_check
          %p597 = pneg %p477
        $region90: #{release_relation_net.1} parent=11 // pred_check_branch
          %599 = sbr.rel (%p597) target = $region92
        $region91: #{release_relation_net.1} parent=11 // pred_region
          _
        $region92: #{release_relation_net.1} parent=11 // pred_fallthru
          _
      $region12: #{release_relation_net.1} parent=5 // pred_fallthru
        _
      %p600 = scmp.lt.s32.totalorder %s31, 2
      // Predicated region
      $region93: #{release_relation_net.1} parent=5 // pred_check
        %p601 = pneg %p600
      $region94: #{release_relation_net.1} parent=5 // pred_check_branch
        %603 = sbr.rel (%p601) target = $region96
      $region95: #{release_relation_net.1} parent=5 // pred_region
        // Predicated region
        $region97: #{release_relation_net.1} parent=95 // pred_check
          %p604 = pneg %p51
        $region98: #{release_relation_net.1} parent=95 // pred_check_branch
          %606 = sbr.rel (%p604) target = $region100
        $region99: #{release_relation_net.1} parent=95 // pred_region
          %p607 = scmp.lt.s32.totalorder %s31, 1
          %s608 = scalar_select %p607, %s31, 1
          %s609 = smul.addr %s608, 5
          %s610 = smul.addr %s609, 8
          %s611 = scalar_lea.vmem %s0, %s610
        $region100: #{release_relation_net.1} parent=95 // pred_fallthru
          _
      $region96: #{release_relation_net.1} parent=5 // pred_fallthru
        _
      %p612 = scmp.le.s32.totalorder 1, %s31
      %p613 = scmp.lt.s32.totalorder %s31, 3
      %p614 = pnand %p612, %p613
      %p615 = pneg %p614
      // Predicated region
      $region101: #{release_relation_net.1} parent=5 // pred_check
        _
      $region102: #{release_relation_net.1} parent=5 // pred_check_branch
        %617 = sbr.rel (%p614) target = $region104
      $region103: #{release_relation_net.1} parent=5 // pred_region
        %s618 = ssub.s32 %s31, 1
        // Predicated region
        $region105: #{release_relation_net.1} parent=103 // pred_check
          %p619 = pneg %p162
        $region106: #{release_relation_net.1} parent=103 // pred_check_branch
          %621 = sbr.rel (%p619) target = $region108
        $region107: #{release_relation_net.1} parent=103 // pred_region
          %623 = dma.done [#allocation4], 24576
        $region108: #{release_relation_net.1} parent=103 // pred_fallthru
          _
        // Predicated region
        $region109: #{release_relation_net.1} parent=103 // pred_check
          %p624 = pneg %p246
        $region110: #{release_relation_net.1} parent=103 // pred_check_branch
          %626 = sbr.rel (%p624) target = $region112
        $region111: #{release_relation_net.1} parent=103 // pred_region
          %628 = dma.done [#allocation6], 24576
        $region112: #{release_relation_net.1} parent=103 // pred_fallthru
          _
        %p629 = scmp.lt.s32.totalorder %s36, 1
        %s630 = scalar_select %p629, %s36, 1
        %s631 = smul.addr %s630, 5
        %s632 = smul.addr %s631, 8
        %s633 = scalar_lea.vmem %s0, %s632
        %p634 = pneg %p57
        %p635 = pneg %p54
        %p636 = pneg %p78
        %p637 = pneg %p75
        %p638 = pneg %p99
        %p639 = pneg %p96
        %p640 = pneg %p120
        %p641 = pneg %p117
        %p642 = pneg %p141
        %p643 = pneg %p138
        %p644 = pneg %p162
        %p645 = pneg %p159
        %p646 = pneg %p183
        %p647 = pneg %p180
        %p648 = pneg %p204
        %p649 = pneg %p201
        %p650 = pneg %p225
        %p651 = pneg %p222
        %p652 = pneg %p246
        %p653 = pneg %p243
        %p654 = pneg %p267
        %p655 = pneg %p264
        %p656 = pneg %p288
        %p657 = pneg %p285
        %p658 = pneg %p309
        %p659 = pneg %p306
        %p660 = pneg %p330
        %p661 = pneg %p327
        %p662 = pneg %p351
        %p663 = pneg %p348
        %p664 = pneg %p372
        %p665 = pneg %p369
        %p666 = pneg %p393
        %p667 = pneg %p390
        %p668 = pneg %p414
        %p669 = pneg %p411
        %p670 = pneg %p435
        %p671 = pneg %p432
        %p672 = pneg %p456
        %p673 = pneg %p453
        %p674 = pneg %p477
        %p675 = pneg %p474
        %p676 = pneg %p503
        %p677 = pneg %p500
        %p678 = scmp.lt.s32.totalorder %s36, 1
        %s679 = scalar_select %p678, %s36, 1
        %s680 = scalar_lea.vmem %s21, %s679
        %p681 = scmp.lt.s32.totalorder %s36, 1
        %s682 = scalar_select %p681, %s36, 1
        %s683 = smul.addr %s682, 5
        %s684 = smul.addr %s683, 8
        %s685 = scalar_lea.vmem %s0, %s684
        %p686 = scmp.lt.s32.totalorder %s36, 1
        %s687 = scalar_select %p686, %s36, 1
        %s688 = scalar_lea.vmem %s21, %s687
        %v690 = vld [vmem:[%s685] sm:$0xff]
        %v691 = vld [vmem:[%s685 + $0x8] sm:$0xff]
        %v692 = vld [vmem:[%s685 + $0x10] sm:$0xff]
        %v693 = vld [vmem:[%s685 + $0x18] sm:$0xff]
        %v694 = vld [vmem:[%s685 + $0x20] sm:$0xff]
        %v695 = vpack.c.bf16 %v691, %v690
        %v696 = vpack.c.bf16 %v693, %v692
        %v697 = vpack.c.bf16 %v694, %v694
        %v698 = vld [vmem:[%s1] sm:$0xff]
        %v699 = vld [vmem:[%s1 + $0x8] sm:$0xff]
        %v700 = vld [vmem:[%s1 + $0x10] sm:$0xff]
        %v701 = vld [vmem:[%s1 + $0x18] sm:$0xff]
        %v702 = vld [vmem:[%s1 + $0x20] sm:$0xff]
        %v703 = vld [vmem:[%s1 + $0x28] sm:$0xff]
        %v704 = vld [vmem:[%s1 + $0x30] sm:$0xff]
        %v705 = vld [vmem:[%s1 + $0x38] sm:$0xff]
        %v706 = vld [vmem:[%s1 + $0x40] sm:$0xff]
        %v707 = vld [vmem:[%s1 + $0x48] sm:$0xff]
        %v708 = vld [vmem:[%s1 + $0x50] sm:$0xff]
        %v709 = vld [vmem:[%s1 + $0x58] sm:$0xff]
        %v710 = vld [vmem:[%s1 + $0x60] sm:$0xff]
        %v711 = vld [vmem:[%s1 + $0x68] sm:$0xff]
        %v712 = vld [vmem:[%s1 + $0x70] sm:$0xff]
        %v713 = vld [vmem:[%s1 + $0x78] sm:$0xff]
        %v714 = vld [vmem:[%s1 + $0x80] sm:$0xff]
        %v715 = vld [vmem:[%s1 + $0x88] sm:$0xff]
        %v716 = vld [vmem:[%s1 + $0x90] sm:$0xff]
        %v717 = vld [vmem:[%s1 + $0x98] sm:$0xff]
        %v718 = vld [vmem:[%s1 + $0xa0] sm:$0xff]
        %v719 = vld [vmem:[%s1 + $0xa8] sm:$0xff]
        %v720 = vld [vmem:[%s1 + $0xb0] sm:$0xff]
        %v721 = vld [vmem:[%s1 + $0xb8] sm:$0xff]
        %vm727 = vcmask 1046528
        %v728 = vrot.slane %v690, 1
        %v729 = vrot.slane %v691, 1
        %v730 = vsel %vm727, %v728, %v729
        %v731 = vrot.slane %v692, 1
        %v732 = vsel %vm727, %v729, %v731
        %v733 = vrot.slane %v693, 1
        %v734 = vsel %vm727, %v731, %v733
        %v735 = vrot.slane %v694, 1
        %v736 = vsel %vm727, %v733, %v735
        %v743 = vsel %vm727, %v735, %v728
        %v744 = vpack.c.bf16 %v732, %v730
        %v745 = vpack.c.bf16 %v736, %v734
        %v746 = vpack.c.bf16 %v743, %v743
        %s747 = scalar_lea.vmem %s1, 192
        %v748 = vld [vmem:[%s747] sm:$0xff]
        %v749 = vld [vmem:[%s747 + $0x8] sm:$0xff]
        %v750 = vld [vmem:[%s747 + $0x10] sm:$0xff]
        %v751 = vld [vmem:[%s747 + $0x18] sm:$0xff]
        %v752 = vld [vmem:[%s747 + $0x20] sm:$0xff]
        %v753 = vld [vmem:[%s747 + $0x28] sm:$0xff]
        %v754 = vld [vmem:[%s747 + $0x30] sm:$0xff]
        %v755 = vld [vmem:[%s747 + $0x38] sm:$0xff]
        %v756 = vld [vmem:[%s747 + $0x40] sm:$0xff]
        %v757 = vld [vmem:[%s747 + $0x48] sm:$0xff]
        %v758 = vld [vmem:[%s747 + $0x50] sm:$0xff]
        %v759 = vld [vmem:[%s747 + $0x58] sm:$0xff]
        %v760 = vld [vmem:[%s747 + $0x60] sm:$0xff]
        %v761 = vld [vmem:[%s747 + $0x68] sm:$0xff]
        %v762 = vld [vmem:[%s747 + $0x70] sm:$0xff]
        %v763 = vld [vmem:[%s747 + $0x78] sm:$0xff]
        %v764 = vld [vmem:[%s747 + $0x80] sm:$0xff]
        %v765 = vld [vmem:[%s747 + $0x88] sm:$0xff]
        %v766 = vld [vmem:[%s747 + $0x90] sm:$0xff]
        %v767 = vld [vmem:[%s747 + $0x98] sm:$0xff]
        %v768 = vld [vmem:[%s747 + $0xa0] sm:$0xff]
        %v769 = vld [vmem:[%s747 + $0xa8] sm:$0xff]
        %v770 = vld [vmem:[%s747 + $0xb0] sm:$0xff]
        %v771 = vld [vmem:[%s747 + $0xb8] sm:$0xff]
        %v796 = vunpack.c.l.b16 %v748
        %v797 = vunpack.c.h.b16 %v748
        %v798 = vunpack.c.l.b16 %v749
        %v799 = vunpack.c.h.b16 %v749
        %v800 = vunpack.c.l.b16 %v750
        %v801 = vunpack.c.h.b16 %v750
        %v802 = vunpack.c.l.b16 %v751
        %v803 = vunpack.c.h.b16 %v751
        %v804 = vunpack.c.l.b16 %v752
        %v805 = vunpack.c.h.b16 %v752
        %v806 = vunpack.c.l.b16 %v753
        %v807 = vunpack.c.h.b16 %v753
        %v808 = vunpack.c.l.b16 %v754
        %v809 = vunpack.c.h.b16 %v754
        %v810 = vunpack.c.l.b16 %v755
        %v811 = vunpack.c.h.b16 %v755
        %v812 = vunpack.c.l.b16 %v756
        %v813 = vunpack.c.h.b16 %v756
        %v814 = vunpack.c.l.b16 %v757
        %v815 = vunpack.c.h.b16 %v757
        %v816 = vunpack.c.l.b16 %v758
        %v817 = vunpack.c.h.b16 %v758
        %v818 = vunpack.c.l.b16 %v759
        %v819 = vunpack.c.h.b16 %v759
        %v820 = vunpack.c.l.b16 %v760
        %v821 = vunpack.c.h.b16 %v760
        %v822 = vunpack.c.l.b16 %v761
        %v823 = vunpack.c.h.b16 %v761
        %v824 = vunpack.c.l.b16 %v762
        %v825 = vunpack.c.h.b16 %v762
        %v826 = vunpack.c.l.b16 %v763
        %v827 = vunpack.c.h.b16 %v763
        %v828 = vunpack.c.l.b16 %v764
        %v829 = vunpack.c.h.b16 %v764
        %v830 = vunpack.c.l.b16 %v765
        %v831 = vunpack.c.h.b16 %v765
        %v832 = vunpack.c.l.b16 %v766
        %v833 = vunpack.c.h.b16 %v766
        %v834 = vunpack.c.l.b16 %v767
        %v835 = vunpack.c.h.b16 %v767
        %v836 = vunpack.c.l.b16 %v768
        %v837 = vunpack.c.h.b16 %v768
        %v838 = vunpack.c.l.b16 %v769
        %v839 = vunpack.c.h.b16 %v769
        %v840 = vunpack.c.l.b16 %v770
        %v841 = vunpack.c.h.b16 %v770
        %v842 = vunpack.c.l.b16 %v771
        %v843 = vunpack.c.h.b16 %v771
        %v844 = vpack.c.b16 %v800, %v796
        %v845 = vpack.c.b16 %v801, %v797
        %v846 = vpack.c.b16 %v802, %v798
        %v847 = vpack.c.b16 %v803, %v799
        %v848 = vpack.c.b16 %v808, %v804
        %v849 = vpack.c.b16 %v809, %v805
        %v850 = vpack.c.b16 %v810, %v806
        %v851 = vpack.c.b16 %v811, %v807
        %v852 = vpack.c.b16 %v816, %v812
        %v853 = vpack.c.b16 %v817, %v813
        %v854 = vpack.c.b16 %v818, %v814
        %v855 = vpack.c.b16 %v819, %v815
        %v856 = vpack.c.b16 %v824, %v820
        %v857 = vpack.c.b16 %v825, %v821
        %v858 = vpack.c.b16 %v826, %v822
        %v859 = vpack.c.b16 %v827, %v823
        %v860 = vpack.c.b16 %v832, %v828
        %v861 = vpack.c.b16 %v833, %v829
        %v862 = vpack.c.b16 %v834, %v830
        %v863 = vpack.c.b16 %v835, %v831
        %v864 = vpack.c.b16 %v840, %v836
        %v865 = vpack.c.b16 %v841, %v837
        %v866 = vpack.c.b16 %v842, %v838
        %v867 = vpack.c.b16 %v843, %v839
        %vm892 = vcmask 785408
        %v894 = vsel %vm892, %v744, 0
        %v897 = vsel %vm892, %v745, 0
        %v900 = vsel %vm892, %v746, 0
        %902 = vmatpush.bf16.msra.mxu0 0
        %903 = vmatpush.bf16.msra.mxu0 0
        %904 = vmatpush.bf16.msra.mxu0 %v864
        %905 = vmatpush.bf16.msra.mxu0 %v860
        %906 = vmatpush.bf16.msra.mxu0 %v856
        %907 = vmatpush.bf16.msra.mxu0 %v852
        %908 = vmatpush.bf16.msra.mxu0 %v848
        %909 = vmatpush.bf16.msra.mxu0 %v844
        %910 = vmatmul.bf16.gmra.mxu0 %v894
        %v911 = vpop.f32.mrf.mxu0
        %v912 = vadd.f32 0.0, %v911
        %v913 = vpop.f32.mrf.mxu0
        %v914 = vadd.f32 0.0, %v913
        %915 = vmatmul.bf16.gmra.mxu0 %v897
        %v916 = vpop.f32.mrf.mxu0
        %v917 = vadd.f32 0.0, %v916
        %v918 = vpop.f32.mrf.mxu0
        %v919 = vadd.f32 0.0, %v918
        %920 = vmatmul.bf16.gmra.mxu0 %v900
        %v921 = vpop.f32.mrf.mxu0
        %v922 = vadd.f32 0.0, %v921
        %v923 = vpop.f32.mrf.mxu0
        %924 = vdwg.mxu0
        %925 = vmatpush.bf16.msra.mxu0 0
        %926 = vmatpush.bf16.msra.mxu0 0
        %927 = vmatpush.bf16.msra.mxu0 %v865
        %928 = vmatpush.bf16.msra.mxu0 %v861
        %929 = vmatpush.bf16.msra.mxu0 %v857
        %930 = vmatpush.bf16.msra.mxu0 %v853
        %931 = vmatpush.bf16.msra.mxu0 %v849
        %932 = vmatpush.bf16.msra.mxu0 %v845
        %933 = vmatmul.bf16.gmra.mxu0 %v894
        %v934 = vpop.f32.mrf.mxu0
        %v935 = vadd.f32 0.0, %v934
        %v936 = vpop.f32.mrf.mxu0
        %v937 = vadd.f32 0.0, %v936
        %938 = vmatmul.bf16.gmra.mxu0 %v897
        %v939 = vpop.f32.mrf.mxu0
        %v940 = vadd.f32 0.0, %v939
        %v941 = vpop.f32.mrf.mxu0
        %v942 = vadd.f32 0.0, %v941
        %943 = vmatmul.bf16.gmra.mxu0 %v900
        %v944 = vpop.f32.mrf.mxu0
        %v945 = vadd.f32 0.0, %v944
        %v946 = vpop.f32.mrf.mxu0
        %947 = vdwg.mxu0
        %948 = vmatpush.bf16.msra.mxu0 0
        %949 = vmatpush.bf16.msra.mxu0 0
        %950 = vmatpush.bf16.msra.mxu0 %v866
        %951 = vmatpush.bf16.msra.mxu0 %v862
        %952 = vmatpush.bf16.msra.mxu0 %v858
        %953 = vmatpush.bf16.msra.mxu0 %v854
        %954 = vmatpush.bf16.msra.mxu0 %v850
        %955 = vmatpush.bf16.msra.mxu0 %v846
        %956 = vmatmul.bf16.gmra.mxu0 %v894
        %v957 = vpop.f32.mrf.mxu0
        %v958 = vadd.f32 0.0, %v957
        %v959 = vpop.f32.mrf.mxu0
        %v960 = vadd.f32 0.0, %v959
        %961 = vmatmul.bf16.gmra.mxu0 %v897
        %v962 = vpop.f32.mrf.mxu0
        %v963 = vadd.f32 0.0, %v962
        %v964 = vpop.f32.mrf.mxu0
        %v965 = vadd.f32 0.0, %v964
        %966 = vmatmul.bf16.gmra.mxu0 %v900
        %v967 = vpop.f32.mrf.mxu0
        %v968 = vadd.f32 0.0, %v967
        %v969 = vpop.f32.mrf.mxu0
        %970 = vdwg.mxu0
        %971 = vmatpush.bf16.msra.mxu0 0
        %972 = vmatpush.bf16.msra.mxu0 0
        %973 = vmatpush.bf16.msra.mxu0 %v867
        %974 = vmatpush.bf16.msra.mxu0 %v863
        %975 = vmatpush.bf16.msra.mxu0 %v859
        %976 = vmatpush.bf16.msra.mxu0 %v855
        %977 = vmatpush.bf16.msra.mxu0 %v851
        %978 = vmatpush.bf16.msra.mxu0 %v847
        %979 = vmatmul.bf16.gmra.mxu0 %v894
        %v980 = vpop.f32.mrf.mxu0
        %v981 = vadd.f32 0.0, %v980
        %v982 = vpop.f32.mrf.mxu0
        %v983 = vadd.f32 0.0, %v982
        %984 = vmatmul.bf16.gmra.mxu0 %v897
        %v985 = vpop.f32.mrf.mxu0
        %v986 = vadd.f32 0.0, %v985
        %v987 = vpop.f32.mrf.mxu0
        %v988 = vadd.f32 0.0, %v987
        %989 = vmatmul.bf16.gmra.mxu0 %v900
        %v990 = vpop.f32.mrf.mxu0
        %v991 = vadd.f32 0.0, %v990
        %v992 = vpop.f32.mrf.mxu0
        %993 = vdwg.mxu0
        %v1018 = vunpack.c.l.b16 %v698
        %v1019 = vunpack.c.h.b16 %v698
        %v1020 = vunpack.c.l.b16 %v699
        %v1021 = vunpack.c.h.b16 %v699
        %v1022 = vunpack.c.l.b16 %v700
        %v1023 = vunpack.c.h.b16 %v700
        %v1024 = vunpack.c.l.b16 %v701
        %v1025 = vunpack.c.h.b16 %v701
        %v1026 = vunpack.c.l.b16 %v702
        %v1027 = vunpack.c.h.b16 %v702
        %v1028 = vunpack.c.l.b16 %v703
        %v1029 = vunpack.c.h.b16 %v703
        %v1030 = vunpack.c.l.b16 %v704
        %v1031 = vunpack.c.h.b16 %v704
        %v1032 = vunpack.c.l.b16 %v705
        %v1033 = vunpack.c.h.b16 %v705
        %v1034 = vunpack.c.l.b16 %v706
        %v1035 = vunpack.c.h.b16 %v706
        %v1036 = vunpack.c.l.b16 %v707
        %v1037 = vunpack.c.h.b16 %v707
        %v1038 = vunpack.c.l.b16 %v708
        %v1039 = vunpack.c.h.b16 %v708
        %v1040 = vunpack.c.l.b16 %v709
        %v1041 = vunpack.c.h.b16 %v709
        %v1042 = vunpack.c.l.b16 %v710
        %v1043 = vunpack.c.h.b16 %v710
        %v1044 = vunpack.c.l.b16 %v711
        %v1045 = vunpack.c.h.b16 %v711
        %v1046 = vunpack.c.l.b16 %v712
        %v1047 = vunpack.c.h.b16 %v712
        %v1048 = vunpack.c.l.b16 %v713
        %v1049 = vunpack.c.h.b16 %v713
        %v1050 = vunpack.c.l.b16 %v714
        %v1051 = vunpack.c.h.b16 %v714
        %v1052 = vunpack.c.l.b16 %v715
        %v1053 = vunpack.c.h.b16 %v715
        %v1054 = vunpack.c.l.b16 %v716
        %v1055 = vunpack.c.h.b16 %v716
        %v1056 = vunpack.c.l.b16 %v717
        %v1057 = vunpack.c.h.b16 %v717
        %v1058 = vunpack.c.l.b16 %v718
        %v1059 = vunpack.c.h.b16 %v718
        %v1060 = vunpack.c.l.b16 %v719
        %v1061 = vunpack.c.h.b16 %v719
        %v1062 = vunpack.c.l.b16 %v720
        %v1063 = vunpack.c.h.b16 %v720
        %v1064 = vunpack.c.l.b16 %v721
        %v1065 = vunpack.c.h.b16 %v721
        %v1066 = vpack.c.b16 %v1022, %v1018
        %v1067 = vpack.c.b16 %v1023, %v1019
        %v1068 = vpack.c.b16 %v1024, %v1020
        %v1069 = vpack.c.b16 %v1025, %v1021
        %v1070 = vpack.c.b16 %v1030, %v1026
        %v1071 = vpack.c.b16 %v1031, %v1027
        %v1072 = vpack.c.b16 %v1032, %v1028
        %v1073 = vpack.c.b16 %v1033, %v1029
        %v1074 = vpack.c.b16 %v1038, %v1034
        %v1075 = vpack.c.b16 %v1039, %v1035
        %v1076 = vpack.c.b16 %v1040, %v1036
        %v1077 = vpack.c.b16 %v1041, %v1037
        %v1078 = vpack.c.b16 %v1046, %v1042
        %v1079 = vpack.c.b16 %v1047, %v1043
        %v1080 = vpack.c.b16 %v1048, %v1044
        %v1081 = vpack.c.b16 %v1049, %v1045
        %v1082 = vpack.c.b16 %v1054, %v1050
        %v1083 = vpack.c.b16 %v1055, %v1051
        %v1084 = vpack.c.b16 %v1056, %v1052
        %v1085 = vpack.c.b16 %v1057, %v1053
        %v1086 = vpack.c.b16 %v1062, %v1058
        %v1087 = vpack.c.b16 %v1063, %v1059
        %v1088 = vpack.c.b16 %v1064, %v1060
        %v1089 = vpack.c.b16 %v1065, %v1061
        %v1115 = vsel %vm892, %v695, 0
        %v1118 = vsel %vm892, %v696, 0
        %v1121 = vsel %vm892, %v697, 0
        %1123 = vmatpush.bf16.msra.mxu0 0
        %1124 = vmatpush.bf16.msra.mxu0 0
        %1125 = vmatpush.bf16.msra.mxu0 %v1086
        %1126 = vmatpush.bf16.msra.mxu0 %v1082
        %1127 = vmatpush.bf16.msra.mxu0 %v1078
        %1128 = vmatpush.bf16.msra.mxu0 %v1074
        %1129 = vmatpush.bf16.msra.mxu0 %v1070
        %1130 = vmatpush.bf16.msra.mxu0 %v1066
        %1131 = vmatmul.bf16.gmra.mxu0 %v1115
        %v1132 = vpop.f32.mrf.mxu0
        %v1133 = vadd.f32 %v912, %v1132
        %v1134 = vpop.f32.mrf.mxu0
        %v1135 = vadd.f32 %v914, %v1134
        %1136 = vmatmul.bf16.gmra.mxu0 %v1118
        %v1137 = vpop.f32.mrf.mxu0
        %v1138 = vadd.f32 %v917, %v1137
        %v1139 = vpop.f32.mrf.mxu0
        %v1140 = vadd.f32 %v919, %v1139
        %1141 = vmatmul.bf16.gmra.mxu0 %v1121
        %v1142 = vpop.f32.mrf.mxu0
        %v1143 = vadd.f32 %v922, %v1142
        %v1144 = vpop.f32.mrf.mxu0
        %1145 = vdwg.mxu0
        %1146 = vmatpush.bf16.msra.mxu0 0
        %1147 = vmatpush.bf16.msra.mxu0 0
        %1148 = vmatpush.bf16.msra.mxu0 %v1087
        %1149 = vmatpush.bf16.msra.mxu0 %v1083
        %1150 = vmatpush.bf16.msra.mxu0 %v1079
        %1151 = vmatpush.bf16.msra.mxu0 %v1075
        %1152 = vmatpush.bf16.msra.mxu0 %v1071
        %1153 = vmatpush.bf16.msra.mxu0 %v1067
        %1154 = vmatmul.bf16.gmra.mxu0 %v1115
        %v1155 = vpop.f32.mrf.mxu0
        %v1156 = vadd.f32 %v935, %v1155
        %v1157 = vpop.f32.mrf.mxu0
        %v1158 = vadd.f32 %v937, %v1157
        %1159 = vmatmul.bf16.gmra.mxu0 %v1118
        %v1160 = vpop.f32.mrf.mxu0
        %v1161 = vadd.f32 %v940, %v1160
        %v1162 = vpop.f32.mrf.mxu0
        %v1163 = vadd.f32 %v942, %v1162
        %1164 = vmatmul.bf16.gmra.mxu0 %v1121
        %v1165 = vpop.f32.mrf.mxu0
        %v1166 = vadd.f32 %v945, %v1165
        %v1167 = vpop.f32.mrf.mxu0
        %1168 = vdwg.mxu0
        %1169 = vmatpush.bf16.msra.mxu0 0
        %1170 = vmatpush.bf16.msra.mxu0 0
        %1171 = vmatpush.bf16.msra.mxu0 %v1088
        %1172 = vmatpush.bf16.msra.mxu0 %v1084
        %1173 = vmatpush.bf16.msra.mxu0 %v1080
        %1174 = vmatpush.bf16.msra.mxu0 %v1076
        %1175 = vmatpush.bf16.msra.mxu0 %v1072
        %1176 = vmatpush.bf16.msra.mxu0 %v1068
        %1177 = vmatmul.bf16.gmra.mxu0 %v1115
        %v1178 = vpop.f32.mrf.mxu0
        %v1179 = vadd.f32 %v958, %v1178
        %v1180 = vpop.f32.mrf.mxu0
        %v1181 = vadd.f32 %v960, %v1180
        %1182 = vmatmul.bf16.gmra.mxu0 %v1118
        %v1183 = vpop.f32.mrf.mxu0
        %v1184 = vadd.f32 %v963, %v1183
        %v1185 = vpop.f32.mrf.mxu0
        %v1186 = vadd.f32 %v965, %v1185
        %1187 = vmatmul.bf16.gmra.mxu0 %v1121
        %v1188 = vpop.f32.mrf.mxu0
        %v1189 = vadd.f32 %v968, %v1188
        %v1190 = vpop.f32.mrf.mxu0
        %1191 = vdwg.mxu0
        %1192 = vmatpush.bf16.msra.mxu0 0
        %1193 = vmatpush.bf16.msra.mxu0 0
        %1194 = vmatpush.bf16.msra.mxu0 %v1089
        %1195 = vmatpush.bf16.msra.mxu0 %v1085
        %1196 = vmatpush.bf16.msra.mxu0 %v1081
        %1197 = vmatpush.bf16.msra.mxu0 %v1077
        %1198 = vmatpush.bf16.msra.mxu0 %v1073
        %1199 = vmatpush.bf16.msra.mxu0 %v1069
        %1200 = vmatmul.bf16.gmra.mxu0 %v1115
        %v1201 = vpop.f32.mrf.mxu0
        %v1202 = vadd.f32 %v981, %v1201
        %v1203 = vpop.f32.mrf.mxu0
        %v1204 = vadd.f32 %v983, %v1203
        %1205 = vmatmul.bf16.gmra.mxu0 %v1118
        %v1206 = vpop.f32.mrf.mxu0
        %v1207 = vadd.f32 %v986, %v1206
        %v1208 = vpop.f32.mrf.mxu0
        %v1209 = vadd.f32 %v988, %v1208
        %1210 = vmatmul.bf16.gmra.mxu0 %v1121
        %v1211 = vpop.f32.mrf.mxu0
        %v1212 = vadd.f32 %v991, %v1211
        %v1213 = vpop.f32.mrf.mxu0
        %1214 = vdwg.mxu0
        %vm1215 = vcmask 1045504
        %v1216 = vrot.slane %v690, 2
        %v1217 = vrot.slane %v691, 2
        %v1218 = vsel %vm1215, %v1216, %v1217
        %v1219 = vrot.slane %v692, 2
        %v1220 = vsel %vm1215, %v1217, %v1219
        %v1221 = vrot.slane %v693, 2
        %v1222 = vsel %vm1215, %v1219, %v1221
        %v1223 = vrot.slane %v694, 2
        %v1224 = vsel %vm1215, %v1221, %v1223
        %v1231 = vsel %vm1215, %v1223, %v1216
        %v1232 = vpack.c.bf16 %v1220, %v1218
        %v1233 = vpack.c.bf16 %v1224, %v1222
        %v1234 = vpack.c.bf16 %v1231, %v1231
        %s1235 = scalar_lea.vmem %s1, 384
        %v1236 = vld [vmem:[%s1235] sm:$0xff]
        %v1237 = vld [vmem:[%s1235 + $0x8] sm:$0xff]
        %v1238 = vld [vmem:[%s1235 + $0x10] sm:$0xff]
        %v1239 = vld [vmem:[%s1235 + $0x18] sm:$0xff]
        %v1240 = vld [vmem:[%s1235 + $0x20] sm:$0xff]
        %v1241 = vld [vmem:[%s1235 + $0x28] sm:$0xff]
        %v1242 = vld [vmem:[%s1235 + $0x30] sm:$0xff]
        %v1243 = vld [vmem:[%s1235 + $0x38] sm:$0xff]
        %v1244 = vld [vmem:[%s1235 + $0x40] sm:$0xff]
        %v1245 = vld [vmem:[%s1235 + $0x48] sm:$0xff]
        %v1246 = vld [vmem:[%s1235 + $0x50] sm:$0xff]
        %v1247 = vld [vmem:[%s1235 + $0x58] sm:$0xff]
        %v1248 = vld [vmem:[%s1235 + $0x60] sm:$0xff]
        %v1249 = vld [vmem:[%s1235 + $0x68] sm:$0xff]
        %v1250 = vld [vmem:[%s1235 + $0x70] sm:$0xff]
        %v1251 = vld [vmem:[%s1235 + $0x78] sm:$0xff]
        %v1252 = vld [vmem:[%s1235 + $0x80] sm:$0xff]
        %v1253 = vld [vmem:[%s1235 + $0x88] sm:$0xff]
        %v1254 = vld [vmem:[%s1235 + $0x90] sm:$0xff]
        %v1255 = vld [vmem:[%s1235 + $0x98] sm:$0xff]
        %v1256 = vld [vmem:[%s1235 + $0xa0] sm:$0xff]
        %v1257 = vld [vmem:[%s1235 + $0xa8] sm:$0xff]
        %v1258 = vld [vmem:[%s1235 + $0xb0] sm:$0xff]
        %v1259 = vld [vmem:[%s1235 + $0xb8] sm:$0xff]
        %v1284 = vunpack.c.l.b16 %v1236
        %v1285 = vunpack.c.h.b16 %v1236
        %v1286 = vunpack.c.l.b16 %v1237
        %v1287 = vunpack.c.h.b16 %v1237
        %v1288 = vunpack.c.l.b16 %v1238
        %v1289 = vunpack.c.h.b16 %v1238
        %v1290 = vunpack.c.l.b16 %v1239
        %v1291 = vunpack.c.h.b16 %v1239
        %v1292 = vunpack.c.l.b16 %v1240
        %v1293 = vunpack.c.h.b16 %v1240
        %v1294 = vunpack.c.l.b16 %v1241
        %v1295 = vunpack.c.h.b16 %v1241
        %v1296 = vunpack.c.l.b16 %v1242
        %v1297 = vunpack.c.h.b16 %v1242
        %v1298 = vunpack.c.l.b16 %v1243
        %v1299 = vunpack.c.h.b16 %v1243
        %v1300 = vunpack.c.l.b16 %v1244
        %v1301 = vunpack.c.h.b16 %v1244
        %v1302 = vunpack.c.l.b16 %v1245
        %v1303 = vunpack.c.h.b16 %v1245
        %v1304 = vunpack.c.l.b16 %v1246
        %v1305 = vunpack.c.h.b16 %v1246
        %v1306 = vunpack.c.l.b16 %v1247
        %v1307 = vunpack.c.h.b16 %v1247
        %v1308 = vunpack.c.l.b16 %v1248
        %v1309 = vunpack.c.h.b16 %v1248
        %v1310 = vunpack.c.l.b16 %v1249
        %v1311 = vunpack.c.h.b16 %v1249
        %v1312 = vunpack.c.l.b16 %v1250
        %v1313 = vunpack.c.h.b16 %v1250
        %v1314 = vunpack.c.l.b16 %v1251
        %v1315 = vunpack.c.h.b16 %v1251
        %v1316 = vunpack.c.l.b16 %v1252
        %v1317 = vunpack.c.h.b16 %v1252
        %v1318 = vunpack.c.l.b16 %v1253
        %v1319 = vunpack.c.h.b16 %v1253
        %v1320 = vunpack.c.l.b16 %v1254
        %v1321 = vunpack.c.h.b16 %v1254
        %v1322 = vunpack.c.l.b16 %v1255
        %v1323 = vunpack.c.h.b16 %v1255
        %v1324 = vunpack.c.l.b16 %v1256
        %v1325 = vunpack.c.h.b16 %v1256
        %v1326 = vunpack.c.l.b16 %v1257
        %v1327 = vunpack.c.h.b16 %v1257
        %v1328 = vunpack.c.l.b16 %v1258
        %v1329 = vunpack.c.h.b16 %v1258
        %v1330 = vunpack.c.l.b16 %v1259
        %v1331 = vunpack.c.h.b16 %v1259
        %v1332 = vpack.c.b16 %v1288, %v1284
        %v1333 = vpack.c.b16 %v1289, %v1285
        %v1334 = vpack.c.b16 %v1290, %v1286
        %v1335 = vpack.c.b16 %v1291, %v1287
        %v1336 = vpack.c.b16 %v1296, %v1292
        %v1337 = vpack.c.b16 %v1297, %v1293
        %v1338 = vpack.c.b16 %v1298, %v1294
        %v1339 = vpack.c.b16 %v1299, %v1295
        %v1340 = vpack.c.b16 %v1304, %v1300
        %v1341 = vpack.c.b16 %v1305, %v1301
        %v1342 = vpack.c.b16 %v1306, %v1302
        %v1343 = vpack.c.b16 %v1307, %v1303
        %v1344 = vpack.c.b16 %v1312, %v1308
        %v1345 = vpack.c.b16 %v1313, %v1309
        %v1346 = vpack.c.b16 %v1314, %v1310
        %v1347 = vpack.c.b16 %v1315, %v1311
        %v1348 = vpack.c.b16 %v1320, %v1316
        %v1349 = vpack.c.b16 %v1321, %v1317
        %v1350 = vpack.c.b16 %v1322, %v1318
        %v1351 = vpack.c.b16 %v1323, %v1319
        %v1352 = vpack.c.b16 %v1328, %v1324
        %v1353 = vpack.c.b16 %v1329, %v1325
        %v1354 = vpack.c.b16 %v1330, %v1326
        %v1355 = vpack.c.b16 %v1331, %v1327
        %v1381 = vsel %vm892, %v1232, 0
        %v1384 = vsel %vm892, %v1233, 0
        %v1387 = vsel %vm892, %v1234, 0
        %1389 = vmatpush.bf16.msra.mxu0 0
        %1390 = vmatpush.bf16.msra.mxu0 0
        %1391 = vmatpush.bf16.msra.mxu0 %v1352
        %1392 = vmatpush.bf16.msra.mxu0 %v1348
        %1393 = vmatpush.bf16.msra.mxu0 %v1344
        %1394 = vmatpush.bf16.msra.mxu0 %v1340
        %1395 = vmatpush.bf16.msra.mxu0 %v1336
        %1396 = vmatpush.bf16.msra.mxu0 %v1332
        %1397 = vmatmul.bf16.gmra.mxu0 %v1381
        %v1398 = vpop.f32.mrf.mxu0
        %v1399 = vadd.f32 0.0, %v1398
        %v1400 = vpop.f32.mrf.mxu0
        %v1401 = vadd.f32 0.0, %v1400
        %1402 = vmatmul.bf16.gmra.mxu0 %v1384
        %v1403 = vpop.f32.mrf.mxu0
        %v1404 = vadd.f32 0.0, %v1403
        %v1405 = vpop.f32.mrf.mxu0
        %v1406 = vadd.f32 0.0, %v1405
        %1407 = vmatmul.bf16.gmra.mxu0 %v1387
        %v1408 = vpop.f32.mrf.mxu0
        %v1409 = vadd.f32 0.0, %v1408
        %v1410 = vpop.f32.mrf.mxu0
        %1411 = vdwg.mxu0
        %1412 = vmatpush.bf16.msra.mxu0 0
        %1413 = vmatpush.bf16.msra.mxu0 0
        %1414 = vmatpush.bf16.msra.mxu0 %v1353
        %1415 = vmatpush.bf16.msra.mxu0 %v1349
        %1416 = vmatpush.bf16.msra.mxu0 %v1345
        %1417 = vmatpush.bf16.msra.mxu0 %v1341
        %1418 = vmatpush.bf16.msra.mxu0 %v1337
        %1419 = vmatpush.bf16.msra.mxu0 %v1333
        %1420 = vmatmul.bf16.gmra.mxu0 %v1381
        %v1421 = vpop.f32.mrf.mxu0
        %v1422 = vadd.f32 0.0, %v1421
        %v1423 = vpop.f32.mrf.mxu0
        %v1424 = vadd.f32 0.0, %v1423
        %1425 = vmatmul.bf16.gmra.mxu0 %v1384
        %v1426 = vpop.f32.mrf.mxu0
        %v1427 = vadd.f32 0.0, %v1426
        %v1428 = vpop.f32.mrf.mxu0
        %v1429 = vadd.f32 0.0, %v1428
        %1430 = vmatmul.bf16.gmra.mxu0 %v1387
        %v1431 = vpop.f32.mrf.mxu0
        %v1432 = vadd.f32 0.0, %v1431
        %v1433 = vpop.f32.mrf.mxu0
        %1434 = vdwg.mxu0
        %1435 = vmatpush.bf16.msra.mxu0 0
        %1436 = vmatpush.bf16.msra.mxu0 0
        %1437 = vmatpush.bf16.msra.mxu0 %v1354
        %1438 = vmatpush.bf16.msra.mxu0 %v1350
        %1439 = vmatpush.bf16.msra.mxu0 %v1346
        %1440 = vmatpush.bf16.msra.mxu0 %v1342
        %1441 = vmatpush.bf16.msra.mxu0 %v1338
        %1442 = vmatpush.bf16.msra.mxu0 %v1334
        %1443 = vmatmul.bf16.gmra.mxu0 %v1381
        %v1444 = vpop.f32.mrf.mxu0
        %v1445 = vadd.f32 0.0, %v1444
        %v1446 = vpop.f32.mrf.mxu0
        %v1447 = vadd.f32 0.0, %v1446
        %1448 = vmatmul.bf16.gmra.mxu0 %v1384
        %v1449 = vpop.f32.mrf.mxu0
        %v1450 = vadd.f32 0.0, %v1449
        %v1451 = vpop.f32.mrf.mxu0
        %v1452 = vadd.f32 0.0, %v1451
        %1453 = vmatmul.bf16.gmra.mxu0 %v1387
        %v1454 = vpop.f32.mrf.mxu0
        %v1455 = vadd.f32 0.0, %v1454
        %v1456 = vpop.f32.mrf.mxu0
        %1457 = vdwg.mxu0
        %1458 = vmatpush.bf16.msra.mxu0 0
        %1459 = vmatpush.bf16.msra.mxu0 0
        %1460 = vmatpush.bf16.msra.mxu0 %v1355
        %1461 = vmatpush.bf16.msra.mxu0 %v1351
        %1462 = vmatpush.bf16.msra.mxu0 %v1347
        %1463 = vmatpush.bf16.msra.mxu0 %v1343
        %1464 = vmatpush.bf16.msra.mxu0 %v1339
        %1465 = vmatpush.bf16.msra.mxu0 %v1335
        %1466 = vmatmul.bf16.gmra.mxu0 %v1381
        %v1467 = vpop.f32.mrf.mxu0
        %v1468 = vadd.f32 0.0, %v1467
        %v1469 = vpop.f32.mrf.mxu0
        %v1470 = vadd.f32 0.0, %v1469
        %1471 = vmatmul.bf16.gmra.mxu0 %v1384
        %v1472 = vpop.f32.mrf.mxu0
        %v1473 = vadd.f32 0.0, %v1472
        %v1474 = vpop.f32.mrf.mxu0
        %v1475 = vadd.f32 0.0, %v1474
        %1476 = vmatmul.bf16.gmra.mxu0 %v1387
        %v1477 = vpop.f32.mrf.mxu0
        %v1478 = vadd.f32 0.0, %v1477
        %v1479 = vpop.f32.mrf.mxu0
        %1480 = vdwg.mxu0
        %v1481 = vadd.f32 %v1133, %v1399
        %v1482 = vadd.f32 %v1156, %v1422
        %v1483 = vadd.f32 %v1179, %v1445
        %v1484 = vadd.f32 %v1202, %v1468
        %v1485 = vadd.f32 %v1135, %v1401
        %v1486 = vadd.f32 %v1158, %v1424
        %v1487 = vadd.f32 %v1181, %v1447
        %v1488 = vadd.f32 %v1204, %v1470
        %v1489 = vadd.f32 %v1138, %v1404
        %v1490 = vadd.f32 %v1161, %v1427
        %v1491 = vadd.f32 %v1184, %v1450
        %v1492 = vadd.f32 %v1207, %v1473
        %v1493 = vadd.f32 %v1140, %v1406
        %v1494 = vadd.f32 %v1163, %v1429
        %v1495 = vadd.f32 %v1186, %v1452
        %v1496 = vadd.f32 %v1209, %v1475
        %v1497 = vadd.f32 %v1143, %v1409
        %v1498 = vadd.f32 %v1166, %v1432
        %v1499 = vadd.f32 %v1189, %v1455
        %v1500 = vadd.f32 %v1212, %v1478
        %vm1501 = vcmask 1044480
        %v1502 = vrot.slane %v690, 3
        %v1503 = vrot.slane %v691, 3
        %v1504 = vsel %vm1501, %v1502, %v1503
        %v1505 = vrot.slane %v692, 3
        %v1506 = vsel %vm1501, %v1503, %v1505
        %v1507 = vrot.slane %v693, 3
        %v1508 = vsel %vm1501, %v1505, %v1507
        %v1509 = vrot.slane %v694, 3
        %v1510 = vsel %vm1501, %v1507, %v1509
        %v1517 = vsel %vm1501, %v1509, %v1502
        %v1518 = vpack.c.bf16 %v1506, %v1504
        %v1519 = vpack.c.bf16 %v1510, %v1508
        %v1520 = vpack.c.bf16 %v1517, %v1517
        %s1521 = scalar_lea.vmem %s1, 576
        %v1522 = vld [vmem:[%s1521] sm:$0xff]
        %v1523 = vld [vmem:[%s1521 + $0x8] sm:$0xff]
        %v1524 = vld [vmem:[%s1521 + $0x10] sm:$0xff]
        %v1525 = vld [vmem:[%s1521 + $0x18] sm:$0xff]
        %v1526 = vld [vmem:[%s1521 + $0x20] sm:$0xff]
        %v1527 = vld [vmem:[%s1521 + $0x28] sm:$0xff]
        %v1528 = vld [vmem:[%s1521 + $0x30] sm:$0xff]
        %v1529 = vld [vmem:[%s1521 + $0x38] sm:$0xff]
        %v1530 = vld [vmem:[%s1521 + $0x40] sm:$0xff]
        %v1531 = vld [vmem:[%s1521 + $0x48] sm:$0xff]
        %v1532 = vld [vmem:[%s1521 + $0x50] sm:$0xff]
        %v1533 = vld [vmem:[%s1521 + $0x58] sm:$0xff]
        %v1534 = vld [vmem:[%s1521 + $0x60] sm:$0xff]
        %v1535 = vld [vmem:[%s1521 + $0x68] sm:$0xff]
        %v1536 = vld [vmem:[%s1521 + $0x70] sm:$0xff]
        %v1537 = vld [vmem:[%s1521 + $0x78] sm:$0xff]
        %v1538 = vld [vmem:[%s1521 + $0x80] sm:$0xff]
        %v1539 = vld [vmem:[%s1521 + $0x88] sm:$0xff]
        %v1540 = vld [vmem:[%s1521 + $0x90] sm:$0xff]
        %v1541 = vld [vmem:[%s1521 + $0x98] sm:$0xff]
        %v1542 = vld [vmem:[%s1521 + $0xa0] sm:$0xff]
        %v1543 = vld [vmem:[%s1521 + $0xa8] sm:$0xff]
        %v1544 = vld [vmem:[%s1521 + $0xb0] sm:$0xff]
        %v1545 = vld [vmem:[%s1521 + $0xb8] sm:$0xff]
        %v1570 = vunpack.c.l.b16 %v1522
        %v1571 = vunpack.c.h.b16 %v1522
        %v1572 = vunpack.c.l.b16 %v1523
        %v1573 = vunpack.c.h.b16 %v1523
        %v1574 = vunpack.c.l.b16 %v1524
        %v1575 = vunpack.c.h.b16 %v1524
        %v1576 = vunpack.c.l.b16 %v1525
        %v1577 = vunpack.c.h.b16 %v1525
        %v1578 = vunpack.c.l.b16 %v1526
        %v1579 = vunpack.c.h.b16 %v1526
        %v1580 = vunpack.c.l.b16 %v1527
        %v1581 = vunpack.c.h.b16 %v1527
        %v1582 = vunpack.c.l.b16 %v1528
        %v1583 = vunpack.c.h.b16 %v1528
        %v1584 = vunpack.c.l.b16 %v1529
        %v1585 = vunpack.c.h.b16 %v1529
        %v1586 = vunpack.c.l.b16 %v1530
        %v1587 = vunpack.c.h.b16 %v1530
        %v1588 = vunpack.c.l.b16 %v1531
        %v1589 = vunpack.c.h.b16 %v1531
        %v1590 = vunpack.c.l.b16 %v1532
        %v1591 = vunpack.c.h.b16 %v1532
        %v1592 = vunpack.c.l.b16 %v1533
        %v1593 = vunpack.c.h.b16 %v1533
        %v1594 = vunpack.c.l.b16 %v1534
        %v1595 = vunpack.c.h.b16 %v1534
        %v1596 = vunpack.c.l.b16 %v1535
        %v1597 = vunpack.c.h.b16 %v1535
        %v1598 = vunpack.c.l.b16 %v1536
        %v1599 = vunpack.c.h.b16 %v1536
        %v1600 = vunpack.c.l.b16 %v1537
        %v1601 = vunpack.c.h.b16 %v1537
        %v1602 = vunpack.c.l.b16 %v1538
        %v1603 = vunpack.c.h.b16 %v1538
        %v1604 = vunpack.c.l.b16 %v1539
        %v1605 = vunpack.c.h.b16 %v1539
        %v1606 = vunpack.c.l.b16 %v1540
        %v1607 = vunpack.c.h.b16 %v1540
        %v1608 = vunpack.c.l.b16 %v1541
        %v1609 = vunpack.c.h.b16 %v1541
        %v1610 = vunpack.c.l.b16 %v1542
        %v1611 = vunpack.c.h.b16 %v1542
        %v1612 = vunpack.c.l.b16 %v1543
        %v1613 = vunpack.c.h.b16 %v1543
        %v1614 = vunpack.c.l.b16 %v1544
        %v1615 = vunpack.c.h.b16 %v1544
        %v1616 = vunpack.c.l.b16 %v1545
        %v1617 = vunpack.c.h.b16 %v1545
        %v1618 = vpack.c.b16 %v1574, %v1570
        %v1619 = vpack.c.b16 %v1575, %v1571
        %v1620 = vpack.c.b16 %v1576, %v1572
        %v1621 = vpack.c.b16 %v1577, %v1573
        %v1622 = vpack.c.b16 %v1582, %v1578
        %v1623 = vpack.c.b16 %v1583, %v1579
        %v1624 = vpack.c.b16 %v1584, %v1580
        %v1625 = vpack.c.b16 %v1585, %v1581
        %v1626 = vpack.c.b16 %v1590, %v1586
        %v1627 = vpack.c.b16 %v1591, %v1587
        %v1628 = vpack.c.b16 %v1592, %v1588
        %v1629 = vpack.c.b16 %v1593, %v1589
        %v1630 = vpack.c.b16 %v1598, %v1594
        %v1631 = vpack.c.b16 %v1599, %v1595
        %v1632 = vpack.c.b16 %v1600, %v1596
        %v1633 = vpack.c.b16 %v1601, %v1597
        %v1634 = vpack.c.b16 %v1606, %v1602
        %v1635 = vpack.c.b16 %v1607, %v1603
        %v1636 = vpack.c.b16 %v1608, %v1604
        %v1637 = vpack.c.b16 %v1609, %v1605
        %v1638 = vpack.c.b16 %v1614, %v1610
        %v1639 = vpack.c.b16 %v1615, %v1611
        %v1640 = vpack.c.b16 %v1616, %v1612
        %v1641 = vpack.c.b16 %v1617, %v1613
        %v1667 = vsel %vm892, %v1518, 0
        %v1670 = vsel %vm892, %v1519, 0
        %v1673 = vsel %vm892, %v1520, 0
        %1675 = vmatpush.bf16.msra.mxu0 0
        %1676 = vmatpush.bf16.msra.mxu0 0
        %1677 = vmatpush.bf16.msra.mxu0 %v1638
        %1678 = vmatpush.bf16.msra.mxu0 %v1634
        %1679 = vmatpush.bf16.msra.mxu0 %v1630
        %1680 = vmatpush.bf16.msra.mxu0 %v1626
        %1681 = vmatpush.bf16.msra.mxu0 %v1622
        %1682 = vmatpush.bf16.msra.mxu0 %v1618
        %1683 = vmatmul.bf16.gmra.mxu0 %v1667
        %v1684 = vpop.f32.mrf.mxu0
        %v1685 = vadd.f32 0.0, %v1684
        %v1686 = vpop.f32.mrf.mxu0
        %v1687 = vadd.f32 0.0, %v1686
        %1688 = vmatmul.bf16.gmra.mxu0 %v1670
        %v1689 = vpop.f32.mrf.mxu0
        %v1690 = vadd.f32 0.0, %v1689
        %v1691 = vpop.f32.mrf.mxu0
        %v1692 = vadd.f32 0.0, %v1691
        %1693 = vmatmul.bf16.gmra.mxu0 %v1673
        %v1694 = vpop.f32.mrf.mxu0
        %v1695 = vadd.f32 0.0, %v1694
        %v1696 = vpop.f32.mrf.mxu0
        %1697 = vdwg.mxu0
        %1698 = vmatpush.bf16.msra.mxu0 0
        %1699 = vmatpush.bf16.msra.mxu0 0
        %1700 = vmatpush.bf16.msra.mxu0 %v1639
        %1701 = vmatpush.bf16.msra.mxu0 %v1635
        %1702 = vmatpush.bf16.msra.mxu0 %v1631
        %1703 = vmatpush.bf16.msra.mxu0 %v1627
        %1704 = vmatpush.bf16.msra.mxu0 %v1623
        %1705 = vmatpush.bf16.msra.mxu0 %v1619
        %1706 = vmatmul.bf16.gmra.mxu0 %v1667
        %v1707 = vpop.f32.mrf.mxu0
        %v1708 = vadd.f32 0.0, %v1707
        %v1709 = vpop.f32.mrf.mxu0
        %v1710 = vadd.f32 0.0, %v1709
        %1711 = vmatmul.bf16.gmra.mxu0 %v1670
        %v1712 = vpop.f32.mrf.mxu0
        %v1713 = vadd.f32 0.0, %v1712
        %v1714 = vpop.f32.mrf.mxu0
        %v1715 = vadd.f32 0.0, %v1714
        %1716 = vmatmul.bf16.gmra.mxu0 %v1673
        %v1717 = vpop.f32.mrf.mxu0
        %v1718 = vadd.f32 0.0, %v1717
        %v1719 = vpop.f32.mrf.mxu0
        %1720 = vdwg.mxu0
        %1721 = vmatpush.bf16.msra.mxu0 0
        %1722 = vmatpush.bf16.msra.mxu0 0
        %1723 = vmatpush.bf16.msra.mxu0 %v1640
        %1724 = vmatpush.bf16.msra.mxu0 %v1636
        %1725 = vmatpush.bf16.msra.mxu0 %v1632
        %1726 = vmatpush.bf16.msra.mxu0 %v1628
        %1727 = vmatpush.bf16.msra.mxu0 %v1624
        %1728 = vmatpush.bf16.msra.mxu0 %v1620
        %1729 = vmatmul.bf16.gmra.mxu0 %v1667
        %v1730 = vpop.f32.mrf.mxu0
        %v1731 = vadd.f32 0.0, %v1730
        %v1732 = vpop.f32.mrf.mxu0
        %v1733 = vadd.f32 0.0, %v1732
        %1734 = vmatmul.bf16.gmra.mxu0 %v1670
        %v1735 = vpop.f32.mrf.mxu0
        %v1736 = vadd.f32 0.0, %v1735
        %v1737 = vpop.f32.mrf.mxu0
        %v1738 = vadd.f32 0.0, %v1737
        %1739 = vmatmul.bf16.gmra.mxu0 %v1673
        %v1740 = vpop.f32.mrf.mxu0
        %v1741 = vadd.f32 0.0, %v1740
        %v1742 = vpop.f32.mrf.mxu0
        %1743 = vdwg.mxu0
        %1744 = vmatpush.bf16.msra.mxu0 0
        %1745 = vmatpush.bf16.msra.mxu0 0
        %1746 = vmatpush.bf16.msra.mxu0 %v1641
        %1747 = vmatpush.bf16.msra.mxu0 %v1637
        %1748 = vmatpush.bf16.msra.mxu0 %v1633
        %1749 = vmatpush.bf16.msra.mxu0 %v1629
        %1750 = vmatpush.bf16.msra.mxu0 %v1625
        %1751 = vmatpush.bf16.msra.mxu0 %v1621
        %1752 = vmatmul.bf16.gmra.mxu0 %v1667
        %v1753 = vpop.f32.mrf.mxu0
        %v1754 = vadd.f32 0.0, %v1753
        %v1755 = vpop.f32.mrf.mxu0
        %v1756 = vadd.f32 0.0, %v1755
        %1757 = vmatmul.bf16.gmra.mxu0 %v1670
        %v1758 = vpop.f32.mrf.mxu0
        %v1759 = vadd.f32 0.0, %v1758
        %v1760 = vpop.f32.mrf.mxu0
        %v1761 = vadd.f32 0.0, %v1760
        %1762 = vmatmul.bf16.gmra.mxu0 %v1673
        %v1763 = vpop.f32.mrf.mxu0
        %v1764 = vadd.f32 0.0, %v1763
        %v1765 = vpop.f32.mrf.mxu0
        %1766 = vdwg.mxu0
        %v1767 = vadd.f32 %v1481, %v1685
        %v1768 = vadd.f32 %v1482, %v1708
        %v1769 = vadd.f32 %v1483, %v1731
        %v1770 = vadd.f32 %v1484, %v1754
        %v1771 = vadd.f32 %v1485, %v1687
        %v1772 = vadd.f32 %v1486, %v1710
        %v1773 = vadd.f32 %v1487, %v1733
        %v1774 = vadd.f32 %v1488, %v1756
        %v1775 = vadd.f32 %v1489, %v1690
        %v1776 = vadd.f32 %v1490, %v1713
        %v1777 = vadd.f32 %v1491, %v1736
        %v1778 = vadd.f32 %v1492, %v1759
        %v1779 = vadd.f32 %v1493, %v1692
        %v1780 = vadd.f32 %v1494, %v1715
        %v1781 = vadd.f32 %v1495, %v1738
        %v1782 = vadd.f32 %v1496, %v1761
        %v1783 = vadd.f32 %v1497, %v1695
        %v1784 = vadd.f32 %v1498, %v1718
        %v1785 = vadd.f32 %v1499, %v1741
        %v1786 = vadd.f32 %v1500, %v1764
        %vm1787 = vcmask 1043456
        %v1788 = vrot.slane %v690, 4
        %v1789 = vrot.slane %v691, 4
        %v1790 = vsel %vm1787, %v1788, %v1789
        %v1791 = vrot.slane %v692, 4
        %v1792 = vsel %vm1787, %v1789, %v1791
        %v1793 = vrot.slane %v693, 4
        %v1794 = vsel %vm1787, %v1791, %v1793
        %v1795 = vrot.slane %v694, 4
        %v1796 = vsel %vm1787, %v1793, %v1795
        %v1803 = vsel %vm1787, %v1795, %v1788
        %v1804 = vpack.c.bf16 %v1792, %v1790
        %v1805 = vpack.c.bf16 %v1796, %v1794
        %v1806 = vpack.c.bf16 %v1803, %v1803
        %s1807 = scalar_lea.vmem %s1, 768
        %v1808 = vld [vmem:[%s1807] sm:$0xff]
        %v1809 = vld [vmem:[%s1807 + $0x8] sm:$0xff]
        %v1810 = vld [vmem:[%s1807 + $0x10] sm:$0xff]
        %v1811 = vld [vmem:[%s1807 + $0x18] sm:$0xff]
        %v1812 = vld [vmem:[%s1807 + $0x20] sm:$0xff]
        %v1813 = vld [vmem:[%s1807 + $0x28] sm:$0xff]
        %v1814 = vld [vmem:[%s1807 + $0x30] sm:$0xff]
        %v1815 = vld [vmem:[%s1807 + $0x38] sm:$0xff]
        %v1816 = vld [vmem:[%s1807 + $0x40] sm:$0xff]
        %v1817 = vld [vmem:[%s1807 + $0x48] sm:$0xff]
        %v1818 = vld [vmem:[%s1807 + $0x50] sm:$0xff]
        %v1819 = vld [vmem:[%s1807 + $0x58] sm:$0xff]
        %v1820 = vld [vmem:[%s1807 + $0x60] sm:$0xff]
        %v1821 = vld [vmem:[%s1807 + $0x68] sm:$0xff]
        %v1822 = vld [vmem:[%s1807 + $0x70] sm:$0xff]
        %v1823 = vld [vmem:[%s1807 + $0x78] sm:$0xff]
        %v1824 = vld [vmem:[%s1807 + $0x80] sm:$0xff]
        %v1825 = vld [vmem:[%s1807 + $0x88] sm:$0xff]
        %v1826 = vld [vmem:[%s1807 + $0x90] sm:$0xff]
        %v1827 = vld [vmem:[%s1807 + $0x98] sm:$0xff]
        %v1828 = vld [vmem:[%s1807 + $0xa0] sm:$0xff]
        %v1829 = vld [vmem:[%s1807 + $0xa8] sm:$0xff]
        %v1830 = vld [vmem:[%s1807 + $0xb0] sm:$0xff]
        %v1831 = vld [vmem:[%s1807 + $0xb8] sm:$0xff]
        %v1856 = vunpack.c.l.b16 %v1808
        %v1857 = vunpack.c.h.b16 %v1808
        %v1858 = vunpack.c.l.b16 %v1809
        %v1859 = vunpack.c.h.b16 %v1809
        %v1860 = vunpack.c.l.b16 %v1810
        %v1861 = vunpack.c.h.b16 %v1810
        %v1862 = vunpack.c.l.b16 %v1811
        %v1863 = vunpack.c.h.b16 %v1811
        %v1864 = vunpack.c.l.b16 %v1812
        %v1865 = vunpack.c.h.b16 %v1812
        %v1866 = vunpack.c.l.b16 %v1813
        %v1867 = vunpack.c.h.b16 %v1813
        %v1868 = vunpack.c.l.b16 %v1814
        %v1869 = vunpack.c.h.b16 %v1814
        %v1870 = vunpack.c.l.b16 %v1815
        %v1871 = vunpack.c.h.b16 %v1815
        %v1872 = vunpack.c.l.b16 %v1816
        %v1873 = vunpack.c.h.b16 %v1816
        %v1874 = vunpack.c.l.b16 %v1817
        %v1875 = vunpack.c.h.b16 %v1817
        %v1876 = vunpack.c.l.b16 %v1818
        %v1877 = vunpack.c.h.b16 %v1818
        %v1878 = vunpack.c.l.b16 %v1819
        %v1879 = vunpack.c.h.b16 %v1819
        %v1880 = vunpack.c.l.b16 %v1820
        %v1881 = vunpack.c.h.b16 %v1820
        %v1882 = vunpack.c.l.b16 %v1821
        %v1883 = vunpack.c.h.b16 %v1821
        %v1884 = vunpack.c.l.b16 %v1822
        %v1885 = vunpack.c.h.b16 %v1822
        %v1886 = vunpack.c.l.b16 %v1823
        %v1887 = vunpack.c.h.b16 %v1823
        %v1888 = vunpack.c.l.b16 %v1824
        %v1889 = vunpack.c.h.b16 %v1824
        %v1890 = vunpack.c.l.b16 %v1825
        %v1891 = vunpack.c.h.b16 %v1825
        %v1892 = vunpack.c.l.b16 %v1826
        %v1893 = vunpack.c.h.b16 %v1826
        %v1894 = vunpack.c.l.b16 %v1827
        %v1895 = vunpack.c.h.b16 %v1827
        %v1896 = vunpack.c.l.b16 %v1828
        %v1897 = vunpack.c.h.b16 %v1828
        %v1898 = vunpack.c.l.b16 %v1829
        %v1899 = vunpack.c.h.b16 %v1829
        %v1900 = vunpack.c.l.b16 %v1830
        %v1901 = vunpack.c.h.b16 %v1830
        %v1902 = vunpack.c.l.b16 %v1831
        %v1903 = vunpack.c.h.b16 %v1831
        %v1904 = vpack.c.b16 %v1860, %v1856
        %v1905 = vpack.c.b16 %v1861, %v1857
        %v1906 = vpack.c.b16 %v1862, %v1858
        %v1907 = vpack.c.b16 %v1863, %v1859
        %v1908 = vpack.c.b16 %v1868, %v1864
        %v1909 = vpack.c.b16 %v1869, %v1865
        %v1910 = vpack.c.b16 %v1870, %v1866
        %v1911 = vpack.c.b16 %v1871, %v1867
        %v1912 = vpack.c.b16 %v1876, %v1872
        %v1913 = vpack.c.b16 %v1877, %v1873
        %v1914 = vpack.c.b16 %v1878, %v1874
        %v1915 = vpack.c.b16 %v1879, %v1875
        %v1916 = vpack.c.b16 %v1884, %v1880
        %v1917 = vpack.c.b16 %v1885, %v1881
        %v1918 = vpack.c.b16 %v1886, %v1882
        %v1919 = vpack.c.b16 %v1887, %v1883
        %v1920 = vpack.c.b16 %v1892, %v1888
        %v1921 = vpack.c.b16 %v1893, %v1889
        %v1922 = vpack.c.b16 %v1894, %v1890
        %v1923 = vpack.c.b16 %v1895, %v1891
        %v1924 = vpack.c.b16 %v1900, %v1896
        %v1925 = vpack.c.b16 %v1901, %v1897
        %v1926 = vpack.c.b16 %v1902, %v1898
        %v1927 = vpack.c.b16 %v1903, %v1899
        %v1953 = vsel %vm892, %v1804, 0
        %v1956 = vsel %vm892, %v1805, 0
        %v1959 = vsel %vm892, %v1806, 0
        %1961 = vmatpush.bf16.msra.mxu0 0
        %1962 = vmatpush.bf16.msra.mxu0 0
        %1963 = vmatpush.bf16.msra.mxu0 %v1924
        %1964 = vmatpush.bf16.msra.mxu0 %v1920
        %1965 = vmatpush.bf16.msra.mxu0 %v1916
        %1966 = vmatpush.bf16.msra.mxu0 %v1912
        %1967 = vmatpush.bf16.msra.mxu0 %v1908
        %1968 = vmatpush.bf16.msra.mxu0 %v1904
        %1969 = vmatmul.bf16.gmra.mxu0 %v1953
        %v1970 = vpop.f32.mrf.mxu0
        %v1971 = vadd.f32 0.0, %v1970
        %v1972 = vpop.f32.mrf.mxu0
        %v1973 = vadd.f32 0.0, %v1972
        %1974 = vmatmul.bf16.gmra.mxu0 %v1956
        %v1975 = vpop.f32.mrf.mxu0
        %v1976 = vadd.f32 0.0, %v1975
        %v1977 = vpop.f32.mrf.mxu0
        %v1978 = vadd.f32 0.0, %v1977
        %1979 = vmatmul.bf16.gmra.mxu0 %v1959
        %v1980 = vpop.f32.mrf.mxu0
        %v1981 = vadd.f32 0.0, %v1980
        %v1982 = vpop.f32.mrf.mxu0
        %1983 = vdwg.mxu0
        %1984 = vmatpush.bf16.msra.mxu0 0
        %1985 = vmatpush.bf16.msra.mxu0 0
        %1986 = vmatpush.bf16.msra.mxu0 %v1925
        %1987 = vmatpush.bf16.msra.mxu0 %v1921
        %1988 = vmatpush.bf16.msra.mxu0 %v1917
        %1989 = vmatpush.bf16.msra.mxu0 %v1913
        %1990 = vmatpush.bf16.msra.mxu0 %v1909
        %1991 = vmatpush.bf16.msra.mxu0 %v1905
        %1992 = vmatmul.bf16.gmra.mxu0 %v1953
        %v1993 = vpop.f32.mrf.mxu0
        %v1994 = vadd.f32 0.0, %v1993
        %v1995 = vpop.f32.mrf.mxu0
        %v1996 = vadd.f32 0.0, %v1995
        %1997 = vmatmul.bf16.gmra.mxu0 %v1956
        %v1998 = vpop.f32.mrf.mxu0
        %v1999 = vadd.f32 0.0, %v1998
        %v2000 = vpop.f32.mrf.mxu0
        %v2001 = vadd.f32 0.0, %v2000
        %2002 = vmatmul.bf16.gmra.mxu0 %v1959
        %v2003 = vpop.f32.mrf.mxu0
        %v2004 = vadd.f32 0.0, %v2003
        %v2005 = vpop.f32.mrf.mxu0
        %2006 = vdwg.mxu0
        %2007 = vmatpush.bf16.msra.mxu0 0
        %2008 = vmatpush.bf16.msra.mxu0 0
        %2009 = vmatpush.bf16.msra.mxu0 %v1926
        %2010 = vmatpush.bf16.msra.mxu0 %v1922
        %2011 = vmatpush.bf16.msra.mxu0 %v1918
        %2012 = vmatpush.bf16.msra.mxu0 %v1914
        %2013 = vmatpush.bf16.msra.mxu0 %v1910
        %2014 = vmatpush.bf16.msra.mxu0 %v1906
        %2015 = vmatmul.bf16.gmra.mxu0 %v1953
        %v2016 = vpop.f32.mrf.mxu0
        %v2017 = vadd.f32 0.0, %v2016
        %v2018 = vpop.f32.mrf.mxu0
        %v2019 = vadd.f32 0.0, %v2018
        %2020 = vmatmul.bf16.gmra.mxu0 %v1956
        %v2021 = vpop.f32.mrf.mxu0
        %v2022 = vadd.f32 0.0, %v2021
        %v2023 = vpop.f32.mrf.mxu0
        %v2024 = vadd.f32 0.0, %v2023
        %2025 = vmatmul.bf16.gmra.mxu0 %v1959
        %v2026 = vpop.f32.mrf.mxu0
        %v2027 = vadd.f32 0.0, %v2026
        %v2028 = vpop.f32.mrf.mxu0
        %2029 = vdwg.mxu0
        %2030 = vmatpush.bf16.msra.mxu0 0
        %2031 = vmatpush.bf16.msra.mxu0 0
        %2032 = vmatpush.bf16.msra.mxu0 %v1927
        %2033 = vmatpush.bf16.msra.mxu0 %v1923
        %2034 = vmatpush.bf16.msra.mxu0 %v1919
        %2035 = vmatpush.bf16.msra.mxu0 %v1915
        %2036 = vmatpush.bf16.msra.mxu0 %v1911
        %2037 = vmatpush.bf16.msra.mxu0 %v1907
        %2038 = vmatmul.bf16.gmra.mxu0 %v1953
        %v2039 = vpop.f32.mrf.mxu0
        %v2040 = vadd.f32 0.0, %v2039
        %v2041 = vpop.f32.mrf.mxu0
        %v2042 = vadd.f32 0.0, %v2041
        %2043 = vmatmul.bf16.gmra.mxu0 %v1956
        %v2044 = vpop.f32.mrf.mxu0
        %v2045 = vadd.f32 0.0, %v2044
        %v2046 = vpop.f32.mrf.mxu0
        %v2047 = vadd.f32 0.0, %v2046
        %2048 = vmatmul.bf16.gmra.mxu0 %v1959
        %v2049 = vpop.f32.mrf.mxu0
        %v2050 = vadd.f32 0.0, %v2049
        %v2051 = vpop.f32.mrf.mxu0
        %2052 = vdwg.mxu0
        %v2053 = vadd.f32 %v1767, %v1971
        %v2054 = vadd.f32 %v1768, %v1994
        %v2055 = vadd.f32 %v1769, %v2017
        %v2056 = vadd.f32 %v1770, %v2040
        %v2057 = vadd.f32 %v1771, %v1973
        %v2058 = vadd.f32 %v1772, %v1996
        %v2059 = vadd.f32 %v1773, %v2019
        %v2060 = vadd.f32 %v1774, %v2042
        %v2061 = vadd.f32 %v1775, %v1976
        %v2062 = vadd.f32 %v1776, %v1999
        %v2063 = vadd.f32 %v1777, %v2022
        %v2064 = vadd.f32 %v1778, %v2045
        %v2065 = vadd.f32 %v1779, %v1978
        %v2066 = vadd.f32 %v1780, %v2001
        %v2067 = vadd.f32 %v1781, %v2024
        %v2068 = vadd.f32 %v1782, %v2047
        %v2069 = vadd.f32 %v1783, %v1981
        %v2070 = vadd.f32 %v1784, %v2004
        %v2071 = vadd.f32 %v1785, %v2027
        %v2072 = vadd.f32 %v1786, %v2050
        %v2073 = vld [vmem:[%s2] sm:$0xf]
        %v2075 = vperm.slane %v2073, 0
        %v2076 = vperm.slane %v2073, 1
        %v2077 = vperm.slane %v2073, 2
        %v2078 = vperm.slane %v2073, 3
        %v2083 = vadd.f32 %v2053, %v2075
        %v2084 = vadd.f32 %v2054, %v2076
        %v2085 = vadd.f32 %v2055, %v2077
        %v2086 = vadd.f32 %v2056, %v2078
        %v2087 = vadd.f32 %v2057, %v2075
        %v2088 = vadd.f32 %v2058, %v2076
        %v2089 = vadd.f32 %v2059, %v2077
        %v2090 = vadd.f32 %v2060, %v2078
        %v2091 = vadd.f32 %v2061, %v2075
        %v2092 = vadd.f32 %v2062, %v2076
        %v2093 = vadd.f32 %v2063, %v2077
        %v2094 = vadd.f32 %v2064, %v2078
        %v2095 = vadd.f32 %v2065, %v2075
        %v2096 = vadd.f32 %v2066, %v2076
        %v2097 = vadd.f32 %v2067, %v2077
        %v2098 = vadd.f32 %v2068, %v2078
        %v2099 = vadd.f32 %v2069, %v2075
        %v2100 = vadd.f32 %v2070, %v2076
        %v2101 = vadd.f32 %v2071, %v2077
        %v2102 = vadd.f32 %v2072, %v2078
        %v2103 = vmax.f32 %v2083, 0.0
        %v2104 = vmax.f32 %v2084, 0.0
        %v2105 = vmax.f32 %v2085, 0.0
        %v2106 = vmax.f32 %v2086, 0.0
        %v2107 = vmax.f32 %v2087, 0.0
        %v2108 = vmax.f32 %v2088, 0.0
        %v2109 = vmax.f32 %v2089, 0.0
        %v2110 = vmax.f32 %v2090, 0.0
        %v2111 = vmax.f32 %v2091, 0.0
        %v2112 = vmax.f32 %v2092, 0.0
        %v2113 = vmax.f32 %v2093, 0.0
        %v2114 = vmax.f32 %v2094, 0.0
        %v2115 = vmax.f32 %v2095, 0.0
        %v2116 = vmax.f32 %v2096, 0.0
        %v2117 = vmax.f32 %v2097, 0.0
        %v2118 = vmax.f32 %v2098, 0.0
        %v2119 = vmax.f32 %v2099, 0.0
        %v2120 = vmax.f32 %v2100, 0.0
        %v2121 = vmax.f32 %v2101, 0.0
        %v2122 = vmax.f32 %v2102, 0.0
        %v2123 = vmax.f32 %v2103, %v2105
        %v2124 = vmax.f32 %v2104, %v2106
        %v2125 = vmax.f32 %v2107, %v2109
        %v2126 = vmax.f32 %v2108, %v2110
        %v2127 = vmax.f32 %v2111, %v2113
        %v2128 = vmax.f32 %v2112, %v2114
        %v2129 = vmax.f32 %v2115, %v2117
        %v2130 = vmax.f32 %v2116, %v2118
        %v2131 = vmax.f32 %v2119, %v2121
        %v2132 = vmax.f32 %v2120, %v2122
        %v2143 = vrot.slane %v2124, 6
        %v2144 = vrot.slane %v2126, 6
        %v2145 = vrot.slane %v2128, 6
        %v2146 = vrot.slane %v2130, 6
        %v2147 = vrot.slane %v2132, 6
        %vm2148 = vcmask 1041408
        %v2149 = vsel %vm2148, %v2123, %v2143
        %vm2150 = vcmask 1043458
        %v2151 = vsel %vm2150, %v2123, %v2143
        %v2152 = vrot.slane %v2151, 2
        %vm2153 = vcmask 1045508
        %v2154 = vsel %vm2153, %v2123, %v2143
        %v2155 = vrot.slane %v2154, 4
        %v2156 = vsel %vm1215, %v2143, %v2123
        %v2157 = vrot.slane %v2156, 6
        %v2158 = vsel %vm2148, %v2125, %v2144
        %v2159 = vsel %vm2150, %v2125, %v2144
        %v2160 = vrot.slane %v2159, 2
        %v2161 = vsel %vm2153, %v2125, %v2144
        %v2162 = vrot.slane %v2161, 4
        %v2163 = vsel %vm1215, %v2144, %v2125
        %v2164 = vrot.slane %v2163, 6
        %v2165 = vsel %vm2148, %v2127, %v2145
        %v2166 = vsel %vm2150, %v2127, %v2145
        %v2167 = vrot.slane %v2166, 2
        %v2168 = vsel %vm2153, %v2127, %v2145
        %v2169 = vrot.slane %v2168, 4
        %v2170 = vsel %vm1215, %v2145, %v2127
        %v2171 = vrot.slane %v2170, 6
        %v2172 = vsel %vm2148, %v2129, %v2146
        %v2173 = vsel %vm2150, %v2129, %v2146
        %v2174 = vrot.slane %v2173, 2
        %v2175 = vsel %vm2153, %v2129, %v2146
        %v2176 = vrot.slane %v2175, 4
        %v2177 = vsel %vm1215, %v2146, %v2129
        %v2178 = vrot.slane %v2177, 6
        %v2179 = vsel %vm2148, %v2131, %v2147
        %v2180 = vsel %vm2150, %v2131, %v2147
        %v2181 = vrot.slane %v2180, 2
        %v2182 = vsel %vm2153, %v2131, %v2147
        %v2183 = vrot.slane %v2182, 4
        %v2184 = vsel %vm1215, %v2147, %v2131
        %v2185 = vrot.slane %v2184, 6
        %2186 = vst [vmem:[#allocation1] ss:$4 sm:$0xff] %v2149
        %v2187 = vld.sshfl [vmem:[#allocation1] sm:$0xff pattern:$0x73625140]
        %v2188 = vld.sshfl [vmem:[#allocation1 + $0x8] sm:$0xff pattern:$0x73625140]
        %s2189 = scalar_lea.vmem [#allocation1], 32
        %2190 = vst [vmem:[%s2189] ss:$4 sm:$0xff] %v2152
        %v2191 = vld.sshfl [vmem:[#allocation1 + $0x20] sm:$0xff pattern:$0x73625140]
        %v2192 = vld.sshfl [vmem:[#allocation1 + $0x28] sm:$0xff pattern:$0x73625140]
        %2193 = vst [vmem:[#allocation1] ss:$4 sm:$0xff] %v2155
        %v2194 = vld.sshfl [vmem:[#allocation1] sm:$0xff pattern:$0x73625140]
        %v2195 = vld.sshfl [vmem:[#allocation1 + $0x8] sm:$0xff pattern:$0x73625140]
        %2196 = vst [vmem:[%s2189] ss:$4 sm:$0xff] %v2157
        %v2197 = vld.sshfl [vmem:[#allocation1 + $0x20] sm:$0xff pattern:$0x73625140]
        %v2198 = vld.sshfl [vmem:[#allocation1 + $0x28] sm:$0xff pattern:$0x73625140]
        %2199 = vst [vmem:[#allocation1] ss:$4 sm:$0xff] %v2158
        %v2200 = vld.sshfl [vmem:[#allocation1] sm:$0xff pattern:$0x73625140]
        %v2201 = vld.sshfl [vmem:[#allocation1 + $0x8] sm:$0xff pattern:$0x73625140]
        %2202 = vst [vmem:[%s2189] ss:$4 sm:$0xff] %v2160
        %v2203 = vld.sshfl [vmem:[#allocation1 + $0x20] sm:$0xff pattern:$0x73625140]
        %v2204 = vld.sshfl [vmem:[#allocation1 + $0x28] sm:$0xff pattern:$0x73625140]
        %2205 = vst [vmem:[#allocation1] ss:$4 sm:$0xff] %v2162
        %v2206 = vld.sshfl [vmem:[#allocation1] sm:$0xff pattern:$0x73625140]
        %v2207 = vld.sshfl [vmem:[#allocation1 + $0x8] sm:$0xff pattern:$0x73625140]
        %2208 = vst [vmem:[%s2189] ss:$4 sm:$0xff] %v2164
        %v2209 = vld.sshfl [vmem:[#allocation1 + $0x20] sm:$0xff pattern:$0x73625140]
        %v2210 = vld.sshfl [vmem:[#allocation1 + $0x28] sm:$0xff pattern:$0x73625140]
        %2211 = vst [vmem:[#allocation1] ss:$4 sm:$0xff] %v2165
        %v2212 = vld.sshfl [vmem:[#allocation1] sm:$0xff pattern:$0x73625140]
        %v2213 = vld.sshfl [vmem:[#allocation1 + $0x8] sm:$0xff pattern:$0x73625140]
        %2214 = vst [vmem:[%s2189] ss:$4 sm:$0xff] %v2167
        %v2215 = vld.sshfl [vmem:[#allocation1 + $0x20] sm:$0xff pattern:$0x73625140]
        %v2216 = vld.sshfl [vmem:[#allocation1 + $0x28] sm:$0xff pattern:$0x73625140]
        %2217 = vst [vmem:[#allocation1] ss:$4 sm:$0xff] %v2169
        %v2218 = vld.sshfl [vmem:[#allocation1] sm:$0xff pattern:$0x73625140]
        %v2219 = vld.sshfl [vmem:[#allocation1 + $0x8] sm:$0xff pattern:$0x73625140]
        %2220 = vst [vmem:[%s2189] ss:$4 sm:$0xff] %v2171
        %v2221 = vld.sshfl [vmem:[#allocation1 + $0x20] sm:$0xff pattern:$0x73625140]
        %v2222 = vld.sshfl [vmem:[#allocation1 + $0x28] sm:$0xff pattern:$0x73625140]
        %2223 = vst [vmem:[#allocation1] ss:$4 sm:$0xff] %v2172
        %v2224 = vld.sshfl [vmem:[#allocation1] sm:$0xff pattern:$0x73625140]
        %v2225 = vld.sshfl [vmem:[#allocation1 + $0x8] sm:$0xff pattern:$0x73625140]
        %2226 = vst [vmem:[%s2189] ss:$4 sm:$0xff] %v2174
        %v2227 = vld.sshfl [vmem:[#allocation1 + $0x20] sm:$0xff pattern:$0x73625140]
        %v2228 = vld.sshfl [vmem:[#allocation1 + $0x28] sm:$0xff pattern:$0x73625140]
        %2229 = vst [vmem:[#allocation1] ss:$4 sm:$0xff] %v2176
        %v2230 = vld.sshfl [vmem:[#allocation1] sm:$0xff pattern:$0x73625140]
        %v2231 = vld.sshfl [vmem:[#allocation1 + $0x8] sm:$0xff pattern:$0x73625140]
        %2232 = vst [vmem:[%s2189] ss:$4 sm:$0xff] %v2178
        %v2233 = vld.sshfl [vmem:[#allocation1 + $0x20] sm:$0xff pattern:$0x73625140]
        %v2234 = vld.sshfl [vmem:[#allocation1 + $0x28] sm:$0xff pattern:$0x73625140]
        %2235 = vst [vmem:[#allocation1] ss:$4 sm:$0xff] %v2179
        %v2236 = vld.sshfl [vmem:[#allocation1] sm:$0xff pattern:$0x73625140]
        %v2237 = vld.sshfl [vmem:[#allocation1 + $0x8] sm:$0xff pattern:$0x73625140]
        %2238 = vst [vmem:[%s2189] ss:$4 sm:$0xff] %v2181
        %v2239 = vld.sshfl [vmem:[#allocation1 + $0x20] sm:$0xff pattern:$0x73625140]
        %v2240 = vld.sshfl [vmem:[#allocation1 + $0x28] sm:$0xff pattern:$0x73625140]
        %2241 = vst [vmem:[#allocation1] ss:$4 sm:$0xff] %v2183
        %v2242 = vld.sshfl [vmem:[#allocation1] sm:$0xff pattern:$0x73625140]
        %v2243 = vld.sshfl [vmem:[#allocation1 + $0x8] sm:$0xff pattern:$0x73625140]
        %2244 = vst [vmem:[%s2189] ss:$4 sm:$0xff] %v2185
        %v2245 = vld.sshfl [vmem:[#allocation1 + $0x20] sm:$0xff pattern:$0x73625140]
        %v2246 = vld.sshfl [vmem:[#allocation1 + $0x28] sm:$0xff pattern:$0x73625140]
        %v2287 = vsel %vm2148, %v2187, -inf
        %v2288 = vrot.slane %v2287, 4
        %v2289 = vmax.f32 %v2287, %v2288
        %v2290 = vrot.slane %v2289, 2
        %v2291 = vmax.f32 %v2289, %v2290
        %v2292 = vrot.slane %v2291, 1
        %v2293 = vmax.f32 %v2291, %v2292
        %v2294 = vsel %vm2148, %v2188, -inf
        %v2295 = vrot.slane %v2294, 4
        %v2296 = vmax.f32 %v2294, %v2295
        %v2297 = vrot.slane %v2296, 2
        %v2298 = vmax.f32 %v2296, %v2297
        %v2299 = vrot.slane %v2298, 1
        %v2300 = vmax.f32 %v2298, %v2299
        %v2301 = vsel %vm2148, %v2191, -inf
        %v2302 = vrot.slane %v2301, 4
        %v2303 = vmax.f32 %v2301, %v2302
        %v2304 = vrot.slane %v2303, 2
        %v2305 = vmax.f32 %v2303, %v2304
        %v2306 = vrot.slane %v2305, 1
        %v2307 = vmax.f32 %v2305, %v2306
        %v2308 = vsel %vm2148, %v2192, -inf
        %v2309 = vrot.slane %v2308, 4
        %v2310 = vmax.f32 %v2308, %v2309
        %v2311 = vrot.slane %v2310, 2
        %v2312 = vmax.f32 %v2310, %v2311
        %v2313 = vrot.slane %v2312, 1
        %v2314 = vmax.f32 %v2312, %v2313
        %v2315 = vsel %vm2148, %v2194, -inf
        %v2316 = vrot.slane %v2315, 4
        %v2317 = vmax.f32 %v2315, %v2316
        %v2318 = vrot.slane %v2317, 2
        %v2319 = vmax.f32 %v2317, %v2318
        %v2320 = vrot.slane %v2319, 1
        %v2321 = vmax.f32 %v2319, %v2320
        %v2322 = vsel %vm2148, %v2195, -inf
        %v2323 = vrot.slane %v2322, 4
        %v2324 = vmax.f32 %v2322, %v2323
        %v2325 = vrot.slane %v2324, 2
        %v2326 = vmax.f32 %v2324, %v2325
        %v2327 = vrot.slane %v2326, 1
        %v2328 = vmax.f32 %v2326, %v2327
        %v2329 = vsel %vm2148, %v2197, -inf
        %v2330 = vrot.slane %v2329, 4
        %v2331 = vmax.f32 %v2329, %v2330
        %v2332 = vrot.slane %v2331, 2
        %v2333 = vmax.f32 %v2331, %v2332
        %v2334 = vrot.slane %v2333, 1
        %v2335 = vmax.f32 %v2333, %v2334
        %v2336 = vsel %vm2148, %v2198, -inf
        %v2337 = vrot.slane %v2336, 4
        %v2338 = vmax.f32 %v2336, %v2337
        %v2339 = vrot.slane %v2338, 2
        %v2340 = vmax.f32 %v2338, %v2339
        %v2341 = vrot.slane %v2340, 1
        %v2342 = vmax.f32 %v2340, %v2341
        %v2343 = vsel %vm2148, %v2200, -inf
        %v2344 = vrot.slane %v2343, 4
        %v2345 = vmax.f32 %v2343, %v2344
        %v2346 = vrot.slane %v2345, 2
        %v2347 = vmax.f32 %v2345, %v2346
        %v2348 = vrot.slane %v2347, 1
        %v2349 = vmax.f32 %v2347, %v2348
        %v2350 = vsel %vm2148, %v2201, -inf
        %v2351 = vrot.slane %v2350, 4
        %v2352 = vmax.f32 %v2350, %v2351
        %v2353 = vrot.slane %v2352, 2
        %v2354 = vmax.f32 %v2352, %v2353
        %v2355 = vrot.slane %v2354, 1
        %v2356 = vmax.f32 %v2354, %v2355
        %v2357 = vsel %vm2148, %v2203, -inf
        %v2358 = vrot.slane %v2357, 4
        %v2359 = vmax.f32 %v2357, %v2358
        %v2360 = vrot.slane %v2359, 2
        %v2361 = vmax.f32 %v2359, %v2360
        %v2362 = vrot.slane %v2361, 1
        %v2363 = vmax.f32 %v2361, %v2362
        %v2364 = vsel %vm2148, %v2204, -inf
        %v2365 = vrot.slane %v2364, 4
        %v2366 = vmax.f32 %v2364, %v2365
        %v2367 = vrot.slane %v2366, 2
        %v2368 = vmax.f32 %v2366, %v2367
        %v2369 = vrot.slane %v2368, 1
        %v2370 = vmax.f32 %v2368, %v2369
        %v2371 = vsel %vm2148, %v2206, -inf
        %v2372 = vrot.slane %v2371, 4
        %v2373 = vmax.f32 %v2371, %v2372
        %v2374 = vrot.slane %v2373, 2
        %v2375 = vmax.f32 %v2373, %v2374
        %v2376 = vrot.slane %v2375, 1
        %v2377 = vmax.f32 %v2375, %v2376
        %v2378 = vsel %vm2148, %v2207, -inf
        %v2379 = vrot.slane %v2378, 4
        %v2380 = vmax.f32 %v2378, %v2379
        %v2381 = vrot.slane %v2380, 2
        %v2382 = vmax.f32 %v2380, %v2381
        %v2383 = vrot.slane %v2382, 1
        %v2384 = vmax.f32 %v2382, %v2383
        %v2385 = vsel %vm2148, %v2209, -inf
        %v2386 = vrot.slane %v2385, 4
        %v2387 = vmax.f32 %v2385, %v2386
        %v2388 = vrot.slane %v2387, 2
        %v2389 = vmax.f32 %v2387, %v2388
        %v2390 = vrot.slane %v2389, 1
        %v2391 = vmax.f32 %v2389, %v2390
        %v2392 = vsel %vm2148, %v2210, -inf
        %v2393 = vrot.slane %v2392, 4
        %v2394 = vmax.f32 %v2392, %v2393
        %v2395 = vrot.slane %v2394, 2
        %v2396 = vmax.f32 %v2394, %v2395
        %v2397 = vrot.slane %v2396, 1
        %v2398 = vmax.f32 %v2396, %v2397
        %v2399 = vsel %vm2148, %v2212, -inf
        %v2400 = vrot.slane %v2399, 4
        %v2401 = vmax.f32 %v2399, %v2400
        %v2402 = vrot.slane %v2401, 2
        %v2403 = vmax.f32 %v2401, %v2402
        %v2404 = vrot.slane %v2403, 1
        %v2405 = vmax.f32 %v2403, %v2404
        %v2406 = vsel %vm2148, %v2213, -inf
        %v2407 = vrot.slane %v2406, 4
        %v2408 = vmax.f32 %v2406, %v2407
        %v2409 = vrot.slane %v2408, 2
        %v2410 = vmax.f32 %v2408, %v2409
        %v2411 = vrot.slane %v2410, 1
        %v2412 = vmax.f32 %v2410, %v2411
        %v2413 = vsel %vm2148, %v2215, -inf
        %v2414 = vrot.slane %v2413, 4
        %v2415 = vmax.f32 %v2413, %v2414
        %v2416 = vrot.slane %v2415, 2
        %v2417 = vmax.f32 %v2415, %v2416
        %v2418 = vrot.slane %v2417, 1
        %v2419 = vmax.f32 %v2417, %v2418
        %v2420 = vsel %vm2148, %v2216, -inf
        %v2421 = vrot.slane %v2420, 4
        %v2422 = vmax.f32 %v2420, %v2421
        %v2423 = vrot.slane %v2422, 2
        %v2424 = vmax.f32 %v2422, %v2423
        %v2425 = vrot.slane %v2424, 1
        %v2426 = vmax.f32 %v2424, %v2425
        %v2427 = vsel %vm2148, %v2218, -inf
        %v2428 = vrot.slane %v2427, 4
        %v2429 = vmax.f32 %v2427, %v2428
        %v2430 = vrot.slane %v2429, 2
        %v2431 = vmax.f32 %v2429, %v2430
        %v2432 = vrot.slane %v2431, 1
        %v2433 = vmax.f32 %v2431, %v2432
        %v2434 = vsel %vm2148, %v2219, -inf
        %v2435 = vrot.slane %v2434, 4
        %v2436 = vmax.f32 %v2434, %v2435
        %v2437 = vrot.slane %v2436, 2
        %v2438 = vmax.f32 %v2436, %v2437
        %v2439 = vrot.slane %v2438, 1
        %v2440 = vmax.f32 %v2438, %v2439
        %v2441 = vsel %vm2148, %v2221, -inf
        %v2442 = vrot.slane %v2441, 4
        %v2443 = vmax.f32 %v2441, %v2442
        %v2444 = vrot.slane %v2443, 2
        %v2445 = vmax.f32 %v2443, %v2444
        %v2446 = vrot.slane %v2445, 1
        %v2447 = vmax.f32 %v2445, %v2446
        %v2448 = vsel %vm2148, %v2222, -inf
        %v2449 = vrot.slane %v2448, 4
        %v2450 = vmax.f32 %v2448, %v2449
        %v2451 = vrot.slane %v2450, 2
        %v2452 = vmax.f32 %v2450, %v2451
        %v2453 = vrot.slane %v2452, 1
        %v2454 = vmax.f32 %v2452, %v2453
        %v2455 = vsel %vm2148, %v2224, -inf
        %v2456 = vrot.slane %v2455, 4
        %v2457 = vmax.f32 %v2455, %v2456
        %v2458 = vrot.slane %v2457, 2
        %v2459 = vmax.f32 %v2457, %v2458
        %v2460 = vrot.slane %v2459, 1
        %v2461 = vmax.f32 %v2459, %v2460
        %v2462 = vsel %vm2148, %v2225, -inf
        %v2463 = vrot.slane %v2462, 4
        %v2464 = vmax.f32 %v2462, %v2463
        %v2465 = vrot.slane %v2464, 2
        %v2466 = vmax.f32 %v2464, %v2465
        %v2467 = vrot.slane %v2466, 1
        %v2468 = vmax.f32 %v2466, %v2467
        %v2469 = vsel %vm2148, %v2227, -inf
        %v2470 = vrot.slane %v2469, 4
        %v2471 = vmax.f32 %v2469, %v2470
        %v2472 = vrot.slane %v2471, 2
        %v2473 = vmax.f32 %v2471, %v2472
        %v2474 = vrot.slane %v2473, 1
        %v2475 = vmax.f32 %v2473, %v2474
        %v2476 = vsel %vm2148, %v2228, -inf
        %v2477 = vrot.slane %v2476, 4
        %v2478 = vmax.f32 %v2476, %v2477
        %v2479 = vrot.slane %v2478, 2
        %v2480 = vmax.f32 %v2478, %v2479
        %v2481 = vrot.slane %v2480, 1
        %v2482 = vmax.f32 %v2480, %v2481
        %v2483 = vsel %vm2148, %v2230, -inf
        %v2484 = vrot.slane %v2483, 4
        %v2485 = vmax.f32 %v2483, %v2484
        %v2486 = vrot.slane %v2485, 2
        %v2487 = vmax.f32 %v2485, %v2486
        %v2488 = vrot.slane %v2487, 1
        %v2489 = vmax.f32 %v2487, %v2488
        %v2490 = vsel %vm2148, %v2231, -inf
        %v2491 = vrot.slane %v2490, 4
        %v2492 = vmax.f32 %v2490, %v2491
        %v2493 = vrot.slane %v2492, 2
        %v2494 = vmax.f32 %v2492, %v2493
        %v2495 = vrot.slane %v2494, 1
        %v2496 = vmax.f32 %v2494, %v2495
        %v2497 = vsel %vm2148, %v2233, -inf
        %v2498 = vrot.slane %v2497, 4
        %v2499 = vmax.f32 %v2497, %v2498
        %v2500 = vrot.slane %v2499, 2
        %v2501 = vmax.f32 %v2499, %v2500
        %v2502 = vrot.slane %v2501, 1
        %v2503 = vmax.f32 %v2501, %v2502
        %v2504 = vsel %vm2148, %v2234, -inf
        %v2505 = vrot.slane %v2504, 4
        %v2506 = vmax.f32 %v2504, %v2505
        %v2507 = vrot.slane %v2506, 2
        %v2508 = vmax.f32 %v2506, %v2507
        %v2509 = vrot.slane %v2508, 1
        %v2510 = vmax.f32 %v2508, %v2509
        %v2511 = vsel %vm2148, %v2236, -inf
        %v2512 = vrot.slane %v2511, 4
        %v2513 = vmax.f32 %v2511, %v2512
        %v2514 = vrot.slane %v2513, 2
        %v2515 = vmax.f32 %v2513, %v2514
        %v2516 = vrot.slane %v2515, 1
        %v2517 = vmax.f32 %v2515, %v2516
        %v2518 = vsel %vm2148, %v2237, -inf
        %v2519 = vrot.slane %v2518, 4
        %v2520 = vmax.f32 %v2518, %v2519
        %v2521 = vrot.slane %v2520, 2
        %v2522 = vmax.f32 %v2520, %v2521
        %v2523 = vrot.slane %v2522, 1
        %v2524 = vmax.f32 %v2522, %v2523
        %v2525 = vsel %vm2148, %v2239, -inf
        %v2526 = vrot.slane %v2525, 4
        %v2527 = vmax.f32 %v2525, %v2526
        %v2528 = vrot.slane %v2527, 2
        %v2529 = vmax.f32 %v2527, %v2528
        %v2530 = vrot.slane %v2529, 1
        %v2531 = vmax.f32 %v2529, %v2530
        %v2532 = vsel %vm2148, %v2240, -inf
        %v2533 = vrot.slane %v2532, 4
        %v2534 = vmax.f32 %v2532, %v2533
        %v2535 = vrot.slane %v2534, 2
        %v2536 = vmax.f32 %v2534, %v2535
        %v2537 = vrot.slane %v2536, 1
        %v2538 = vmax.f32 %v2536, %v2537
        %v2539 = vsel %vm2148, %v2242, -inf
        %v2540 = vrot.slane %v2539, 4
        %v2541 = vmax.f32 %v2539, %v2540
        %v2542 = vrot.slane %v2541, 2
        %v2543 = vmax.f32 %v2541, %v2542
        %v2544 = vrot.slane %v2543, 1
        %v2545 = vmax.f32 %v2543, %v2544
        %v2546 = vsel %vm2148, %v2243, -inf
        %v2547 = vrot.slane %v2546, 4
        %v2548 = vmax.f32 %v2546, %v2547
        %v2549 = vrot.slane %v2548, 2
        %v2550 = vmax.f32 %v2548, %v2549
        %v2551 = vrot.slane %v2550, 1
        %v2552 = vmax.f32 %v2550, %v2551
        %v2553 = vsel %vm2148, %v2245, -inf
        %v2554 = vrot.slane %v2553, 4
        %v2555 = vmax.f32 %v2553, %v2554
        %v2556 = vrot.slane %v2555, 2
        %v2557 = vmax.f32 %v2555, %v2556
        %v2558 = vrot.slane %v2557, 1
        %v2559 = vmax.f32 %v2557, %v2558
        %v2560 = vsel %vm2148, %v2246, -inf
        %v2561 = vrot.slane %v2560, 4
        %v2562 = vmax.f32 %v2560, %v2561
        %v2563 = vrot.slane %v2562, 2
        %v2564 = vmax.f32 %v2562, %v2563
        %v2565 = vrot.slane %v2564, 1
        %v2566 = vmax.f32 %v2564, %v2565
        %v2567 = vld [vmem:[%s3] sm:$0x3]
        %v2569 = vperm.slane %v2567, 0
        %v2570 = vperm.slane %v2567, 1
        %v2573 = vmul.f32 %v2293, %v2569
        %v2574 = vmul.f32 %v2300, %v2570
        %v2575 = vmul.f32 %v2307, %v2569
        %v2576 = vmul.f32 %v2314, %v2570
        %v2577 = vmul.f32 %v2321, %v2569
        %v2578 = vmul.f32 %v2328, %v2570
        %v2579 = vmul.f32 %v2335, %v2569
        %v2580 = vmul.f32 %v2342, %v2570
        %v2581 = vmul.f32 %v2349, %v2569
        %v2582 = vmul.f32 %v2356, %v2570
        %v2583 = vmul.f32 %v2363, %v2569
        %v2584 = vmul.f32 %v2370, %v2570
        %v2585 = vmul.f32 %v2377, %v2569
        %v2586 = vmul.f32 %v2384, %v2570
        %v2587 = vmul.f32 %v2391, %v2569
        %v2588 = vmul.f32 %v2398, %v2570
        %v2589 = vmul.f32 %v2405, %v2569
        %v2590 = vmul.f32 %v2412, %v2570
        %v2591 = vmul.f32 %v2419, %v2569
        %v2592 = vmul.f32 %v2426, %v2570
        %v2593 = vmul.f32 %v2433, %v2569
        %v2594 = vmul.f32 %v2440, %v2570
        %v2595 = vmul.f32 %v2447, %v2569
        %v2596 = vmul.f32 %v2454, %v2570
        %v2597 = vmul.f32 %v2461, %v2569
        %v2598 = vmul.f32 %v2468, %v2570
        %v2599 = vmul.f32 %v2475, %v2569
        %v2600 = vmul.f32 %v2482, %v2570
        %v2601 = vmul.f32 %v2489, %v2569
        %v2602 = vmul.f32 %v2496, %v2570
        %v2603 = vmul.f32 %v2503, %v2569
        %v2604 = vmul.f32 %v2510, %v2570
        %v2605 = vmul.f32 %v2517, %v2569
        %v2606 = vmul.f32 %v2524, %v2570
        %v2607 = vmul.f32 %v2531, %v2569
        %v2608 = vmul.f32 %v2538, %v2570
        %v2609 = vmul.f32 %v2545, %v2569
        %v2610 = vmul.f32 %v2552, %v2570
        %v2611 = vmul.f32 %v2559, %v2569
        %v2612 = vmul.f32 %v2566, %v2570
        %v2613 = vld [vmem:[%s4] sm:$0x3]
        %v2615 = vperm.slane %v2613, 0
        %v2616 = vperm.slane %v2613, 1
        %v2619 = vadd.f32 %v2573, %v2615
        %v2620 = vadd.f32 %v2574, %v2616
        %v2621 = vadd.f32 %v2575, %v2615
        %v2622 = vadd.f32 %v2576, %v2616
        %v2623 = vadd.f32 %v2577, %v2615
        %v2624 = vadd.f32 %v2578, %v2616
        %v2625 = vadd.f32 %v2579, %v2615
        %v2626 = vadd.f32 %v2580, %v2616
        %v2627 = vadd.f32 %v2581, %v2615
        %v2628 = vadd.f32 %v2582, %v2616
        %v2629 = vadd.f32 %v2583, %v2615
        %v2630 = vadd.f32 %v2584, %v2616
        %v2631 = vadd.f32 %v2585, %v2615
        %v2632 = vadd.f32 %v2586, %v2616
        %v2633 = vadd.f32 %v2587, %v2615
        %v2634 = vadd.f32 %v2588, %v2616
        %v2635 = vadd.f32 %v2589, %v2615
        %v2636 = vadd.f32 %v2590, %v2616
        %v2637 = vadd.f32 %v2591, %v2615
        %v2638 = vadd.f32 %v2592, %v2616
        %v2639 = vadd.f32 %v2593, %v2615
        %v2640 = vadd.f32 %v2594, %v2616
        %v2641 = vadd.f32 %v2595, %v2615
        %v2642 = vadd.f32 %v2596, %v2616
        %v2643 = vadd.f32 %v2597, %v2615
        %v2644 = vadd.f32 %v2598, %v2616
        %v2645 = vadd.f32 %v2599, %v2615
        %v2646 = vadd.f32 %v2600, %v2616
        %v2647 = vadd.f32 %v2601, %v2615
        %v2648 = vadd.f32 %v2602, %v2616
        %v2649 = vadd.f32 %v2603, %v2615
        %v2650 = vadd.f32 %v2604, %v2616
        %v2651 = vadd.f32 %v2605, %v2615
        %v2652 = vadd.f32 %v2606, %v2616
        %v2653 = vadd.f32 %v2607, %v2615
        %v2654 = vadd.f32 %v2608, %v2616
        %v2655 = vadd.f32 %v2609, %v2615
        %v2656 = vadd.f32 %v2610, %v2616
        %v2657 = vadd.f32 %v2611, %v2615
        %v2658 = vadd.f32 %v2612, %v2616
        %v2659 = vlaneseq
        %v2660 = vshrl.u32 %v2659, 7
        %v2661 = vadd.s32 %v2660, 8
        %v2662 = vadd.s32 %v2660, 16
        %vm2663 = vcmp.lt.s32.totalorder %v2660, 0
        %v2664 = vsub.s32 0, %v2660
        %v2665 = vsel %vm2663, %v2664, %v2660
        %v2666 = vand.u32 %v2665, 65535
        %v2667 = vshrl.u32 %v2665, 16
        %v2669 = vmul.u32 %v2666, 52429
        %v2670 = vmul.u32 %v2666, 52428
        %v2671 = vmul.u32 %v2667, 52429
        %v2672 = vmul.u32 %v2667, 52428
        %v2673 = vshll.u32 %v2670, 16
        %v2674 = vshrl.u32 %v2670, 16
        %v2675 = vshll.u32 %v2671, 16
        %v2676 = vshrl.u32 %v2671, 16
        %vm2677 = vc.u32 %v2669, %v2673
        %v2678 = vsel %vm2677, 1, 0
        %v2679 = vadd.s32 %v2669, %v2673
        %v2680 = vadd.s32 %v2672, %v2678
        %vm2681 = vc.u32 %v2679, %v2675
        %v2682 = vsel %vm2681, 1, 0
        %v2683 = vadd.s32 %v2679, %v2675
        %v2684 = vadd.s32 %v2680, %v2682
        %v2685 = vadd.s32 %v2684, %v2674
        %v2686 = vadd.s32 %v2685, %v2676
        %v2687 = vshrl.u32 %v2686, 3
        %v2688 = vmul.u32 %v2687, 10
        %v2689 = vsub.s32 %v2665, %v2688
        %v2690 = vsub.s32 0, %v2689
        %v2691 = vsel %vm2663, %v2690, %v2689
        %vm2692 = vcmp.lt.s32.totalorder %v2661, 0
        %v2693 = vsub.s32 0, %v2661
        %v2694 = vsel %vm2692, %v2693, %v2661
        %v2695 = vand.u32 %v2694, 65535
        %v2696 = vshrl.u32 %v2694, 16
        %v2698 = vmul.u32 %v2695, 52429
        %v2699 = vmul.u32 %v2695, 52428
        %v2700 = vmul.u32 %v2696, 52429
        %v2701 = vmul.u32 %v2696, 52428
        %v2702 = vshll.u32 %v2699, 16
        %v2703 = vshrl.u32 %v2699, 16
        %v2704 = vshll.u32 %v2700, 16
        %v2705 = vshrl.u32 %v2700, 16
        %vm2706 = vc.u32 %v2698, %v2702
        %v2707 = vsel %vm2706, 1, 0
        %v2708 = vadd.s32 %v2698, %v2702
        %v2709 = vadd.s32 %v2701, %v2707
        %vm2710 = vc.u32 %v2708, %v2704
        %v2711 = vsel %vm2710, 1, 0
        %v2712 = vadd.s32 %v2708, %v2704
        %v2713 = vadd.s32 %v2709, %v2711
        %v2714 = vadd.s32 %v2713, %v2703
        %v2715 = vadd.s32 %v2714, %v2705
        %v2716 = vshrl.u32 %v2715, 3
        %v2717 = vmul.u32 %v2716, 10
        %v2718 = vsub.s32 %v2694, %v2717
        %v2719 = vsub.s32 0, %v2718
        %v2720 = vsel %vm2692, %v2719, %v2718
        %vm2721 = vcmp.lt.s32.totalorder %v2662, 0
        %v2722 = vsub.s32 0, %v2662
        %v2723 = vsel %vm2721, %v2722, %v2662
        %v2724 = vand.u32 %v2723, 65535
        %v2725 = vshrl.u32 %v2723, 16
        %v2727 = vmul.u32 %v2724, 52429
        %v2728 = vmul.u32 %v2724, 52428
        %v2729 = vmul.u32 %v2725, 52429
        %v2730 = vmul.u32 %v2725, 52428
        %v2731 = vshll.u32 %v2728, 16
        %v2732 = vshrl.u32 %v2728, 16
        %v2733 = vshll.u32 %v2729, 16
        %v2734 = vshrl.u32 %v2729, 16
        %vm2735 = vc.u32 %v2727, %v2731
        %v2736 = vsel %vm2735, 1, 0
        %v2737 = vadd.s32 %v2727, %v2731
        %v2738 = vadd.s32 %v2730, %v2736
        %vm2739 = vc.u32 %v2737, %v2733
        %v2740 = vsel %vm2739, 1, 0
        %v2741 = vadd.s32 %v2737, %v2733
        %v2742 = vadd.s32 %v2738, %v2740
        %v2743 = vadd.s32 %v2742, %v2732
        %v2744 = vadd.s32 %v2743, %v2734
        %v2745 = vshrl.u32 %v2744, 3
        %v2746 = vmul.u32 %v2745, 10
        %v2747 = vsub.s32 %v2723, %v2746
        %v2748 = vsub.s32 0, %v2747
        %v2749 = vsel %vm2721, %v2748, %v2747
        %vm2750 = vcmp.ne.s32.totalorder %v2691, 0
        %vm2751 = vcmp.ne.s32.totalorder %v2720, 0
        %vm2752 = vcmp.ne.s32.totalorder %v2749, 0
        %vm2753 = vcmp.lt.s32.totalorder %v2691, 0
        %vm2754 = vcmp.lt.s32.totalorder %v2720, 0
        %vm2755 = vcmp.lt.s32.totalorder %v2749, 0
        %vm2756 = vmand %vm2753, %vm2750
        %vm2757 = vmand %vm2754, %vm2751
        %vm2758 = vmand %vm2755, %vm2752
        %v2759 = vadd.s32 %v2691, 10
        %v2760 = vadd.s32 %v2720, 10
        %v2761 = vadd.s32 %v2749, 10
        %v2762 = vsel %vm2756, %v2759, %v2691
        %v2763 = vsel %vm2757, %v2760, %v2720
        %v2764 = vsel %vm2758, %v2761, %v2749
        %vm2765 = vcmp.lt.s32.totalorder %v2762, 8
        %vm2766 = vcmp.lt.s32.totalorder %v2763, 8
        %vm2767 = vcmp.lt.s32.totalorder %v2764, 8
        %v2768 = vsel %vm2765, 1, 0
        %v2769 = vsel %vm2766, 1, 0
        %v2770 = vsel %vm2767, 1, 0
        %vm2771 = vcmp.eq.s32.totalorder %v2768, 1
        %vm2772 = vcmp.eq.s32.totalorder %v2769, 1
        %vm2773 = vcmp.eq.s32.totalorder %v2770, 1
        %v2814 = vrot.slane %v2621, 7
        %vm2815 = vcmask 1041409
        %v2816 = vsel %vm2815, %v2814, %v2619
        %v2817 = vrot.slane %v2623, 6
        %vm2818 = vcmask 1042434
        %v2819 = vsel %vm2818, %v2817, %v2816
        %v2820 = vrot.slane %v2625, 5
        %vm2821 = vcmask 1043459
        %v2822 = vsel %vm2821, %v2820, %v2819
        %v2823 = vrot.slane %v2627, 4
        %vm2824 = vcmask 1044484
        %v2825 = vsel %vm2824, %v2823, %v2822
        %v2826 = vrot.slane %v2629, 3
        %vm2827 = vcmask 1045509
        %v2828 = vsel %vm2827, %v2826, %v2825
        %v2829 = vrot.slane %v2631, 2
        %vm2830 = vcmask 1046534
        %v2831 = vsel %vm2830, %v2829, %v2828
        %v2832 = vrot.slane %v2633, 1
        %vm2833 = vcmask 1047559
        %v2834 = vsel %vm2833, %v2832, %v2831
        %v2835 = vrot.slane %v2622, 7
        %v2836 = vsel %vm2815, %v2835, %v2620
        %v2837 = vrot.slane %v2624, 6
        %v2838 = vsel %vm2818, %v2837, %v2836
        %v2839 = vrot.slane %v2626, 5
        %v2840 = vsel %vm2821, %v2839, %v2838
        %v2841 = vrot.slane %v2628, 4
        %v2842 = vsel %vm2824, %v2841, %v2840
        %v2843 = vrot.slane %v2630, 3
        %v2844 = vsel %vm2827, %v2843, %v2842
        %v2845 = vrot.slane %v2632, 2
        %v2846 = vsel %vm2830, %v2845, %v2844
        %v2847 = vrot.slane %v2634, 1
        %v2848 = vsel %vm2833, %v2847, %v2846
        %v2849 = vrot.slane %v2637, 7
        %v2850 = vsel %vm2815, %v2849, %v2635
        %v2851 = vrot.slane %v2639, 6
        %v2852 = vsel %vm2818, %v2851, %v2850
        %v2853 = vrot.slane %v2641, 5
        %v2854 = vsel %vm2821, %v2853, %v2852
        %v2855 = vrot.slane %v2643, 4
        %v2856 = vsel %vm2824, %v2855, %v2854
        %v2857 = vrot.slane %v2645, 3
        %v2858 = vsel %vm2827, %v2857, %v2856
        %v2859 = vrot.slane %v2647, 2
        %v2860 = vsel %vm2830, %v2859, %v2858
        %v2861 = vrot.slane %v2649, 1
        %v2862 = vsel %vm2833, %v2861, %v2860
        %v2863 = vrot.slane %v2638, 7
        %v2864 = vsel %vm2815, %v2863, %v2636
        %v2865 = vrot.slane %v2640, 6
        %v2866 = vsel %vm2818, %v2865, %v2864
        %v2867 = vrot.slane %v2642, 5
        %v2868 = vsel %vm2821, %v2867, %v2866
        %v2869 = vrot.slane %v2644, 4
        %v2870 = vsel %vm2824, %v2869, %v2868
        %v2871 = vrot.slane %v2646, 3
        %v2872 = vsel %vm2827, %v2871, %v2870
        %v2873 = vrot.slane %v2648, 2
        %v2874 = vsel %vm2830, %v2873, %v2872
        %v2875 = vrot.slane %v2650, 1
        %v2876 = vsel %vm2833, %v2875, %v2874
        %v2877 = vrot.slane %v2653, 7
        %v2878 = vsel %vm2815, %v2877, %v2651
        %v2879 = vrot.slane %v2655, 6
        %v2880 = vsel %vm2818, %v2879, %v2878
        %v2881 = vrot.slane %v2657, 5
        %v2882 = vsel %vm2821, %v2881, %v2880
        %v2883 = vrot.slane %v2654, 7
        %v2884 = vsel %vm2815, %v2883, %v2652
        %v2885 = vrot.slane %v2656, 6
        %v2886 = vsel %vm2818, %v2885, %v2884
        %v2887 = vrot.slane %v2658, 5
        %v2888 = vsel %vm2821, %v2887, %v2886
        %v2895 = vsel %vm2771, %v2834, 0.0
        %v2896 = vsel %vm2771, %v2848, 0.0
        %v2897 = vsel %vm2772, %v2862, 0.0
        %v2898 = vsel %vm2772, %v2876, 0.0
        %v2899 = vsel %vm2773, %v2882, 0.0
        %v2900 = vsel %vm2773, %v2888, 0.0
        %v2903 = vrot.slane %v2899, 3
        %v2904 = vrot.slane %v2900, 3
        %vm2911 = vcmask 1040384
        %v2912 = vrot.slane %v2895, 7
        %v2913 = vrot.slane %v2896, 7
        %v2914 = vrot.slane %v2897, 7
        %v2915 = vsel %vm2911, %v2912, %v2914
        %v2916 = vrot.slane %v2898, 7
        %v2917 = vsel %vm2911, %v2913, %v2916
        %v2918 = vrot.slane %v2899, 7
        %v2919 = vsel %vm2911, %v2914, %v2918
        %v2920 = vrot.slane %v2900, 7
        %v2921 = vsel %vm2911, %v2916, %v2920
        %v2928 = vsel %vm2911, %v2903, %v2912
        %v2929 = vsel %vm2911, %v2904, %v2913
        %v2930 = vpack.c.bf16 %v2915, %v2928
        %v2931 = vpack.c.bf16 %v2917, %v2929
        %v2932 = vpack.c.bf16 %v2919, %v2919
        %v2933 = vpack.c.bf16 %v2921, %v2921
        %v2934 = vld [vmem:[#allocation3] sm:$0xff]
        %v2935 = vld [vmem:[#allocation3 + $0x8] sm:$0xff]
        %v2936 = vld [vmem:[#allocation3 + $0x10] sm:$0xff]
        %v2937 = vld [vmem:[#allocation3 + $0x18] sm:$0xff]
        %v2938 = vld [vmem:[#allocation3 + $0x20] sm:$0xff]
        %v2939 = vld [vmem:[#allocation3 + $0x28] sm:$0xff]
        %v2940 = vld [vmem:[#allocation3 + $0x30] sm:$0xff]
        %v2941 = vld [vmem:[#allocation3 + $0x38] sm:$0xff]
        %v2942 = vld [vmem:[#allocation3 + $0x40] sm:$0xff]
        %v2943 = vld [vmem:[#allocation3 + $0x48] sm:$0xff]
        %v2944 = vld [vmem:[#allocation3 + $0x50] sm:$0xff]
        %v2945 = vld [vmem:[#allocation3 + $0x58] sm:$0xff]
        %v2946 = vld [vmem:[#allocation3 + $0x60] sm:$0xff]
        %v2947 = vld [vmem:[#allocation3 + $0x68] sm:$0xff]
        %v2948 = vld [vmem:[#allocation3 + $0x70] sm:$0xff]
        %v2949 = vld [vmem:[#allocation3 + $0x78] sm:$0xff]
        %v2950 = vld [vmem:[#allocation3 + $0x80] sm:$0xff]
        %v2951 = vld [vmem:[#allocation3 + $0x88] sm:$0xff]
        %v2952 = vld [vmem:[#allocation3 + $0x90] sm:$0xff]
        %v2953 = vld [vmem:[#allocation3 + $0x98] sm:$0xff]
        %v2954 = vld [vmem:[#allocation3 + $0xa0] sm:$0xff]
        %v2955 = vld [vmem:[#allocation3 + $0xa8] sm:$0xff]
        %v2956 = vld [vmem:[#allocation3 + $0xb0] sm:$0xff]
        %v2957 = vld [vmem:[#allocation3 + $0xb8] sm:$0xff]
        %v2958 = vld [vmem:[#allocation3 + $0xc0] sm:$0xff]
        %v2959 = vld [vmem:[#allocation3 + $0xc8] sm:$0xff]
        %v2960 = vld [vmem:[#allocation3 + $0xd0] sm:$0xff]
        %v2961 = vld [vmem:[#allocation3 + $0xd8] sm:$0xff]
        %v2962 = vld [vmem:[#allocation3 + $0xe0] sm:$0xff]
        %v2963 = vld [vmem:[#allocation3 + $0xe8] sm:$0xff]
        %v2964 = vld [vmem:[#allocation3 + $0xf0] sm:$0xff]
        %v2965 = vld [vmem:[#allocation3 + $0xf8] sm:$0xff]
        %v2966 = vld [vmem:[#allocation3 + $0x100] sm:$0xff]
        %v2967 = vld [vmem:[#allocation3 + $0x108] sm:$0xff]
        %v2968 = vld [vmem:[#allocation3 + $0x110] sm:$0xff]
        %v2969 = vld [vmem:[#allocation3 + $0x118] sm:$0xff]
        %v2970 = vld [vmem:[#allocation3 + $0x120] sm:$0xff]
        %v2971 = vld [vmem:[#allocation3 + $0x128] sm:$0xff]
        %v2972 = vld [vmem:[#allocation3 + $0x130] sm:$0xff]
        %v2973 = vld [vmem:[#allocation3 + $0x138] sm:$0xff]
        %v2974 = vld [vmem:[#allocation3 + $0x140] sm:$0xff]
        %v2975 = vld [vmem:[#allocation3 + $0x148] sm:$0xff]
        %v2976 = vld [vmem:[#allocation3 + $0x150] sm:$0xff]
        %v2977 = vld [vmem:[#allocation3 + $0x158] sm:$0xff]
        %v2978 = vld [vmem:[#allocation3 + $0x160] sm:$0xff]
        %v2979 = vld [vmem:[#allocation3 + $0x168] sm:$0xff]
        %v2980 = vld [vmem:[#allocation3 + $0x170] sm:$0xff]
        %v2981 = vld [vmem:[#allocation3 + $0x178] sm:$0xff]
        %v2982 = vld [vmem:[#allocation3 + $0x180] sm:$0xff]
        %v2983 = vld [vmem:[#allocation3 + $0x188] sm:$0xff]
        %v2984 = vld [vmem:[#allocation3 + $0x190] sm:$0xff]
        %v2985 = vld [vmem:[#allocation3 + $0x198] sm:$0xff]
        %v2986 = vld [vmem:[#allocation3 + $0x1a0] sm:$0xff]
        %v2987 = vld [vmem:[#allocation3 + $0x1a8] sm:$0xff]
        %v2988 = vld [vmem:[#allocation3 + $0x1b0] sm:$0xff]
        %v2989 = vld [vmem:[#allocation3 + $0x1b8] sm:$0xff]
        %v2990 = vld [vmem:[#allocation3 + $0x1c0] sm:$0xff]
        %v2991 = vld [vmem:[#allocation3 + $0x1c8] sm:$0xff]
        %v2992 = vld [vmem:[#allocation3 + $0x1d0] sm:$0xff]
        %v2993 = vld [vmem:[#allocation3 + $0x1d8] sm:$0xff]
        %v2994 = vld [vmem:[#allocation3 + $0x1e0] sm:$0xff]
        %v2995 = vld [vmem:[#allocation3 + $0x1e8] sm:$0xff]
        %v2996 = vld [vmem:[#allocation3 + $0x1f0] sm:$0xff]
        %v2997 = vld [vmem:[#allocation3 + $0x1f8] sm:$0xff]
        %v2998 = vpack.c.bf16 %v2897, %v2895
        %v2999 = vpack.c.bf16 %v2898, %v2896
        %v3000 = vpack.c.bf16 %v2899, %v2899
        %v3001 = vpack.c.bf16 %v2900, %v2900
        %s3002 = scalar_lea.vmem [#allocation3], 512
        %v3003 = vld [vmem:[%s3002] sm:$0xff]
        %v3004 = vld [vmem:[%s3002 + $0x8] sm:$0xff]
        %v3005 = vld [vmem:[%s3002 + $0x10] sm:$0xff]
        %v3006 = vld [vmem:[%s3002 + $0x18] sm:$0xff]
        %v3007 = vld [vmem:[%s3002 + $0x20] sm:$0xff]
        %v3008 = vld [vmem:[%s3002 + $0x28] sm:$0xff]
        %v3009 = vld [vmem:[%s3002 + $0x30] sm:$0xff]
        %v3010 = vld [vmem:[%s3002 + $0x38] sm:$0xff]
        %v3011 = vld [vmem:[%s3002 + $0x40] sm:$0xff]
        %v3012 = vld [vmem:[%s3002 + $0x48] sm:$0xff]
        %v3013 = vld [vmem:[%s3002 + $0x50] sm:$0xff]
        %v3014 = vld [vmem:[%s3002 + $0x58] sm:$0xff]
        %v3015 = vld [vmem:[%s3002 + $0x60] sm:$0xff]
        %v3016 = vld [vmem:[%s3002 + $0x68] sm:$0xff]
        %v3017 = vld [vmem:[%s3002 + $0x70] sm:$0xff]
        %v3018 = vld [vmem:[%s3002 + $0x78] sm:$0xff]
        %v3019 = vld [vmem:[%s3002 + $0x80] sm:$0xff]
        %v3020 = vld [vmem:[%s3002 + $0x88] sm:$0xff]
        %v3021 = vld [vmem:[%s3002 + $0x90] sm:$0xff]
        %v3022 = vld [vmem:[%s3002 + $0x98] sm:$0xff]
        %v3023 = vld [vmem:[%s3002 + $0xa0] sm:$0xff]
        %v3024 = vld [vmem:[%s3002 + $0xa8] sm:$0xff]
        %v3025 = vld [vmem:[%s3002 + $0xb0] sm:$0xff]
        %v3026 = vld [vmem:[%s3002 + $0xb8] sm:$0xff]
        %v3027 = vld [vmem:[%s3002 + $0xc0] sm:$0xff]
        %v3028 = vld [vmem:[%s3002 + $0xc8] sm:$0xff]
        %v3029 = vld [vmem:[%s3002 + $0xd0] sm:$0xff]
        %v3030 = vld [vmem:[%s3002 + $0xd8] sm:$0xff]
        %v3031 = vld [vmem:[%s3002 + $0xe0] sm:$0xff]
        %v3032 = vld [vmem:[%s3002 + $0xe8] sm:$0xff]
        %v3033 = vld [vmem:[%s3002 + $0xf0] sm:$0xff]
        %v3034 = vld [vmem:[%s3002 + $0xf8] sm:$0xff]
        %v3035 = vld [vmem:[%s3002 + $0x100] sm:$0xff]
        %v3036 = vld [vmem:[%s3002 + $0x108] sm:$0xff]
        %v3037 = vld [vmem:[%s3002 + $0x110] sm:$0xff]
        %v3038 = vld [vmem:[%s3002 + $0x118] sm:$0xff]
        %v3039 = vld [vmem:[%s3002 + $0x120] sm:$0xff]
        %v3040 = vld [vmem:[%s3002 + $0x128] sm:$0xff]
        %v3041 = vld [vmem:[%s3002 + $0x130] sm:$0xff]
        %v3042 = vld [vmem:[%s3002 + $0x138] sm:$0xff]
        %v3043 = vld [vmem:[%s3002 + $0x140] sm:$0xff]
        %v3044 = vld [vmem:[%s3002 + $0x148] sm:$0xff]
        %v3045 = vld [vmem:[%s3002 + $0x150] sm:$0xff]
        %v3046 = vld [vmem:[%s3002 + $0x158] sm:$0xff]
        %v3047 = vld [vmem:[%s3002 + $0x160] sm:$0xff]
        %v3048 = vld [vmem:[%s3002 + $0x168] sm:$0xff]
        %v3049 = vld [vmem:[%s3002 + $0x170] sm:$0xff]
        %v3050 = vld [vmem:[%s3002 + $0x178] sm:$0xff]
        %v3051 = vld [vmem:[%s3002 + $0x180] sm:$0xff]
        %v3052 = vld [vmem:[%s3002 + $0x188] sm:$0xff]
        %v3053 = vld [vmem:[%s3002 + $0x190] sm:$0xff]
        %v3054 = vld [vmem:[%s3002 + $0x198] sm:$0xff]
        %v3055 = vld [vmem:[%s3002 + $0x1a0] sm:$0xff]
        %v3056 = vld [vmem:[%s3002 + $0x1a8] sm:$0xff]
        %v3057 = vld [vmem:[%s3002 + $0x1b0] sm:$0xff]
        %v3058 = vld [vmem:[%s3002 + $0x1b8] sm:$0xff]
        %v3059 = vld [vmem:[%s3002 + $0x1c0] sm:$0xff]
        %v3060 = vld [vmem:[%s3002 + $0x1c8] sm:$0xff]
        %v3061 = vld [vmem:[%s3002 + $0x1d0] sm:$0xff]
        %v3062 = vld [vmem:[%s3002 + $0x1d8] sm:$0xff]
        %v3063 = vld [vmem:[%s3002 + $0x1e0] sm:$0xff]
        %v3064 = vld [vmem:[%s3002 + $0x1e8] sm:$0xff]
        %v3065 = vld [vmem:[%s3002 + $0x1f0] sm:$0xff]
        %v3066 = vld [vmem:[%s3002 + $0x1f8] sm:$0xff]
        %v3131 = vunpack.c.l.b16 %v3003
        %v3132 = vunpack.c.h.b16 %v3003
        %v3133 = vunpack.c.l.b16 %v3004
        %v3134 = vunpack.c.h.b16 %v3004
        %v3135 = vunpack.c.l.b16 %v3005
        %v3136 = vunpack.c.h.b16 %v3005
        %v3137 = vunpack.c.l.b16 %v3006
        %v3138 = vunpack.c.h.b16 %v3006
        %v3139 = vunpack.c.l.b16 %v3007
        %v3140 = vunpack.c.h.b16 %v3007
        %v3141 = vunpack.c.l.b16 %v3008
        %v3142 = vunpack.c.h.b16 %v3008
        %v3143 = vunpack.c.l.b16 %v3009
        %v3144 = vunpack.c.h.b16 %v3009
        %v3145 = vunpack.c.l.b16 %v3010
        %v3146 = vunpack.c.h.b16 %v3010
        %v3147 = vunpack.c.l.b16 %v3011
        %v3148 = vunpack.c.h.b16 %v3011
        %v3149 = vunpack.c.l.b16 %v3012
        %v3150 = vunpack.c.h.b16 %v3012
        %v3151 = vunpack.c.l.b16 %v3013
        %v3152 = vunpack.c.h.b16 %v3013
        %v3153 = vunpack.c.l.b16 %v3014
        %v3154 = vunpack.c.h.b16 %v3014
        %v3155 = vunpack.c.l.b16 %v3015
        %v3156 = vunpack.c.h.b16 %v3015
        %v3157 = vunpack.c.l.b16 %v3016
        %v3158 = vunpack.c.h.b16 %v3016
        %v3159 = vunpack.c.l.b16 %v3017
        %v3160 = vunpack.c.h.b16 %v3017
        %v3161 = vunpack.c.l.b16 %v3018
        %v3162 = vunpack.c.h.b16 %v3018
        %v3163 = vunpack.c.l.b16 %v3019
        %v3164 = vunpack.c.h.b16 %v3019
        %v3165 = vunpack.c.l.b16 %v3020
        %v3166 = vunpack.c.h.b16 %v3020
        %v3167 = vunpack.c.l.b16 %v3021
        %v3168 = vunpack.c.h.b16 %v3021
        %v3169 = vunpack.c.l.b16 %v3022
        %v3170 = vunpack.c.h.b16 %v3022
        %v3171 = vunpack.c.l.b16 %v3023
        %v3172 = vunpack.c.h.b16 %v3023
        %v3173 = vunpack.c.l.b16 %v3024
        %v3174 = vunpack.c.h.b16 %v3024
        %v3175 = vunpack.c.l.b16 %v3025
        %v3176 = vunpack.c.h.b16 %v3025
        %v3177 = vunpack.c.l.b16 %v3026
        %v3178 = vunpack.c.h.b16 %v3026
        %v3179 = vunpack.c.l.b16 %v3027
        %v3180 = vunpack.c.h.b16 %v3027
        %v3181 = vunpack.c.l.b16 %v3028
        %v3182 = vunpack.c.h.b16 %v3028
        %v3183 = vunpack.c.l.b16 %v3029
        %v3184 = vunpack.c.h.b16 %v3029
        %v3185 = vunpack.c.l.b16 %v3030
        %v3186 = vunpack.c.h.b16 %v3030
        %v3187 = vunpack.c.l.b16 %v3031
        %v3188 = vunpack.c.h.b16 %v3031
        %v3189 = vunpack.c.l.b16 %v3032
        %v3190 = vunpack.c.h.b16 %v3032
        %v3191 = vunpack.c.l.b16 %v3033
        %v3192 = vunpack.c.h.b16 %v3033
        %v3193 = vunpack.c.l.b16 %v3034
        %v3194 = vunpack.c.h.b16 %v3034
        %v3195 = vunpack.c.l.b16 %v3035
        %v3196 = vunpack.c.h.b16 %v3035
        %v3197 = vunpack.c.l.b16 %v3036
        %v3198 = vunpack.c.h.b16 %v3036
        %v3199 = vunpack.c.l.b16 %v3037
        %v3200 = vunpack.c.h.b16 %v3037
        %v3201 = vunpack.c.l.b16 %v3038
        %v3202 = vunpack.c.h.b16 %v3038
        %v3203 = vunpack.c.l.b16 %v3039
        %v3204 = vunpack.c.h.b16 %v3039
        %v3205 = vunpack.c.l.b16 %v3040
        %v3206 = vunpack.c.h.b16 %v3040
        %v3207 = vunpack.c.l.b16 %v3041
        %v3208 = vunpack.c.h.b16 %v3041
        %v3209 = vunpack.c.l.b16 %v3042
        %v3210 = vunpack.c.h.b16 %v3042
        %v3211 = vunpack.c.l.b16 %v3043
        %v3212 = vunpack.c.h.b16 %v3043
        %v3213 = vunpack.c.l.b16 %v3044
        %v3214 = vunpack.c.h.b16 %v3044
        %v3215 = vunpack.c.l.b16 %v3045
        %v3216 = vunpack.c.h.b16 %v3045
        %v3217 = vunpack.c.l.b16 %v3046
        %v3218 = vunpack.c.h.b16 %v3046
        %v3219 = vunpack.c.l.b16 %v3047
        %v3220 = vunpack.c.h.b16 %v3047
        %v3221 = vunpack.c.l.b16 %v3048
        %v3222 = vunpack.c.h.b16 %v3048
        %v3223 = vunpack.c.l.b16 %v3049
        %v3224 = vunpack.c.h.b16 %v3049
        %v3225 = vunpack.c.l.b16 %v3050
        %v3226 = vunpack.c.h.b16 %v3050
        %v3227 = vunpack.c.l.b16 %v3051
        %v3228 = vunpack.c.h.b16 %v3051
        %v3229 = vunpack.c.l.b16 %v3052
        %v3230 = vunpack.c.h.b16 %v3052
        %v3231 = vunpack.c.l.b16 %v3053
        %v3232 = vunpack.c.h.b16 %v3053
        %v3233 = vunpack.c.l.b16 %v3054
        %v3234 = vunpack.c.h.b16 %v3054
        %v3235 = vunpack.c.l.b16 %v3055
        %v3236 = vunpack.c.h.b16 %v3055
        %v3237 = vunpack.c.l.b16 %v3056
        %v3238 = vunpack.c.h.b16 %v3056
        %v3239 = vunpack.c.l.b16 %v3057
        %v3240 = vunpack.c.h.b16 %v3057
        %v3241 = vunpack.c.l.b16 %v3058
        %v3242 = vunpack.c.h.b16 %v3058
        %v3243 = vunpack.c.l.b16 %v3059
        %v3244 = vunpack.c.h.b16 %v3059
        %v3245 = vunpack.c.l.b16 %v3060
        %v3246 = vunpack.c.h.b16 %v3060
        %v3247 = vunpack.c.l.b16 %v3061
        %v3248 = vunpack.c.h.b16 %v3061
        %v3249 = vunpack.c.l.b16 %v3062
        %v3250 = vunpack.c.h.b16 %v3062
        %v3251 = vunpack.c.l.b16 %v3063
        %v3252 = vunpack.c.h.b16 %v3063
        %v3253 = vunpack.c.l.b16 %v3064
        %v3254 = vunpack.c.h.b16 %v3064
        %v3255 = vunpack.c.l.b16 %v3065
        %v3256 = vunpack.c.h.b16 %v3065
        %v3257 = vunpack.c.l.b16 %v3066
        %v3258 = vunpack.c.h.b16 %v3066
        %v3259 = vpack.c.b16 %v3135, %v3131
        %v3260 = vpack.c.b16 %v3136, %v3132
        %v3261 = vpack.c.b16 %v3137, %v3133
        %v3262 = vpack.c.b16 %v3138, %v3134
        %v3263 = vpack.c.b16 %v3143, %v3139
        %v3264 = vpack.c.b16 %v3144, %v3140
        %v3265 = vpack.c.b16 %v3145, %v3141
        %v3266 = vpack.c.b16 %v3146, %v3142
        %v3267 = vpack.c.b16 %v3151, %v3147
        %v3268 = vpack.c.b16 %v3152, %v3148
        %v3269 = vpack.c.b16 %v3153, %v3149
        %v3270 = vpack.c.b16 %v3154, %v3150
        %v3271 = vpack.c.b16 %v3159, %v3155
        %v3272 = vpack.c.b16 %v3160, %v3156
        %v3273 = vpack.c.b16 %v3161, %v3157
        %v3274 = vpack.c.b16 %v3162, %v3158
        %v3275 = vpack.c.b16 %v3167, %v3163
        %v3276 = vpack.c.b16 %v3168, %v3164
        %v3277 = vpack.c.b16 %v3169, %v3165
        %v3278 = vpack.c.b16 %v3170, %v3166
        %v3279 = vpack.c.b16 %v3175, %v3171
        %v3280 = vpack.c.b16 %v3176, %v3172
        %v3281 = vpack.c.b16 %v3177, %v3173
        %v3282 = vpack.c.b16 %v3178, %v3174
        %v3283 = vpack.c.b16 %v3183, %v3179
        %v3284 = vpack.c.b16 %v3184, %v3180
        %v3285 = vpack.c.b16 %v3185, %v3181
        %v3286 = vpack.c.b16 %v3186, %v3182
        %v3287 = vpack.c.b16 %v3191, %v3187
        %v3288 = vpack.c.b16 %v3192, %v3188
        %v3289 = vpack.c.b16 %v3193, %v3189
        %v3290 = vpack.c.b16 %v3194, %v3190
        %v3291 = vpack.c.b16 %v3199, %v3195
        %v3292 = vpack.c.b16 %v3200, %v3196
        %v3293 = vpack.c.b16 %v3201, %v3197
        %v3294 = vpack.c.b16 %v3202, %v3198
        %v3295 = vpack.c.b16 %v3207, %v3203
        %v3296 = vpack.c.b16 %v3208, %v3204
        %v3297 = vpack.c.b16 %v3209, %v3205
        %v3298 = vpack.c.b16 %v3210, %v3206
        %v3299 = vpack.c.b16 %v3215, %v3211
        %v3300 = vpack.c.b16 %v3216, %v3212
        %v3301 = vpack.c.b16 %v3217, %v3213
        %v3302 = vpack.c.b16 %v3218, %v3214
        %v3303 = vpack.c.b16 %v3223, %v3219
        %v3304 = vpack.c.b16 %v3224, %v3220
        %v3305 = vpack.c.b16 %v3225, %v3221
        %v3306 = vpack.c.b16 %v3226, %v3222
        %v3307 = vpack.c.b16 %v3231, %v3227
        %v3308 = vpack.c.b16 %v3232, %v3228
        %v3309 = vpack.c.b16 %v3233, %v3229
        %v3310 = vpack.c.b16 %v3234, %v3230
        %v3311 = vpack.c.b16 %v3239, %v3235
        %v3312 = vpack.c.b16 %v3240, %v3236
        %v3313 = vpack.c.b16 %v3241, %v3237
        %v3314 = vpack.c.b16 %v3242, %v3238
        %v3315 = vpack.c.b16 %v3247, %v3243
        %v3316 = vpack.c.b16 %v3248, %v3244
        %v3317 = vpack.c.b16 %v3249, %v3245
        %v3318 = vpack.c.b16 %v3250, %v3246
        %v3319 = vpack.c.b16 %v3255, %v3251
        %v3320 = vpack.c.b16 %v3256, %v3252
        %v3321 = vpack.c.b16 %v3257, %v3253
        %v3322 = vpack.c.b16 %v3258, %v3254
        %3387 = vmatpush.bf16.msra.mxu0 %v3287
        %3388 = vmatpush.bf16.msra.mxu0 %v3283
        %3389 = vmatpush.bf16.msra.mxu0 %v3279
        %3390 = vmatpush.bf16.msra.mxu0 %v3275
        %3391 = vmatpush.bf16.msra.mxu0 %v3271
        %3392 = vmatpush.bf16.msra.mxu0 %v3267
        %3393 = vmatpush.bf16.msra.mxu0 %v3263
        %3394 = vmatpush.bf16.msra.mxu0 %v3259
        %3395 = vmatmul.bf16.gmra.mxu0 %v2998
        %v3396 = vpop.f32.mrf.mxu0
        %v3397 = vadd.f32 0.0, %v3396
        %v3398 = vpop.f32.mrf.mxu0
        %v3399 = vadd.f32 0.0, %v3398
        %3400 = vmatmul.bf16.gmra.mxu0 %v3000
        %v3401 = vpop.f32.mrf.mxu0
        %v3402 = vadd.f32 0.0, %v3401
        %v3403 = vpop.f32.mrf.mxu0
        %3404 = vdwg.mxu0
        %3405 = vmatpush.bf16.msra.mxu0 %v3319
        %3406 = vmatpush.bf16.msra.mxu0 %v3315
        %3407 = vmatpush.bf16.msra.mxu0 %v3311
        %3408 = vmatpush.bf16.msra.mxu0 %v3307
        %3409 = vmatpush.bf16.msra.mxu0 %v3303
        %3410 = vmatpush.bf16.msra.mxu0 %v3299
        %3411 = vmatpush.bf16.msra.mxu0 %v3295
        %3412 = vmatpush.bf16.msra.mxu0 %v3291
        %3413 = vmatmul.bf16.gmra.mxu0 %v2999
        %v3414 = vpop.f32.mrf.mxu0
        %v3415 = vadd.f32 %v3397, %v3414
        %v3416 = vpop.f32.mrf.mxu0
        %v3417 = vadd.f32 %v3399, %v3416
        %3418 = vmatmul.bf16.gmra.mxu0 %v3001
        %v3419 = vpop.f32.mrf.mxu0
        %v3420 = vadd.f32 %v3402, %v3419
        %v3421 = vpop.f32.mrf.mxu0
        %3422 = vdwg.mxu0
        %3423 = vmatpush.bf16.msra.mxu0 %v3288
        %3424 = vmatpush.bf16.msra.mxu0 %v3284
        %3425 = vmatpush.bf16.msra.mxu0 %v3280
        %3426 = vmatpush.bf16.msra.mxu0 %v3276
        %3427 = vmatpush.bf16.msra.mxu0 %v3272
        %3428 = vmatpush.bf16.msra.mxu0 %v3268
        %3429 = vmatpush.bf16.msra.mxu0 %v3264
        %3430 = vmatpush.bf16.msra.mxu0 %v3260
        %3431 = vmatmul.bf16.gmra.mxu0 %v2998
        %v3432 = vpop.f32.mrf.mxu0
        %v3433 = vadd.f32 0.0, %v3432
        %v3434 = vpop.f32.mrf.mxu0
        %v3435 = vadd.f32 0.0, %v3434
        %3436 = vmatmul.bf16.gmra.mxu0 %v3000
        %v3437 = vpop.f32.mrf.mxu0
        %v3438 = vadd.f32 0.0, %v3437
        %v3439 = vpop.f32.mrf.mxu0
        %3440 = vdwg.mxu0
        %3441 = vmatpush.bf16.msra.mxu0 %v3320
        %3442 = vmatpush.bf16.msra.mxu0 %v3316
        %3443 = vmatpush.bf16.msra.mxu0 %v3312
        %3444 = vmatpush.bf16.msra.mxu0 %v3308
        %3445 = vmatpush.bf16.msra.mxu0 %v3304
        %3446 = vmatpush.bf16.msra.mxu0 %v3300
        %3447 = vmatpush.bf16.msra.mxu0 %v3296
        %3448 = vmatpush.bf16.msra.mxu0 %v3292
        %3449 = vmatmul.bf16.gmra.mxu0 %v2999
        %v3450 = vpop.f32.mrf.mxu0
        %v3451 = vadd.f32 %v3433, %v3450
        %v3452 = vpop.f32.mrf.mxu0
        %v3453 = vadd.f32 %v3435, %v3452
        %3454 = vmatmul.bf16.gmra.mxu0 %v3001
        %v3455 = vpop.f32.mrf.mxu0
        %v3456 = vadd.f32 %v3438, %v3455
        %v3457 = vpop.f32.mrf.mxu0
        %3458 = vdwg.mxu0
        %3459 = vmatpush.bf16.msra.mxu0 %v3289
        %3460 = vmatpush.bf16.msra.mxu0 %v3285
        %3461 = vmatpush.bf16.msra.mxu0 %v3281
        %3462 = vmatpush.bf16.msra.mxu0 %v3277
        %3463 = vmatpush.bf16.msra.mxu0 %v3273
        %3464 = vmatpush.bf16.msra.mxu0 %v3269
        %3465 = vmatpush.bf16.msra.mxu0 %v3265
        %3466 = vmatpush.bf16.msra.mxu0 %v3261
        %3467 = vmatmul.bf16.gmra.mxu0 %v2998
        %v3468 = vpop.f32.mrf.mxu0
        %v3469 = vadd.f32 0.0, %v3468
        %v3470 = vpop.f32.mrf.mxu0
        %v3471 = vadd.f32 0.0, %v3470
        %3472 = vmatmul.bf16.gmra.mxu0 %v3000
        %v3473 = vpop.f32.mrf.mxu0
        %v3474 = vadd.f32 0.0, %v3473
        %v3475 = vpop.f32.mrf.mxu0
        %3476 = vdwg.mxu0
        %3477 = vmatpush.bf16.msra.mxu0 %v3321
        %3478 = vmatpush.bf16.msra.mxu0 %v3317
        %3479 = vmatpush.bf16.msra.mxu0 %v3313
        %3480 = vmatpush.bf16.msra.mxu0 %v3309
        %3481 = vmatpush.bf16.msra.mxu0 %v3305
        %3482 = vmatpush.bf16.msra.mxu0 %v3301
        %3483 = vmatpush.bf16.msra.mxu0 %v3297
        %3484 = vmatpush.bf16.msra.mxu0 %v3293
        %3485 = vmatmul.bf16.gmra.mxu0 %v2999
        %v3486 = vpop.f32.mrf.mxu0
        %v3487 = vadd.f32 %v3469, %v3486
        %v3488 = vpop.f32.mrf.mxu0
        %v3489 = vadd.f32 %v3471, %v3488
        %3490 = vmatmul.bf16.gmra.mxu0 %v3001
        %v3491 = vpop.f32.mrf.mxu0
        %v3492 = vadd.f32 %v3474, %v3491
        %v3493 = vpop.f32.mrf.mxu0
        %3494 = vdwg.mxu0
        %3495 = vmatpush.bf16.msra.mxu0 %v3290
        %3496 = vmatpush.bf16.msra.mxu0 %v3286
        %3497 = vmatpush.bf16.msra.mxu0 %v3282
        %3498 = vmatpush.bf16.msra.mxu0 %v3278
        %3499 = vmatpush.bf16.msra.mxu0 %v3274
        %3500 = vmatpush.bf16.msra.mxu0 %v3270
        %3501 = vmatpush.bf16.msra.mxu0 %v3266
        %3502 = vmatpush.bf16.msra.mxu0 %v3262
        %3503 = vmatmul.bf16.gmra.mxu0 %v2998
        %v3504 = vpop.f32.mrf.mxu0
        %v3505 = vadd.f32 0.0, %v3504
        %v3506 = vpop.f32.mrf.mxu0
        %v3507 = vadd.f32 0.0, %v3506
        %3508 = vmatmul.bf16.gmra.mxu0 %v3000
        %v3509 = vpop.f32.mrf.mxu0
        %v3510 = vadd.f32 0.0, %v3509
        %v3511 = vpop.f32.mrf.mxu0
        %3512 = vdwg.mxu0
        %3513 = vmatpush.bf16.msra.mxu0 %v3322
        %3514 = vmatpush.bf16.msra.mxu0 %v3318
        %3515 = vmatpush.bf16.msra.mxu0 %v3314
        %3516 = vmatpush.bf16.msra.mxu0 %v3310
        %3517 = vmatpush.bf16.msra.mxu0 %v3306
        %3518 = vmatpush.bf16.msra.mxu0 %v3302
        %3519 = vmatpush.bf16.msra.mxu0 %v3298
        %3520 = vmatpush.bf16.msra.mxu0 %v3294
        %3521 = vmatmul.bf16.gmra.mxu0 %v2999
        %v3522 = vpop.f32.mrf.mxu0
        %v3523 = vadd.f32 %v3505, %v3522
        %v3524 = vpop.f32.mrf.mxu0
        %v3525 = vadd.f32 %v3507, %v3524
        %3526 = vmatmul.bf16.gmra.mxu0 %v3001
        %v3527 = vpop.f32.mrf.mxu0
        %v3528 = vadd.f32 %v3510, %v3527
        %v3529 = vpop.f32.mrf.mxu0
        %3530 = vdwg.mxu0
        %v3595 = vunpack.c.l.b16 %v2934
        %v3596 = vunpack.c.h.b16 %v2934
        %v3597 = vunpack.c.l.b16 %v2935
        %v3598 = vunpack.c.h.b16 %v2935
        %v3599 = vunpack.c.l.b16 %v2936
        %v3600 = vunpack.c.h.b16 %v2936
        %v3601 = vunpack.c.l.b16 %v2937
        %v3602 = vunpack.c.h.b16 %v2937
        %v3603 = vunpack.c.l.b16 %v2938
        %v3604 = vunpack.c.h.b16 %v2938
        %v3605 = vunpack.c.l.b16 %v2939
        %v3606 = vunpack.c.h.b16 %v2939
        %v3607 = vunpack.c.l.b16 %v2940
        %v3608 = vunpack.c.h.b16 %v2940
        %v3609 = vunpack.c.l.b16 %v2941
        %v3610 = vunpack.c.h.b16 %v2941
        %v3611 = vunpack.c.l.b16 %v2942
        %v3612 = vunpack.c.h.b16 %v2942
        %v3613 = vunpack.c.l.b16 %v2943
        %v3614 = vunpack.c.h.b16 %v2943
        %v3615 = vunpack.c.l.b16 %v2944
        %v3616 = vunpack.c.h.b16 %v2944
        %v3617 = vunpack.c.l.b16 %v2945
        %v3618 = vunpack.c.h.b16 %v2945
        %v3619 = vunpack.c.l.b16 %v2946
        %v3620 = vunpack.c.h.b16 %v2946
        %v3621 = vunpack.c.l.b16 %v2947
        %v3622 = vunpack.c.h.b16 %v2947
        %v3623 = vunpack.c.l.b16 %v2948
        %v3624 = vunpack.c.h.b16 %v2948
        %v3625 = vunpack.c.l.b16 %v2949
        %v3626 = vunpack.c.h.b16 %v2949
        %v3627 = vunpack.c.l.b16 %v2950
        %v3628 = vunpack.c.h.b16 %v2950
        %v3629 = vunpack.c.l.b16 %v2951
        %v3630 = vunpack.c.h.b16 %v2951
        %v3631 = vunpack.c.l.b16 %v2952
        %v3632 = vunpack.c.h.b16 %v2952
        %v3633 = vunpack.c.l.b16 %v2953
        %v3634 = vunpack.c.h.b16 %v2953
        %v3635 = vunpack.c.l.b16 %v2954
        %v3636 = vunpack.c.h.b16 %v2954
        %v3637 = vunpack.c.l.b16 %v2955
        %v3638 = vunpack.c.h.b16 %v2955
        %v3639 = vunpack.c.l.b16 %v2956
        %v3640 = vunpack.c.h.b16 %v2956
        %v3641 = vunpack.c.l.b16 %v2957
        %v3642 = vunpack.c.h.b16 %v2957
        %v3643 = vunpack.c.l.b16 %v2958
        %v3644 = vunpack.c.h.b16 %v2958
        %v3645 = vunpack.c.l.b16 %v2959
        %v3646 = vunpack.c.h.b16 %v2959
        %v3647 = vunpack.c.l.b16 %v2960
        %v3648 = vunpack.c.h.b16 %v2960
        %v3649 = vunpack.c.l.b16 %v2961
        %v3650 = vunpack.c.h.b16 %v2961
        %v3651 = vunpack.c.l.b16 %v2962
        %v3652 = vunpack.c.h.b16 %v2962
        %v3653 = vunpack.c.l.b16 %v2963
        %v3654 = vunpack.c.h.b16 %v2963
        %v3655 = vunpack.c.l.b16 %v2964
        %v3656 = vunpack.c.h.b16 %v2964
        %v3657 = vunpack.c.l.b16 %v2965
        %v3658 = vunpack.c.h.b16 %v2965
        %v3659 = vunpack.c.l.b16 %v2966
        %v3660 = vunpack.c.h.b16 %v2966
        %v3661 = vunpack.c.l.b16 %v2967
        %v3662 = vunpack.c.h.b16 %v2967
        %v3663 = vunpack.c.l.b16 %v2968
        %v3664 = vunpack.c.h.b16 %v2968
        %v3665 = vunpack.c.l.b16 %v2969
        %v3666 = vunpack.c.h.b16 %v2969
        %v3667 = vunpack.c.l.b16 %v2970
        %v3668 = vunpack.c.h.b16 %v2970
        %v3669 = vunpack.c.l.b16 %v2971
        %v3670 = vunpack.c.h.b16 %v2971
        %v3671 = vunpack.c.l.b16 %v2972
        %v3672 = vunpack.c.h.b16 %v2972
        %v3673 = vunpack.c.l.b16 %v2973
        %v3674 = vunpack.c.h.b16 %v2973
        %v3675 = vunpack.c.l.b16 %v2974
        %v3676 = vunpack.c.h.b16 %v2974
        %v3677 = vunpack.c.l.b16 %v2975
        %v3678 = vunpack.c.h.b16 %v2975
        %v3679 = vunpack.c.l.b16 %v2976
        %v3680 = vunpack.c.h.b16 %v2976
        %v3681 = vunpack.c.l.b16 %v2977
        %v3682 = vunpack.c.h.b16 %v2977
        %v3683 = vunpack.c.l.b16 %v2978
        %v3684 = vunpack.c.h.b16 %v2978
        %v3685 = vunpack.c.l.b16 %v2979
        %v3686 = vunpack.c.h.b16 %v2979
        %v3687 = vunpack.c.l.b16 %v2980
        %v3688 = vunpack.c.h.b16 %v2980
        %v3689 = vunpack.c.l.b16 %v2981
        %v3690 = vunpack.c.h.b16 %v2981
        %v3691 = vunpack.c.l.b16 %v2982
        %v3692 = vunpack.c.h.b16 %v2982
        %v3693 = vunpack.c.l.b16 %v2983
        %v3694 = vunpack.c.h.b16 %v2983
        %v3695 = vunpack.c.l.b16 %v2984
        %v3696 = vunpack.c.h.b16 %v2984
        %v3697 = vunpack.c.l.b16 %v2985
        %v3698 = vunpack.c.h.b16 %v2985
        %v3699 = vunpack.c.l.b16 %v2986
        %v3700 = vunpack.c.h.b16 %v2986
        %v3701 = vunpack.c.l.b16 %v2987
        %v3702 = vunpack.c.h.b16 %v2987
        %v3703 = vunpack.c.l.b16 %v2988
        %v3704 = vunpack.c.h.b16 %v2988
        %v3705 = vunpack.c.l.b16 %v2989
        %v3706 = vunpack.c.h.b16 %v2989
        %v3707 = vunpack.c.l.b16 %v2990
        %v3708 = vunpack.c.h.b16 %v2990
        %v3709 = vunpack.c.l.b16 %v2991
        %v3710 = vunpack.c.h.b16 %v2991
        %v3711 = vunpack.c.l.b16 %v2992
        %v3712 = vunpack.c.h.b16 %v2992
        %v3713 = vunpack.c.l.b16 %v2993
        %v3714 = vunpack.c.h.b16 %v2993
        %v3715 = vunpack.c.l.b16 %v2994
        %v3716 = vunpack.c.h.b16 %v2994
        %v3717 = vunpack.c.l.b16 %v2995
        %v3718 = vunpack.c.h.b16 %v2995
        %v3719 = vunpack.c.l.b16 %v2996
        %v3720 = vunpack.c.h.b16 %v2996
        %v3721 = vunpack.c.l.b16 %v2997
        %v3722 = vunpack.c.h.b16 %v2997
        %v3723 = vpack.c.b16 %v3599, %v3595
        %v3724 = vpack.c.b16 %v3600, %v3596
        %v3725 = vpack.c.b16 %v3601, %v3597
        %v3726 = vpack.c.b16 %v3602, %v3598
        %v3727 = vpack.c.b16 %v3607, %v3603
        %v3728 = vpack.c.b16 %v3608, %v3604
        %v3729 = vpack.c.b16 %v3609, %v3605
        %v3730 = vpack.c.b16 %v3610, %v3606
        %v3731 = vpack.c.b16 %v3615, %v3611
        %v3732 = vpack.c.b16 %v3616, %v3612
        %v3733 = vpack.c.b16 %v3617, %v3613
        %v3734 = vpack.c.b16 %v3618, %v3614
        %v3735 = vpack.c.b16 %v3623, %v3619
        %v3736 = vpack.c.b16 %v3624, %v3620
        %v3737 = vpack.c.b16 %v3625, %v3621
        %v3738 = vpack.c.b16 %v3626, %v3622
        %v3739 = vpack.c.b16 %v3631, %v3627
        %v3740 = vpack.c.b16 %v3632, %v3628
        %v3741 = vpack.c.b16 %v3633, %v3629
        %v3742 = vpack.c.b16 %v3634, %v3630
        %v3743 = vpack.c.b16 %v3639, %v3635
        %v3744 = vpack.c.b16 %v3640, %v3636
        %v3745 = vpack.c.b16 %v3641, %v3637
        %v3746 = vpack.c.b16 %v3642, %v3638
        %v3747 = vpack.c.b16 %v3647, %v3643
        %v3748 = vpack.c.b16 %v3648, %v3644
        %v3749 = vpack.c.b16 %v3649, %v3645
        %v3750 = vpack.c.b16 %v3650, %v3646
        %v3751 = vpack.c.b16 %v3655, %v3651
        %v3752 = vpack.c.b16 %v3656, %v3652
        %v3753 = vpack.c.b16 %v3657, %v3653
        %v3754 = vpack.c.b16 %v3658, %v3654
        %v3755 = vpack.c.b16 %v3663, %v3659
        %v3756 = vpack.c.b16 %v3664, %v3660
        %v3757 = vpack.c.b16 %v3665, %v3661
        %v3758 = vpack.c.b16 %v3666, %v3662
        %v3759 = vpack.c.b16 %v3671, %v3667
        %v3760 = vpack.c.b16 %v3672, %v3668
        %v3761 = vpack.c.b16 %v3673, %v3669
        %v3762 = vpack.c.b16 %v3674, %v3670
        %v3763 = vpack.c.b16 %v3679, %v3675
        %v3764 = vpack.c.b16 %v3680, %v3676
        %v3765 = vpack.c.b16 %v3681, %v3677
        %v3766 = vpack.c.b16 %v3682, %v3678
        %v3767 = vpack.c.b16 %v3687, %v3683
        %v3768 = vpack.c.b16 %v3688, %v3684
        %v3769 = vpack.c.b16 %v3689, %v3685
        %v3770 = vpack.c.b16 %v3690, %v3686
        %v3771 = vpack.c.b16 %v3695, %v3691
        %v3772 = vpack.c.b16 %v3696, %v3692
        %v3773 = vpack.c.b16 %v3697, %v3693
        %v3774 = vpack.c.b16 %v3698, %v3694
        %v3775 = vpack.c.b16 %v3703, %v3699
        %v3776 = vpack.c.b16 %v3704, %v3700
        %v3777 = vpack.c.b16 %v3705, %v3701
        %v3778 = vpack.c.b16 %v3706, %v3702
        %v3779 = vpack.c.b16 %v3711, %v3707
        %v3780 = vpack.c.b16 %v3712, %v3708
        %v3781 = vpack.c.b16 %v3713, %v3709
        %v3782 = vpack.c.b16 %v3714, %v3710
        %v3783 = vpack.c.b16 %v3719, %v3715
        %v3784 = vpack.c.b16 %v3720, %v3716
        %v3785 = vpack.c.b16 %v3721, %v3717
        %v3786 = vpack.c.b16 %v3722, %v3718
        %3851 = vmatpush.bf16.msra.mxu0 %v3751
        %3852 = vmatpush.bf16.msra.mxu0 %v3747
        %3853 = vmatpush.bf16.msra.mxu0 %v3743
        %3854 = vmatpush.bf16.msra.mxu0 %v3739
        %3855 = vmatpush.bf16.msra.mxu0 %v3735
        %3856 = vmatpush.bf16.msra.mxu0 %v3731
        %3857 = vmatpush.bf16.msra.mxu0 %v3727
        %3858 = vmatpush.bf16.msra.mxu0 %v3723
        %3859 = vmatmul.bf16.gmra.mxu0 %v2930
        %v3860 = vpop.f32.mrf.mxu0
        %v3861 = vadd.f32 %v3415, %v3860
        %v3862 = vpop.f32.mrf.mxu0
        %v3863 = vadd.f32 %v3417, %v3862
        %3864 = vmatmul.bf16.gmra.mxu0 %v2932
        %v3865 = vpop.f32.mrf.mxu0
        %v3866 = vadd.f32 %v3420, %v3865
        %v3867 = vpop.f32.mrf.mxu0
        %3868 = vdwg.mxu0
        %3869 = vmatpush.bf16.msra.mxu0 %v3783
        %3870 = vmatpush.bf16.msra.mxu0 %v3779
        %3871 = vmatpush.bf16.msra.mxu0 %v3775
        %3872 = vmatpush.bf16.msra.mxu0 %v3771
        %3873 = vmatpush.bf16.msra.mxu0 %v3767
        %3874 = vmatpush.bf16.msra.mxu0 %v3763
        %3875 = vmatpush.bf16.msra.mxu0 %v3759
        %3876 = vmatpush.bf16.msra.mxu0 %v3755
        %3877 = vmatmul.bf16.gmra.mxu0 %v2931
        %v3878 = vpop.f32.mrf.mxu0
        %v3879 = vadd.f32 %v3861, %v3878
        %v3880 = vpop.f32.mrf.mxu0
        %v3881 = vadd.f32 %v3863, %v3880
        %3882 = vmatmul.bf16.gmra.mxu0 %v2933
        %v3883 = vpop.f32.mrf.mxu0
        %v3884 = vadd.f32 %v3866, %v3883
        %v3885 = vpop.f32.mrf.mxu0
        %3886 = vdwg.mxu0
        %3887 = vmatpush.bf16.msra.mxu0 %v3752
        %3888 = vmatpush.bf16.msra.mxu0 %v3748
        %3889 = vmatpush.bf16.msra.mxu0 %v3744
        %3890 = vmatpush.bf16.msra.mxu0 %v3740
        %3891 = vmatpush.bf16.msra.mxu0 %v3736
        %3892 = vmatpush.bf16.msra.mxu0 %v3732
        %3893 = vmatpush.bf16.msra.mxu0 %v3728
        %3894 = vmatpush.bf16.msra.mxu0 %v3724
        %3895 = vmatmul.bf16.gmra.mxu0 %v2930
        %v3896 = vpop.f32.mrf.mxu0
        %v3897 = vadd.f32 %v3451, %v3896
        %v3898 = vpop.f32.mrf.mxu0
        %v3899 = vadd.f32 %v3453, %v3898
        %3900 = vmatmul.bf16.gmra.mxu0 %v2932
        %v3901 = vpop.f32.mrf.mxu0
        %v3902 = vadd.f32 %v3456, %v3901
        %v3903 = vpop.f32.mrf.mxu0
        %3904 = vdwg.mxu0
        %3905 = vmatpush.bf16.msra.mxu0 %v3784
        %3906 = vmatpush.bf16.msra.mxu0 %v3780
        %3907 = vmatpush.bf16.msra.mxu0 %v3776
        %3908 = vmatpush.bf16.msra.mxu0 %v3772
        %3909 = vmatpush.bf16.msra.mxu0 %v3768
        %3910 = vmatpush.bf16.msra.mxu0 %v3764
        %3911 = vmatpush.bf16.msra.mxu0 %v3760
        %3912 = vmatpush.bf16.msra.mxu0 %v3756
        %3913 = vmatmul.bf16.gmra.mxu0 %v2931
        %v3914 = vpop.f32.mrf.mxu0
        %v3915 = vadd.f32 %v3897, %v3914
        %v3916 = vpop.f32.mrf.mxu0
        %v3917 = vadd.f32 %v3899, %v3916
        %3918 = vmatmul.bf16.gmra.mxu0 %v2933
        %v3919 = vpop.f32.mrf.mxu0
        %v3920 = vadd.f32 %v3902, %v3919
        %v3921 = vpop.f32.mrf.mxu0
        %3922 = vdwg.mxu0
        %3923 = vmatpush.bf16.msra.mxu0 %v3753
        %3924 = vmatpush.bf16.msra.mxu0 %v3749
        %3925 = vmatpush.bf16.msra.mxu0 %v3745
        %3926 = vmatpush.bf16.msra.mxu0 %v3741
        %3927 = vmatpush.bf16.msra.mxu0 %v3737
        %3928 = vmatpush.bf16.msra.mxu0 %v3733
        %3929 = vmatpush.bf16.msra.mxu0 %v3729
        %3930 = vmatpush.bf16.msra.mxu0 %v3725
        %3931 = vmatmul.bf16.gmra.mxu0 %v2930
        %v3932 = vpop.f32.mrf.mxu0
        %v3933 = vadd.f32 %v3487, %v3932
        %v3934 = vpop.f32.mrf.mxu0
        %v3935 = vadd.f32 %v3489, %v3934
        %3936 = vmatmul.bf16.gmra.mxu0 %v2932
        %v3937 = vpop.f32.mrf.mxu0
        %v3938 = vadd.f32 %v3492, %v3937
        %v3939 = vpop.f32.mrf.mxu0
        %3940 = vdwg.mxu0
        %3941 = vmatpush.bf16.msra.mxu0 %v3785
        %3942 = vmatpush.bf16.msra.mxu0 %v3781
        %3943 = vmatpush.bf16.msra.mxu0 %v3777
        %3944 = vmatpush.bf16.msra.mxu0 %v3773
        %3945 = vmatpush.bf16.msra.mxu0 %v3769
        %3946 = vmatpush.bf16.msra.mxu0 %v3765
        %3947 = vmatpush.bf16.msra.mxu0 %v3761
        %3948 = vmatpush.bf16.msra.mxu0 %v3757
        %3949 = vmatmul.bf16.gmra.mxu0 %v2931
        %v3950 = vpop.f32.mrf.mxu0
        %v3951 = vadd.f32 %v3933, %v3950
        %v3952 = vpop.f32.mrf.mxu0
        %v3953 = vadd.f32 %v3935, %v3952
        %3954 = vmatmul.bf16.gmra.mxu0 %v2933
        %v3955 = vpop.f32.mrf.mxu0
        %v3956 = vadd.f32 %v3938, %v3955
        %v3957 = vpop.f32.mrf.mxu0
        %3958 = vdwg.mxu0
        %3959 = vmatpush.bf16.msra.mxu0 %v3754
        %3960 = vmatpush.bf16.msra.mxu0 %v3750
        %3961 = vmatpush.bf16.msra.mxu0 %v3746
        %3962 = vmatpush.bf16.msra.mxu0 %v3742
        %3963 = vmatpush.bf16.msra.mxu0 %v3738
        %3964 = vmatpush.bf16.msra.mxu0 %v3734
        %3965 = vmatpush.bf16.msra.mxu0 %v3730
        %3966 = vmatpush.bf16.msra.mxu0 %v3726
        %3967 = vmatmul.bf16.gmra.mxu0 %v2930
        %v3968 = vpop.f32.mrf.mxu0
        %v3969 = vadd.f32 %v3523, %v3968
        %v3970 = vpop.f32.mrf.mxu0
        %v3971 = vadd.f32 %v3525, %v3970
        %3972 = vmatmul.bf16.gmra.mxu0 %v2932
        %v3973 = vpop.f32.mrf.mxu0
        %v3974 = vadd.f32 %v3528, %v3973
        %v3975 = vpop.f32.mrf.mxu0
        %3976 = vdwg.mxu0
        %3977 = vmatpush.bf16.msra.mxu0 %v3786
        %3978 = vmatpush.bf16.msra.mxu0 %v3782
        %3979 = vmatpush.bf16.msra.mxu0 %v3778
        %3980 = vmatpush.bf16.msra.mxu0 %v3774
        %3981 = vmatpush.bf16.msra.mxu0 %v3770
        %3982 = vmatpush.bf16.msra.mxu0 %v3766
        %3983 = vmatpush.bf16.msra.mxu0 %v3762
        %3984 = vmatpush.bf16.msra.mxu0 %v3758
        %3985 = vmatmul.bf16.gmra.mxu0 %v2931
        %v3986 = vpop.f32.mrf.mxu0
        %v3987 = vadd.f32 %v3969, %v3986
        %v3988 = vpop.f32.mrf.mxu0
        %v3989 = vadd.f32 %v3971, %v3988
        %3990 = vmatmul.bf16.gmra.mxu0 %v2933
        %v3991 = vpop.f32.mrf.mxu0
        %v3992 = vadd.f32 %v3974, %v3991
        %v3993 = vpop.f32.mrf.mxu0
        %3994 = vdwg.mxu0
        %v3995 = vrot.slane %v2895, 1
        %v3996 = vrot.slane %v2897, 1
        %v3997 = vsel %vm727, %v3995, %v3996
        %v3998 = vrot.slane %v2896, 1
        %v3999 = vrot.slane %v2898, 1
        %v4000 = vsel %vm727, %v3998, %v3999
        %v4001 = vrot.slane %v2899, 1
        %v4002 = vsel %vm727, %v3996, %v4001
        %v4003 = vrot.slane %v2900, 1
        %v4004 = vsel %vm727, %v3999, %v4003
        %v4011 = vrot.slane %v2895, 5
        %v4012 = vrot.slane %v2896, 5
        %vm4015 = vcmask 1042432
        %v4016 = vsel %vm4015, %v4001, %v4011
        %v4017 = vsel %vm4015, %v4003, %v4012
        %v4018 = vpack.c.bf16 %v4002, %v3997
        %v4019 = vpack.c.bf16 %v4004, %v4000
        %v4020 = vpack.c.bf16 %v4016, %v4016
        %v4021 = vpack.c.bf16 %v4017, %v4017
        %s4022 = scalar_lea.vmem [#allocation3], 1024
        %v4023 = vld [vmem:[%s4022] sm:$0xff]
        %v4024 = vld [vmem:[%s4022 + $0x8] sm:$0xff]
        %v4025 = vld [vmem:[%s4022 + $0x10] sm:$0xff]
        %v4026 = vld [vmem:[%s4022 + $0x18] sm:$0xff]
        %v4027 = vld [vmem:[%s4022 + $0x20] sm:$0xff]
        %v4028 = vld [vmem:[%s4022 + $0x28] sm:$0xff]
        %v4029 = vld [vmem:[%s4022 + $0x30] sm:$0xff]
        %v4030 = vld [vmem:[%s4022 + $0x38] sm:$0xff]
        %v4031 = vld [vmem:[%s4022 + $0x40] sm:$0xff]
        %v4032 = vld [vmem:[%s4022 + $0x48] sm:$0xff]
        %v4033 = vld [vmem:[%s4022 + $0x50] sm:$0xff]
        %v4034 = vld [vmem:[%s4022 + $0x58] sm:$0xff]
        %v4035 = vld [vmem:[%s4022 + $0x60] sm:$0xff]
        %v4036 = vld [vmem:[%s4022 + $0x68] sm:$0xff]
        %v4037 = vld [vmem:[%s4022 + $0x70] sm:$0xff]
        %v4038 = vld [vmem:[%s4022 + $0x78] sm:$0xff]
        %v4039 = vld [vmem:[%s4022 + $0x80] sm:$0xff]
        %v4040 = vld [vmem:[%s4022 + $0x88] sm:$0xff]
        %v4041 = vld [vmem:[%s4022 + $0x90] sm:$0xff]
        %v4042 = vld [vmem:[%s4022 + $0x98] sm:$0xff]
        %v4043 = vld [vmem:[%s4022 + $0xa0] sm:$0xff]
        %v4044 = vld [vmem:[%s4022 + $0xa8] sm:$0xff]
        %v4045 = vld [vmem:[%s4022 + $0xb0] sm:$0xff]
        %v4046 = vld [vmem:[%s4022 + $0xb8] sm:$0xff]
        %v4047 = vld [vmem:[%s4022 + $0xc0] sm:$0xff]
        %v4048 = vld [vmem:[%s4022 + $0xc8] sm:$0xff]
        %v4049 = vld [vmem:[%s4022 + $0xd0] sm:$0xff]
        %v4050 = vld [vmem:[%s4022 + $0xd8] sm:$0xff]
        %v4051 = vld [vmem:[%s4022 + $0xe0] sm:$0xff]
        %v4052 = vld [vmem:[%s4022 + $0xe8] sm:$0xff]
        %v4053 = vld [vmem:[%s4022 + $0xf0] sm:$0xff]
        %v4054 = vld [vmem:[%s4022 + $0xf8] sm:$0xff]
        %v4055 = vld [vmem:[%s4022 + $0x100] sm:$0xff]
        %v4056 = vld [vmem:[%s4022 + $0x108] sm:$0xff]
        %v4057 = vld [vmem:[%s4022 + $0x110] sm:$0xff]
        %v4058 = vld [vmem:[%s4022 + $0x118] sm:$0xff]
        %v4059 = vld [vmem:[%s4022 + $0x120] sm:$0xff]
        %v4060 = vld [vmem:[%s4022 + $0x128] sm:$0xff]
        %v4061 = vld [vmem:[%s4022 + $0x130] sm:$0xff]
        %v4062 = vld [vmem:[%s4022 + $0x138] sm:$0xff]
        %v4063 = vld [vmem:[%s4022 + $0x140] sm:$0xff]
        %v4064 = vld [vmem:[%s4022 + $0x148] sm:$0xff]
        %v4065 = vld [vmem:[%s4022 + $0x150] sm:$0xff]
        %v4066 = vld [vmem:[%s4022 + $0x158] sm:$0xff]
        %v4067 = vld [vmem:[%s4022 + $0x160] sm:$0xff]
        %v4068 = vld [vmem:[%s4022 + $0x168] sm:$0xff]
        %v4069 = vld [vmem:[%s4022 + $0x170] sm:$0xff]
        %v4070 = vld [vmem:[%s4022 + $0x178] sm:$0xff]
        %v4071 = vld [vmem:[%s4022 + $0x180] sm:$0xff]
        %v4072 = vld [vmem:[%s4022 + $0x188] sm:$0xff]
        %v4073 = vld [vmem:[%s4022 + $0x190] sm:$0xff]
        %v4074 = vld [vmem:[%s4022 + $0x198] sm:$0xff]
        %v4075 = vld [vmem:[%s4022 + $0x1a0] sm:$0xff]
        %v4076 = vld [vmem:[%s4022 + $0x1a8] sm:$0xff]
        %v4077 = vld [vmem:[%s4022 + $0x1b0] sm:$0xff]
        %v4078 = vld [vmem:[%s4022 + $0x1b8] sm:$0xff]
        %v4079 = vld [vmem:[%s4022 + $0x1c0] sm:$0xff]
        %v4080 = vld [vmem:[%s4022 + $0x1c8] sm:$0xff]
        %v4081 = vld [vmem:[%s4022 + $0x1d0] sm:$0xff]
        %v4082 = vld [vmem:[%s4022 + $0x1d8] sm:$0xff]
        %v4083 = vld [vmem:[%s4022 + $0x1e0] sm:$0xff]
        %v4084 = vld [vmem:[%s4022 + $0x1e8] sm:$0xff]
        %v4085 = vld [vmem:[%s4022 + $0x1f0] sm:$0xff]
        %v4086 = vld [vmem:[%s4022 + $0x1f8] sm:$0xff]
        %v4151 = vunpack.c.l.b16 %v4023
        %v4152 = vunpack.c.h.b16 %v4023
        %v4153 = vunpack.c.l.b16 %v4024
        %v4154 = vunpack.c.h.b16 %v4024
        %v4155 = vunpack.c.l.b16 %v4025
        %v4156 = vunpack.c.h.b16 %v4025
        %v4157 = vunpack.c.l.b16 %v4026
        %v4158 = vunpack.c.h.b16 %v4026
        %v4159 = vunpack.c.l.b16 %v4027
        %v4160 = vunpack.c.h.b16 %v4027
        %v4161 = vunpack.c.l.b16 %v4028
        %v4162 = vunpack.c.h.b16 %v4028
        %v4163 = vunpack.c.l.b16 %v4029
        %v4164 = vunpack.c.h.b16 %v4029
        %v4165 = vunpack.c.l.b16 %v4030
        %v4166 = vunpack.c.h.b16 %v4030
        %v4167 = vunpack.c.l.b16 %v4031
        %v4168 = vunpack.c.h.b16 %v4031
        %v4169 = vunpack.c.l.b16 %v4032
        %v4170 = vunpack.c.h.b16 %v4032
        %v4171 = vunpack.c.l.b16 %v4033
        %v4172 = vunpack.c.h.b16 %v4033
        %v4173 = vunpack.c.l.b16 %v4034
        %v4174 = vunpack.c.h.b16 %v4034
        %v4175 = vunpack.c.l.b16 %v4035
        %v4176 = vunpack.c.h.b16 %v4035
        %v4177 = vunpack.c.l.b16 %v4036
        %v4178 = vunpack.c.h.b16 %v4036
        %v4179 = vunpack.c.l.b16 %v4037
        %v4180 = vunpack.c.h.b16 %v4037
        %v4181 = vunpack.c.l.b16 %v4038
        %v4182 = vunpack.c.h.b16 %v4038
        %v4183 = vunpack.c.l.b16 %v4039
        %v4184 = vunpack.c.h.b16 %v4039
        %v4185 = vunpack.c.l.b16 %v4040
        %v4186 = vunpack.c.h.b16 %v4040
        %v4187 = vunpack.c.l.b16 %v4041
        %v4188 = vunpack.c.h.b16 %v4041
        %v4189 = vunpack.c.l.b16 %v4042
        %v4190 = vunpack.c.h.b16 %v4042
        %v4191 = vunpack.c.l.b16 %v4043
        %v4192 = vunpack.c.h.b16 %v4043
        %v4193 = vunpack.c.l.b16 %v4044
        %v4194 = vunpack.c.h.b16 %v4044
        %v4195 = vunpack.c.l.b16 %v4045
        %v4196 = vunpack.c.h.b16 %v4045
        %v4197 = vunpack.c.l.b16 %v4046
        %v4198 = vunpack.c.h.b16 %v4046
        %v4199 = vunpack.c.l.b16 %v4047
        %v4200 = vunpack.c.h.b16 %v4047
        %v4201 = vunpack.c.l.b16 %v4048
        %v4202 = vunpack.c.h.b16 %v4048
        %v4203 = vunpack.c.l.b16 %v4049
        %v4204 = vunpack.c.h.b16 %v4049
        %v4205 = vunpack.c.l.b16 %v4050
        %v4206 = vunpack.c.h.b16 %v4050
        %v4207 = vunpack.c.l.b16 %v4051
        %v4208 = vunpack.c.h.b16 %v4051
        %v4209 = vunpack.c.l.b16 %v4052
        %v4210 = vunpack.c.h.b16 %v4052
        %v4211 = vunpack.c.l.b16 %v4053
        %v4212 = vunpack.c.h.b16 %v4053
        %v4213 = vunpack.c.l.b16 %v4054
        %v4214 = vunpack.c.h.b16 %v4054
        %v4215 = vunpack.c.l.b16 %v4055
        %v4216 = vunpack.c.h.b16 %v4055
        %v4217 = vunpack.c.l.b16 %v4056
        %v4218 = vunpack.c.h.b16 %v4056
        %v4219 = vunpack.c.l.b16 %v4057
        %v4220 = vunpack.c.h.b16 %v4057
        %v4221 = vunpack.c.l.b16 %v4058
        %v4222 = vunpack.c.h.b16 %v4058
        %v4223 = vunpack.c.l.b16 %v4059
        %v4224 = vunpack.c.h.b16 %v4059
        %v4225 = vunpack.c.l.b16 %v4060
        %v4226 = vunpack.c.h.b16 %v4060
        %v4227 = vunpack.c.l.b16 %v4061
        %v4228 = vunpack.c.h.b16 %v4061
        %v4229 = vunpack.c.l.b16 %v4062
        %v4230 = vunpack.c.h.b16 %v4062
        %v4231 = vunpack.c.l.b16 %v4063
        %v4232 = vunpack.c.h.b16 %v4063
        %v4233 = vunpack.c.l.b16 %v4064
        %v4234 = vunpack.c.h.b16 %v4064
        %v4235 = vunpack.c.l.b16 %v4065
        %v4236 = vunpack.c.h.b16 %v4065
        %v4237 = vunpack.c.l.b16 %v4066
        %v4238 = vunpack.c.h.b16 %v4066
        %v4239 = vunpack.c.l.b16 %v4067
        %v4240 = vunpack.c.h.b16 %v4067
        %v4241 = vunpack.c.l.b16 %v4068
        %v4242 = vunpack.c.h.b16 %v4068
        %v4243 = vunpack.c.l.b16 %v4069
        %v4244 = vunpack.c.h.b16 %v4069
        %v4245 = vunpack.c.l.b16 %v4070
        %v4246 = vunpack.c.h.b16 %v4070
        %v4247 = vunpack.c.l.b16 %v4071
        %v4248 = vunpack.c.h.b16 %v4071
        %v4249 = vunpack.c.l.b16 %v4072
        %v4250 = vunpack.c.h.b16 %v4072
        %v4251 = vunpack.c.l.b16 %v4073
        %v4252 = vunpack.c.h.b16 %v4073
        %v4253 = vunpack.c.l.b16 %v4074
        %v4254 = vunpack.c.h.b16 %v4074
        %v4255 = vunpack.c.l.b16 %v4075
        %v4256 = vunpack.c.h.b16 %v4075
        %v4257 = vunpack.c.l.b16 %v4076
        %v4258 = vunpack.c.h.b16 %v4076
        %v4259 = vunpack.c.l.b16 %v4077
        %v4260 = vunpack.c.h.b16 %v4077
        %v4261 = vunpack.c.l.b16 %v4078
        %v4262 = vunpack.c.h.b16 %v4078
        %v4263 = vunpack.c.l.b16 %v4079
        %v4264 = vunpack.c.h.b16 %v4079
        %v4265 = vunpack.c.l.b16 %v4080
        %v4266 = vunpack.c.h.b16 %v4080
        %v4267 = vunpack.c.l.b16 %v4081
        %v4268 = vunpack.c.h.b16 %v4081
        %v4269 = vunpack.c.l.b16 %v4082
        %v4270 = vunpack.c.h.b16 %v4082
        %v4271 = vunpack.c.l.b16 %v4083
        %v4272 = vunpack.c.h.b16 %v4083
        %v4273 = vunpack.c.l.b16 %v4084
        %v4274 = vunpack.c.h.b16 %v4084
        %v4275 = vunpack.c.l.b16 %v4085
        %v4276 = vunpack.c.h.b16 %v4085
        %v4277 = vunpack.c.l.b16 %v4086
        %v4278 = vunpack.c.h.b16 %v4086
        %v4279 = vpack.c.b16 %v4155, %v4151
        %v4280 = vpack.c.b16 %v4156, %v4152
        %v4281 = vpack.c.b16 %v4157, %v4153
        %v4282 = vpack.c.b16 %v4158, %v4154
        %v4283 = vpack.c.b16 %v4163, %v4159
        %v4284 = vpack.c.b16 %v4164, %v4160
        %v4285 = vpack.c.b16 %v4165, %v4161
        %v4286 = vpack.c.b16 %v4166, %v4162
        %v4287 = vpack.c.b16 %v4171, %v4167
        %v4288 = vpack.c.b16 %v4172, %v4168
        %v4289 = vpack.c.b16 %v4173, %v4169
        %v4290 = vpack.c.b16 %v4174, %v4170
        %v4291 = vpack.c.b16 %v4179, %v4175
        %v4292 = vpack.c.b16 %v4180, %v4176
        %v4293 = vpack.c.b16 %v4181, %v4177
        %v4294 = vpack.c.b16 %v4182, %v4178
        %v4295 = vpack.c.b16 %v4187, %v4183
        %v4296 = vpack.c.b16 %v4188, %v4184
        %v4297 = vpack.c.b16 %v4189, %v4185
        %v4298 = vpack.c.b16 %v4190, %v4186
        %v4299 = vpack.c.b16 %v4195, %v4191
        %v4300 = vpack.c.b16 %v4196, %v4192
        %v4301 = vpack.c.b16 %v4197, %v4193
        %v4302 = vpack.c.b16 %v4198, %v4194
        %v4303 = vpack.c.b16 %v4203, %v4199
        %v4304 = vpack.c.b16 %v4204, %v4200
        %v4305 = vpack.c.b16 %v4205, %v4201
        %v4306 = vpack.c.b16 %v4206, %v4202
        %v4307 = vpack.c.b16 %v4211, %v4207
        %v4308 = vpack.c.b16 %v4212, %v4208
        %v4309 = vpack.c.b16 %v4213, %v4209
        %v4310 = vpack.c.b16 %v4214, %v4210
        %v4311 = vpack.c.b16 %v4219, %v4215
        %v4312 = vpack.c.b16 %v4220, %v4216
        %v4313 = vpack.c.b16 %v4221, %v4217
        %v4314 = vpack.c.b16 %v4222, %v4218
        %v4315 = vpack.c.b16 %v4227, %v4223
        %v4316 = vpack.c.b16 %v4228, %v4224
        %v4317 = vpack.c.b16 %v4229, %v4225
        %v4318 = vpack.c.b16 %v4230, %v4226
        %v4319 = vpack.c.b16 %v4235, %v4231
        %v4320 = vpack.c.b16 %v4236, %v4232
        %v4321 = vpack.c.b16 %v4237, %v4233
        %v4322 = vpack.c.b16 %v4238, %v4234
        %v4323 = vpack.c.b16 %v4243, %v4239
        %v4324 = vpack.c.b16 %v4244, %v4240
        %v4325 = vpack.c.b16 %v4245, %v4241
        %v4326 = vpack.c.b16 %v4246, %v4242
        %v4327 = vpack.c.b16 %v4251, %v4247
        %v4328 = vpack.c.b16 %v4252, %v4248
        %v4329 = vpack.c.b16 %v4253, %v4249
        %v4330 = vpack.c.b16 %v4254, %v4250
        %v4331 = vpack.c.b16 %v4259, %v4255
        %v4332 = vpack.c.b16 %v4260, %v4256
        %v4333 = vpack.c.b16 %v4261, %v4257
        %v4334 = vpack.c.b16 %v4262, %v4258
        %v4335 = vpack.c.b16 %v4267, %v4263
        %v4336 = vpack.c.b16 %v4268, %v4264
        %v4337 = vpack.c.b16 %v4269, %v4265
        %v4338 = vpack.c.b16 %v4270, %v4266
        %v4339 = vpack.c.b16 %v4275, %v4271
        %v4340 = vpack.c.b16 %v4276, %v4272
        %v4341 = vpack.c.b16 %v4277, %v4273
        %v4342 = vpack.c.b16 %v4278, %v4274
        %4407 = vmatpush.bf16.msra.mxu0 %v4307
        %4408 = vmatpush.bf16.msra.mxu0 %v4303
        %4409 = vmatpush.bf16.msra.mxu0 %v4299
        %4410 = vmatpush.bf16.msra.mxu0 %v4295
        %4411 = vmatpush.bf16.msra.mxu0 %v4291
        %4412 = vmatpush.bf16.msra.mxu0 %v4287
        %4413 = vmatpush.bf16.msra.mxu0 %v4283
        %4414 = vmatpush.bf16.msra.mxu0 %v4279
        %4415 = vmatmul.bf16.gmra.mxu0 %v4018
        %v4416 = vpop.f32.mrf.mxu0
        %v4417 = vadd.f32 0.0, %v4416
        %v4418 = vpop.f32.mrf.mxu0
        %v4419 = vadd.f32 0.0, %v4418
        %4420 = vmatmul.bf16.gmra.mxu0 %v4020
        %v4421 = vpop.f32.mrf.mxu0
        %v4422 = vadd.f32 0.0, %v4421
        %v4423 = vpop.f32.mrf.mxu0
        %4424 = vdwg.mxu0
        %4425 = vmatpush.bf16.msra.mxu0 %v4339
        %4426 = vmatpush.bf16.msra.mxu0 %v4335
        %4427 = vmatpush.bf16.msra.mxu0 %v4331
        %4428 = vmatpush.bf16.msra.mxu0 %v4327
        %4429 = vmatpush.bf16.msra.mxu0 %v4323
        %4430 = vmatpush.bf16.msra.mxu0 %v4319
        %4431 = vmatpush.bf16.msra.mxu0 %v4315
        %4432 = vmatpush.bf16.msra.mxu0 %v4311
        %4433 = vmatmul.bf16.gmra.mxu0 %v4019
        %v4434 = vpop.f32.mrf.mxu0
        %v4435 = vadd.f32 %v4417, %v4434
        %v4436 = vpop.f32.mrf.mxu0
        %v4437 = vadd.f32 %v4419, %v4436
        %4438 = vmatmul.bf16.gmra.mxu0 %v4021
        %v4439 = vpop.f32.mrf.mxu0
        %v4440 = vadd.f32 %v4422, %v4439
        %v4441 = vpop.f32.mrf.mxu0
        %4442 = vdwg.mxu0
        %4443 = vmatpush.bf16.msra.mxu0 %v4308
        %4444 = vmatpush.bf16.msra.mxu0 %v4304
        %4445 = vmatpush.bf16.msra.mxu0 %v4300
        %4446 = vmatpush.bf16.msra.mxu0 %v4296
        %4447 = vmatpush.bf16.msra.mxu0 %v4292
        %4448 = vmatpush.bf16.msra.mxu0 %v4288
        %4449 = vmatpush.bf16.msra.mxu0 %v4284
        %4450 = vmatpush.bf16.msra.mxu0 %v4280
        %4451 = vmatmul.bf16.gmra.mxu0 %v4018
        %v4452 = vpop.f32.mrf.mxu0
        %v4453 = vadd.f32 0.0, %v4452
        %v4454 = vpop.f32.mrf.mxu0
        %v4455 = vadd.f32 0.0, %v4454
        %4456 = vmatmul.bf16.gmra.mxu0 %v4020
        %v4457 = vpop.f32.mrf.mxu0
        %v4458 = vadd.f32 0.0, %v4457
        %v4459 = vpop.f32.mrf.mxu0
        %4460 = vdwg.mxu0
        %4461 = vmatpush.bf16.msra.mxu0 %v4340
        %4462 = vmatpush.bf16.msra.mxu0 %v4336
        %4463 = vmatpush.bf16.msra.mxu0 %v4332
        %4464 = vmatpush.bf16.msra.mxu0 %v4328
        %4465 = vmatpush.bf16.msra.mxu0 %v4324
        %4466 = vmatpush.bf16.msra.mxu0 %v4320
        %4467 = vmatpush.bf16.msra.mxu0 %v4316
        %4468 = vmatpush.bf16.msra.mxu0 %v4312
        %4469 = vmatmul.bf16.gmra.mxu0 %v4019
        %v4470 = vpop.f32.mrf.mxu0
        %v4471 = vadd.f32 %v4453, %v4470
        %v4472 = vpop.f32.mrf.mxu0
        %v4473 = vadd.f32 %v4455, %v4472
        %4474 = vmatmul.bf16.gmra.mxu0 %v4021
        %v4475 = vpop.f32.mrf.mxu0
        %v4476 = vadd.f32 %v4458, %v4475
        %v4477 = vpop.f32.mrf.mxu0
        %4478 = vdwg.mxu0
        %4479 = vmatpush.bf16.msra.mxu0 %v4309
        %4480 = vmatpush.bf16.msra.mxu0 %v4305
        %4481 = vmatpush.bf16.msra.mxu0 %v4301
        %4482 = vmatpush.bf16.msra.mxu0 %v4297
        %4483 = vmatpush.bf16.msra.mxu0 %v4293
        %4484 = vmatpush.bf16.msra.mxu0 %v4289
        %4485 = vmatpush.bf16.msra.mxu0 %v4285
        %4486 = vmatpush.bf16.msra.mxu0 %v4281
        %4487 = vmatmul.bf16.gmra.mxu0 %v4018
        %v4488 = vpop.f32.mrf.mxu0
        %v4489 = vadd.f32 0.0, %v4488
        %v4490 = vpop.f32.mrf.mxu0
        %v4491 = vadd.f32 0.0, %v4490
        %4492 = vmatmul.bf16.gmra.mxu0 %v4020
        %v4493 = vpop.f32.mrf.mxu0
        %v4494 = vadd.f32 0.0, %v4493
        %v4495 = vpop.f32.mrf.mxu0
        %4496 = vdwg.mxu0
        %4497 = vmatpush.bf16.msra.mxu0 %v4341
        %4498 = vmatpush.bf16.msra.mxu0 %v4337
        %4499 = vmatpush.bf16.msra.mxu0 %v4333
        %4500 = vmatpush.bf16.msra.mxu0 %v4329
        %4501 = vmatpush.bf16.msra.mxu0 %v4325
        %4502 = vmatpush.bf16.msra.mxu0 %v4321
        %4503 = vmatpush.bf16.msra.mxu0 %v4317
        %4504 = vmatpush.bf16.msra.mxu0 %v4313
        %4505 = vmatmul.bf16.gmra.mxu0 %v4019
        %v4506 = vpop.f32.mrf.mxu0
        %v4507 = vadd.f32 %v4489, %v4506
        %v4508 = vpop.f32.mrf.mxu0
        %v4509 = vadd.f32 %v4491, %v4508
        %4510 = vmatmul.bf16.gmra.mxu0 %v4021
        %v4511 = vpop.f32.mrf.mxu0
        %v4512 = vadd.f32 %v4494, %v4511
        %v4513 = vpop.f32.mrf.mxu0
        %4514 = vdwg.mxu0
        %4515 = vmatpush.bf16.msra.mxu0 %v4310
        %4516 = vmatpush.bf16.msra.mxu0 %v4306
        %4517 = vmatpush.bf16.msra.mxu0 %v4302
        %4518 = vmatpush.bf16.msra.mxu0 %v4298
        %4519 = vmatpush.bf16.msra.mxu0 %v4294
        %4520 = vmatpush.bf16.msra.mxu0 %v4290
        %4521 = vmatpush.bf16.msra.mxu0 %v4286
        %4522 = vmatpush.bf16.msra.mxu0 %v4282
        %4523 = vmatmul.bf16.gmra.mxu0 %v4018
        %v4524 = vpop.f32.mrf.mxu0
        %v4525 = vadd.f32 0.0, %v4524
        %v4526 = vpop.f32.mrf.mxu0
        %v4527 = vadd.f32 0.0, %v4526
        %4528 = vmatmul.bf16.gmra.mxu0 %v4020
        %v4529 = vpop.f32.mrf.mxu0
        %v4530 = vadd.f32 0.0, %v4529
        %v4531 = vpop.f32.mrf.mxu0
        %4532 = vdwg.mxu0
        %4533 = vmatpush.bf16.msra.mxu0 %v4342
        %4534 = vmatpush.bf16.msra.mxu0 %v4338
        %4535 = vmatpush.bf16.msra.mxu0 %v4334
        %4536 = vmatpush.bf16.msra.mxu0 %v4330
        %4537 = vmatpush.bf16.msra.mxu0 %v4326
        %4538 = vmatpush.bf16.msra.mxu0 %v4322
        %4539 = vmatpush.bf16.msra.mxu0 %v4318
        %4540 = vmatpush.bf16.msra.mxu0 %v4314
        %4541 = vmatmul.bf16.gmra.mxu0 %v4019
        %v4542 = vpop.f32.mrf.mxu0
        %v4543 = vadd.f32 %v4525, %v4542
        %v4544 = vpop.f32.mrf.mxu0
        %v4545 = vadd.f32 %v4527, %v4544
        %4546 = vmatmul.bf16.gmra.mxu0 %v4021
        %v4547 = vpop.f32.mrf.mxu0
        %v4548 = vadd.f32 %v4530, %v4547
        %v4549 = vpop.f32.mrf.mxu0
        %4550 = vdwg.mxu0
        %v4551 = vadd.f32 %v3879, %v4435
        %v4552 = vadd.f32 %v3915, %v4471
        %v4553 = vadd.f32 %v3951, %v4507
        %v4554 = vadd.f32 %v3987, %v4543
        %v4555 = vadd.f32 %v3881, %v4437
        %v4556 = vadd.f32 %v3917, %v4473
        %v4557 = vadd.f32 %v3953, %v4509
        %v4558 = vadd.f32 %v3989, %v4545
        %v4559 = vadd.f32 %v3884, %v4440
        %v4560 = vadd.f32 %v3920, %v4476
        %v4561 = vadd.f32 %v3956, %v4512
        %v4562 = vadd.f32 %v3992, %v4548
        %v4563 = vld [vmem:[%s6] sm:$0xf]
        %v4565 = vperm.slane %v4563, 0
        %v4566 = vperm.slane %v4563, 1
        %v4567 = vperm.slane %v4563, 2
        %v4568 = vperm.slane %v4563, 3
        %v4573 = vadd.f32 %v4551, %v4565
        %v4574 = vadd.f32 %v4552, %v4566
        %v4575 = vadd.f32 %v4553, %v4567
        %v4576 = vadd.f32 %v4554, %v4568
        %v4577 = vadd.f32 %v4555, %v4565
        %v4578 = vadd.f32 %v4556, %v4566
        %v4579 = vadd.f32 %v4557, %v4567
        %v4580 = vadd.f32 %v4558, %v4568
        %v4581 = vadd.f32 %v4559, %v4565
        %v4582 = vadd.f32 %v4560, %v4566
        %v4583 = vadd.f32 %v4561, %v4567
        %v4584 = vadd.f32 %v4562, %v4568
        %v4585 = vmax.f32 %v4573, 0.0
        %v4586 = vmax.f32 %v4574, 0.0
        %v4587 = vmax.f32 %v4575, 0.0
        %v4588 = vmax.f32 %v4576, 0.0
        %v4589 = vmax.f32 %v4577, 0.0
        %v4590 = vmax.f32 %v4578, 0.0
        %v4591 = vmax.f32 %v4579, 0.0
        %v4592 = vmax.f32 %v4580, 0.0
        %v4593 = vmax.f32 %v4581, 0.0
        %v4594 = vmax.f32 %v4582, 0.0
        %v4595 = vmax.f32 %v4583, 0.0
        %v4596 = vmax.f32 %v4584, 0.0
        %v4597 = vmax.f32 %v4585, %v4587
        %v4598 = vmax.f32 %v4586, %v4588
        %v4599 = vmax.f32 %v4589, %v4591
        %v4600 = vmax.f32 %v4590, %v4592
        %v4601 = vmax.f32 %v4593, %v4595
        %v4602 = vmax.f32 %v4594, %v4596
        %v4609 = vrot.slane %v4598, 6
        %v4610 = vrot.slane %v4600, 6
        %v4611 = vrot.slane %v4602, 6
        %v4612 = vsel %vm2148, %v4597, %v4609
        %v4613 = vsel %vm2150, %v4597, %v4609
        %v4614 = vrot.slane %v4613, 2
        %v4615 = vsel %vm2153, %v4597, %v4609
        %v4616 = vrot.slane %v4615, 4
        %v4617 = vsel %vm1215, %v4609, %v4597
        %v4618 = vrot.slane %v4617, 6
        %v4619 = vsel %vm2148, %v4599, %v4610
        %v4620 = vsel %vm2150, %v4599, %v4610
        %v4621 = vrot.slane %v4620, 2
        %v4622 = vsel %vm2153, %v4599, %v4610
        %v4623 = vrot.slane %v4622, 4
        %v4624 = vsel %vm1215, %v4610, %v4599
        %v4625 = vrot.slane %v4624, 6
        %v4626 = vsel %vm2148, %v4601, %v4611
        %v4627 = vsel %vm2150, %v4601, %v4611
        %v4628 = vrot.slane %v4627, 2
        %4629 = vst [vmem:[#allocation1] ss:$4 sm:$0xff] %v4612
        %v4630 = vld.sshfl [vmem:[#allocation1] sm:$0xff pattern:$0x73625140]
        %v4631 = vld.sshfl [vmem:[#allocation1 + $0x8] sm:$0xff pattern:$0x73625140]
        %s4632 = scalar_lea.vmem [#allocation1], 32
        %4633 = vst [vmem:[%s4632] ss:$4 sm:$0xff] %v4614
        %v4634 = vld.sshfl [vmem:[#allocation1 + $0x20] sm:$0xff pattern:$0x73625140]
        %v4635 = vld.sshfl [vmem:[#allocation1 + $0x28] sm:$0xff pattern:$0x73625140]
        %4636 = vst [vmem:[#allocation1] ss:$4 sm:$0xff] %v4616
        %v4637 = vld.sshfl [vmem:[#allocation1] sm:$0xff pattern:$0x73625140]
        %v4638 = vld.sshfl [vmem:[#allocation1 + $0x8] sm:$0xff pattern:$0x73625140]
        %4639 = vst [vmem:[%s4632] ss:$4 sm:$0xff] %v4618
        %v4640 = vld.sshfl [vmem:[#allocation1 + $0x20] sm:$0xff pattern:$0x73625140]
        %v4641 = vld.sshfl [vmem:[#allocation1 + $0x28] sm:$0xff pattern:$0x73625140]
        %4642 = vst [vmem:[#allocation1] ss:$4 sm:$0xff] %v4619
        %v4643 = vld.sshfl [vmem:[#allocation1] sm:$0xff pattern:$0x73625140]
        %v4644 = vld.sshfl [vmem:[#allocation1 + $0x8] sm:$0xff pattern:$0x73625140]
        %4645 = vst [vmem:[%s4632] ss:$4 sm:$0xff] %v4621
        %v4646 = vld.sshfl [vmem:[#allocation1 + $0x20] sm:$0xff pattern:$0x73625140]
        %v4647 = vld.sshfl [vmem:[#allocation1 + $0x28] sm:$0xff pattern:$0x73625140]
        %4648 = vst [vmem:[#allocation1] ss:$4 sm:$0xff] %v4623
        %v4649 = vld.sshfl [vmem:[#allocation1] sm:$0xff pattern:$0x73625140]
        %v4650 = vld.sshfl [vmem:[#allocation1 + $0x8] sm:$0xff pattern:$0x73625140]
        %4651 = vst [vmem:[%s4632] ss:$4 sm:$0xff] %v4625
        %v4652 = vld.sshfl [vmem:[#allocation1 + $0x20] sm:$0xff pattern:$0x73625140]
        %v4653 = vld.sshfl [vmem:[#allocation1 + $0x28] sm:$0xff pattern:$0x73625140]
        %4654 = vst [vmem:[#allocation1] ss:$4 sm:$0xff] %v4626
        %v4655 = vld.sshfl [vmem:[#allocation1] sm:$0xff pattern:$0x73625140]
        %v4656 = vld.sshfl [vmem:[#allocation1 + $0x8] sm:$0xff pattern:$0x73625140]
        %4657 = vst [vmem:[%s4632] ss:$4 sm:$0xff] %v4628
        %v4658 = vld.sshfl [vmem:[#allocation1 + $0x20] sm:$0xff pattern:$0x73625140]
        %v4659 = vld.sshfl [vmem:[#allocation1 + $0x28] sm:$0xff pattern:$0x73625140]
        %v4680 = vsel %vm2148, %v4630, -inf
        %v4681 = vrot.slane %v4680, 4
        %v4682 = vmax.f32 %v4680, %v4681
        %v4683 = vrot.slane %v4682, 2
        %v4684 = vmax.f32 %v4682, %v4683
        %v4685 = vrot.slane %v4684, 1
        %v4686 = vmax.f32 %v4684, %v4685
        %v4687 = vsel %vm2148, %v4631, -inf
        %v4688 = vrot.slane %v4687, 4
        %v4689 = vmax.f32 %v4687, %v4688
        %v4690 = vrot.slane %v4689, 2
        %v4691 = vmax.f32 %v4689, %v4690
        %v4692 = vrot.slane %v4691, 1
        %v4693 = vmax.f32 %v4691, %v4692
        %v4694 = vsel %vm2148, %v4634, -inf
        %v4695 = vrot.slane %v4694, 4
        %v4696 = vmax.f32 %v4694, %v4695
        %v4697 = vrot.slane %v4696, 2
        %v4698 = vmax.f32 %v4696, %v4697
        %v4699 = vrot.slane %v4698, 1
        %v4700 = vmax.f32 %v4698, %v4699
        %v4701 = vsel %vm2148, %v4635, -inf
        %v4702 = vrot.slane %v4701, 4
        %v4703 = vmax.f32 %v4701, %v4702
        %v4704 = vrot.slane %v4703, 2
        %v4705 = vmax.f32 %v4703, %v4704
        %v4706 = vrot.slane %v4705, 1
        %v4707 = vmax.f32 %v4705, %v4706
        %v4708 = vsel %vm2148, %v4637, -inf
        %v4709 = vrot.slane %v4708, 4
        %v4710 = vmax.f32 %v4708, %v4709
        %v4711 = vrot.slane %v4710, 2
        %v4712 = vmax.f32 %v4710, %v4711
        %v4713 = vrot.slane %v4712, 1
        %v4714 = vmax.f32 %v4712, %v4713
        %v4715 = vsel %vm2148, %v4638, -inf
        %v4716 = vrot.slane %v4715, 4
        %v4717 = vmax.f32 %v4715, %v4716
        %v4718 = vrot.slane %v4717, 2
        %v4719 = vmax.f32 %v4717, %v4718
        %v4720 = vrot.slane %v4719, 1
        %v4721 = vmax.f32 %v4719, %v4720
        %v4722 = vsel %vm2148, %v4640, -inf
        %v4723 = vrot.slane %v4722, 4
        %v4724 = vmax.f32 %v4722, %v4723
        %v4725 = vrot.slane %v4724, 2
        %v4726 = vmax.f32 %v4724, %v4725
        %v4727 = vrot.slane %v4726, 1
        %v4728 = vmax.f32 %v4726, %v4727
        %v4729 = vsel %vm2148, %v4641, -inf
        %v4730 = vrot.slane %v4729, 4
        %v4731 = vmax.f32 %v4729, %v4730
        %v4732 = vrot.slane %v4731, 2
        %v4733 = vmax.f32 %v4731, %v4732
        %v4734 = vrot.slane %v4733, 1
        %v4735 = vmax.f32 %v4733, %v4734
        %v4736 = vsel %vm2148, %v4643, -inf
        %v4737 = vrot.slane %v4736, 4
        %v4738 = vmax.f32 %v4736, %v4737
        %v4739 = vrot.slane %v4738, 2
        %v4740 = vmax.f32 %v4738, %v4739
        %v4741 = vrot.slane %v4740, 1
        %v4742 = vmax.f32 %v4740, %v4741
        %v4743 = vsel %vm2148, %v4644, -inf
        %v4744 = vrot.slane %v4743, 4
        %v4745 = vmax.f32 %v4743, %v4744
        %v4746 = vrot.slane %v4745, 2
        %v4747 = vmax.f32 %v4745, %v4746
        %v4748 = vrot.slane %v4747, 1
        %v4749 = vmax.f32 %v4747, %v4748
        %v4750 = vsel %vm2148, %v4646, -inf
        %v4751 = vrot.slane %v4750, 4
        %v4752 = vmax.f32 %v4750, %v4751
        %v4753 = vrot.slane %v4752, 2
        %v4754 = vmax.f32 %v4752, %v4753
        %v4755 = vrot.slane %v4754, 1
        %v4756 = vmax.f32 %v4754, %v4755
        %v4757 = vsel %vm2148, %v4647, -inf
        %v4758 = vrot.slane %v4757, 4
        %v4759 = vmax.f32 %v4757, %v4758
        %v4760 = vrot.slane %v4759, 2
        %v4761 = vmax.f32 %v4759, %v4760
        %v4762 = vrot.slane %v4761, 1
        %v4763 = vmax.f32 %v4761, %v4762
        %v4764 = vsel %vm2148, %v4649, -inf
        %v4765 = vrot.slane %v4764, 4
        %v4766 = vmax.f32 %v4764, %v4765
        %v4767 = vrot.slane %v4766, 2
        %v4768 = vmax.f32 %v4766, %v4767
        %v4769 = vrot.slane %v4768, 1
        %v4770 = vmax.f32 %v4768, %v4769
        %v4771 = vsel %vm2148, %v4650, -inf
        %v4772 = vrot.slane %v4771, 4
        %v4773 = vmax.f32 %v4771, %v4772
        %v4774 = vrot.slane %v4773, 2
        %v4775 = vmax.f32 %v4773, %v4774
        %v4776 = vrot.slane %v4775, 1
        %v4777 = vmax.f32 %v4775, %v4776
        %v4778 = vsel %vm2148, %v4652, -inf
        %v4779 = vrot.slane %v4778, 4
        %v4780 = vmax.f32 %v4778, %v4779
        %v4781 = vrot.slane %v4780, 2
        %v4782 = vmax.f32 %v4780, %v4781
        %v4783 = vrot.slane %v4782, 1
        %v4784 = vmax.f32 %v4782, %v4783
        %v4785 = vsel %vm2148, %v4653, -inf
        %v4786 = vrot.slane %v4785, 4
        %v4787 = vmax.f32 %v4785, %v4786
        %v4788 = vrot.slane %v4787, 2
        %v4789 = vmax.f32 %v4787, %v4788
        %v4790 = vrot.slane %v4789, 1
        %v4791 = vmax.f32 %v4789, %v4790
        %v4792 = vsel %vm2148, %v4655, -inf
        %v4793 = vrot.slane %v4792, 4
        %v4794 = vmax.f32 %v4792, %v4793
        %v4795 = vrot.slane %v4794, 2
        %v4796 = vmax.f32 %v4794, %v4795
        %v4797 = vrot.slane %v4796, 1
        %v4798 = vmax.f32 %v4796, %v4797
        %v4799 = vsel %vm2148, %v4656, -inf
        %v4800 = vrot.slane %v4799, 4
        %v4801 = vmax.f32 %v4799, %v4800
        %v4802 = vrot.slane %v4801, 2
        %v4803 = vmax.f32 %v4801, %v4802
        %v4804 = vrot.slane %v4803, 1
        %v4805 = vmax.f32 %v4803, %v4804
        %v4806 = vsel %vm2148, %v4658, -inf
        %v4807 = vrot.slane %v4806, 4
        %v4808 = vmax.f32 %v4806, %v4807
        %v4809 = vrot.slane %v4808, 2
        %v4810 = vmax.f32 %v4808, %v4809
        %v4811 = vrot.slane %v4810, 1
        %v4812 = vmax.f32 %v4810, %v4811
        %v4813 = vsel %vm2148, %v4659, -inf
        %v4814 = vrot.slane %v4813, 4
        %v4815 = vmax.f32 %v4813, %v4814
        %v4816 = vrot.slane %v4815, 2
        %v4817 = vmax.f32 %v4815, %v4816
        %v4818 = vrot.slane %v4817, 1
        %v4819 = vmax.f32 %v4817, %v4818
        %v4820 = vld [vmem:[%s7] sm:$0x3]
        %v4822 = vperm.slane %v4820, 0
        %v4823 = vperm.slane %v4820, 1
        %v4826 = vmul.f32 %v4686, %v4822
        %v4827 = vmul.f32 %v4693, %v4823
        %v4828 = vmul.f32 %v4700, %v4822
        %v4829 = vmul.f32 %v4707, %v4823
        %v4830 = vmul.f32 %v4714, %v4822
        %v4831 = vmul.f32 %v4721, %v4823
        %v4832 = vmul.f32 %v4728, %v4822
        %v4833 = vmul.f32 %v4735, %v4823
        %v4834 = vmul.f32 %v4742, %v4822
        %v4835 = vmul.f32 %v4749, %v4823
        %v4836 = vmul.f32 %v4756, %v4822
        %v4837 = vmul.f32 %v4763, %v4823
        %v4838 = vmul.f32 %v4770, %v4822
        %v4839 = vmul.f32 %v4777, %v4823
        %v4840 = vmul.f32 %v4784, %v4822
        %v4841 = vmul.f32 %v4791, %v4823
        %v4842 = vmul.f32 %v4798, %v4822
        %v4843 = vmul.f32 %v4805, %v4823
        %v4844 = vmul.f32 %v4812, %v4822
        %v4845 = vmul.f32 %v4819, %v4823
        %v4846 = vld [vmem:[%s8] sm:$0x3]
        %v4848 = vperm.slane %v4846, 0
        %v4849 = vperm.slane %v4846, 1
        %v4852 = vadd.f32 %v4826, %v4848
        %v4853 = vadd.f32 %v4827, %v4849
        %v4854 = vadd.f32 %v4828, %v4848
        %v4855 = vadd.f32 %v4829, %v4849
        %v4856 = vadd.f32 %v4830, %v4848
        %v4857 = vadd.f32 %v4831, %v4849
        %v4858 = vadd.f32 %v4832, %v4848
        %v4859 = vadd.f32 %v4833, %v4849
        %v4860 = vadd.f32 %v4834, %v4848
        %v4861 = vadd.f32 %v4835, %v4849
        %v4862 = vadd.f32 %v4836, %v4848
        %v4863 = vadd.f32 %v4837, %v4849
        %v4864 = vadd.f32 %v4838, %v4848
        %v4865 = vadd.f32 %v4839, %v4849
        %v4866 = vadd.f32 %v4840, %v4848
        %v4867 = vadd.f32 %v4841, %v4849
        %v4868 = vadd.f32 %v4842, %v4848
        %v4869 = vadd.f32 %v4843, %v4849
        %v4870 = vadd.f32 %v4844, %v4848
        %v4871 = vadd.f32 %v4845, %v4849
        %vm4872 = vcmp.lt.s32.totalorder %v2660, 0
        %v4873 = vsub.s32 0, %v2660
        %v4874 = vsel %vm4872, %v4873, %v2660
        %v4875 = vand.u32 %v4874, 65535
        %v4876 = vshrl.u32 %v4874, 16
        %v4878 = vmul.u32 %v4875, 52429
        %v4879 = vmul.u32 %v4875, 52428
        %v4880 = vmul.u32 %v4876, 52429
        %v4881 = vmul.u32 %v4876, 52428
        %v4882 = vshll.u32 %v4879, 16
        %v4883 = vshrl.u32 %v4879, 16
        %v4884 = vshll.u32 %v4880, 16
        %v4885 = vshrl.u32 %v4880, 16
        %vm4886 = vc.u32 %v4878, %v4882
        %v4887 = vsel %vm4886, 1, 0
        %v4888 = vadd.s32 %v4878, %v4882
        %v4889 = vadd.s32 %v4881, %v4887
        %vm4890 = vc.u32 %v4888, %v4884
        %v4891 = vsel %vm4890, 1, 0
        %v4892 = vadd.s32 %v4888, %v4884
        %v4893 = vadd.s32 %v4889, %v4891
        %v4894 = vadd.s32 %v4893, %v4883
        %v4895 = vadd.s32 %v4894, %v4885
        %v4896 = vshrl.u32 %v4895, 2
        %v4897 = vmul.u32 %v4896, 5
        %v4898 = vsub.s32 %v4874, %v4897
        %v4899 = vsub.s32 0, %v4898
        %v4900 = vsel %vm4872, %v4899, %v4898
        %vm4901 = vcmp.lt.s32.totalorder %v2661, 0
        %v4902 = vsub.s32 0, %v2661
        %v4903 = vsel %vm4901, %v4902, %v2661
        %v4904 = vand.u32 %v4903, 65535
        %v4905 = vshrl.u32 %v4903, 16
        %v4907 = vmul.u32 %v4904, 52429
        %v4908 = vmul.u32 %v4904, 52428
        %v4909 = vmul.u32 %v4905, 52429
        %v4910 = vmul.u32 %v4905, 52428
        %v4911 = vshll.u32 %v4908, 16
        %v4912 = vshrl.u32 %v4908, 16
        %v4913 = vshll.u32 %v4909, 16
        %v4914 = vshrl.u32 %v4909, 16
        %vm4915 = vc.u32 %v4907, %v4911
        %v4916 = vsel %vm4915, 1, 0
        %v4917 = vadd.s32 %v4907, %v4911
        %v4918 = vadd.s32 %v4910, %v4916
        %vm4919 = vc.u32 %v4917, %v4913
        %v4920 = vsel %vm4919, 1, 0
        %v4921 = vadd.s32 %v4917, %v4913
        %v4922 = vadd.s32 %v4918, %v4920
        %v4923 = vadd.s32 %v4922, %v4912
        %v4924 = vadd.s32 %v4923, %v4914
        %v4925 = vshrl.u32 %v4924, 2
        %v4926 = vmul.u32 %v4925, 5
        %v4927 = vsub.s32 %v4903, %v4926
        %v4928 = vsub.s32 0, %v4927
        %v4929 = vsel %vm4901, %v4928, %v4927
        %vm4930 = vcmp.ne.s32.totalorder %v4900, 0
        %vm4931 = vcmp.ne.s32.totalorder %v4929, 0
        %vm4932 = vcmp.lt.s32.totalorder %v4900, 0
        %vm4933 = vcmp.lt.s32.totalorder %v4929, 0
        %vm4934 = vmand %vm4932, %vm4930
        %vm4935 = vmand %vm4933, %vm4931
        %v4936 = vadd.s32 %v4900, 5
        %v4937 = vadd.s32 %v4929, 5
        %v4938 = vsel %vm4934, %v4936, %v4900
        %v4939 = vsel %vm4935, %v4937, %v4929
        %vm4940 = vcmp.lt.s32.totalorder %v4938, 4
        %vm4941 = vcmp.lt.s32.totalorder %v4939, 4
        %v4942 = vsel %vm4940, 1, 0
        %v4943 = vsel %vm4941, 1, 0
        %vm4944 = vcmp.eq.s32.totalorder %v4942, 1
        %vm4945 = vcmp.eq.s32.totalorder %v4943, 1
        %v4966 = vrot.slane %v4854, 7
        %v4967 = vsel %vm2815, %v4966, %v4852
        %v4968 = vrot.slane %v4856, 6
        %v4969 = vsel %vm2818, %v4968, %v4967
        %v4970 = vrot.slane %v4858, 5
        %v4971 = vsel %vm2821, %v4970, %v4969
        %v4972 = vrot.slane %v4860, 4
        %v4973 = vsel %vm2824, %v4972, %v4971
        %v4974 = vrot.slane %v4862, 3
        %v4975 = vsel %vm2827, %v4974, %v4973
        %v4976 = vrot.slane %v4864, 2
        %v4977 = vsel %vm2830, %v4976, %v4975
        %v4978 = vrot.slane %v4866, 1
        %v4979 = vsel %vm2833, %v4978, %v4977
        %v4980 = vrot.slane %v4855, 7
        %v4981 = vsel %vm2815, %v4980, %v4853
        %v4982 = vrot.slane %v4857, 6
        %v4983 = vsel %vm2818, %v4982, %v4981
        %v4984 = vrot.slane %v4859, 5
        %v4985 = vsel %vm2821, %v4984, %v4983
        %v4986 = vrot.slane %v4861, 4
        %v4987 = vsel %vm2824, %v4986, %v4985
        %v4988 = vrot.slane %v4863, 3
        %v4989 = vsel %vm2827, %v4988, %v4987
        %v4990 = vrot.slane %v4865, 2
        %v4991 = vsel %vm2830, %v4990, %v4989
        %v4992 = vrot.slane %v4867, 1
        %v4993 = vsel %vm2833, %v4992, %v4991
        %v4994 = vrot.slane %v4870, 7
        %v4995 = vsel %vm2815, %v4994, %v4868
        %v4996 = vrot.slane %v4871, 7
        %v4997 = vsel %vm2815, %v4996, %v4869
        %v5002 = vsel %vm4944, %v4979, 0.0
        %v5003 = vsel %vm4944, %v4993, 0.0
        %v5004 = vsel %vm4945, %v4995, 0.0
        %v5005 = vsel %vm4945, %v4997, 0.0
        %v5008 = vrot.slane %v5004, 1
        %v5009 = vrot.slane %v5005, 1
        %v5014 = vrot.slane %v5002, 7
        %v5015 = vrot.slane %v5003, 7
        %v5016 = vrot.slane %v5004, 7
        %v5017 = vsel %vm2911, %v5014, %v5016
        %v5018 = vrot.slane %v5005, 7
        %v5019 = vsel %vm2911, %v5015, %v5018
        %v5024 = vsel %vm2911, %v5008, %v5014
        %v5025 = vsel %vm2911, %v5009, %v5015
        %v5026 = vpack.c.bf16 %v5017, %v5024
        %v5027 = vpack.c.bf16 %v5019, %v5025
        %v5028 = vld [vmem:[#allocation5] sm:$0xff]
        %v5029 = vld [vmem:[#allocation5 + $0x8] sm:$0xff]
        %v5030 = vld [vmem:[#allocation5 + $0x10] sm:$0xff]
        %v5031 = vld [vmem:[#allocation5 + $0x18] sm:$0xff]
        %v5032 = vld [vmem:[#allocation5 + $0x20] sm:$0xff]
        %v5033 = vld [vmem:[#allocation5 + $0x28] sm:$0xff]
        %v5034 = vld [vmem:[#allocation5 + $0x30] sm:$0xff]
        %v5035 = vld [vmem:[#allocation5 + $0x38] sm:$0xff]
        %v5036 = vld [vmem:[#allocation5 + $0x40] sm:$0xff]
        %v5037 = vld [vmem:[#allocation5 + $0x48] sm:$0xff]
        %v5038 = vld [vmem:[#allocation5 + $0x50] sm:$0xff]
        %v5039 = vld [vmem:[#allocation5 + $0x58] sm:$0xff]
        %v5040 = vld [vmem:[#allocation5 + $0x60] sm:$0xff]
        %v5041 = vld [vmem:[#allocation5 + $0x68] sm:$0xff]
        %v5042 = vld [vmem:[#allocation5 + $0x70] sm:$0xff]
        %v5043 = vld [vmem:[#allocation5 + $0x78] sm:$0xff]
        %v5044 = vld [vmem:[#allocation5 + $0x80] sm:$0xff]
        %v5045 = vld [vmem:[#allocation5 + $0x88] sm:$0xff]
        %v5046 = vld [vmem:[#allocation5 + $0x90] sm:$0xff]
        %v5047 = vld [vmem:[#allocation5 + $0x98] sm:$0xff]
        %v5048 = vld [vmem:[#allocation5 + $0xa0] sm:$0xff]
        %v5049 = vld [vmem:[#allocation5 + $0xa8] sm:$0xff]
        %v5050 = vld [vmem:[#allocation5 + $0xb0] sm:$0xff]
        %v5051 = vld [vmem:[#allocation5 + $0xb8] sm:$0xff]
        %v5052 = vld [vmem:[#allocation5 + $0xc0] sm:$0xff]
        %v5053 = vld [vmem:[#allocation5 + $0xc8] sm:$0xff]
        %v5054 = vld [vmem:[#allocation5 + $0xd0] sm:$0xff]
        %v5055 = vld [vmem:[#allocation5 + $0xd8] sm:$0xff]
        %v5056 = vld [vmem:[#allocation5 + $0xe0] sm:$0xff]
        %v5057 = vld [vmem:[#allocation5 + $0xe8] sm:$0xff]
        %v5058 = vld [vmem:[#allocation5 + $0xf0] sm:$0xff]
        %v5059 = vld [vmem:[#allocation5 + $0xf8] sm:$0xff]
        %v5060 = vld [vmem:[#allocation5 + $0x100] sm:$0xff]
        %v5061 = vld [vmem:[#allocation5 + $0x108] sm:$0xff]
        %v5062 = vld [vmem:[#allocation5 + $0x110] sm:$0xff]
        %v5063 = vld [vmem:[#allocation5 + $0x118] sm:$0xff]
        %v5064 = vld [vmem:[#allocation5 + $0x120] sm:$0xff]
        %v5065 = vld [vmem:[#allocation5 + $0x128] sm:$0xff]
        %v5066 = vld [vmem:[#allocation5 + $0x130] sm:$0xff]
        %v5067 = vld [vmem:[#allocation5 + $0x138] sm:$0xff]
        %v5068 = vld [vmem:[#allocation5 + $0x140] sm:$0xff]
        %v5069 = vld [vmem:[#allocation5 + $0x148] sm:$0xff]
        %v5070 = vld [vmem:[#allocation5 + $0x150] sm:$0xff]
        %v5071 = vld [vmem:[#allocation5 + $0x158] sm:$0xff]
        %v5072 = vld [vmem:[#allocation5 + $0x160] sm:$0xff]
        %v5073 = vld [vmem:[#allocation5 + $0x168] sm:$0xff]
        %v5074 = vld [vmem:[#allocation5 + $0x170] sm:$0xff]
        %v5075 = vld [vmem:[#allocation5 + $0x178] sm:$0xff]
        %v5076 = vld [vmem:[#allocation5 + $0x180] sm:$0xff]
        %v5077 = vld [vmem:[#allocation5 + $0x188] sm:$0xff]
        %v5078 = vld [vmem:[#allocation5 + $0x190] sm:$0xff]
        %v5079 = vld [vmem:[#allocation5 + $0x198] sm:$0xff]
        %v5080 = vld [vmem:[#allocation5 + $0x1a0] sm:$0xff]
        %v5081 = vld [vmem:[#allocation5 + $0x1a8] sm:$0xff]
        %v5082 = vld [vmem:[#allocation5 + $0x1b0] sm:$0xff]
        %v5083 = vld [vmem:[#allocation5 + $0x1b8] sm:$0xff]
        %v5084 = vld [vmem:[#allocation5 + $0x1c0] sm:$0xff]
        %v5085 = vld [vmem:[#allocation5 + $0x1c8] sm:$0xff]
        %v5086 = vld [vmem:[#allocation5 + $0x1d0] sm:$0xff]
        %v5087 = vld [vmem:[#allocation5 + $0x1d8] sm:$0xff]
        %v5088 = vld [vmem:[#allocation5 + $0x1e0] sm:$0xff]
        %v5089 = vld [vmem:[#allocation5 + $0x1e8] sm:$0xff]
        %v5090 = vld [vmem:[#allocation5 + $0x1f0] sm:$0xff]
        %v5091 = vld [vmem:[#allocation5 + $0x1f8] sm:$0xff]
        %v5092 = vpack.c.bf16 %v5004, %v5002
        %v5093 = vpack.c.bf16 %v5005, %v5003
        %s5094 = scalar_lea.vmem [#allocation5], 512
        %v5095 = vld [vmem:[%s5094] sm:$0xff]
        %v5096 = vld [vmem:[%s5094 + $0x8] sm:$0xff]
        %v5097 = vld [vmem:[%s5094 + $0x10] sm:$0xff]
        %v5098 = vld [vmem:[%s5094 + $0x18] sm:$0xff]
        %v5099 = vld [vmem:[%s5094 + $0x20] sm:$0xff]
        %v5100 = vld [vmem:[%s5094 + $0x28] sm:$0xff]
        %v5101 = vld [vmem:[%s5094 + $0x30] sm:$0xff]
        %v5102 = vld [vmem:[%s5094 + $0x38] sm:$0xff]
        %v5103 = vld [vmem:[%s5094 + $0x40] sm:$0xff]
        %v5104 = vld [vmem:[%s5094 + $0x48] sm:$0xff]
        %v5105 = vld [vmem:[%s5094 + $0x50] sm:$0xff]
        %v5106 = vld [vmem:[%s5094 + $0x58] sm:$0xff]
        %v5107 = vld [vmem:[%s5094 + $0x60] sm:$0xff]
        %v5108 = vld [vmem:[%s5094 + $0x68] sm:$0xff]
        %v5109 = vld [vmem:[%s5094 + $0x70] sm:$0xff]
        %v5110 = vld [vmem:[%s5094 + $0x78] sm:$0xff]
        %v5111 = vld [vmem:[%s5094 + $0x80] sm:$0xff]
        %v5112 = vld [vmem:[%s5094 + $0x88] sm:$0xff]
        %v5113 = vld [vmem:[%s5094 + $0x90] sm:$0xff]
        %v5114 = vld [vmem:[%s5094 + $0x98] sm:$0xff]
        %v5115 = vld [vmem:[%s5094 + $0xa0] sm:$0xff]
        %v5116 = vld [vmem:[%s5094 + $0xa8] sm:$0xff]
        %v5117 = vld [vmem:[%s5094 + $0xb0] sm:$0xff]
        %v5118 = vld [vmem:[%s5094 + $0xb8] sm:$0xff]
        %v5119 = vld [vmem:[%s5094 + $0xc0] sm:$0xff]
        %v5120 = vld [vmem:[%s5094 + $0xc8] sm:$0xff]
        %v5121 = vld [vmem:[%s5094 + $0xd0] sm:$0xff]
        %v5122 = vld [vmem:[%s5094 + $0xd8] sm:$0xff]
        %v5123 = vld [vmem:[%s5094 + $0xe0] sm:$0xff]
        %v5124 = vld [vmem:[%s5094 + $0xe8] sm:$0xff]
        %v5125 = vld [vmem:[%s5094 + $0xf0] sm:$0xff]
        %v5126 = vld [vmem:[%s5094 + $0xf8] sm:$0xff]
        %v5127 = vld [vmem:[%s5094 + $0x100] sm:$0xff]
        %v5128 = vld [vmem:[%s5094 + $0x108] sm:$0xff]
        %v5129 = vld [vmem:[%s5094 + $0x110] sm:$0xff]
        %v5130 = vld [vmem:[%s5094 + $0x118] sm:$0xff]
        %v5131 = vld [vmem:[%s5094 + $0x120] sm:$0xff]
        %v5132 = vld [vmem:[%s5094 + $0x128] sm:$0xff]
        %v5133 = vld [vmem:[%s5094 + $0x130] sm:$0xff]
        %v5134 = vld [vmem:[%s5094 + $0x138] sm:$0xff]
        %v5135 = vld [vmem:[%s5094 + $0x140] sm:$0xff]
        %v5136 = vld [vmem:[%s5094 + $0x148] sm:$0xff]
        %v5137 = vld [vmem:[%s5094 + $0x150] sm:$0xff]
        %v5138 = vld [vmem:[%s5094 + $0x158] sm:$0xff]
        %v5139 = vld [vmem:[%s5094 + $0x160] sm:$0xff]
        %v5140 = vld [vmem:[%s5094 + $0x168] sm:$0xff]
        %v5141 = vld [vmem:[%s5094 + $0x170] sm:$0xff]
        %v5142 = vld [vmem:[%s5094 + $0x178] sm:$0xff]
        %v5143 = vld [vmem:[%s5094 + $0x180] sm:$0xff]
        %v5144 = vld [vmem:[%s5094 + $0x188] sm:$0xff]
        %v5145 = vld [vmem:[%s5094 + $0x190] sm:$0xff]
        %v5146 = vld [vmem:[%s5094 + $0x198] sm:$0xff]
        %v5147 = vld [vmem:[%s5094 + $0x1a0] sm:$0xff]
        %v5148 = vld [vmem:[%s5094 + $0x1a8] sm:$0xff]
        %v5149 = vld [vmem:[%s5094 + $0x1b0] sm:$0xff]
        %v5150 = vld [vmem:[%s5094 + $0x1b8] sm:$0xff]
        %v5151 = vld [vmem:[%s5094 + $0x1c0] sm:$0xff]
        %v5152 = vld [vmem:[%s5094 + $0x1c8] sm:$0xff]
        %v5153 = vld [vmem:[%s5094 + $0x1d0] sm:$0xff]
        %v5154 = vld [vmem:[%s5094 + $0x1d8] sm:$0xff]
        %v5155 = vld [vmem:[%s5094 + $0x1e0] sm:$0xff]
        %v5156 = vld [vmem:[%s5094 + $0x1e8] sm:$0xff]
        %v5157 = vld [vmem:[%s5094 + $0x1f0] sm:$0xff]
        %v5158 = vld [vmem:[%s5094 + $0x1f8] sm:$0xff]
        %v5223 = vunpack.c.l.b16 %v5095
        %v5224 = vunpack.c.h.b16 %v5095
        %v5225 = vunpack.c.l.b16 %v5096
        %v5226 = vunpack.c.h.b16 %v5096
        %v5227 = vunpack.c.l.b16 %v5097
        %v5228 = vunpack.c.h.b16 %v5097
        %v5229 = vunpack.c.l.b16 %v5098
        %v5230 = vunpack.c.h.b16 %v5098
        %v5231 = vunpack.c.l.b16 %v5099
        %v5232 = vunpack.c.h.b16 %v5099
        %v5233 = vunpack.c.l.b16 %v5100
        %v5234 = vunpack.c.h.b16 %v5100
        %v5235 = vunpack.c.l.b16 %v5101
        %v5236 = vunpack.c.h.b16 %v5101
        %v5237 = vunpack.c.l.b16 %v5102
        %v5238 = vunpack.c.h.b16 %v5102
        %v5239 = vunpack.c.l.b16 %v5103
        %v5240 = vunpack.c.h.b16 %v5103
        %v5241 = vunpack.c.l.b16 %v5104
        %v5242 = vunpack.c.h.b16 %v5104
        %v5243 = vunpack.c.l.b16 %v5105
        %v5244 = vunpack.c.h.b16 %v5105
        %v5245 = vunpack.c.l.b16 %v5106
        %v5246 = vunpack.c.h.b16 %v5106
        %v5247 = vunpack.c.l.b16 %v5107
        %v5248 = vunpack.c.h.b16 %v5107
        %v5249 = vunpack.c.l.b16 %v5108
        %v5250 = vunpack.c.h.b16 %v5108
        %v5251 = vunpack.c.l.b16 %v5109
        %v5252 = vunpack.c.h.b16 %v5109
        %v5253 = vunpack.c.l.b16 %v5110
        %v5254 = vunpack.c.h.b16 %v5110
        %v5255 = vunpack.c.l.b16 %v5111
        %v5256 = vunpack.c.h.b16 %v5111
        %v5257 = vunpack.c.l.b16 %v5112
        %v5258 = vunpack.c.h.b16 %v5112
        %v5259 = vunpack.c.l.b16 %v5113
        %v5260 = vunpack.c.h.b16 %v5113
        %v5261 = vunpack.c.l.b16 %v5114
        %v5262 = vunpack.c.h.b16 %v5114
        %v5263 = vunpack.c.l.b16 %v5115
        %v5264 = vunpack.c.h.b16 %v5115
        %v5265 = vunpack.c.l.b16 %v5116
        %v5266 = vunpack.c.h.b16 %v5116
        %v5267 = vunpack.c.l.b16 %v5117
        %v5268 = vunpack.c.h.b16 %v5117
        %v5269 = vunpack.c.l.b16 %v5118
        %v5270 = vunpack.c.h.b16 %v5118
        %v5271 = vunpack.c.l.b16 %v5119
        %v5272 = vunpack.c.h.b16 %v5119
        %v5273 = vunpack.c.l.b16 %v5120
        %v5274 = vunpack.c.h.b16 %v5120
        %v5275 = vunpack.c.l.b16 %v5121
        %v5276 = vunpack.c.h.b16 %v5121
        %v5277 = vunpack.c.l.b16 %v5122
        %v5278 = vunpack.c.h.b16 %v5122
        %v5279 = vunpack.c.l.b16 %v5123
        %v5280 = vunpack.c.h.b16 %v5123
        %v5281 = vunpack.c.l.b16 %v5124
        %v5282 = vunpack.c.h.b16 %v5124
        %v5283 = vunpack.c.l.b16 %v5125
        %v5284 = vunpack.c.h.b16 %v5125
        %v5285 = vunpack.c.l.b16 %v5126
        %v5286 = vunpack.c.h.b16 %v5126
        %v5287 = vunpack.c.l.b16 %v5127
        %v5288 = vunpack.c.h.b16 %v5127
        %v5289 = vunpack.c.l.b16 %v5128
        %v5290 = vunpack.c.h.b16 %v5128
        %v5291 = vunpack.c.l.b16 %v5129
        %v5292 = vunpack.c.h.b16 %v5129
        %v5293 = vunpack.c.l.b16 %v5130
        %v5294 = vunpack.c.h.b16 %v5130
        %v5295 = vunpack.c.l.b16 %v5131
        %v5296 = vunpack.c.h.b16 %v5131
        %v5297 = vunpack.c.l.b16 %v5132
        %v5298 = vunpack.c.h.b16 %v5132
        %v5299 = vunpack.c.l.b16 %v5133
        %v5300 = vunpack.c.h.b16 %v5133
        %v5301 = vunpack.c.l.b16 %v5134
        %v5302 = vunpack.c.h.b16 %v5134
        %v5303 = vunpack.c.l.b16 %v5135
        %v5304 = vunpack.c.h.b16 %v5135
        %v5305 = vunpack.c.l.b16 %v5136
        %v5306 = vunpack.c.h.b16 %v5136
        %v5307 = vunpack.c.l.b16 %v5137
        %v5308 = vunpack.c.h.b16 %v5137
        %v5309 = vunpack.c.l.b16 %v5138
        %v5310 = vunpack.c.h.b16 %v5138
        %v5311 = vunpack.c.l.b16 %v5139
        %v5312 = vunpack.c.h.b16 %v5139
        %v5313 = vunpack.c.l.b16 %v5140
        %v5314 = vunpack.c.h.b16 %v5140
        %v5315 = vunpack.c.l.b16 %v5141
        %v5316 = vunpack.c.h.b16 %v5141
        %v5317 = vunpack.c.l.b16 %v5142
        %v5318 = vunpack.c.h.b16 %v5142
        %v5319 = vunpack.c.l.b16 %v5143
        %v5320 = vunpack.c.h.b16 %v5143
        %v5321 = vunpack.c.l.b16 %v5144
        %v5322 = vunpack.c.h.b16 %v5144
        %v5323 = vunpack.c.l.b16 %v5145
        %v5324 = vunpack.c.h.b16 %v5145
        %v5325 = vunpack.c.l.b16 %v5146
        %v5326 = vunpack.c.h.b16 %v5146
        %v5327 = vunpack.c.l.b16 %v5147
        %v5328 = vunpack.c.h.b16 %v5147
        %v5329 = vunpack.c.l.b16 %v5148
        %v5330 = vunpack.c.h.b16 %v5148
        %v5331 = vunpack.c.l.b16 %v5149
        %v5332 = vunpack.c.h.b16 %v5149
        %v5333 = vunpack.c.l.b16 %v5150
        %v5334 = vunpack.c.h.b16 %v5150
        %v5335 = vunpack.c.l.b16 %v5151
        %v5336 = vunpack.c.h.b16 %v5151
        %v5337 = vunpack.c.l.b16 %v5152
        %v5338 = vunpack.c.h.b16 %v5152
        %v5339 = vunpack.c.l.b16 %v5153
        %v5340 = vunpack.c.h.b16 %v5153
        %v5341 = vunpack.c.l.b16 %v5154
        %v5342 = vunpack.c.h.b16 %v5154
        %v5343 = vunpack.c.l.b16 %v5155
        %v5344 = vunpack.c.h.b16 %v5155
        %v5345 = vunpack.c.l.b16 %v5156
        %v5346 = vunpack.c.h.b16 %v5156
        %v5347 = vunpack.c.l.b16 %v5157
        %v5348 = vunpack.c.h.b16 %v5157
        %v5349 = vunpack.c.l.b16 %v5158
        %v5350 = vunpack.c.h.b16 %v5158
        %v5351 = vpack.c.b16 %v5227, %v5223
        %v5352 = vpack.c.b16 %v5228, %v5224
        %v5353 = vpack.c.b16 %v5229, %v5225
        %v5354 = vpack.c.b16 %v5230, %v5226
        %v5355 = vpack.c.b16 %v5235, %v5231
        %v5356 = vpack.c.b16 %v5236, %v5232
        %v5357 = vpack.c.b16 %v5237, %v5233
        %v5358 = vpack.c.b16 %v5238, %v5234
        %v5359 = vpack.c.b16 %v5243, %v5239
        %v5360 = vpack.c.b16 %v5244, %v5240
        %v5361 = vpack.c.b16 %v5245, %v5241
        %v5362 = vpack.c.b16 %v5246, %v5242
        %v5363 = vpack.c.b16 %v5251, %v5247
        %v5364 = vpack.c.b16 %v5252, %v5248
        %v5365 = vpack.c.b16 %v5253, %v5249
        %v5366 = vpack.c.b16 %v5254, %v5250
        %v5367 = vpack.c.b16 %v5259, %v5255
        %v5368 = vpack.c.b16 %v5260, %v5256
        %v5369 = vpack.c.b16 %v5261, %v5257
        %v5370 = vpack.c.b16 %v5262, %v5258
        %v5371 = vpack.c.b16 %v5267, %v5263
        %v5372 = vpack.c.b16 %v5268, %v5264
        %v5373 = vpack.c.b16 %v5269, %v5265
        %v5374 = vpack.c.b16 %v5270, %v5266
        %v5375 = vpack.c.b16 %v5275, %v5271
        %v5376 = vpack.c.b16 %v5276, %v5272
        %v5377 = vpack.c.b16 %v5277, %v5273
        %v5378 = vpack.c.b16 %v5278, %v5274
        %v5379 = vpack.c.b16 %v5283, %v5279
        %v5380 = vpack.c.b16 %v5284, %v5280
        %v5381 = vpack.c.b16 %v5285, %v5281
        %v5382 = vpack.c.b16 %v5286, %v5282
        %v5383 = vpack.c.b16 %v5291, %v5287
        %v5384 = vpack.c.b16 %v5292, %v5288
        %v5385 = vpack.c.b16 %v5293, %v5289
        %v5386 = vpack.c.b16 %v5294, %v5290
        %v5387 = vpack.c.b16 %v5299, %v5295
        %v5388 = vpack.c.b16 %v5300, %v5296
        %v5389 = vpack.c.b16 %v5301, %v5297
        %v5390 = vpack.c.b16 %v5302, %v5298
        %v5391 = vpack.c.b16 %v5307, %v5303
        %v5392 = vpack.c.b16 %v5308, %v5304
        %v5393 = vpack.c.b16 %v5309, %v5305
        %v5394 = vpack.c.b16 %v5310, %v5306
        %v5395 = vpack.c.b16 %v5315, %v5311
        %v5396 = vpack.c.b16 %v5316, %v5312
        %v5397 = vpack.c.b16 %v5317, %v5313
        %v5398 = vpack.c.b16 %v5318, %v5314
        %v5399 = vpack.c.b16 %v5323, %v5319
        %v5400 = vpack.c.b16 %v5324, %v5320
        %v5401 = vpack.c.b16 %v5325, %v5321
        %v5402 = vpack.c.b16 %v5326, %v5322
        %v5403 = vpack.c.b16 %v5331, %v5327
        %v5404 = vpack.c.b16 %v5332, %v5328
        %v5405 = vpack.c.b16 %v5333, %v5329
        %v5406 = vpack.c.b16 %v5334, %v5330
        %v5407 = vpack.c.b16 %v5339, %v5335
        %v5408 = vpack.c.b16 %v5340, %v5336
        %v5409 = vpack.c.b16 %v5341, %v5337
        %v5410 = vpack.c.b16 %v5342, %v5338
        %v5411 = vpack.c.b16 %v5347, %v5343
        %v5412 = vpack.c.b16 %v5348, %v5344
        %v5413 = vpack.c.b16 %v5349, %v5345
        %v5414 = vpack.c.b16 %v5350, %v5346
        %5479 = vmatpush.bf16.msra.mxu0 %v5379
        %5480 = vmatpush.bf16.msra.mxu0 %v5375
        %5481 = vmatpush.bf16.msra.mxu0 %v5371
        %5482 = vmatpush.bf16.msra.mxu0 %v5367
        %5483 = vmatpush.bf16.msra.mxu0 %v5363
        %5484 = vmatpush.bf16.msra.mxu0 %v5359
        %5485 = vmatpush.bf16.msra.mxu0 %v5355
        %5486 = vmatpush.bf16.msra.mxu0 %v5351
        %5487 = vmatmul.bf16.gmra.mxu0 %v5092
        %v5488 = vpop.f32.mrf.mxu0
        %v5489 = vadd.f32 0.0, %v5488
        %v5490 = vpop.f32.mrf.mxu0
        %v5491 = vadd.f32 0.0, %v5490
        %5492 = vdwg.mxu0
        %5493 = vmatpush.bf16.msra.mxu0 %v5411
        %5494 = vmatpush.bf16.msra.mxu0 %v5407
        %5495 = vmatpush.bf16.msra.mxu0 %v5403
        %5496 = vmatpush.bf16.msra.mxu0 %v5399
        %5497 = vmatpush.bf16.msra.mxu0 %v5395
        %5498 = vmatpush.bf16.msra.mxu0 %v5391
        %5499 = vmatpush.bf16.msra.mxu0 %v5387
        %5500 = vmatpush.bf16.msra.mxu0 %v5383
        %5501 = vmatmul.bf16.gmra.mxu0 %v5093
        %v5502 = vpop.f32.mrf.mxu0
        %v5503 = vadd.f32 %v5489, %v5502
        %v5504 = vpop.f32.mrf.mxu0
        %v5505 = vadd.f32 %v5491, %v5504
        %5506 = vdwg.mxu0
        %5507 = vmatpush.bf16.msra.mxu0 %v5380
        %5508 = vmatpush.bf16.msra.mxu0 %v5376
        %5509 = vmatpush.bf16.msra.mxu0 %v5372
        %5510 = vmatpush.bf16.msra.mxu0 %v5368
        %5511 = vmatpush.bf16.msra.mxu0 %v5364
        %5512 = vmatpush.bf16.msra.mxu0 %v5360
        %5513 = vmatpush.bf16.msra.mxu0 %v5356
        %5514 = vmatpush.bf16.msra.mxu0 %v5352
        %5515 = vmatmul.bf16.gmra.mxu0 %v5092
        %v5516 = vpop.f32.mrf.mxu0
        %v5517 = vadd.f32 0.0, %v5516
        %v5518 = vpop.f32.mrf.mxu0
        %v5519 = vadd.f32 0.0, %v5518
        %5520 = vdwg.mxu0
        %5521 = vmatpush.bf16.msra.mxu0 %v5412
        %5522 = vmatpush.bf16.msra.mxu0 %v5408
        %5523 = vmatpush.bf16.msra.mxu0 %v5404
        %5524 = vmatpush.bf16.msra.mxu0 %v5400
        %5525 = vmatpush.bf16.msra.mxu0 %v5396
        %5526 = vmatpush.bf16.msra.mxu0 %v5392
        %5527 = vmatpush.bf16.msra.mxu0 %v5388
        %5528 = vmatpush.bf16.msra.mxu0 %v5384
        %5529 = vmatmul.bf16.gmra.mxu0 %v5093
        %v5530 = vpop.f32.mrf.mxu0
        %v5531 = vadd.f32 %v5517, %v5530
        %v5532 = vpop.f32.mrf.mxu0
        %v5533 = vadd.f32 %v5519, %v5532
        %5534 = vdwg.mxu0
        %5535 = vmatpush.bf16.msra.mxu0 %v5381
        %5536 = vmatpush.bf16.msra.mxu0 %v5377
        %5537 = vmatpush.bf16.msra.mxu0 %v5373
        %5538 = vmatpush.bf16.msra.mxu0 %v5369
        %5539 = vmatpush.bf16.msra.mxu0 %v5365
        %5540 = vmatpush.bf16.msra.mxu0 %v5361
        %5541 = vmatpush.bf16.msra.mxu0 %v5357
        %5542 = vmatpush.bf16.msra.mxu0 %v5353
        %5543 = vmatmul.bf16.gmra.mxu0 %v5092
        %v5544 = vpop.f32.mrf.mxu0
        %v5545 = vadd.f32 0.0, %v5544
        %v5546 = vpop.f32.mrf.mxu0
        %v5547 = vadd.f32 0.0, %v5546
        %5548 = vdwg.mxu0
        %5549 = vmatpush.bf16.msra.mxu0 %v5413
        %5550 = vmatpush.bf16.msra.mxu0 %v5409
        %5551 = vmatpush.bf16.msra.mxu0 %v5405
        %5552 = vmatpush.bf16.msra.mxu0 %v5401
        %5553 = vmatpush.bf16.msra.mxu0 %v5397
        %5554 = vmatpush.bf16.msra.mxu0 %v5393
        %5555 = vmatpush.bf16.msra.mxu0 %v5389
        %5556 = vmatpush.bf16.msra.mxu0 %v5385
        %5557 = vmatmul.bf16.gmra.mxu0 %v5093
        %v5558 = vpop.f32.mrf.mxu0
        %v5559 = vadd.f32 %v5545, %v5558
        %v5560 = vpop.f32.mrf.mxu0
        %v5561 = vadd.f32 %v5547, %v5560
        %5562 = vdwg.mxu0
        %5563 = vmatpush.bf16.msra.mxu0 %v5382
        %5564 = vmatpush.bf16.msra.mxu0 %v5378
        %5565 = vmatpush.bf16.msra.mxu0 %v5374
        %5566 = vmatpush.bf16.msra.mxu0 %v5370
        %5567 = vmatpush.bf16.msra.mxu0 %v5366
        %5568 = vmatpush.bf16.msra.mxu0 %v5362
        %5569 = vmatpush.bf16.msra.mxu0 %v5358
        %5570 = vmatpush.bf16.msra.mxu0 %v5354
        %5571 = vmatmul.bf16.gmra.mxu0 %v5092
        %v5572 = vpop.f32.mrf.mxu0
        %v5573 = vadd.f32 0.0, %v5572
        %v5574 = vpop.f32.mrf.mxu0
        %v5575 = vadd.f32 0.0, %v5574
        %5576 = vdwg.mxu0
        %5577 = vmatpush.bf16.msra.mxu0 %v5414
        %5578 = vmatpush.bf16.msra.mxu0 %v5410
        %5579 = vmatpush.bf16.msra.mxu0 %v5406
        %5580 = vmatpush.bf16.msra.mxu0 %v5402
        %5581 = vmatpush.bf16.msra.mxu0 %v5398
        %5582 = vmatpush.bf16.msra.mxu0 %v5394
        %5583 = vmatpush.bf16.msra.mxu0 %v5390
        %5584 = vmatpush.bf16.msra.mxu0 %v5386
        %5585 = vmatmul.bf16.gmra.mxu0 %v5093
        %v5586 = vpop.f32.mrf.mxu0
        %v5587 = vadd.f32 %v5573, %v5586
        %v5588 = vpop.f32.mrf.mxu0
        %v5589 = vadd.f32 %v5575, %v5588
        %5590 = vdwg.mxu0
        %v5655 = vunpack.c.l.b16 %v5028
        %v5656 = vunpack.c.h.b16 %v5028
        %v5657 = vunpack.c.l.b16 %v5029
        %v5658 = vunpack.c.h.b16 %v5029
        %v5659 = vunpack.c.l.b16 %v5030
        %v5660 = vunpack.c.h.b16 %v5030
        %v5661 = vunpack.c.l.b16 %v5031
        %v5662 = vunpack.c.h.b16 %v5031
        %v5663 = vunpack.c.l.b16 %v5032
        %v5664 = vunpack.c.h.b16 %v5032
        %v5665 = vunpack.c.l.b16 %v5033
        %v5666 = vunpack.c.h.b16 %v5033
        %v5667 = vunpack.c.l.b16 %v5034
        %v5668 = vunpack.c.h.b16 %v5034
        %v5669 = vunpack.c.l.b16 %v5035
        %v5670 = vunpack.c.h.b16 %v5035
        %v5671 = vunpack.c.l.b16 %v5036
        %v5672 = vunpack.c.h.b16 %v5036
        %v5673 = vunpack.c.l.b16 %v5037
        %v5674 = vunpack.c.h.b16 %v5037
        %v5675 = vunpack.c.l.b16 %v5038
        %v5676 = vunpack.c.h.b16 %v5038
        %v5677 = vunpack.c.l.b16 %v5039
        %v5678 = vunpack.c.h.b16 %v5039
        %v5679 = vunpack.c.l.b16 %v5040
        %v5680 = vunpack.c.h.b16 %v5040
        %v5681 = vunpack.c.l.b16 %v5041
        %v5682 = vunpack.c.h.b16 %v5041
        %v5683 = vunpack.c.l.b16 %v5042
        %v5684 = vunpack.c.h.b16 %v5042
        %v5685 = vunpack.c.l.b16 %v5043
        %v5686 = vunpack.c.h.b16 %v5043
        %v5687 = vunpack.c.l.b16 %v5044
        %v5688 = vunpack.c.h.b16 %v5044
        %v5689 = vunpack.c.l.b16 %v5045
        %v5690 = vunpack.c.h.b16 %v5045
        %v5691 = vunpack.c.l.b16 %v5046
        %v5692 = vunpack.c.h.b16 %v5046
        %v5693 = vunpack.c.l.b16 %v5047
        %v5694 = vunpack.c.h.b16 %v5047
        %v5695 = vunpack.c.l.b16 %v5048
        %v5696 = vunpack.c.h.b16 %v5048
        %v5697 = vunpack.c.l.b16 %v5049
        %v5698 = vunpack.c.h.b16 %v5049
        %v5699 = vunpack.c.l.b16 %v5050
        %v5700 = vunpack.c.h.b16 %v5050
        %v5701 = vunpack.c.l.b16 %v5051
        %v5702 = vunpack.c.h.b16 %v5051
        %v5703 = vunpack.c.l.b16 %v5052
        %v5704 = vunpack.c.h.b16 %v5052
        %v5705 = vunpack.c.l.b16 %v5053
        %v5706 = vunpack.c.h.b16 %v5053
        %v5707 = vunpack.c.l.b16 %v5054
        %v5708 = vunpack.c.h.b16 %v5054
        %v5709 = vunpack.c.l.b16 %v5055
        %v5710 = vunpack.c.h.b16 %v5055
        %v5711 = vunpack.c.l.b16 %v5056
        %v5712 = vunpack.c.h.b16 %v5056
        %v5713 = vunpack.c.l.b16 %v5057
        %v5714 = vunpack.c.h.b16 %v5057
        %v5715 = vunpack.c.l.b16 %v5058
        %v5716 = vunpack.c.h.b16 %v5058
        %v5717 = vunpack.c.l.b16 %v5059
        %v5718 = vunpack.c.h.b16 %v5059
        %v5719 = vunpack.c.l.b16 %v5060
        %v5720 = vunpack.c.h.b16 %v5060
        %v5721 = vunpack.c.l.b16 %v5061
        %v5722 = vunpack.c.h.b16 %v5061
        %v5723 = vunpack.c.l.b16 %v5062
        %v5724 = vunpack.c.h.b16 %v5062
        %v5725 = vunpack.c.l.b16 %v5063
        %v5726 = vunpack.c.h.b16 %v5063
        %v5727 = vunpack.c.l.b16 %v5064
        %v5728 = vunpack.c.h.b16 %v5064
        %v5729 = vunpack.c.l.b16 %v5065
        %v5730 = vunpack.c.h.b16 %v5065
        %v5731 = vunpack.c.l.b16 %v5066
        %v5732 = vunpack.c.h.b16 %v5066
        %v5733 = vunpack.c.l.b16 %v5067
        %v5734 = vunpack.c.h.b16 %v5067
        %v5735 = vunpack.c.l.b16 %v5068
        %v5736 = vunpack.c.h.b16 %v5068
        %v5737 = vunpack.c.l.b16 %v5069
        %v5738 = vunpack.c.h.b16 %v5069
        %v5739 = vunpack.c.l.b16 %v5070
        %v5740 = vunpack.c.h.b16 %v5070
        %v5741 = vunpack.c.l.b16 %v5071
        %v5742 = vunpack.c.h.b16 %v5071
        %v5743 = vunpack.c.l.b16 %v5072
        %v5744 = vunpack.c.h.b16 %v5072
        %v5745 = vunpack.c.l.b16 %v5073
        %v5746 = vunpack.c.h.b16 %v5073
        %v5747 = vunpack.c.l.b16 %v5074
        %v5748 = vunpack.c.h.b16 %v5074
        %v5749 = vunpack.c.l.b16 %v5075
        %v5750 = vunpack.c.h.b16 %v5075
        %v5751 = vunpack.c.l.b16 %v5076
        %v5752 = vunpack.c.h.b16 %v5076
        %v5753 = vunpack.c.l.b16 %v5077
        %v5754 = vunpack.c.h.b16 %v5077
        %v5755 = vunpack.c.l.b16 %v5078
        %v5756 = vunpack.c.h.b16 %v5078
        %v5757 = vunpack.c.l.b16 %v5079
        %v5758 = vunpack.c.h.b16 %v5079
        %v5759 = vunpack.c.l.b16 %v5080
        %v5760 = vunpack.c.h.b16 %v5080
        %v5761 = vunpack.c.l.b16 %v5081
        %v5762 = vunpack.c.h.b16 %v5081
        %v5763 = vunpack.c.l.b16 %v5082
        %v5764 = vunpack.c.h.b16 %v5082
        %v5765 = vunpack.c.l.b16 %v5083
        %v5766 = vunpack.c.h.b16 %v5083
        %v5767 = vunpack.c.l.b16 %v5084
        %v5768 = vunpack.c.h.b16 %v5084
        %v5769 = vunpack.c.l.b16 %v5085
        %v5770 = vunpack.c.h.b16 %v5085
        %v5771 = vunpack.c.l.b16 %v5086
        %v5772 = vunpack.c.h.b16 %v5086
        %v5773 = vunpack.c.l.b16 %v5087
        %v5774 = vunpack.c.h.b16 %v5087
        %v5775 = vunpack.c.l.b16 %v5088
        %v5776 = vunpack.c.h.b16 %v5088
        %v5777 = vunpack.c.l.b16 %v5089
        %v5778 = vunpack.c.h.b16 %v5089
        %v5779 = vunpack.c.l.b16 %v5090
        %v5780 = vunpack.c.h.b16 %v5090
        %v5781 = vunpack.c.l.b16 %v5091
        %v5782 = vunpack.c.h.b16 %v5091
        %v5783 = vpack.c.b16 %v5659, %v5655
        %v5784 = vpack.c.b16 %v5660, %v5656
        %v5785 = vpack.c.b16 %v5661, %v5657
        %v5786 = vpack.c.b16 %v5662, %v5658
        %v5787 = vpack.c.b16 %v5667, %v5663
        %v5788 = vpack.c.b16 %v5668, %v5664
        %v5789 = vpack.c.b16 %v5669, %v5665
        %v5790 = vpack.c.b16 %v5670, %v5666
        %v5791 = vpack.c.b16 %v5675, %v5671
        %v5792 = vpack.c.b16 %v5676, %v5672
        %v5793 = vpack.c.b16 %v5677, %v5673
        %v5794 = vpack.c.b16 %v5678, %v5674
        %v5795 = vpack.c.b16 %v5683, %v5679
        %v5796 = vpack.c.b16 %v5684, %v5680
        %v5797 = vpack.c.b16 %v5685, %v5681
        %v5798 = vpack.c.b16 %v5686, %v5682
        %v5799 = vpack.c.b16 %v5691, %v5687
        %v5800 = vpack.c.b16 %v5692, %v5688
        %v5801 = vpack.c.b16 %v5693, %v5689
        %v5802 = vpack.c.b16 %v5694, %v5690
        %v5803 = vpack.c.b16 %v5699, %v5695
        %v5804 = vpack.c.b16 %v5700, %v5696
        %v5805 = vpack.c.b16 %v5701, %v5697
        %v5806 = vpack.c.b16 %v5702, %v5698
        %v5807 = vpack.c.b16 %v5707, %v5703
        %v5808 = vpack.c.b16 %v5708, %v5704
        %v5809 = vpack.c.b16 %v5709, %v5705
        %v5810 = vpack.c.b16 %v5710, %v5706
        %v5811 = vpack.c.b16 %v5715, %v5711
        %v5812 = vpack.c.b16 %v5716, %v5712
        %v5813 = vpack.c.b16 %v5717, %v5713
        %v5814 = vpack.c.b16 %v5718, %v5714
        %v5815 = vpack.c.b16 %v5723, %v5719
        %v5816 = vpack.c.b16 %v5724, %v5720
        %v5817 = vpack.c.b16 %v5725, %v5721
        %v5818 = vpack.c.b16 %v5726, %v5722
        %v5819 = vpack.c.b16 %v5731, %v5727
        %v5820 = vpack.c.b16 %v5732, %v5728
        %v5821 = vpack.c.b16 %v5733, %v5729
        %v5822 = vpack.c.b16 %v5734, %v5730
        %v5823 = vpack.c.b16 %v5739, %v5735
        %v5824 = vpack.c.b16 %v5740, %v5736
        %v5825 = vpack.c.b16 %v5741, %v5737
        %v5826 = vpack.c.b16 %v5742, %v5738
        %v5827 = vpack.c.b16 %v5747, %v5743
        %v5828 = vpack.c.b16 %v5748, %v5744
        %v5829 = vpack.c.b16 %v5749, %v5745
        %v5830 = vpack.c.b16 %v5750, %v5746
        %v5831 = vpack.c.b16 %v5755, %v5751
        %v5832 = vpack.c.b16 %v5756, %v5752
        %v5833 = vpack.c.b16 %v5757, %v5753
        %v5834 = vpack.c.b16 %v5758, %v5754
        %v5835 = vpack.c.b16 %v5763, %v5759
        %v5836 = vpack.c.b16 %v5764, %v5760
        %v5837 = vpack.c.b16 %v5765, %v5761
        %v5838 = vpack.c.b16 %v5766, %v5762
        %v5839 = vpack.c.b16 %v5771, %v5767
        %v5840 = vpack.c.b16 %v5772, %v5768
        %v5841 = vpack.c.b16 %v5773, %v5769
        %v5842 = vpack.c.b16 %v5774, %v5770
        %v5843 = vpack.c.b16 %v5779, %v5775
        %v5844 = vpack.c.b16 %v5780, %v5776
        %v5845 = vpack.c.b16 %v5781, %v5777
        %v5846 = vpack.c.b16 %v5782, %v5778
        %5911 = vmatpush.bf16.msra.mxu0 %v5811
        %5912 = vmatpush.bf16.msra.mxu0 %v5807
        %5913 = vmatpush.bf16.msra.mxu0 %v5803
        %5914 = vmatpush.bf16.msra.mxu0 %v5799
        %5915 = vmatpush.bf16.msra.mxu0 %v5795
        %5916 = vmatpush.bf16.msra.mxu0 %v5791
        %5917 = vmatpush.bf16.msra.mxu0 %v5787
        %5918 = vmatpush.bf16.msra.mxu0 %v5783
        %5919 = vmatmul.bf16.gmra.mxu0 %v5026
        %v5920 = vpop.f32.mrf.mxu0
        %v5921 = vadd.f32 %v5503, %v5920
        %v5922 = vpop.f32.mrf.mxu0
        %v5923 = vadd.f32 %v5505, %v5922
        %5924 = vdwg.mxu0
        %5925 = vmatpush.bf16.msra.mxu0 %v5843
        %5926 = vmatpush.bf16.msra.mxu0 %v5839
        %5927 = vmatpush.bf16.msra.mxu0 %v5835
        %5928 = vmatpush.bf16.msra.mxu0 %v5831
        %5929 = vmatpush.bf16.msra.mxu0 %v5827
        %5930 = vmatpush.bf16.msra.mxu0 %v5823
        %5931 = vmatpush.bf16.msra.mxu0 %v5819
        %5932 = vmatpush.bf16.msra.mxu0 %v5815
        %5933 = vmatmul.bf16.gmra.mxu0 %v5027
        %v5934 = vpop.f32.mrf.mxu0
        %v5935 = vadd.f32 %v5921, %v5934
        %v5936 = vpop.f32.mrf.mxu0
        %v5937 = vadd.f32 %v5923, %v5936
        %5938 = vdwg.mxu0
        %5939 = vmatpush.bf16.msra.mxu0 %v5812
        %5940 = vmatpush.bf16.msra.mxu0 %v5808
        %5941 = vmatpush.bf16.msra.mxu0 %v5804
        %5942 = vmatpush.bf16.msra.mxu0 %v5800
        %5943 = vmatpush.bf16.msra.mxu0 %v5796
        %5944 = vmatpush.bf16.msra.mxu0 %v5792
        %5945 = vmatpush.bf16.msra.mxu0 %v5788
        %5946 = vmatpush.bf16.msra.mxu0 %v5784
        %5947 = vmatmul.bf16.gmra.mxu0 %v5026
        %v5948 = vpop.f32.mrf.mxu0
        %v5949 = vadd.f32 %v5531, %v5948
        %v5950 = vpop.f32.mrf.mxu0
        %v5951 = vadd.f32 %v5533, %v5950
        %5952 = vdwg.mxu0
        %5953 = vmatpush.bf16.msra.mxu0 %v5844
        %5954 = vmatpush.bf16.msra.mxu0 %v5840
        %5955 = vmatpush.bf16.msra.mxu0 %v5836
        %5956 = vmatpush.bf16.msra.mxu0 %v5832
        %5957 = vmatpush.bf16.msra.mxu0 %v5828
        %5958 = vmatpush.bf16.msra.mxu0 %v5824
        %5959 = vmatpush.bf16.msra.mxu0 %v5820
        %5960 = vmatpush.bf16.msra.mxu0 %v5816
        %5961 = vmatmul.bf16.gmra.mxu0 %v5027
        %v5962 = vpop.f32.mrf.mxu0
        %v5963 = vadd.f32 %v5949, %v5962
        %v5964 = vpop.f32.mrf.mxu0
        %v5965 = vadd.f32 %v5951, %v5964
        %5966 = vdwg.mxu0
        %5967 = vmatpush.bf16.msra.mxu0 %v5813
        %5968 = vmatpush.bf16.msra.mxu0 %v5809
        %5969 = vmatpush.bf16.msra.mxu0 %v5805
        %5970 = vmatpush.bf16.msra.mxu0 %v5801
        %5971 = vmatpush.bf16.msra.mxu0 %v5797
        %5972 = vmatpush.bf16.msra.mxu0 %v5793
        %5973 = vmatpush.bf16.msra.mxu0 %v5789
        %5974 = vmatpush.bf16.msra.mxu0 %v5785
        %5975 = vmatmul.bf16.gmra.mxu0 %v5026
        %v5976 = vpop.f32.mrf.mxu0
        %v5977 = vadd.f32 %v5559, %v5976
        %v5978 = vpop.f32.mrf.mxu0
        %v5979 = vadd.f32 %v5561, %v5978
        %5980 = vdwg.mxu0
        %5981 = vmatpush.bf16.msra.mxu0 %v5845
        %5982 = vmatpush.bf16.msra.mxu0 %v5841
        %5983 = vmatpush.bf16.msra.mxu0 %v5837
        %5984 = vmatpush.bf16.msra.mxu0 %v5833
        %5985 = vmatpush.bf16.msra.mxu0 %v5829
        %5986 = vmatpush.bf16.msra.mxu0 %v5825
        %5987 = vmatpush.bf16.msra.mxu0 %v5821
        %5988 = vmatpush.bf16.msra.mxu0 %v5817
        %5989 = vmatmul.bf16.gmra.mxu0 %v5027
        %v5990 = vpop.f32.mrf.mxu0
        %v5991 = vadd.f32 %v5977, %v5990
        %v5992 = vpop.f32.mrf.mxu0
        %v5993 = vadd.f32 %v5979, %v5992
        %5994 = vdwg.mxu0
        %5995 = vmatpush.bf16.msra.mxu0 %v5814
        %5996 = vmatpush.bf16.msra.mxu0 %v5810
        %5997 = vmatpush.bf16.msra.mxu0 %v5806
        %5998 = vmatpush.bf16.msra.mxu0 %v5802
        %5999 = vmatpush.bf16.msra.mxu0 %v5798
        %6000 = vmatpush.bf16.msra.mxu0 %v5794
        %6001 = vmatpush.bf16.msra.mxu0 %v5790
        %6002 = vmatpush.bf16.msra.mxu0 %v5786
        %6003 = vmatmul.bf16.gmra.mxu0 %v5026
        %v6004 = vpop.f32.mrf.mxu0
        %v6005 = vadd.f32 %v5587, %v6004
        %v6006 = vpop.f32.mrf.mxu0
        %v6007 = vadd.f32 %v5589, %v6006
        %6008 = vdwg.mxu0
        %6009 = vmatpush.bf16.msra.mxu0 %v5846
        %6010 = vmatpush.bf16.msra.mxu0 %v5842
        %6011 = vmatpush.bf16.msra.mxu0 %v5838
        %6012 = vmatpush.bf16.msra.mxu0 %v5834
        %6013 = vmatpush.bf16.msra.mxu0 %v5830
        %6014 = vmatpush.bf16.msra.mxu0 %v5826
        %6015 = vmatpush.bf16.msra.mxu0 %v5822
        %6016 = vmatpush.bf16.msra.mxu0 %v5818
        %6017 = vmatmul.bf16.gmra.mxu0 %v5027
        %v6018 = vpop.f32.mrf.mxu0
        %v6019 = vadd.f32 %v6005, %v6018
        %v6020 = vpop.f32.mrf.mxu0
        %v6021 = vadd.f32 %v6007, %v6020
        %6022 = vdwg.mxu0
        %v6023 = vrot.slane %v5002, 1
        %v6024 = vsel %vm727, %v6023, %v5008
        %v6025 = vrot.slane %v5003, 1
        %v6026 = vsel %vm727, %v6025, %v5009
        %v6029 = vpack.c.bf16 %v5024, %v6024
        %v6030 = vpack.c.bf16 %v5025, %v6026
        %s6031 = scalar_lea.vmem [#allocation5], 1024
        %v6032 = vld [vmem:[%s6031] sm:$0xff]
        %v6033 = vld [vmem:[%s6031 + $0x8] sm:$0xff]
        %v6034 = vld [vmem:[%s6031 + $0x10] sm:$0xff]
        %v6035 = vld [vmem:[%s6031 + $0x18] sm:$0xff]
        %v6036 = vld [vmem:[%s6031 + $0x20] sm:$0xff]
        %v6037 = vld [vmem:[%s6031 + $0x28] sm:$0xff]
        %v6038 = vld [vmem:[%s6031 + $0x30] sm:$0xff]
        %v6039 = vld [vmem:[%s6031 + $0x38] sm:$0xff]
        %v6040 = vld [vmem:[%s6031 + $0x40] sm:$0xff]
        %v6041 = vld [vmem:[%s6031 + $0x48] sm:$0xff]
        %v6042 = vld [vmem:[%s6031 + $0x50] sm:$0xff]
        %v6043 = vld [vmem:[%s6031 + $0x58] sm:$0xff]
        %v6044 = vld [vmem:[%s6031 + $0x60] sm:$0xff]
        %v6045 = vld [vmem:[%s6031 + $0x68] sm:$0xff]
        %v6046 = vld [vmem:[%s6031 + $0x70] sm:$0xff]
        %v6047 = vld [vmem:[%s6031 + $0x78] sm:$0xff]
        %v6048 = vld [vmem:[%s6031 + $0x80] sm:$0xff]
        %v6049 = vld [vmem:[%s6031 + $0x88] sm:$0xff]
        %v6050 = vld [vmem:[%s6031 + $0x90] sm:$0xff]
        %v6051 = vld [vmem:[%s6031 + $0x98] sm:$0xff]
        %v6052 = vld [vmem:[%s6031 + $0xa0] sm:$0xff]
        %v6053 = vld [vmem:[%s6031 + $0xa8] sm:$0xff]
        %v6054 = vld [vmem:[%s6031 + $0xb0] sm:$0xff]
        %v6055 = vld [vmem:[%s6031 + $0xb8] sm:$0xff]
        %v6056 = vld [vmem:[%s6031 + $0xc0] sm:$0xff]
        %v6057 = vld [vmem:[%s6031 + $0xc8] sm:$0xff]
        %v6058 = vld [vmem:[%s6031 + $0xd0] sm:$0xff]
        %v6059 = vld [vmem:[%s6031 + $0xd8] sm:$0xff]
        %v6060 = vld [vmem:[%s6031 + $0xe0] sm:$0xff]
        %v6061 = vld [vmem:[%s6031 + $0xe8] sm:$0xff]
        %v6062 = vld [vmem:[%s6031 + $0xf0] sm:$0xff]
        %v6063 = vld [vmem:[%s6031 + $0xf8] sm:$0xff]
        %v6064 = vld [vmem:[%s6031 + $0x100] sm:$0xff]
        %v6065 = vld [vmem:[%s6031 + $0x108] sm:$0xff]
        %v6066 = vld [vmem:[%s6031 + $0x110] sm:$0xff]
        %v6067 = vld [vmem:[%s6031 + $0x118] sm:$0xff]
        %v6068 = vld [vmem:[%s6031 + $0x120] sm:$0xff]
        %v6069 = vld [vmem:[%s6031 + $0x128] sm:$0xff]
        %v6070 = vld [vmem:[%s6031 + $0x130] sm:$0xff]
        %v6071 = vld [vmem:[%s6031 + $0x138] sm:$0xff]
        %v6072 = vld [vmem:[%s6031 + $0x140] sm:$0xff]
        %v6073 = vld [vmem:[%s6031 + $0x148] sm:$0xff]
        %v6074 = vld [vmem:[%s6031 + $0x150] sm:$0xff]
        %v6075 = vld [vmem:[%s6031 + $0x158] sm:$0xff]
        %v6076 = vld [vmem:[%s6031 + $0x160] sm:$0xff]
        %v6077 = vld [vmem:[%s6031 + $0x168] sm:$0xff]
        %v6078 = vld [vmem:[%s6031 + $0x170] sm:$0xff]
        %v6079 = vld [vmem:[%s6031 + $0x178] sm:$0xff]
        %v6080 = vld [vmem:[%s6031 + $0x180] sm:$0xff]
        %v6081 = vld [vmem:[%s6031 + $0x188] sm:$0xff]
        %v6082 = vld [vmem:[%s6031 + $0x190] sm:$0xff]
        %v6083 = vld [vmem:[%s6031 + $0x198] sm:$0xff]
        %v6084 = vld [vmem:[%s6031 + $0x1a0] sm:$0xff]
        %v6085 = vld [vmem:[%s6031 + $0x1a8] sm:$0xff]
        %v6086 = vld [vmem:[%s6031 + $0x1b0] sm:$0xff]
        %v6087 = vld [vmem:[%s6031 + $0x1b8] sm:$0xff]
        %v6088 = vld [vmem:[%s6031 + $0x1c0] sm:$0xff]
        %v6089 = vld [vmem:[%s6031 + $0x1c8] sm:$0xff]
        %v6090 = vld [vmem:[%s6031 + $0x1d0] sm:$0xff]
        %v6091 = vld [vmem:[%s6031 + $0x1d8] sm:$0xff]
        %v6092 = vld [vmem:[%s6031 + $0x1e0] sm:$0xff]
        %v6093 = vld [vmem:[%s6031 + $0x1e8] sm:$0xff]
        %v6094 = vld [vmem:[%s6031 + $0x1f0] sm:$0xff]
        %v6095 = vld [vmem:[%s6031 + $0x1f8] sm:$0xff]
        %v6160 = vunpack.c.l.b16 %v6032
        %v6161 = vunpack.c.h.b16 %v6032
        %v6162 = vunpack.c.l.b16 %v6033
        %v6163 = vunpack.c.h.b16 %v6033
        %v6164 = vunpack.c.l.b16 %v6034
        %v6165 = vunpack.c.h.b16 %v6034
        %v6166 = vunpack.c.l.b16 %v6035
        %v6167 = vunpack.c.h.b16 %v6035
        %v6168 = vunpack.c.l.b16 %v6036
        %v6169 = vunpack.c.h.b16 %v6036
        %v6170 = vunpack.c.l.b16 %v6037
        %v6171 = vunpack.c.h.b16 %v6037
        %v6172 = vunpack.c.l.b16 %v6038
        %v6173 = vunpack.c.h.b16 %v6038
        %v6174 = vunpack.c.l.b16 %v6039
        %v6175 = vunpack.c.h.b16 %v6039
        %v6176 = vunpack.c.l.b16 %v6040
        %v6177 = vunpack.c.h.b16 %v6040
        %v6178 = vunpack.c.l.b16 %v6041
        %v6179 = vunpack.c.h.b16 %v6041
        %v6180 = vunpack.c.l.b16 %v6042
        %v6181 = vunpack.c.h.b16 %v6042
        %v6182 = vunpack.c.l.b16 %v6043
        %v6183 = vunpack.c.h.b16 %v6043
        %v6184 = vunpack.c.l.b16 %v6044
        %v6185 = vunpack.c.h.b16 %v6044
        %v6186 = vunpack.c.l.b16 %v6045
        %v6187 = vunpack.c.h.b16 %v6045
        %v6188 = vunpack.c.l.b16 %v6046
        %v6189 = vunpack.c.h.b16 %v6046
        %v6190 = vunpack.c.l.b16 %v6047
        %v6191 = vunpack.c.h.b16 %v6047
        %v6192 = vunpack.c.l.b16 %v6048
        %v6193 = vunpack.c.h.b16 %v6048
        %v6194 = vunpack.c.l.b16 %v6049
        %v6195 = vunpack.c.h.b16 %v6049
        %v6196 = vunpack.c.l.b16 %v6050
        %v6197 = vunpack.c.h.b16 %v6050
        %v6198 = vunpack.c.l.b16 %v6051
        %v6199 = vunpack.c.h.b16 %v6051
        %v6200 = vunpack.c.l.b16 %v6052
        %v6201 = vunpack.c.h.b16 %v6052
        %v6202 = vunpack.c.l.b16 %v6053
        %v6203 = vunpack.c.h.b16 %v6053
        %v6204 = vunpack.c.l.b16 %v6054
        %v6205 = vunpack.c.h.b16 %v6054
        %v6206 = vunpack.c.l.b16 %v6055
        %v6207 = vunpack.c.h.b16 %v6055
        %v6208 = vunpack.c.l.b16 %v6056
        %v6209 = vunpack.c.h.b16 %v6056
        %v6210 = vunpack.c.l.b16 %v6057
        %v6211 = vunpack.c.h.b16 %v6057
        %v6212 = vunpack.c.l.b16 %v6058
        %v6213 = vunpack.c.h.b16 %v6058
        %v6214 = vunpack.c.l.b16 %v6059
        %v6215 = vunpack.c.h.b16 %v6059
        %v6216 = vunpack.c.l.b16 %v6060
        %v6217 = vunpack.c.h.b16 %v6060
        %v6218 = vunpack.c.l.b16 %v6061
        %v6219 = vunpack.c.h.b16 %v6061
        %v6220 = vunpack.c.l.b16 %v6062
        %v6221 = vunpack.c.h.b16 %v6062
        %v6222 = vunpack.c.l.b16 %v6063
        %v6223 = vunpack.c.h.b16 %v6063
        %v6224 = vunpack.c.l.b16 %v6064
        %v6225 = vunpack.c.h.b16 %v6064
        %v6226 = vunpack.c.l.b16 %v6065
        %v6227 = vunpack.c.h.b16 %v6065
        %v6228 = vunpack.c.l.b16 %v6066
        %v6229 = vunpack.c.h.b16 %v6066
        %v6230 = vunpack.c.l.b16 %v6067
        %v6231 = vunpack.c.h.b16 %v6067
        %v6232 = vunpack.c.l.b16 %v6068
        %v6233 = vunpack.c.h.b16 %v6068
        %v6234 = vunpack.c.l.b16 %v6069
        %v6235 = vunpack.c.h.b16 %v6069
        %v6236 = vunpack.c.l.b16 %v6070
        %v6237 = vunpack.c.h.b16 %v6070
        %v6238 = vunpack.c.l.b16 %v6071
        %v6239 = vunpack.c.h.b16 %v6071
        %v6240 = vunpack.c.l.b16 %v6072
        %v6241 = vunpack.c.h.b16 %v6072
        %v6242 = vunpack.c.l.b16 %v6073
        %v6243 = vunpack.c.h.b16 %v6073
        %v6244 = vunpack.c.l.b16 %v6074
        %v6245 = vunpack.c.h.b16 %v6074
        %v6246 = vunpack.c.l.b16 %v6075
        %v6247 = vunpack.c.h.b16 %v6075
        %v6248 = vunpack.c.l.b16 %v6076
        %v6249 = vunpack.c.h.b16 %v6076
        %v6250 = vunpack.c.l.b16 %v6077
        %v6251 = vunpack.c.h.b16 %v6077
        %v6252 = vunpack.c.l.b16 %v6078
        %v6253 = vunpack.c.h.b16 %v6078
        %v6254 = vunpack.c.l.b16 %v6079
        %v6255 = vunpack.c.h.b16 %v6079
        %v6256 = vunpack.c.l.b16 %v6080
        %v6257 = vunpack.c.h.b16 %v6080
        %v6258 = vunpack.c.l.b16 %v6081
        %v6259 = vunpack.c.h.b16 %v6081
        %v6260 = vunpack.c.l.b16 %v6082
        %v6261 = vunpack.c.h.b16 %v6082
        %v6262 = vunpack.c.l.b16 %v6083
        %v6263 = vunpack.c.h.b16 %v6083
        %v6264 = vunpack.c.l.b16 %v6084
        %v6265 = vunpack.c.h.b16 %v6084
        %v6266 = vunpack.c.l.b16 %v6085
        %v6267 = vunpack.c.h.b16 %v6085
        %v6268 = vunpack.c.l.b16 %v6086
        %v6269 = vunpack.c.h.b16 %v6086
        %v6270 = vunpack.c.l.b16 %v6087
        %v6271 = vunpack.c.h.b16 %v6087
        %v6272 = vunpack.c.l.b16 %v6088
        %v6273 = vunpack.c.h.b16 %v6088
        %v6274 = vunpack.c.l.b16 %v6089
        %v6275 = vunpack.c.h.b16 %v6089
        %v6276 = vunpack.c.l.b16 %v6090
        %v6277 = vunpack.c.h.b16 %v6090
        %v6278 = vunpack.c.l.b16 %v6091
        %v6279 = vunpack.c.h.b16 %v6091
        %v6280 = vunpack.c.l.b16 %v6092
        %v6281 = vunpack.c.h.b16 %v6092
        %v6282 = vunpack.c.l.b16 %v6093
        %v6283 = vunpack.c.h.b16 %v6093
        %v6284 = vunpack.c.l.b16 %v6094
        %v6285 = vunpack.c.h.b16 %v6094
        %v6286 = vunpack.c.l.b16 %v6095
        %v6287 = vunpack.c.h.b16 %v6095
        %v6288 = vpack.c.b16 %v6164, %v6160
        %v6289 = vpack.c.b16 %v6165, %v6161
        %v6290 = vpack.c.b16 %v6166, %v6162
        %v6291 = vpack.c.b16 %v6167, %v6163
        %v6292 = vpack.c.b16 %v6172, %v6168
        %v6293 = vpack.c.b16 %v6173, %v6169
        %v6294 = vpack.c.b16 %v6174, %v6170
        %v6295 = vpack.c.b16 %v6175, %v6171
        %v6296 = vpack.c.b16 %v6180, %v6176
        %v6297 = vpack.c.b16 %v6181, %v6177
        %v6298 = vpack.c.b16 %v6182, %v6178
        %v6299 = vpack.c.b16 %v6183, %v6179
        %v6300 = vpack.c.b16 %v6188, %v6184
        %v6301 = vpack.c.b16 %v6189, %v6185
        %v6302 = vpack.c.b16 %v6190, %v6186
        %v6303 = vpack.c.b16 %v6191, %v6187
        %v6304 = vpack.c.b16 %v6196, %v6192
        %v6305 = vpack.c.b16 %v6197, %v6193
        %v6306 = vpack.c.b16 %v6198, %v6194
        %v6307 = vpack.c.b16 %v6199, %v6195
        %v6308 = vpack.c.b16 %v6204, %v6200
        %v6309 = vpack.c.b16 %v6205, %v6201
        %v6310 = vpack.c.b16 %v6206, %v6202
        %v6311 = vpack.c.b16 %v6207, %v6203
        %v6312 = vpack.c.b16 %v6212, %v6208
        %v6313 = vpack.c.b16 %v6213, %v6209
        %v6314 = vpack.c.b16 %v6214, %v6210
        %v6315 = vpack.c.b16 %v6215, %v6211
        %v6316 = vpack.c.b16 %v6220, %v6216
        %v6317 = vpack.c.b16 %v6221, %v6217
        %v6318 = vpack.c.b16 %v6222, %v6218
        %v6319 = vpack.c.b16 %v6223, %v6219
        %v6320 = vpack.c.b16 %v6228, %v6224
        %v6321 = vpack.c.b16 %v6229, %v6225
        %v6322 = vpack.c.b16 %v6230, %v6226
        %v6323 = vpack.c.b16 %v6231, %v6227
        %v6324 = vpack.c.b16 %v6236, %v6232
        %v6325 = vpack.c.b16 %v6237, %v6233
        %v6326 = vpack.c.b16 %v6238, %v6234
        %v6327 = vpack.c.b16 %v6239, %v6235
        %v6328 = vpack.c.b16 %v6244, %v6240
        %v6329 = vpack.c.b16 %v6245, %v6241
        %v6330 = vpack.c.b16 %v6246, %v6242
        %v6331 = vpack.c.b16 %v6247, %v6243
        %v6332 = vpack.c.b16 %v6252, %v6248
        %v6333 = vpack.c.b16 %v6253, %v6249
        %v6334 = vpack.c.b16 %v6254, %v6250
        %v6335 = vpack.c.b16 %v6255, %v6251
        %v6336 = vpack.c.b16 %v6260, %v6256
        %v6337 = vpack.c.b16 %v6261, %v6257
        %v6338 = vpack.c.b16 %v6262, %v6258
        %v6339 = vpack.c.b16 %v6263, %v6259
        %v6340 = vpack.c.b16 %v6268, %v6264
        %v6341 = vpack.c.b16 %v6269, %v6265
        %v6342 = vpack.c.b16 %v6270, %v6266
        %v6343 = vpack.c.b16 %v6271, %v6267
        %v6344 = vpack.c.b16 %v6276, %v6272
        %v6345 = vpack.c.b16 %v6277, %v6273
        %v6346 = vpack.c.b16 %v6278, %v6274
        %v6347 = vpack.c.b16 %v6279, %v6275
        %v6348 = vpack.c.b16 %v6284, %v6280
        %v6349 = vpack.c.b16 %v6285, %v6281
        %v6350 = vpack.c.b16 %v6286, %v6282
        %v6351 = vpack.c.b16 %v6287, %v6283
        %6416 = vmatpush.bf16.msra.mxu0 %v6316
        %6417 = vmatpush.bf16.msra.mxu0 %v6312
        %6418 = vmatpush.bf16.msra.mxu0 %v6308
        %6419 = vmatpush.bf16.msra.mxu0 %v6304
        %6420 = vmatpush.bf16.msra.mxu0 %v6300
        %6421 = vmatpush.bf16.msra.mxu0 %v6296
        %6422 = vmatpush.bf16.msra.mxu0 %v6292
        %6423 = vmatpush.bf16.msra.mxu0 %v6288
        %6424 = vmatmul.bf16.gmra.mxu0 %v6029
        %v6425 = vpop.f32.mrf.mxu0
        %v6426 = vadd.f32 0.0, %v6425
        %v6427 = vpop.f32.mrf.mxu0
        %v6428 = vadd.f32 0.0, %v6427
        %6429 = vdwg.mxu0
        %6430 = vmatpush.bf16.msra.mxu0 %v6348
        %6431 = vmatpush.bf16.msra.mxu0 %v6344
        %6432 = vmatpush.bf16.msra.mxu0 %v6340
        %6433 = vmatpush.bf16.msra.mxu0 %v6336
        %6434 = vmatpush.bf16.msra.mxu0 %v6332
        %6435 = vmatpush.bf16.msra.mxu0 %v6328
        %6436 = vmatpush.bf16.msra.mxu0 %v6324
        %6437 = vmatpush.bf16.msra.mxu0 %v6320
        %6438 = vmatmul.bf16.gmra.mxu0 %v6030
        %v6439 = vpop.f32.mrf.mxu0
        %v6440 = vadd.f32 %v6426, %v6439
        %v6441 = vpop.f32.mrf.mxu0
        %v6442 = vadd.f32 %v6428, %v6441
        %6443 = vdwg.mxu0
        %6444 = vmatpush.bf16.msra.mxu0 %v6317
        %6445 = vmatpush.bf16.msra.mxu0 %v6313
        %6446 = vmatpush.bf16.msra.mxu0 %v6309
        %6447 = vmatpush.bf16.msra.mxu0 %v6305
        %6448 = vmatpush.bf16.msra.mxu0 %v6301
        %6449 = vmatpush.bf16.msra.mxu0 %v6297
        %6450 = vmatpush.bf16.msra.mxu0 %v6293
        %6451 = vmatpush.bf16.msra.mxu0 %v6289
        %6452 = vmatmul.bf16.gmra.mxu0 %v6029
        %v6453 = vpop.f32.mrf.mxu0
        %v6454 = vadd.f32 0.0, %v6453
        %v6455 = vpop.f32.mrf.mxu0
        %v6456 = vadd.f32 0.0, %v6455
        %6457 = vdwg.mxu0
        %6458 = vmatpush.bf16.msra.mxu0 %v6349
        %6459 = vmatpush.bf16.msra.mxu0 %v6345
        %6460 = vmatpush.bf16.msra.mxu0 %v6341
        %6461 = vmatpush.bf16.msra.mxu0 %v6337
        %6462 = vmatpush.bf16.msra.mxu0 %v6333
        %6463 = vmatpush.bf16.msra.mxu0 %v6329
        %6464 = vmatpush.bf16.msra.mxu0 %v6325
        %6465 = vmatpush.bf16.msra.mxu0 %v6321
        %6466 = vmatmul.bf16.gmra.mxu0 %v6030
        %v6467 = vpop.f32.mrf.mxu0
        %v6468 = vadd.f32 %v6454, %v6467
        %v6469 = vpop.f32.mrf.mxu0
        %v6470 = vadd.f32 %v6456, %v6469
        %6471 = vdwg.mxu0
        %6472 = vmatpush.bf16.msra.mxu0 %v6318
        %6473 = vmatpush.bf16.msra.mxu0 %v6314
        %6474 = vmatpush.bf16.msra.mxu0 %v6310
        %6475 = vmatpush.bf16.msra.mxu0 %v6306
        %6476 = vmatpush.bf16.msra.mxu0 %v6302
        %6477 = vmatpush.bf16.msra.mxu0 %v6298
        %6478 = vmatpush.bf16.msra.mxu0 %v6294
        %6479 = vmatpush.bf16.msra.mxu0 %v6290
        %6480 = vmatmul.bf16.gmra.mxu0 %v6029
        %v6481 = vpop.f32.mrf.mxu0
        %v6482 = vadd.f32 0.0, %v6481
        %v6483 = vpop.f32.mrf.mxu0
        %v6484 = vadd.f32 0.0, %v6483
        %6485 = vdwg.mxu0
        %6486 = vmatpush.bf16.msra.mxu0 %v6350
        %6487 = vmatpush.bf16.msra.mxu0 %v6346
        %6488 = vmatpush.bf16.msra.mxu0 %v6342
        %6489 = vmatpush.bf16.msra.mxu0 %v6338
        %6490 = vmatpush.bf16.msra.mxu0 %v6334
        %6491 = vmatpush.bf16.msra.mxu0 %v6330
        %6492 = vmatpush.bf16.msra.mxu0 %v6326
        %6493 = vmatpush.bf16.msra.mxu0 %v6322
        %6494 = vmatmul.bf16.gmra.mxu0 %v6030
        %v6495 = vpop.f32.mrf.mxu0
        %v6496 = vadd.f32 %v6482, %v6495
        %v6497 = vpop.f32.mrf.mxu0
        %v6498 = vadd.f32 %v6484, %v6497
        %6499 = vdwg.mxu0
        %6500 = vmatpush.bf16.msra.mxu0 %v6319
        %6501 = vmatpush.bf16.msra.mxu0 %v6315
        %6502 = vmatpush.bf16.msra.mxu0 %v6311
        %6503 = vmatpush.bf16.msra.mxu0 %v6307
        %6504 = vmatpush.bf16.msra.mxu0 %v6303
        %6505 = vmatpush.bf16.msra.mxu0 %v6299
        %6506 = vmatpush.bf16.msra.mxu0 %v6295
        %6507 = vmatpush.bf16.msra.mxu0 %v6291
        %6508 = vmatmul.bf16.gmra.mxu0 %v6029
        %v6509 = vpop.f32.mrf.mxu0
        %v6510 = vadd.f32 0.0, %v6509
        %v6511 = vpop.f32.mrf.mxu0
        %v6512 = vadd.f32 0.0, %v6511
        %6513 = vdwg.mxu0
        %6514 = vmatpush.bf16.msra.mxu0 %v6351
        %6515 = vmatpush.bf16.msra.mxu0 %v6347
        %6516 = vmatpush.bf16.msra.mxu0 %v6343
        %6517 = vmatpush.bf16.msra.mxu0 %v6339
        %6518 = vmatpush.bf16.msra.mxu0 %v6335
        %6519 = vmatpush.bf16.msra.mxu0 %v6331
        %6520 = vmatpush.bf16.msra.mxu0 %v6327
        %6521 = vmatpush.bf16.msra.mxu0 %v6323
        %6522 = vmatmul.bf16.gmra.mxu0 %v6030
        %v6523 = vpop.f32.mrf.mxu0
        %v6524 = vadd.f32 %v6510, %v6523
        %v6525 = vpop.f32.mrf.mxu0
        %v6526 = vadd.f32 %v6512, %v6525
        %6527 = vdwg.mxu0
        %v6528 = vadd.f32 %v5935, %v6440
        %v6529 = vadd.f32 %v5963, %v6468
        %v6530 = vadd.f32 %v5991, %v6496
        %v6531 = vadd.f32 %v6019, %v6524
        %v6532 = vadd.f32 %v5937, %v6442
        %v6533 = vadd.f32 %v5965, %v6470
        %v6534 = vadd.f32 %v5993, %v6498
        %v6535 = vadd.f32 %v6021, %v6526
        %v6536 = vld [vmem:[%s10] sm:$0xf]
        %v6538 = vperm.slane %v6536, 0
        %v6539 = vperm.slane %v6536, 1
        %v6540 = vperm.slane %v6536, 2
        %v6541 = vperm.slane %v6536, 3
        %v6546 = vadd.f32 %v6528, %v6538
        %v6547 = vadd.f32 %v6529, %v6539
        %v6548 = vadd.f32 %v6530, %v6540
        %v6549 = vadd.f32 %v6531, %v6541
        %v6550 = vadd.f32 %v6532, %v6538
        %v6551 = vadd.f32 %v6533, %v6539
        %v6552 = vadd.f32 %v6534, %v6540
        %v6553 = vadd.f32 %v6535, %v6541
        %v6554 = vmax.f32 %v6546, 0.0
        %v6555 = vmax.f32 %v6547, 0.0
        %v6556 = vmax.f32 %v6548, 0.0
        %v6557 = vmax.f32 %v6549, 0.0
        %v6558 = vmax.f32 %v6550, 0.0
        %v6559 = vmax.f32 %v6551, 0.0
        %v6560 = vmax.f32 %v6552, 0.0
        %v6561 = vmax.f32 %v6553, 0.0
        %v6562 = vmax.f32 %v6554, %v6556
        %v6563 = vmax.f32 %v6555, %v6557
        %v6564 = vmax.f32 %v6558, %v6560
        %v6565 = vmax.f32 %v6559, %v6561
        %v6570 = vrot.slane %v6562, 1
        %v6571 = vrot.slane %v6564, 1
        %v6572 = vsel %vm727, %v6570, %v6571
        %v6573 = vrot.slane %v6563, 1
        %v6574 = vrot.slane %v6565, 1
        %v6575 = vsel %vm727, %v6573, %v6574
        %v6580 = vrot.slane %v6562, 7
        %v6581 = vrot.slane %v6563, 7
        %v6584 = vsel %vm2911, %v6571, %v6580
        %v6585 = vsel %vm2911, %v6574, %v6581
        %v6586 = vmax.f32 %v6562, %v6572
        %v6587 = vmax.f32 %v6563, %v6575
        %v6588 = vmax.f32 %v6564, %v6584
        %v6589 = vmax.f32 %v6565, %v6585
        %v6590 = vld [vmem:[%s11] sm:$0x3]
        %v6592 = vperm.slane %v6590, 0
        %v6593 = vperm.slane %v6590, 1
        %v6596 = vmul.f32 %v6586, %v6592
        %v6597 = vmul.f32 %v6587, %v6593
        %v6598 = vmul.f32 %v6588, %v6592
        %v6599 = vmul.f32 %v6589, %v6593
        %v6600 = vld [vmem:[%s12] sm:$0x3]
        %v6602 = vperm.slane %v6600, 0
        %v6603 = vperm.slane %v6600, 1
        %v6606 = vadd.f32 %v6596, %v6602
        %v6607 = vadd.f32 %v6597, %v6603
        %v6608 = vadd.f32 %v6598, %v6602
        %v6609 = vadd.f32 %v6599, %v6603
        %v6610 = vadd.f32 %v6606, %v6607
        %v6611 = vadd.f32 %v6608, %v6609
        %v6614 = vrot.slane %v6610, 2
        %v6615 = vrot.slane %v6611, 2
        %v6616 = vsel %vm1215, %v6614, %v6615
        %v6618 = vadd.f32 %v6610, %v6616
        %v6620 = vrot.slane %v6618, 4
        %v6622 = vsel %vm2911, %v6618, %v6620
        %v6623 = vmul.f32 %v6622, 0.25
        %v6624 = vpack.c.bf16 %v6623, %v6623
        %v6625 = vld [vmem:[%s13] sm:$0xf]
        %v6626 = vld [vmem:[%s13 + $0x4] sm:$0xf]
        %v6627 = vld [vmem:[%s13 + $0x8] sm:$0xf]
        %v6628 = vld [vmem:[%s13 + $0xc] sm:$0xf]
        %v6629 = vld [vmem:[%s13 + $0x10] sm:$0xf]
        %v6630 = vld [vmem:[%s13 + $0x14] sm:$0xf]
        %v6631 = vld [vmem:[%s13 + $0x18] sm:$0xf]
        %v6632 = vld [vmem:[%s13 + $0x1c] sm:$0xf]
        %v6633 = vld [vmem:[%s13 + $0x20] sm:$0xf]
        %v6634 = vld [vmem:[%s13 + $0x24] sm:$0xf]
        %v6635 = vld [vmem:[%s13 + $0x28] sm:$0xf]
        %v6636 = vld [vmem:[%s13 + $0x2c] sm:$0xf]
        %v6637 = vld [vmem:[%s13 + $0x30] sm:$0xf]
        %v6638 = vld [vmem:[%s13 + $0x34] sm:$0xf]
        %v6639 = vld [vmem:[%s13 + $0x38] sm:$0xf]
        %v6640 = vld [vmem:[%s13 + $0x3c] sm:$0xf]
        %v6641 = vld [vmem:[%s14] sm:$0x1]
        %v6643 = vperm.slane %v6641, 0
        %v6661 = vunpack.c.l.b16 %v6625
        %v6662 = vunpack.c.l.b16 %v6626
        %v6663 = vunpack.c.l.b16 %v6627
        %v6664 = vunpack.c.l.b16 %v6628
        %v6665 = vunpack.c.l.b16 %v6629
        %v6666 = vunpack.c.l.b16 %v6630
        %v6667 = vunpack.c.l.b16 %v6631
        %v6668 = vunpack.c.l.b16 %v6632
        %v6669 = vunpack.c.l.b16 %v6633
        %v6670 = vunpack.c.l.b16 %v6634
        %v6671 = vunpack.c.l.b16 %v6635
        %v6672 = vunpack.c.l.b16 %v6636
        %v6673 = vunpack.c.l.b16 %v6637
        %v6674 = vunpack.c.l.b16 %v6638
        %v6675 = vunpack.c.l.b16 %v6639
        %v6676 = vunpack.c.l.b16 %v6640
        %v6677 = vpack.c.b16 %v6662, %v6661
        %v6678 = vpack.c.b16 %v6664, %v6663
        %v6679 = vpack.c.b16 %v6666, %v6665
        %v6680 = vpack.c.b16 %v6668, %v6667
        %v6681 = vpack.c.b16 %v6670, %v6669
        %v6682 = vpack.c.b16 %v6672, %v6671
        %v6683 = vpack.c.b16 %v6674, %v6673
        %v6684 = vpack.c.b16 %v6676, %v6675
        %6693 = vmatpush.bf16.msra.mxu0 %v6684
        %6694 = vmatpush.bf16.msra.mxu0 %v6683
        %6695 = vmatpush.bf16.msra.mxu0 %v6682
        %6696 = vmatpush.bf16.msra.mxu0 %v6681
        %6697 = vmatpush.bf16.msra.mxu0 %v6680
        %6698 = vmatpush.bf16.msra.mxu0 %v6679
        %6699 = vmatpush.bf16.msra.mxu0 %v6678
        %6700 = vmatpush.bf16.msra.mxu0 %v6677
        %6701 = vmatmul.bf16.gmra.mxu0 %v6624
        %v6702 = vpop.f32.mrf.mxu0
        %v6703 = vadd.f32 %v6643, %v6702
        %v6704 = vpop.f32.mrf.mxu0
        %6705 = vdwg.mxu0
        %v6706 = vld [vmem:[%s15] sm:$0xf]
        %v6707 = vld [vmem:[%s15 + $0x4] sm:$0xf]
        %v6708 = vld [vmem:[%s15 + $0x8] sm:$0xf]
        %v6709 = vld [vmem:[%s15 + $0xc] sm:$0xf]
        %v6710 = vld [vmem:[%s15 + $0x10] sm:$0xf]
        %v6711 = vld [vmem:[%s15 + $0x14] sm:$0xf]
        %v6712 = vld [vmem:[%s15 + $0x18] sm:$0xf]
        %v6713 = vld [vmem:[%s15 + $0x1c] sm:$0xf]
        %v6714 = vld [vmem:[%s15 + $0x20] sm:$0xf]
        %v6715 = vld [vmem:[%s15 + $0x24] sm:$0xf]
        %v6716 = vld [vmem:[%s15 + $0x28] sm:$0xf]
        %v6717 = vld [vmem:[%s15 + $0x2c] sm:$0xf]
        %v6718 = vld [vmem:[%s15 + $0x30] sm:$0xf]
        %v6719 = vld [vmem:[%s15 + $0x34] sm:$0xf]
        %v6720 = vld [vmem:[%s15 + $0x38] sm:$0xf]
        %v6721 = vld [vmem:[%s15 + $0x3c] sm:$0xf]
        %v6722 = vld [vmem:[%s15 + $0x40] sm:$0xf]
        %v6723 = vld [vmem:[%s15 + $0x44] sm:$0xf]
        %v6724 = vld [vmem:[%s15 + $0x48] sm:$0xf]
        %v6725 = vld [vmem:[%s15 + $0x4c] sm:$0xf]
        %v6726 = vld [vmem:[%s15 + $0x50] sm:$0xf]
        %v6727 = vld [vmem:[%s15 + $0x54] sm:$0xf]
        %v6728 = vld [vmem:[%s15 + $0x58] sm:$0xf]
        %v6729 = vld [vmem:[%s15 + $0x5c] sm:$0xf]
        %v6730 = vld [vmem:[%s15 + $0x60] sm:$0xf]
        %v6731 = vld [vmem:[%s15 + $0x64] sm:$0xf]
        %v6732 = vld [vmem:[%s15 + $0x68] sm:$0xf]
        %v6733 = vld [vmem:[%s15 + $0x6c] sm:$0xf]
        %v6734 = vld [vmem:[%s15 + $0x70] sm:$0xf]
        %v6735 = vld [vmem:[%s15 + $0x74] sm:$0xf]
        %v6736 = vld [vmem:[%s15 + $0x78] sm:$0xf]
        %v6737 = vld [vmem:[%s15 + $0x7c] sm:$0xf]
        %v6738 = vpack.c.bf16 %v6703, %v6703
        %v6740 = vshrl.u32 %v6738, 16
        %v6759 = vunpack.c.l.b16 %v6722
        %v6760 = vunpack.c.l.b16 %v6723
        %v6761 = vunpack.c.l.b16 %v6724
        %v6762 = vunpack.c.l.b16 %v6725
        %v6763 = vunpack.c.l.b16 %v6726
        %v6764 = vunpack.c.l.b16 %v6727
        %v6765 = vunpack.c.l.b16 %v6728
        %v6766 = vunpack.c.l.b16 %v6729
        %v6767 = vunpack.c.l.b16 %v6730
        %v6768 = vunpack.c.l.b16 %v6731
        %v6769 = vunpack.c.l.b16 %v6732
        %v6770 = vunpack.c.l.b16 %v6733
        %v6771 = vunpack.c.l.b16 %v6734
        %v6772 = vunpack.c.l.b16 %v6735
        %v6773 = vunpack.c.l.b16 %v6736
        %v6774 = vunpack.c.l.b16 %v6737
        %v6775 = vpack.c.b16 %v6760, %v6759
        %v6776 = vpack.c.b16 %v6762, %v6761
        %v6777 = vpack.c.b16 %v6764, %v6763
        %v6778 = vpack.c.b16 %v6766, %v6765
        %v6779 = vpack.c.b16 %v6768, %v6767
        %v6780 = vpack.c.b16 %v6770, %v6769
        %v6781 = vpack.c.b16 %v6772, %v6771
        %v6782 = vpack.c.b16 %v6774, %v6773
        %6791 = vmatpush.bf16.msra.mxu0 %v6782
        %6792 = vmatpush.bf16.msra.mxu0 %v6781
        %6793 = vmatpush.bf16.msra.mxu0 %v6780
        %6794 = vmatpush.bf16.msra.mxu0 %v6779
        %6795 = vmatpush.bf16.msra.mxu0 %v6778
        %6796 = vmatpush.bf16.msra.mxu0 %v6777
        %6797 = vmatpush.bf16.msra.mxu0 %v6776
        %6798 = vmatpush.bf16.msra.mxu0 %v6775
        %6799 = vmatmul.bf16.gmra.mxu0 %v6740
        %v6800 = vpop.f32.mrf.mxu0
        %v6801 = vadd.f32 0.0, %v6800
        %v6802 = vpop.f32.mrf.mxu0
        %6803 = vdwg.mxu0
        %v6820 = vunpack.c.l.b16 %v6706
        %v6821 = vunpack.c.l.b16 %v6707
        %v6822 = vunpack.c.l.b16 %v6708
        %v6823 = vunpack.c.l.b16 %v6709
        %v6824 = vunpack.c.l.b16 %v6710
        %v6825 = vunpack.c.l.b16 %v6711
        %v6826 = vunpack.c.l.b16 %v6712
        %v6827 = vunpack.c.l.b16 %v6713
        %v6828 = vunpack.c.l.b16 %v6714
        %v6829 = vunpack.c.l.b16 %v6715
        %v6830 = vunpack.c.l.b16 %v6716
        %v6831 = vunpack.c.l.b16 %v6717
        %v6832 = vunpack.c.l.b16 %v6718
        %v6833 = vunpack.c.l.b16 %v6719
        %v6834 = vunpack.c.l.b16 %v6720
        %v6835 = vunpack.c.l.b16 %v6721
        %v6836 = vpack.c.b16 %v6821, %v6820
        %v6837 = vpack.c.b16 %v6823, %v6822
        %v6838 = vpack.c.b16 %v6825, %v6824
        %v6839 = vpack.c.b16 %v6827, %v6826
        %v6840 = vpack.c.b16 %v6829, %v6828
        %v6841 = vpack.c.b16 %v6831, %v6830
        %v6842 = vpack.c.b16 %v6833, %v6832
        %v6843 = vpack.c.b16 %v6835, %v6834
        %6852 = vmatpush.bf16.msra.mxu0 %v6843
        %6853 = vmatpush.bf16.msra.mxu0 %v6842
        %6854 = vmatpush.bf16.msra.mxu0 %v6841
        %6855 = vmatpush.bf16.msra.mxu0 %v6840
        %6856 = vmatpush.bf16.msra.mxu0 %v6839
        %6857 = vmatpush.bf16.msra.mxu0 %v6838
        %6858 = vmatpush.bf16.msra.mxu0 %v6837
        %6859 = vmatpush.bf16.msra.mxu0 %v6836
        %6860 = vmatmul.bf16.gmra.mxu0 %v6738
        %v6861 = vpop.f32.mrf.mxu0
        %v6862 = vadd.f32 %v6801, %v6861
        %v6863 = vpop.f32.mrf.mxu0
        %6864 = vdwg.mxu0
        %v6865 = vld [vmem:[%s16] sm:$0x1]
        %v6866 = vadd.f32 %v6862, %v6865
        %v6867 = vmax.f32 %v6866, 0.0
        %v6868 = vpack.c.bf16 %v6867, %v6867
        %v6869 = vld [vmem:[%s17] sm:$0xf]
        %v6870 = vld [vmem:[%s17 + $0x4] sm:$0xf]
        %v6871 = vld [vmem:[%s17 + $0x8] sm:$0xf]
        %v6872 = vld [vmem:[%s17 + $0xc] sm:$0xf]
        %v6873 = vld [vmem:[%s17 + $0x10] sm:$0xf]
        %v6874 = vld [vmem:[%s17 + $0x14] sm:$0xf]
        %v6875 = vld [vmem:[%s17 + $0x18] sm:$0xf]
        %v6876 = vld [vmem:[%s17 + $0x1c] sm:$0xf]
        %v6877 = vld [vmem:[%s17 + $0x20] sm:$0xf]
        %v6878 = vld [vmem:[%s17 + $0x24] sm:$0xf]
        %v6879 = vld [vmem:[%s17 + $0x28] sm:$0xf]
        %v6880 = vld [vmem:[%s17 + $0x2c] sm:$0xf]
        %v6881 = vld [vmem:[%s17 + $0x30] sm:$0xf]
        %v6882 = vld [vmem:[%s17 + $0x34] sm:$0xf]
        %v6883 = vld [vmem:[%s17 + $0x38] sm:$0xf]
        %v6884 = vld [vmem:[%s17 + $0x3c] sm:$0xf]
        %v6885 = vld [vmem:[%s18] sm:$0x1]
        %v6902 = vunpack.c.l.b16 %v6869
        %v6903 = vunpack.c.l.b16 %v6870
        %v6904 = vunpack.c.l.b16 %v6871
        %v6905 = vunpack.c.l.b16 %v6872
        %v6906 = vunpack.c.l.b16 %v6873
        %v6907 = vunpack.c.l.b16 %v6874
        %v6908 = vunpack.c.l.b16 %v6875
        %v6909 = vunpack.c.l.b16 %v6876
        %v6910 = vunpack.c.l.b16 %v6877
        %v6911 = vunpack.c.l.b16 %v6878
        %v6912 = vunpack.c.l.b16 %v6879
        %v6913 = vunpack.c.l.b16 %v6880
        %v6914 = vunpack.c.l.b16 %v6881
        %v6915 = vunpack.c.l.b16 %v6882
        %v6916 = vunpack.c.l.b16 %v6883
        %v6917 = vunpack.c.l.b16 %v6884
        %v6918 = vpack.c.b16 %v6903, %v6902
        %v6919 = vpack.c.b16 %v6905, %v6904
        %v6920 = vpack.c.b16 %v6907, %v6906
        %v6921 = vpack.c.b16 %v6909, %v6908
        %v6922 = vpack.c.b16 %v6911, %v6910
        %v6923 = vpack.c.b16 %v6913, %v6912
        %v6924 = vpack.c.b16 %v6915, %v6914
        %v6925 = vpack.c.b16 %v6917, %v6916
        %6934 = vmatpush.bf16.msra.mxu0 %v6925
        %6935 = vmatpush.bf16.msra.mxu0 %v6924
        %6936 = vmatpush.bf16.msra.mxu0 %v6923
        %6937 = vmatpush.bf16.msra.mxu0 %v6922
        %6938 = vmatpush.bf16.msra.mxu0 %v6921
        %6939 = vmatpush.bf16.msra.mxu0 %v6920
        %6940 = vmatpush.bf16.msra.mxu0 %v6919
        %6941 = vmatpush.bf16.msra.mxu0 %v6918
        %6942 = vmatmul.bf16.gmra.mxu0 %v6868
        %v6943 = vpop.f32.mrf.mxu0
        %v6944 = vadd.f32 %v6885, %v6943
        %v6945 = vpop.f32.mrf.mxu0
        %6946 = vdwg.mxu0
        %v6947 = vmax.f32 %v6944, 0.0
        %v6948 = vpack.c.bf16 %v6947, %v6947
        %v6949 = vld [vmem:[%s19] sm:$0xf]
        %v6950 = vld [vmem:[%s19 + $0x4] sm:$0xf]
        %v6951 = vld [vmem:[%s19 + $0x8] sm:$0xf]
        %v6952 = vld [vmem:[%s19 + $0xc] sm:$0xf]
        %v6953 = vld [vmem:[%s19 + $0x10] sm:$0xf]
        %v6954 = vld [vmem:[%s19 + $0x14] sm:$0xf]
        %v6955 = vld [vmem:[%s19 + $0x18] sm:$0xf]
        %v6956 = vld [vmem:[%s19 + $0x1c] sm:$0xf]
        %v6957 = vld [vmem:[#allocation2] sm:$0x1]
        %v6966 = vunpack.c.l.b16 %v6949
        %v6967 = vunpack.c.l.b16 %v6950
        %v6968 = vunpack.c.l.b16 %v6951
        %v6969 = vunpack.c.l.b16 %v6952
        %v6970 = vunpack.c.l.b16 %v6953
        %v6971 = vunpack.c.l.b16 %v6954
        %v6972 = vunpack.c.l.b16 %v6955
        %v6973 = vunpack.c.l.b16 %v6956
        %v6974 = vpack.c.b16 %v6967, %v6966
        %v6975 = vpack.c.b16 %v6969, %v6968
        %v6976 = vpack.c.b16 %v6971, %v6970
        %v6977 = vpack.c.b16 %v6973, %v6972
        %vm6982 = vcmask 523264
        %v6984 = vsel %vm6982, %v6948, 0
        %6986 = vmatpush.bf16.msra.mxu0 0
        %6987 = vmatpush.bf16.msra.mxu0 0
        %6988 = vmatpush.bf16.msra.mxu0 0
        %6989 = vmatpush.bf16.msra.mxu0 0
        %6990 = vmatpush.bf16.msra.mxu0 %v6977
        %6991 = vmatpush.bf16.msra.mxu0 %v6976
        %6992 = vmatpush.bf16.msra.mxu0 %v6975
        %6993 = vmatpush.bf16.msra.mxu0 %v6974
        %6994 = vmatmul.bf16.gmra.mxu0 %v6984
        %v6995 = vpop.f32.mrf.mxu0
        %v6996 = vadd.f32 %v6957, %v6995
        %v6997 = vpop.f32.mrf.mxu0
        %6998 = vdwg.mxu0
        %v6999 = vxor.u32 %v6996, 2147483648
        %v7000 = vmul.f32 %v6999, 1.442695
        %v7001 = vpow.pop %v7000
        %v7002 = vadd.f32 %v7001, 1.0
        %v7003 = vrcp.pop %v7002
        %v7004 = vmul.f32 %v7002, %v7003
        %v7005 = vsub.f32 1.0, %v7004
        %v7006 = vmul.f32 %v7003, %v7005
        %v7007 = vadd.f32 %v7003, %v7006
        %vm7008 = vweird.f32 %v7002
        %vm7009 = vweird.f32 %v7003
        %vm7010 = vmor %vm7008, %vm7009
        %v7011 = vsel %vm7010, %v7003, %v7007
        %v7012 = vand.u32 2147483647, %v7002
        %vm7013 = vcmp.eq.f32.partialorder %v7012, 8.507059e+37
        %v7014 = vand.u32 %v7002, 2147483648
        %v7015 = vor.u32 1.1754944e-38, %v7014
        %v7016 = vsel %vm7013, %v7015, %v7011
        %v7017 = vmul.f32 1.0, %v7016
        %vm7018 = vcmask 0
        %7019 = vst.msk [vmem:[%s688] sm:$0x1] %vm7018, %v7017
        %p7020 = scmp.lt.s32.totalorder %s36, 1
        %s7021 = scalar_select %p7020, %s36, 1
        %s7022 = scalar_lea.vmem %s21, %s7021
        // Predicated region
        $region113: #{release_relation_net.1} parent=103 // pred_check
          %p7023 = pneg %p500
        $region114: #{release_relation_net.1} parent=103 // pred_check_branch
          %7025 = sbr.rel (%p7023) target = $region116
        $region115: #{release_relation_net.1} parent=103 // pred_region
          _
        $region116: #{release_relation_net.1} parent=103 // pred_fallthru
          _
      $region104: #{release_relation_net.1} parent=5 // pred_fallthru
        _
      %p7026 = scmp.le.s32.totalorder 2, %s31
      // Predicated region
      $region117: #{release_relation_net.1} parent=5 // pred_check
        %p7027 = pneg %p7026
      $region118: #{release_relation_net.1} parent=5 // pred_check_branch
        %7029 = sbr.rel (%p7027) target = $region120
      $region119: #{release_relation_net.1} parent=5 // pred_region
        %s7030 = ssub.s32 %s31, 2
        // Predicated region
        $region121: #{release_relation_net.1} parent=119 // pred_check
          %p7031 = pneg %p506
        $region122: #{release_relation_net.1} parent=119 // pred_check_branch
          %7033 = sbr.rel (%p7031) target = $region124
        $region123: #{release_relation_net.1} parent=119 // pred_region
          %p7034 = scmp.lt.s32.totalorder %s37, 1
          %s7035 = scalar_select %p7034, %s37, 1
          %s7036 = scalar_lea.vmem %s21, %s7035
        $region124: #{release_relation_net.1} parent=119 // pred_fallthru
          _
      $region120: #{release_relation_net.1} parent=5 // pred_fallthru
        _
    $region6: #{release_relation_net.1} parent=1 // loop_footer
      %s35 = sadd.s32 1, %s31
    $region7: #{release_relation_net.1} parent=1 // loop_footer_branch
      %30 = sbr.rel target = $region3
    $region8: #{release_relation_net.1} parent=1 // loop_exit
      _
    %7037 = vsyncpa [#allocation4], 1
    %s7038 = scalar_lea.sflag [#allocation4], 1
    %7039 = vsyncpa %s7038, 1
    %7040 = vsyncpa [#allocation6], 1

</llo_original>
